<compile_context>
chip_gen: v7x
topology: tpu7x:2x2x1
jax: 0.10.0
libtpu: 0.0.40
codegen_flags: <defaults>
</compile_context>

<pallas_src>
import jax
import jax.numpy as jnp
from jax.experimental import pallas as pl
from jax.experimental.pallas import tpu as pltpu


def _conv3x3_taps(src_ref, w_ref, out_rows, out_cols):
    """3x3 conv on a pre-padded source ref.

    src_ref: (Bb, out_rows + 2, out_cols + 2, C)  bf16
    w_ref  : (9, C, Co)                           bf16, tap-major (t = kh*3 + kw)
    returns: (Bb * out_rows * out_cols, Co)       f32 accumulator
    """
    Bb, _, _, C = src_ref.shape
    Co = w_ref.shape[2]
    M = Bb * out_rows * out_cols

    def tap(dy, dx):
        return src_ref[:, dy:dy + out_rows, dx:dx + out_cols, :].reshape(M, C)

    if C >= 128:
        # Wide channels: single fused im2col matmul (K = 9*C) keeps the MXU busy.
        patches = jnp.concatenate(
            [tap(dy, dx) for dy in range(3) for dx in range(3)], axis=-1)
        w_flat = w_ref[...].reshape(9 * C, Co)
        return jnp.dot(patches, w_flat, preferred_element_type=jnp.float32)

    # Narrow channels (review): 9 accumulating matmuls, no sub-128-lane concat.
    # TODO(synk): benchmark pltpu.roll-derived dx taps (load each dy band once,
    # aligned) to remove the sublane-misaligned tap loads.
    acc = None
    for t in range(9):
        dy, dx = divmod(t, 3)
        part = jnp.dot(tap(dy, dx), w_ref[t], preferred_element_type=jnp.float32)
        acc = part if acc is None else acc + part
    return acc


def _double_conv_kernel(x_ref, w1_ref, w2_ref, o_ref, mid_ref):
    # x_ref  : (Bb, bh+4, W+2, Cin)   bf16 band of zero-padded input (2-row halo)
    # w1_ref : (9, Cin, Cmid)         bf16
    # w2_ref : (9, Cmid, Cout)        bf16
    # o_ref  : (Bb, Cout, bh*W)       lane-dense, Cout-major output block
    # mid_ref: (Bb, bh+2, W+2, Cmid)  bf16 scratch: conv1 rows (band-1 .. band+bh)
    Bb, hin, win, _ = x_ref.shape
    bh, W = hin - 4, win - 2
    Wp, R1 = W + 2, bh + 2
    Cmid = w1_ref.shape[2]
    Cout = w2_ref.shape[2]
    band = pl.program_id(1)
    n_bands = pl.num_programs(1)

    # ---- conv1 + ReLU over bh+2 rows (band interior + one halo row each side) ----
    acc1 = _conv3x3_taps(x_ref, w1_ref, R1, W)                  # (Bb*R1*W, Cmid) f32
    h1 = jnp.maximum(acc1, 0.0).astype(jnp.bfloat16).reshape(Bb, R1, W, Cmid)

    # Interior store + 1-wide halo-column zeroing (done every step: scratch is
    # per-core and both grid axes are "parallel", so there is no reliable
    # "first step" to gate on).
    # TODO(synk): benchmark in-register zero-column pad + one full-width aligned
    # store of mid (review item); kept as explicit stores for lowering safety.
    zcol = jnp.zeros((Bb, R1, 1, Cmid), jnp.bfloat16)
    mid_ref[:, :, 0:1, :] = zcol
    mid_ref[:, :, Wp - 1:Wp, :] = zcol
    mid_ref[:, :, 1:1 + W, :] = h1

    # Rows outside the image must be *zero* for conv2 (conv2's own zero padding),
    # not conv1-of-padding: overwrite the out-of-range halo row of first/last band.
    zrow = jnp.zeros((Bb, 1, Wp, Cmid), jnp.bfloat16)

    @pl.when(band == 0)
    def _():
        mid_ref[:, 0:1, :, :] = zrow

    @pl.when(band == n_bands - 1)
    def _():
        mid_ref[:, R1 - 1:R1, :, :] = zrow

    # ---- conv2 + ReLU over the bh band rows, emitted Cout-major / lane-dense ----
    acc2 = _conv3x3_taps(mid_ref, w2_ref, bh, W)                # (Bb*bh*W, Cout) f32
    act2 = jnp.maximum(acc2, 0.0).astype(o_ref.dtype)
    if Bb == 1:
        o_ref[...] = act2.T.reshape(1, Cout, bh * W)            # one small XLU transpose
    else:
        o_ref[...] = jnp.swapaxes(act2.reshape(Bb, bh * W, Cout), 1, 2)


def _tile_bytes(shape, dtype):
    """VMEM footprint of `shape` after (sublane, 128-lane) tile padding."""
    item = jnp.dtype(dtype).itemsize
    dims = list(shape)
    dims[-1] = ((dims[-1] + 127) // 128) * 128
    if len(dims) >= 2:
        sub = 8 * (4 // item)                     # 8 (f32) / 16 (bf16)
        dims[-2] = ((dims[-2] + sub - 1) // sub) * sub
    n = 1
    for d in dims:
        n *= d
    return n * item


def _vmem_capacity_bytes():
    try:
        cap = getattr(pltpu.get_tpu_info(), "vmem_capacity_bytes", None)
        if cap:
            return int(cap)
    except Exception:
        pass
    return 64 << 20                               # conservative default (v7x)


def double_conv(x_nchw, w1, w2, *, out_dtype=jnp.float32,
                batch_block=None, band_rows=None):
    """x: (B, Cin, H, W); w1: (Cmid, Cin, 3, 3); w2: (Cout, Cmid, 3, 3).
    Returns (B, Cout, H, W) matching PyTorch DoubleConv.forward (bias-free,
    bf16 MXU operands, f32 accumulation).  Use out_dtype=jnp.bfloat16 to halve
    output writeback when the consumer is a bf16 layer."""
    B, Cin, H, W = x_nchw.shape
    Cmid, Cout = w1.shape[0], w2.shape[0]
    Wp = W + 2
    bf16, f32 = jnp.bfloat16, jnp.float32

    # ---- generation-aware VMEM budget (review) ----
    vmem_cap = _vmem_capacity_bytes()
    vmem_limit = (vmem_cap * 3) // 4              # ~75% of physical (48/96 MiB)
    budget = (vmem_limit * 3) // 4                # headroom for compiler temporaries

    def est(Bb, bh):
        R1 = bh + 2
        fuse1, fuse2 = Cin >= 128, Cmid >= 128
        M1, M2 = Bb * R1 * W, Bb * bh * W
        tmp1 = (2 * _tile_bytes((M1, 9 * Cin), bf16) if fuse1
                else 3 * _tile_bytes((M1, Cin), bf16))
        tmp2 = (2 * _tile_bytes((M2, 9 * Cmid), bf16) if fuse2
                else 3 * _tile_bytes((M2, Cmid), bf16))
        return (2 * _tile_bytes((Bb, bh + 4, Wp, Cin), bf16)      # input block x2
                + 2 * _tile_bytes((9, Cin, Cmid), bf16)
                + 2 * _tile_bytes((9, Cmid, Cout), bf16)
                + 2 * _tile_bytes((Bb, Cout, bh * W), out_dtype)  # output block x2
                + _tile_bytes((Bb, R1, Wp, Cmid), bf16)           # mid scratch
                + tmp1 + 2 * _tile_bytes((M1, Cmid), f32)         # taps + acc1
                + tmp2 + 2 * _tile_bytes((M2, Cout), f32))        # taps + acc2

    # ---- band height: largest divisor of H that fits the budget at Bb=1 ----
    if band_rows is None:
        divs = sorted((d for d in range(1, H + 1) if H % d == 0), reverse=True)
        band_rows = divs[-1]
        for d in divs:
            if H // d > 1 and (d * W) % 128 != 0:
                continue                           # lane-dense, (8,128)-legal out blocks
            if est(1, d) <= budget:
                band_rows = d
                break
    band_rows = max(1, min(band_rows, H))
    while H % band_rows:
        band_rows -= 1
    bh = band_rows
    n_bands = H // bh

    # ---- batch block: largest divisor of B that fits AND keeps >= 2 grid steps
    # so both v7x TensorCores get work (review) ----
    if batch_block is None:
        batch_block = 1
        for d in sorted((d for d in range(1, B + 1) if B % d == 0), reverse=True):
            if B >= 2 and (B // d) * n_bands < 2:
                continue
            if est(d, bh) <= budget:
                batch_block = d
                break
    batch_block = max(1, min(batch_block, B))
    while B % batch_block:
        batch_block -= 1
    Bb = batch_block

    # ---- wrapper-side layout prep (fused by XLA into one HBM pass) ----
    # NCHW -> NHWC, bf16 cast, zero pad: 2 rows top/bottom (conv1 halo + conv2
    # padding), 1 column left/right.
    x_nhwc = jnp.transpose(x_nchw, (0, 2, 3, 1)).astype(bf16)
    x_pad = jnp.pad(x_nhwc, ((0, 0), (2, 2), (1, 1), (0, 0)))
    if n_bands == 1:
        x_bands = x_pad[:, None]                   # free expand_dims
    else:
        # TODO(synk): band halos are duplicated in HBM (4 rows/band); fine for
        # bh >= 32, revisit with an overlapping (Element-indexed) BlockSpec.
        x_bands = jnp.stack(
            [x_pad[:, i * bh:i * bh + bh + 4] for i in range(n_bands)], axis=1)

    # PyTorch (O, I, kh, kw) -> tap-major (9, I, O), bf16 (free, in wrapper).
    w1_k = jnp.transpose(w1, (2, 3, 1, 0)).reshape(9, Cin, Cmid).astype(bf16)
    w2_k = jnp.transpose(w2, (2, 3, 1, 0)).reshape(9, Cmid, Cout).astype(bf16)

    out_flat = pl.pallas_call(
        _double_conv_kernel,
        out_shape=jax.ShapeDtypeStruct((B, Cout, H * W), out_dtype),
        grid_spec=pltpu.PrefetchScalarGridSpec(
            num_scalar_prefetch=0,
            grid=(B // Bb, n_bands),
            in_specs=[
                pl.BlockSpec((Bb, None, bh + 4, Wp, Cin),
                             lambda b, s: (b, s, 0, 0, 0)),
                pl.BlockSpec((9, Cin, Cmid), lambda b, s: (0, 0, 0)),
                pl.BlockSpec((9, Cmid, Cout), lambda b, s: (0, 0, 0)),
            ],
            out_specs=pl.BlockSpec((Bb, Cout, bh * W), lambda b, s: (b, 0, s)),
            scratch_shapes=[pltpu.VMEM((Bb, bh + 2, Wp, Cmid), bf16)],
        ),
        compiler_params=pltpu.CompilerParams(
            dimension_semantics=("parallel", "parallel"),
            vmem_limit_bytes=int(vmem_limit)),
    )(x_bands, w1_k, w2_k)

    # Lane-dense (B, Cout, H*W) -> (B, Cout, H, W) is a free reshape; no transpose.
    return out_flat.reshape(B, Cout, H, W)


def _reference_double_conv(x_nchw, w1, w2):
    """Pure-JAX reference (NCHW / OIHW, SAME padding) mirroring the kernel's
    bf16 MXU operands (bf16-rounded inputs/weights/intermediate, f32 accum)."""
    f32 = jnp.float32
    xb = x_nchw.astype(jnp.bfloat16).astype(f32)
    w1b = w1.astype(jnp.bfloat16).astype(f32)
    w2b = w2.astype(jnp.bfloat16).astype(f32)
    dn = jax.lax.conv_dimension_numbers(xb.shape, w1b.shape, ("NCHW", "OIHW", "NCHW"))
    y = jax.lax.conv_general_dilated(xb, w1b, (1, 1), "SAME", dimension_numbers=dn)
    y = jnp.maximum(y, 0.0)
    y = y.astype(jnp.bfloat16).astype(f32)
    dn2 = jax.lax.conv_dimension_numbers(y.shape, w2b.shape, ("NCHW", "OIHW", "NCHW"))
    y = jax.lax.conv_general_dilated(y, w2b, (1, 1), "SAME", dimension_numbers=dn2)
    return jnp.maximum(y, 0.0)


if __name__ == "__main__":
    # Small shapes consistent with the module: batch=2, in_channels=4,
    # out_channels=8 (mid_channels defaults to out_channels), spatial=16.
    B, Cin, Cmid, Cout, H, W = 2, 4, 8, 8, 16, 16

    key = jax.random.PRNGKey(0)
    kx, k1, k2 = jax.random.split(key, 3)
    x = jax.random.normal(kx, (B, Cin, H, W), dtype=jnp.float32)
    # Deterministic Kaiming-like init for the two bias-free 3x3 conv weights.
    w1 = jax.random.normal(k1, (Cmid, Cin, 3, 3), dtype=jnp.float32) * (2.0 / (Cin * 9)) ** 0.5
    w2 = jax.random.normal(k2, (Cout, Cmid, 3, 3), dtype=jnp.float32) * (2.0 / (Cmid * 9)) ** 0.5

    out = jax.block_until_ready(double_conv(x, w1, w2))
    ref = _reference_double_conv(x, w1, w2)
    assert out.shape == (B, Cout, H, W)
    assert jnp.allclose(out, ref, atol=3e-3, rtol=3e-3), "mismatch vs reference"

    print("KERNEL_OK")
</pallas_src>

<mosaic_0001>
module attributes {stable_mosaic.version = 11 : i64} {
  func.func @_double_conv_kernel(%arg0: i32, %arg1: i32, %arg2: memref<1x1x20x18x4xbf16, #tpu.memory_space<vmem>>, %arg3: memref<9x4x8xbf16, #tpu.memory_space<vmem>>, %arg4: memref<9x8x8xbf16, #tpu.memory_space<vmem>>, %arg5: memref<1x8x256xf32, #tpu.memory_space<vmem>>, %arg6: memref<1x18x18x8xbf16, #tpu.memory_space<vmem>>) attributes {dimension_semantics = [#tpu.dimension_semantics<parallel>, #tpu.dimension_semantics<parallel>], iteration_bounds = array<i64: 2, 1>, scalar_prefetch = 0 : i64, scratch_operands = 1 : i64, tpu.core_type = #tpu.core_type<tc>, window_params = [{transform_indices = @transform_0, window_bounds = array<i64: 1, 1, 20, 18, 4>}, {pipeline_mode = #tpu.pipeline_mode<synchronous>, transform_indices = @transform_1, window_bounds = array<i64: 9, 4, 8>}, {pipeline_mode = #tpu.pipeline_mode<synchronous>, transform_indices = @transform_2, window_bounds = array<i64: 9, 8, 8>}, {transform_indices = @transform_3, window_bounds = array<i64: 1, 8, 256>}]} {
    %c0 = arith.constant 0 : index
    %c0_0 = arith.constant 0 : index
    %c0_1 = arith.constant 0 : index
    %c0_2 = arith.constant 0 : index
    %c0_3 = arith.constant 0 : index
    %0 = vector.load %arg2[%c0, %c0_0, %c0_1, %c0_2, %c0_3] : memref<1x1x20x18x4xbf16, #tpu.memory_space<vmem>>, vector<1x1x18x16x4xbf16>
    %1 = vector.shape_cast %0 : vector<1x1x18x16x4xbf16> to vector<1x18x16x4xbf16>
    %2 = vector.shape_cast %1 : vector<1x18x16x4xbf16> to vector<288x4xbf16>
    %c0_4 = arith.constant 0 : index
    %c0_5 = arith.constant 0 : index
    %c0_6 = arith.constant 0 : index
    %3 = vector.load %arg3[%c0_4, %c0_5, %c0_6] : memref<9x4x8xbf16, #tpu.memory_space<vmem>>, vector<1x4x8xbf16>
    %4 = vector.shape_cast %3 : vector<1x4x8xbf16> to vector<4x8xbf16>
    %cst = arith.constant dense<0.000000e+00> : vector<288x8xf32>
    %5 = tpu.matmul %2, %4, %cst {dimension_numbers = #tpu.dot_dimension_numbers<[1], [0], [0], [1], [0, 0, 1, 1], [], []>} : vector<288x4xbf16>, vector<4x8xbf16>, vector<288x8xf32> -> vector<288x8xf32>
    %c0_7 = arith.constant 0 : index
    %c0_8 = arith.constant 0 : index
    %c0_9 = arith.constant 0 : index
    %c1 = arith.constant 1 : index
    %c0_10 = arith.constant 0 : index
    %6 = vector.load %arg2[%c0_7, %c0_8, %c0_9, %c1, %c0_10] : memref<1x1x20x18x4xbf16, #tpu.memory_space<vmem>>, vector<1x1x18x16x4xbf16>
    %7 = vector.shape_cast %6 : vector<1x1x18x16x4xbf16> to vector<1x18x16x4xbf16>
    %8 = vector.shape_cast %7 : vector<1x18x16x4xbf16> to vector<288x4xbf16>
    %c1_11 = arith.constant 1 : index
    %c0_12 = arith.constant 0 : index
    %c0_13 = arith.constant 0 : index
    %9 = vector.load %arg3[%c1_11, %c0_12, %c0_13] : memref<9x4x8xbf16, #tpu.memory_space<vmem>>, vector<1x4x8xbf16>
    %10 = vector.shape_cast %9 : vector<1x4x8xbf16> to vector<4x8xbf16>
    %cst_14 = arith.constant dense<0.000000e+00> : vector<288x8xf32>
    %11 = tpu.matmul %8, %10, %cst_14 {dimension_numbers = #tpu.dot_dimension_numbers<[1], [0], [0], [1], [0, 0, 1, 1], [], []>} : vector<288x4xbf16>, vector<4x8xbf16>, vector<288x8xf32> -> vector<288x8xf32>
    %12 = arith.addf %5, %11 : vector<288x8xf32>
    %c0_15 = arith.constant 0 : index
    %c0_16 = arith.constant 0 : index
    %c0_17 = arith.constant 0 : index
    %c2 = arith.constant 2 : index
    %c0_18 = arith.constant 0 : index
    %13 = vector.load %arg2[%c0_15, %c0_16, %c0_17, %c2, %c0_18] : memref<1x1x20x18x4xbf16, #tpu.memory_space<vmem>>, vector<1x1x18x16x4xbf16>
    %14 = vector.shape_cast %13 : vector<1x1x18x16x4xbf16> to vector<1x18x16x4xbf16>
    %15 = vector.shape_cast %14 : vector<1x18x16x4xbf16> to vector<288x4xbf16>
    %c2_19 = arith.constant 2 : index
    %c0_20 = arith.constant 0 : index
    %c0_21 = arith.constant 0 : index
    %16 = vector.load %arg3[%c2_19, %c0_20, %c0_21] : memref<9x4x8xbf16, #tpu.memory_space<vmem>>, vector<1x4x8xbf16>
    %17 = vector.shape_cast %16 : vector<1x4x8xbf16> to vector<4x8xbf16>
    %cst_22 = arith.constant dense<0.000000e+00> : vector<288x8xf32>
    %18 = tpu.matmul %15, %17, %cst_22 {dimension_numbers = #tpu.dot_dimension_numbers<[1], [0], [0], [1], [0, 0, 1, 1], [], []>} : vector<288x4xbf16>, vector<4x8xbf16>, vector<288x8xf32> -> vector<288x8xf32>
    %19 = arith.addf %12, %18 : vector<288x8xf32>
    %c0_23 = arith.constant 0 : index
    %c0_24 = arith.constant 0 : index
    %c1_25 = arith.constant 1 : index
    %c0_26 = arith.constant 0 : index
    %c0_27 = arith.constant 0 : index
    %20 = vector.load %arg2[%c0_23, %c0_24, %c1_25, %c0_26, %c0_27] : memref<1x1x20x18x4xbf16, #tpu.memory_space<vmem>>, vector<1x1x18x16x4xbf16>
    %21 = vector.shape_cast %20 : vector<1x1x18x16x4xbf16> to vector<1x18x16x4xbf16>
    %22 = vector.shape_cast %21 : vector<1x18x16x4xbf16> to vector<288x4xbf16>
    %c3 = arith.constant 3 : index
    %c0_28 = arith.constant 0 : index
    %c0_29 = arith.constant 0 : index
    %23 = vector.load %arg3[%c3, %c0_28, %c0_29] : memref<9x4x8xbf16, #tpu.memory_space<vmem>>, vector<1x4x8xbf16>
    %24 = vector.shape_cast %23 : vector<1x4x8xbf16> to vector<4x8xbf16>
    %cst_30 = arith.constant dense<0.000000e+00> : vector<288x8xf32>
    %25 = tpu.matmul %22, %24, %cst_30 {dimension_numbers = #tpu.dot_dimension_numbers<[1], [0], [0], [1], [0, 0, 1, 1], [], []>} : vector<288x4xbf16>, vector<4x8xbf16>, vector<288x8xf32> -> vector<288x8xf32>
    %26 = arith.addf %19, %25 : vector<288x8xf32>
    %c0_31 = arith.constant 0 : index
    %c0_32 = arith.constant 0 : index
    %c1_33 = arith.constant 1 : index
    %c1_34 = arith.constant 1 : index
    %c0_35 = arith.constant 0 : index
    %27 = vector.load %arg2[%c0_31, %c0_32, %c1_33, %c1_34, %c0_35] : memref<1x1x20x18x4xbf16, #tpu.memory_space<vmem>>, vector<1x1x18x16x4xbf16>
    %28 = vector.shape_cast %27 : vector<1x1x18x16x4xbf16> to vector<1x18x16x4xbf16>
    %29 = vector.shape_cast %28 : vector<1x18x16x4xbf16> to vector<288x4xbf16>
    %c4 = arith.constant 4 : index
    %c0_36 = arith.constant 0 : index
    %c0_37 = arith.constant 0 : index
    %30 = vector.load %arg3[%c4, %c0_36, %c0_37] : memref<9x4x8xbf16, #tpu.memory_space<vmem>>, vector<1x4x8xbf16>
    %31 = vector.shape_cast %30 : vector<1x4x8xbf16> to vector<4x8xbf16>
    %cst_38 = arith.constant dense<0.000000e+00> : vector<288x8xf32>
    %32 = tpu.matmul %29, %31, %cst_38 {dimension_numbers = #tpu.dot_dimension_numbers<[1], [0], [0], [1], [0, 0, 1, 1], [], []>} : vector<288x4xbf16>, vector<4x8xbf16>, vector<288x8xf32> -> vector<288x8xf32>
    %33 = arith.addf %26, %32 : vector<288x8xf32>
    %c0_39 = arith.constant 0 : index
    %c0_40 = arith.constant 0 : index
    %c1_41 = arith.constant 1 : index
    %c2_42 = arith.constant 2 : index
    %c0_43 = arith.constant 0 : index
    %34 = vector.load %arg2[%c0_39, %c0_40, %c1_41, %c2_42, %c0_43] : memref<1x1x20x18x4xbf16, #tpu.memory_space<vmem>>, vector<1x1x18x16x4xbf16>
    %35 = vector.shape_cast %34 : vector<1x1x18x16x4xbf16> to vector<1x18x16x4xbf16>
    %36 = vector.shape_cast %35 : vector<1x18x16x4xbf16> to vector<288x4xbf16>
    %c5 = arith.constant 5 : index
    %c0_44 = arith.constant 0 : index
    %c0_45 = arith.constant 0 : index
    %37 = vector.load %arg3[%c5, %c0_44, %c0_45] : memref<9x4x8xbf16, #tpu.memory_space<vmem>>, vector<1x4x8xbf16>
    %38 = vector.shape_cast %37 : vector<1x4x8xbf16> to vector<4x8xbf16>
    %cst_46 = arith.constant dense<0.000000e+00> : vector<288x8xf32>
    %39 = tpu.matmul %36, %38, %cst_46 {dimension_numbers = #tpu.dot_dimension_numbers<[1], [0], [0], [1], [0, 0, 1, 1], [], []>} : vector<288x4xbf16>, vector<4x8xbf16>, vector<288x8xf32> -> vector<288x8xf32>
    %40 = arith.addf %33, %39 : vector<288x8xf32>
    %c0_47 = arith.constant 0 : index
    %c0_48 = arith.constant 0 : index
    %c2_49 = arith.constant 2 : index
    %c0_50 = arith.constant 0 : index
    %c0_51 = arith.constant 0 : index
    %41 = vector.load %arg2[%c0_47, %c0_48, %c2_49, %c0_50, %c0_51] : memref<1x1x20x18x4xbf16, #tpu.memory_space<vmem>>, vector<1x1x18x16x4xbf16>
    %42 = vector.shape_cast %41 : vector<1x1x18x16x4xbf16> to vector<1x18x16x4xbf16>
    %43 = vector.shape_cast %42 : vector<1x18x16x4xbf16> to vector<288x4xbf16>
    %c6 = arith.constant 6 : index
    %c0_52 = arith.constant 0 : index
    %c0_53 = arith.constant 0 : index
    %44 = vector.load %arg3[%c6, %c0_52, %c0_53] : memref<9x4x8xbf16, #tpu.memory_space<vmem>>, vector<1x4x8xbf16>
    %45 = vector.shape_cast %44 : vector<1x4x8xbf16> to vector<4x8xbf16>
    %cst_54 = arith.constant dense<0.000000e+00> : vector<288x8xf32>
    %46 = tpu.matmul %43, %45, %cst_54 {dimension_numbers = #tpu.dot_dimension_numbers<[1], [0], [0], [1], [0, 0, 1, 1], [], []>} : vector<288x4xbf16>, vector<4x8xbf16>, vector<288x8xf32> -> vector<288x8xf32>
    %47 = arith.addf %40, %46 : vector<288x8xf32>
    %c0_55 = arith.constant 0 : index
    %c0_56 = arith.constant 0 : index
    %c2_57 = arith.constant 2 : index
    %c1_58 = arith.constant 1 : index
    %c0_59 = arith.constant 0 : index
    %48 = vector.load %arg2[%c0_55, %c0_56, %c2_57, %c1_58, %c0_59] : memref<1x1x20x18x4xbf16, #tpu.memory_space<vmem>>, vector<1x1x18x16x4xbf16>
    %49 = vector.shape_cast %48 : vector<1x1x18x16x4xbf16> to vector<1x18x16x4xbf16>
    %50 = vector.shape_cast %49 : vector<1x18x16x4xbf16> to vector<288x4xbf16>
    %c7 = arith.constant 7 : index
    %c0_60 = arith.constant 0 : index
    %c0_61 = arith.constant 0 : index
    %51 = vector.load %arg3[%c7, %c0_60, %c0_61] : memref<9x4x8xbf16, #tpu.memory_space<vmem>>, vector<1x4x8xbf16>
    %52 = vector.shape_cast %51 : vector<1x4x8xbf16> to vector<4x8xbf16>
    %cst_62 = arith.constant dense<0.000000e+00> : vector<288x8xf32>
    %53 = tpu.matmul %50, %52, %cst_62 {dimension_numbers = #tpu.dot_dimension_numbers<[1], [0], [0], [1], [0, 0, 1, 1], [], []>} : vector<288x4xbf16>, vector<4x8xbf16>, vector<288x8xf32> -> vector<288x8xf32>
    %54 = arith.addf %47, %53 : vector<288x8xf32>
    %c0_63 = arith.constant 0 : index
    %c0_64 = arith.constant 0 : index
    %c2_65 = arith.constant 2 : index
    %c2_66 = arith.constant 2 : index
    %c0_67 = arith.constant 0 : index
    %55 = vector.load %arg2[%c0_63, %c0_64, %c2_65, %c2_66, %c0_67] : memref<1x1x20x18x4xbf16, #tpu.memory_space<vmem>>, vector<1x1x18x16x4xbf16>
    %56 = vector.shape_cast %55 : vector<1x1x18x16x4xbf16> to vector<1x18x16x4xbf16>
    %57 = vector.shape_cast %56 : vector<1x18x16x4xbf16> to vector<288x4xbf16>
    %c8 = arith.constant 8 : index
    %c0_68 = arith.constant 0 : index
    %c0_69 = arith.constant 0 : index
    %58 = vector.load %arg3[%c8, %c0_68, %c0_69] : memref<9x4x8xbf16, #tpu.memory_space<vmem>>, vector<1x4x8xbf16>
    %59 = vector.shape_cast %58 : vector<1x4x8xbf16> to vector<4x8xbf16>
    %cst_70 = arith.constant dense<0.000000e+00> : vector<288x8xf32>
    %60 = tpu.matmul %57, %59, %cst_70 {dimension_numbers = #tpu.dot_dimension_numbers<[1], [0], [0], [1], [0, 0, 1, 1], [], []>} : vector<288x4xbf16>, vector<4x8xbf16>, vector<288x8xf32> -> vector<288x8xf32>
    %61 = arith.addf %54, %60 : vector<288x8xf32>
    %cst_71 = arith.constant 0.000000e+00 : f32
    %62 = vector.broadcast %cst_71 : f32 to vector<288x8xf32>
    %63 = arith.maximumf %61, %62 : vector<288x8xf32>
    %64 = arith.truncf %63 : vector<288x8xf32> to vector<288x8xbf16>
    %65 = vector.shape_cast %64 : vector<288x8xbf16> to vector<1x18x16x8xbf16>
    %cst_72 = arith.constant 0.000000e+00 : bf16
    %66 = vector.broadcast %cst_72 : bf16 to vector<1x18x1x8xbf16>
    %c0_73 = arith.constant 0 : index
    %c0_74 = arith.constant 0 : index
    %c0_75 = arith.constant 0 : index
    %c0_76 = arith.constant 0 : index
    %67 = vector.load %arg6[%c0_73, %c0_74, %c0_75, %c0_76] : memref<1x18x18x8xbf16, #tpu.memory_space<vmem>>, vector<1x18x1x8xbf16>
    tpu.vector_store %arg6[%c0_73, %c0_74, %c0_75, %c0_76], %66 {strides = array<i32>} : memref<1x18x18x8xbf16, #tpu.memory_space<vmem>>, vector<1x18x1x8xbf16>,
    %c0_77 = arith.constant 0 : index
    %c0_78 = arith.constant 0 : index
    %c17 = arith.constant 17 : index
    %c0_79 = arith.constant 0 : index
    %68 = vector.load %arg6[%c0_77, %c0_78, %c17, %c0_79] : memref<1x18x18x8xbf16, #tpu.memory_space<vmem>>, vector<1x18x1x8xbf16>
    tpu.vector_store %arg6[%c0_77, %c0_78, %c17, %c0_79], %66 {strides = array<i32>} : memref<1x18x18x8xbf16, #tpu.memory_space<vmem>>, vector<1x18x1x8xbf16>,
    %c0_80 = arith.constant 0 : index
    %c0_81 = arith.constant 0 : index
    %c1_82 = arith.constant 1 : index
    %c0_83 = arith.constant 0 : index
    %69 = vector.load %arg6[%c0_80, %c0_81, %c1_82, %c0_83] : memref<1x18x18x8xbf16, #tpu.memory_space<vmem>>, vector<1x18x16x8xbf16>
    tpu.vector_store %arg6[%c0_80, %c0_81, %c1_82, %c0_83], %65 {strides = array<i32>} : memref<1x18x18x8xbf16, #tpu.memory_space<vmem>>, vector<1x18x16x8xbf16>,
    %cst_84 = arith.constant 0.000000e+00 : bf16
    %70 = vector.broadcast %cst_84 : bf16 to vector<1x1x18x8xbf16>
    %c0_i32 = arith.constant 0 : i32
    %71 = arith.cmpi eq, %arg1, %c0_i32 : i32
    %72 = arith.extui %71 : i1 to i32
    %c0_i32_85 = arith.constant 0 : i32
    %73 = arith.cmpi ne, %72, %c0_i32_85 : i32
    scf.if %73 {
      %c0_164 = arith.constant 0 : index
      %c0_165 = arith.constant 0 : index
      %c0_166 = arith.constant 0 : index
      %c0_167 = arith.constant 0 : index
      %135 = vector.load %arg6[%c0_164, %c0_165, %c0_166, %c0_167] : memref<1x18x18x8xbf16, #tpu.memory_space<vmem>>, vector<1x1x18x8xbf16>
      tpu.vector_store %arg6[%c0_164, %c0_165, %c0_166, %c0_167], %70 {strides = array<i32>} : memref<1x18x18x8xbf16, #tpu.memory_space<vmem>>, vector<1x1x18x8xbf16>,
    } else {
    }
    %c0_i32_86 = arith.constant 0 : i32
    %74 = arith.cmpi eq, %arg1, %c0_i32_86 : i32
    %75 = arith.extui %74 : i1 to i32
    %c0_i32_87 = arith.constant 0 : i32
    %76 = arith.cmpi ne, %75, %c0_i32_87 : i32
    scf.if %76 {
      %c0_164 = arith.constant 0 : index
      %c17_165 = arith.constant 17 : index
      %c0_166 = arith.constant 0 : index
      %c0_167 = arith.constant 0 : index
      %135 = vector.load %arg6[%c0_164, %c17_165, %c0_166, %c0_167] : memref<1x18x18x8xbf16, #tpu.memory_space<vmem>>, vector<1x1x18x8xbf16>
      tpu.vector_store %arg6[%c0_164, %c17_165, %c0_166, %c0_167], %70 {strides = array<i32>} : memref<1x18x18x8xbf16, #tpu.memory_space<vmem>>, vector<1x1x18x8xbf16>,
    } else {
    }
    %c0_88 = arith.constant 0 : index
    %c0_89 = arith.constant 0 : index
    %c0_90 = arith.constant 0 : index
    %c0_91 = arith.constant 0 : index
    %77 = vector.load %arg6[%c0_88, %c0_89, %c0_90, %c0_91] : memref<1x18x18x8xbf16, #tpu.memory_space<vmem>>, vector<1x16x16x8xbf16>
    %78 = vector.shape_cast %77 : vector<1x16x16x8xbf16> to vector<256x8xbf16>
    %c0_92 = arith.constant 0 : index
    %c0_93 = arith.constant 0 : index
    %c0_94 = arith.constant 0 : index
    %79 = vector.load %arg4[%c0_92, %c0_93, %c0_94] : memref<9x8x8xbf16, #tpu.memory_space<vmem>>, vector<1x8x8xbf16>
    %80 = vector.shape_cast %79 : vector<1x8x8xbf16> to vector<8x8xbf16>
    %cst_95 = arith.constant dense<0.000000e+00> : vector<256x8xf32>
    %81 = tpu.matmul %78, %80, %cst_95 {dimension_numbers = #tpu.dot_dimension_numbers<[1], [0], [0], [1], [0, 0, 1, 1], [], []>} : vector<256x8xbf16>, vector<8x8xbf16>, vector<256x8xf32> -> vector<256x8xf32>
    %c0_96 = arith.constant 0 : index
    %c0_97 = arith.constant 0 : index
    %c1_98 = arith.constant 1 : index
    %c0_99 = arith.constant 0 : index
    %82 = vector.load %arg6[%c0_96, %c0_97, %c1_98, %c0_99] : memref<1x18x18x8xbf16, #tpu.memory_space<vmem>>, vector<1x16x16x8xbf16>
    %83 = vector.shape_cast %82 : vector<1x16x16x8xbf16> to vector<256x8xbf16>
    %c1_100 = arith.constant 1 : index
    %c0_101 = arith.constant 0 : index
    %c0_102 = arith.constant 0 : index
    %84 = vector.load %arg4[%c1_100, %c0_101, %c0_102] : memref<9x8x8xbf16, #tpu.memory_space<vmem>>, vector<1x8x8xbf16>
    %85 = vector.shape_cast %84 : vector<1x8x8xbf16> to vector<8x8xbf16>
    %cst_103 = arith.constant dense<0.000000e+00> : vector<256x8xf32>
    %86 = tpu.matmul %83, %85, %cst_103 {dimension_numbers = #tpu.dot_dimension_numbers<[1], [0], [0], [1], [0, 0, 1, 1], [], []>} : vector<256x8xbf16>, vector<8x8xbf16>, vector<256x8xf32> -> vector<256x8xf32>
    %87 = arith.addf %81, %86 : vector<256x8xf32>
    %c0_104 = arith.constant 0 : index
    %c0_105 = arith.constant 0 : index
    %c2_106 = arith.constant 2 : index
    %c0_107 = arith.constant 0 : index
    %88 = vector.load %arg6[%c0_104, %c0_105, %c2_106, %c0_107] : memref<1x18x18x8xbf16, #tpu.memory_space<vmem>>, vector<1x16x16x8xbf16>
    %89 = vector.shape_cast %88 : vector<1x16x16x8xbf16> to vector<256x8xbf16>
    %c2_108 = arith.constant 2 : index
    %c0_109 = arith.constant 0 : index
    %c0_110 = arith.constant 0 : index
    %90 = vector.load %arg4[%c2_108, %c0_109, %c0_110] : memref<9x8x8xbf16, #tpu.memory_space<vmem>>, vector<1x8x8xbf16>
    %91 = vector.shape_cast %90 : vector<1x8x8xbf16> to vector<8x8xbf16>
    %cst_111 = arith.constant dense<0.000000e+00> : vector<256x8xf32>
    %92 = tpu.matmul %89, %91, %cst_111 {dimension_numbers = #tpu.dot_dimension_numbers<[1], [0], [0], [1], [0, 0, 1, 1], [], []>} : vector<256x8xbf16>, vector<8x8xbf16>, vector<256x8xf32> -> vector<256x8xf32>
    %93 = arith.addf %87, %92 : vector<256x8xf32>
    %c0_112 = arith.constant 0 : index
    %c1_113 = arith.constant 1 : index
    %c0_114 = arith.constant 0 : index
    %c0_115 = arith.constant 0 : index
    %94 = vector.load %arg6[%c0_112, %c1_113, %c0_114, %c0_115] : memref<1x18x18x8xbf16, #tpu.memory_space<vmem>>, vector<1x16x16x8xbf16>
    %95 = vector.shape_cast %94 : vector<1x16x16x8xbf16> to vector<256x8xbf16>
    %c3_116 = arith.constant 3 : index
    %c0_117 = arith.constant 0 : index
    %c0_118 = arith.constant 0 : index
    %96 = vector.load %arg4[%c3_116, %c0_117, %c0_118] : memref<9x8x8xbf16, #tpu.memory_space<vmem>>, vector<1x8x8xbf16>
    %97 = vector.shape_cast %96 : vector<1x8x8xbf16> to vector<8x8xbf16>
    %cst_119 = arith.constant dense<0.000000e+00> : vector<256x8xf32>
    %98 = tpu.matmul %95, %97, %cst_119 {dimension_numbers = #tpu.dot_dimension_numbers<[1], [0], [0], [1], [0, 0, 1, 1], [], []>} : vector<256x8xbf16>, vector<8x8xbf16>, vector<256x8xf32> -> vector<256x8xf32>
    %99 = arith.addf %93, %98 : vector<256x8xf32>
    %c0_120 = arith.constant 0 : index
    %c1_121 = arith.constant 1 : index
    %c1_122 = arith.constant 1 : index
    %c0_123 = arith.constant 0 : index
    %100 = vector.load %arg6[%c0_120, %c1_121, %c1_122, %c0_123] : memref<1x18x18x8xbf16, #tpu.memory_space<vmem>>, vector<1x16x16x8xbf16>
    %101 = vector.shape_cast %100 : vector<1x16x16x8xbf16> to vector<256x8xbf16>
    %c4_124 = arith.constant 4 : index
    %c0_125 = arith.constant 0 : index
    %c0_126 = arith.constant 0 : index
    %102 = vector.load %arg4[%c4_124, %c0_125, %c0_126] : memref<9x8x8xbf16, #tpu.memory_space<vmem>>, vector<1x8x8xbf16>
    %103 = vector.shape_cast %102 : vector<1x8x8xbf16> to vector<8x8xbf16>
    %cst_127 = arith.constant dense<0.000000e+00> : vector<256x8xf32>
    %104 = tpu.matmul %101, %103, %cst_127 {dimension_numbers = #tpu.dot_dimension_numbers<[1], [0], [0], [1], [0, 0, 1, 1], [], []>} : vector<256x8xbf16>, vector<8x8xbf16>, vector<256x8xf32> -> vector<256x8xf32>
    %105 = arith.addf %99, %104 : vector<256x8xf32>
    %c0_128 = arith.constant 0 : index
    %c1_129 = arith.constant 1 : index
    %c2_130 = arith.constant 2 : index
    %c0_131 = arith.constant 0 : index
    %106 = vector.load %arg6[%c0_128, %c1_129, %c2_130, %c0_131] : memref<1x18x18x8xbf16, #tpu.memory_space<vmem>>, vector<1x16x16x8xbf16>
    %107 = vector.shape_cast %106 : vector<1x16x16x8xbf16> to vector<256x8xbf16>
    %c5_132 = arith.constant 5 : index
    %c0_133 = arith.constant 0 : index
    %c0_134 = arith.constant 0 : index
    %108 = vector.load %arg4[%c5_132, %c0_133, %c0_134] : memref<9x8x8xbf16, #tpu.memory_space<vmem>>, vector<1x8x8xbf16>
    %109 = vector.shape_cast %108 : vector<1x8x8xbf16> to vector<8x8xbf16>
    %cst_135 = arith.constant dense<0.000000e+00> : vector<256x8xf32>
    %110 = tpu.matmul %107, %109, %cst_135 {dimension_numbers = #tpu.dot_dimension_numbers<[1], [0], [0], [1], [0, 0, 1, 1], [], []>} : vector<256x8xbf16>, vector<8x8xbf16>, vector<256x8xf32> -> vector<256x8xf32>
    %111 = arith.addf %105, %110 : vector<256x8xf32>
    %c0_136 = arith.constant 0 : index
    %c2_137 = arith.constant 2 : index
    %c0_138 = arith.constant 0 : index
    %c0_139 = arith.constant 0 : index
    %112 = vector.load %arg6[%c0_136, %c2_137, %c0_138, %c0_139] : memref<1x18x18x8xbf16, #tpu.memory_space<vmem>>, vector<1x16x16x8xbf16>
    %113 = vector.shape_cast %112 : vector<1x16x16x8xbf16> to vector<256x8xbf16>
    %c6_140 = arith.constant 6 : index
    %c0_141 = arith.constant 0 : index
    %c0_142 = arith.constant 0 : index
    %114 = vector.load %arg4[%c6_140, %c0_141, %c0_142] : memref<9x8x8xbf16, #tpu.memory_space<vmem>>, vector<1x8x8xbf16>
    %115 = vector.shape_cast %114 : vector<1x8x8xbf16> to vector<8x8xbf16>
    %cst_143 = arith.constant dense<0.000000e+00> : vector<256x8xf32>
    %116 = tpu.matmul %113, %115, %cst_143 {dimension_numbers = #tpu.dot_dimension_numbers<[1], [0], [0], [1], [0, 0, 1, 1], [], []>} : vector<256x8xbf16>, vector<8x8xbf16>, vector<256x8xf32> -> vector<256x8xf32>
    %117 = arith.addf %111, %116 : vector<256x8xf32>
    %c0_144 = arith.constant 0 : index
    %c2_145 = arith.constant 2 : index
    %c1_146 = arith.constant 1 : index
    %c0_147 = arith.constant 0 : index
    %118 = vector.load %arg6[%c0_144, %c2_145, %c1_146, %c0_147] : memref<1x18x18x8xbf16, #tpu.memory_space<vmem>>, vector<1x16x16x8xbf16>
    %119 = vector.shape_cast %118 : vector<1x16x16x8xbf16> to vector<256x8xbf16>
    %c7_148 = arith.constant 7 : index
    %c0_149 = arith.constant 0 : index
    %c0_150 = arith.constant 0 : index
    %120 = vector.load %arg4[%c7_148, %c0_149, %c0_150] : memref<9x8x8xbf16, #tpu.memory_space<vmem>>, vector<1x8x8xbf16>
    %121 = vector.shape_cast %120 : vector<1x8x8xbf16> to vector<8x8xbf16>
    %cst_151 = arith.constant dense<0.000000e+00> : vector<256x8xf32>
    %122 = tpu.matmul %119, %121, %cst_151 {dimension_numbers = #tpu.dot_dimension_numbers<[1], [0], [0], [1], [0, 0, 1, 1], [], []>} : vector<256x8xbf16>, vector<8x8xbf16>, vector<256x8xf32> -> vector<256x8xf32>
    %123 = arith.addf %117, %122 : vector<256x8xf32>
    %c0_152 = arith.constant 0 : index
    %c2_153 = arith.constant 2 : index
    %c2_154 = arith.constant 2 : index
    %c0_155 = arith.constant 0 : index
    %124 = vector.load %arg6[%c0_152, %c2_153, %c2_154, %c0_155] : memref<1x18x18x8xbf16, #tpu.memory_space<vmem>>, vector<1x16x16x8xbf16>
    %125 = vector.shape_cast %124 : vector<1x16x16x8xbf16> to vector<256x8xbf16>
    %c8_156 = arith.constant 8 : index
    %c0_157 = arith.constant 0 : index
    %c0_158 = arith.constant 0 : index
    %126 = vector.load %arg4[%c8_156, %c0_157, %c0_158] : memref<9x8x8xbf16, #tpu.memory_space<vmem>>, vector<1x8x8xbf16>
    %127 = vector.shape_cast %126 : vector<1x8x8xbf16> to vector<8x8xbf16>
    %cst_159 = arith.constant dense<0.000000e+00> : vector<256x8xf32>
    %128 = tpu.matmul %125, %127, %cst_159 {dimension_numbers = #tpu.dot_dimension_numbers<[1], [0], [0], [1], [0, 0, 1, 1], [], []>} : vector<256x8xbf16>, vector<8x8xbf16>, vector<256x8xf32> -> vector<256x8xf32>
    %129 = arith.addf %123, %128 : vector<256x8xf32>
    %cst_160 = arith.constant 0.000000e+00 : f32
    %130 = vector.broadcast %cst_160 : f32 to vector<256x8xf32>
    %131 = arith.maximumf %129, %130 : vector<256x8xf32>
    %132 = tpu.transpose %131, [1, 0] : vector<256x8xf32> -> vector<8x256xf32>
    %133 = vector.shape_cast %132 : vector<8x256xf32> to vector<1x8x256xf32>
    %c0_161 = arith.constant 0 : index
    %c0_162 = arith.constant 0 : index
    %c0_163 = arith.constant 0 : index
    %134 = vector.load %arg5[%c0_161, %c0_162, %c0_163] : memref<1x8x256xf32, #tpu.memory_space<vmem>>, vector<1x8x256xf32>
    tpu.vector_store %arg5[%c0_161, %c0_162, %c0_163], %133 {strides = array<i32>} : memref<1x8x256xf32, #tpu.memory_space<vmem>>, vector<1x8x256xf32>,
    return
  }
  func.func @transform_0(%arg0: i32, %arg1: i32) -> (i32, i32, i32, i32, i32) {
    %c0_i32 = arith.constant 0 : i32
    %c0_i32_0 = arith.constant 0 : i32
    %c0_i32_1 = arith.constant 0 : i32
    %c0_i32_2 = arith.constant 0 : i32
    return %arg0, %arg1, %c0_i32, %c0_i32_0, %c0_i32_1 : i32, i32, i32, i32, i32
  }
  func.func @transform_1(%arg0: i32, %arg1: i32) -> (i32, i32, i32) {
    %c0_i32 = arith.constant 0 : i32
    %c0_i32_0 = arith.constant 0 : i32
    %c0_i32_1 = arith.constant 0 : i32
    %c0_i32_2 = arith.constant 0 : i32
    return %c0_i32, %c0_i32_0, %c0_i32_1 : i32, i32, i32
  }
  func.func @transform_2(%arg0: i32, %arg1: i32) -> (i32, i32, i32) {
    %c0_i32 = arith.constant 0 : i32
    %c0_i32_0 = arith.constant 0 : i32
    %c0_i32_1 = arith.constant 0 : i32
    %c0_i32_2 = arith.constant 0 : i32
    return %c0_i32, %c0_i32_0, %c0_i32_1 : i32, i32, i32
  }
  func.func @transform_3(%arg0: i32, %arg1: i32) -> (i32, i32, i32) {
    %c0_i32 = arith.constant 0 : i32
    %c0_i32_0 = arith.constant 0 : i32
    return %arg0, %c0_i32, %arg1 : i32, i32, i32
  }
}

</mosaic_0001>

<llo_original>
// kernel: tpu_custom_call.1
$region0: #{tpu_custom_call.1}
  #allocation0 [shape = 'u32[]', space=smem, size = 0x4, offset = 0x4, fixed_abs, tag = 'smem constant byte address 0x4 - core index']
  #allocation1 [shape = 'u32[144,128]{1,0:T(1,128)}', space=vmem, size = 0x12000, scoped, tag = 'internal scratch']
  #allocation2 [shape = 'bf16[1,18,18,8]{3,2,1,0:T(8,128)(2,1)}', space=vmem, size = 0x1b000, scoped, tag = 'scratch operand']
  %s0 = inlined_call_operand.vmem [shape: bf16[2,1,20,18,4], index: 0, kind: input, shape index: {}]
  %s1 = inlined_call_operand.vmem [shape: bf16[9,4,8], index: 1, kind: input, shape index: {}]
  %s2 = inlined_call_operand.vmem [shape: bf16[9,8,8], index: 2, kind: input, shape index: {}]
  %s3 = inlined_call_operand.hbm [shape: f32[2,8,256], index: 3, kind: output, shape index: {}]
  %s4 = sld [smem:[#allocation0]]
  $region49: #{tpu_custom_call.1} parent=0
    _
  %s6 = ssub.s32 1, %s4
  %s7 = scalar_select 0, %s6, %s4
  $region1: #{tpu_custom_call.1} parent=0
    #allocation3 [shape = 'u8[16384]{0}', space=vmem, size = 0x4000, scoped, tag = 'output window, operand 0']
    #allocation4 [shape = 's32[2]{0}', space=sflag, size = 0x8, scoped, tag = 'scoped memory for tpu_custom_call.1']
    %8 = vsyncpa [#allocation4], 0
    %s9 = scalar_lea.sflag [#allocation4], 1
    %10 = vsyncpa %s9, 0
    loop: start=0, step=1, limit=4
    $region2: #{tpu_custom_call.1} parent=1 // loop_pre_header
      _
    $region3: #{tpu_custom_call.1} parent=1 // loop_header
      %s12 = sphi 0, %s16
      %p13 = scmp.ge.s32.totalorder %s12, 4
      %s19 = sphi 0, %s31
      %s20 = sphi 0, %s27
      %s21 = sphi 0, %s19
      %s22 = sphi 0, %s20
      %s23 = sphi 0, %s21
      %s24 = sphi 0, %s22
      %s36 = sphi 0, %s38
      %s39 = sphi 0, %s36
      %s40 = sphi 0, %s39
      %s56 = sphi 0, %s40
      %s60 = sphi 0, %s60
      %s62 = sphi 0, %s60
      %s63 = sphi 0, %s62
      %s77 = sphi 0, %s63
      %s81 = sphi 0, %s81
      %s83 = sphi 0, %s81
      %s84 = sphi 0, %s83
      %s98 = sphi 0, %s84
      %s106 = sphi 0, %s108
      %s109 = sphi 0, %s106
      %s110 = sphi 0, %s109
      %s126 = sphi 0, %s110
    $region4: #{tpu_custom_call.1} parent=1 // loop_header_branch
      %15 = sbr.rel (%p13) target = $region8
    $region5: #{tpu_custom_call.1} parent=1 // loop_body
      %s17 = ssub.s32 %s12, 1
      %s18 = ssub.s32 %s12, 2
      %s25 = sadd.s32 1, %s20
      %p26 = scmp.ge.s32.totalorder %s25, 1
      %s27 = scalar_select %p26, 0, %s25
      %s28 = sadd.s32 1, %s19
      %s29 = scalar_select %p26, %s28, %s19
      %p30 = scmp.ge.s32.totalorder %s29, 2
      %s31 = scalar_select %p30, 0, %s29
      %s32 = ssub.s32 %s19, %s31
      %s33 = ssub.s32 %s20, %s27
      %s34 = sor.u32 %s32, %s33
      %p35 = scmp.eq.s32.totalorder %s34, 0
      %s37 = sadd.s32 %s36, 1
      %s38 = scalar_select %p35, %s36, %s37
      %p41 = pneg %p35
      %p42 = scmp.eq.s32.totalorder %s12, 1
      %p43 = por %p41, %p42
      %p44 = scmp.ne.s32.totalorder %s36, %s39
      %p45 = scmp.eq.s32.totalorder %s12, 0
      %p46 = por %p44, %p45
      %p47 = scmp.ne.s32.totalorder %s36, %s39
      %p48 = scmp.eq.s32.totalorder %s17, 1
      %p49 = por %p47, %p48
      %p50 = scmp.ne.s32.totalorder %s39, %s40
      %p51 = scmp.eq.s32.totalorder %s17, 0
      %p52 = por %p50, %p51
      %p53 = scmp.ne.s32.totalorder %s39, %s40
      %p54 = scmp.eq.s32.totalorder %s18, 1
      %p55 = por %p53, %p54
      %p57 = scmp.ne.s32.totalorder %s40, %s56
      %p58 = scmp.eq.s32.totalorder %s18, 0
      %p59 = por %p57, %p58
      %s61 = sadd.s32 %s60, 1
      %p64 = scmp.eq.s32.totalorder %s12, 1
      %p65 = scmp.ne.s32.totalorder %s60, %s62
      %p66 = scmp.eq.s32.totalorder %s12, 0
      %p67 = por %p65, %p66
      %p68 = scmp.ne.s32.totalorder %s60, %s62
      %p69 = scmp.eq.s32.totalorder %s17, 1
      %p70 = por %p68, %p69
      %p71 = scmp.ne.s32.totalorder %s62, %s63
      %p72 = scmp.eq.s32.totalorder %s17, 0
      %p73 = por %p71, %p72
      %p74 = scmp.ne.s32.totalorder %s62, %s63
      %p75 = scmp.eq.s32.totalorder %s18, 1
      %p76 = por %p74, %p75
      %p78 = scmp.ne.s32.totalorder %s63, %s77
      %p79 = scmp.eq.s32.totalorder %s18, 0
      %p80 = por %p78, %p79
      %s82 = sadd.s32 %s81, 1
      %p85 = scmp.eq.s32.totalorder %s12, 1
      %p86 = scmp.ne.s32.totalorder %s81, %s83
      %p87 = scmp.eq.s32.totalorder %s12, 0
      %p88 = por %p86, %p87
      %p89 = scmp.ne.s32.totalorder %s81, %s83
      %p90 = scmp.eq.s32.totalorder %s17, 1
      %p91 = por %p89, %p90
      %p92 = scmp.ne.s32.totalorder %s83, %s84
      %p93 = scmp.eq.s32.totalorder %s17, 0
      %p94 = por %p92, %p93
      %p95 = scmp.ne.s32.totalorder %s83, %s84
      %p96 = scmp.eq.s32.totalorder %s18, 1
      %p97 = por %p95, %p96
      %p99 = scmp.ne.s32.totalorder %s84, %s98
      %p100 = scmp.eq.s32.totalorder %s18, 0
      %p101 = por %p99, %p100
      %s102 = ssub.s32 %s19, %s31
      %s103 = ssub.s32 %s20, %s27
      %s104 = sor.u32 %s102, %s103
      %p105 = scmp.eq.s32.totalorder %s104, 0
      %s107 = sadd.s32 %s106, 1
      %s108 = scalar_select %p105, %s106, %s107
      %p111 = pneg %p105
      %p112 = scmp.eq.s32.totalorder %s12, 1
      %p113 = por %p111, %p112
      %p114 = scmp.ne.s32.totalorder %s106, %s109
      %p115 = scmp.eq.s32.totalorder %s12, 0
      %p116 = por %p114, %p115
      %p117 = scmp.ne.s32.totalorder %s106, %s109
      %p118 = scmp.eq.s32.totalorder %s17, 1
      %p119 = por %p117, %p118
      %p120 = scmp.ne.s32.totalorder %s109, %s110
      %p121 = scmp.eq.s32.totalorder %s17, 0
      %p122 = por %p120, %p121
      %p123 = scmp.ne.s32.totalorder %s109, %s110
      %p124 = scmp.eq.s32.totalorder %s18, 1
      %p125 = por %p123, %p124
      %p127 = scmp.ne.s32.totalorder %s110, %s126
      %p128 = scmp.eq.s32.totalorder %s18, 0
      %p129 = por %p127, %p128
      %p130 = scmp.le.s32.totalorder 1, %s12
      %p131 = scmp.lt.s32.totalorder %s12, 3
      %p132 = pnand %p130, %p131
      %p133 = pneg %p132
      // Predicated region
      $region9: #{tpu_custom_call.1} parent=5 // pred_check
        _
      $region10: #{tpu_custom_call.1} parent=5 // pred_check_branch
        %135 = sbr.rel (%p132) target = $region12
      $region11: #{tpu_custom_call.1} parent=5 // pred_region
        %s136 = ssub.s32 %s12, 1
        // Predicated region
        $region13: #{tpu_custom_call.1} parent=11 // pred_check
          %p137 = pneg %p73
        $region14: #{tpu_custom_call.1} parent=11 // pred_check_branch
          %139 = sbr.rel (%p137) target = $region16
        $region15: #{tpu_custom_call.1} parent=11 // pred_region
          _
        $region16: #{tpu_custom_call.1} parent=11 // pred_fallthru
          _
        // Predicated region
        $region17: #{tpu_custom_call.1} parent=11 // pred_check
          %p140 = pneg %p94
        $region18: #{tpu_custom_call.1} parent=11 // pred_check_branch
          %142 = sbr.rel (%p140) target = $region20
        $region19: #{tpu_custom_call.1} parent=11 // pred_region
          _
        $region20: #{tpu_custom_call.1} parent=11 // pred_fallthru
          _
      $region12: #{tpu_custom_call.1} parent=5 // pred_fallthru
        _
      %p143 = scmp.lt.s32.totalorder %s12, 2
      // Predicated region
      $region21: #{tpu_custom_call.1} parent=5 // pred_check
        %p144 = pneg %p143
      $region22: #{tpu_custom_call.1} parent=5 // pred_check_branch
        %146 = sbr.rel (%p144) target = $region24
      $region23: #{tpu_custom_call.1} parent=5 // pred_region
        // Predicated region
        $region25: #{tpu_custom_call.1} parent=23 // pred_check
          %p147 = pneg %p46
        $region26: #{tpu_custom_call.1} parent=23 // pred_check_branch
          %149 = sbr.rel (%p147) target = $region28
        $region27: #{tpu_custom_call.1} parent=23 // pred_region
          %p150 = scmp.lt.s32.totalorder %s19, 1
          %s151 = scalar_select %p150, %s19, 1
          %p152 = scmp.lt.s32.totalorder %s20, 0
          %s153 = scalar_select %p152, %s20, 0
          %s154 = smul.addr %s153, 60
          %s155 = smul.addr %s151, 60
          %s156 = sadd.s32 %s154, %s155
          %s157 = smul.addr %s156, 4
          %s158 = scalar_lea.vmem %s0, %s157
        $region28: #{tpu_custom_call.1} parent=23 // pred_fallthru
          _
      $region24: #{tpu_custom_call.1} parent=5 // pred_fallthru
        _
      %p159 = scmp.le.s32.totalorder 1, %s12
      %p160 = scmp.lt.s32.totalorder %s12, 3
      %p161 = pnand %p159, %p160
      %p162 = pneg %p161
      // Predicated region
      $region29: #{tpu_custom_call.1} parent=5 // pred_check
        _
      $region30: #{tpu_custom_call.1} parent=5 // pred_check_branch
        %164 = sbr.rel (%p161) target = $region32
      $region31: #{tpu_custom_call.1} parent=5 // pred_region
        %s165 = ssub.s32 %s12, 1
        %p166 = scmp.lt.s32.totalorder %s21, 1
        %s167 = scalar_select %p166, %s21, 1
        %p168 = scmp.lt.s32.totalorder %s22, 0
        %s169 = scalar_select %p168, %s22, 0
        %s170 = smul.addr %s169, 60
        %s171 = smul.addr %s167, 60
        %s172 = sadd.s32 %s170, %s171
        %s173 = smul.addr %s172, 4
        %s174 = scalar_lea.vmem %s0, %s173
        %p175 = pneg %p52
        %p176 = pneg %p49
        %p177 = pneg %p73
        %p178 = pneg %p70
        %p179 = pneg %p94
        %p180 = pneg %p91
        %p181 = pneg %p122
        %p182 = pneg %p119
        %s183 = sand.u32 %s109, 1
        %s184 = scalar_lea.sflag [#allocation4], %s183
        %s185 = sand.u32 %s109, 1
        %s186 = smul.addr %s185, 16
        %s187 = scalar_lea.vmem [#allocation3], %s186
        %p188 = scmp.lt.s32.totalorder %s21, 1
        %s189 = scalar_select %p188, %s21, 1
        %p190 = scmp.lt.s32.totalorder %s22, 0
        %s191 = scalar_select %p190, %s22, 0
        %s192 = smul.addr %s191, 60
        %s193 = smul.addr %s189, 60
        %s194 = sadd.s32 %s192, %s193
        %s195 = smul.addr %s194, 4
        %s196 = scalar_lea.vmem %s0, %s195
        %s197 = smul.u32 2, %s22
        %v199 = vld [vmem:[%s196] sm:$0xf]
        %v200 = vld [vmem:[%s196 + $0x4] sm:$0xf]
        %v201 = vld [vmem:[%s196 + $0xc] sm:$0xf]
        %v202 = vld [vmem:[%s196 + $0x10] sm:$0xf]
        %v203 = vld [vmem:[%s196 + $0x18] sm:$0xf]
        %v204 = vld [vmem:[%s196 + $0x1c] sm:$0xf]
        %v205 = vld [vmem:[%s196 + $0x24] sm:$0xf]
        %v206 = vld [vmem:[%s196 + $0x28] sm:$0xf]
        %v207 = vld [vmem:[%s196 + $0x30] sm:$0xf]
        %v208 = vld [vmem:[%s196 + $0x34] sm:$0xf]
        %v209 = vld [vmem:[%s196 + $0x3c] sm:$0xf]
        %v210 = vld [vmem:[%s196 + $0x40] sm:$0xf]
        %v211 = vld [vmem:[%s196 + $0x48] sm:$0xf]
        %v212 = vld [vmem:[%s196 + $0x4c] sm:$0xf]
        %v213 = vld [vmem:[%s196 + $0x54] sm:$0xf]
        %v214 = vld [vmem:[%s196 + $0x58] sm:$0xf]
        %v215 = vld [vmem:[%s196 + $0x60] sm:$0xf]
        %v216 = vld [vmem:[%s196 + $0x64] sm:$0xf]
        %v217 = vld [vmem:[%s196 + $0x6c] sm:$0xf]
        %v218 = vld [vmem:[%s196 + $0x70] sm:$0xf]
        %v219 = vld [vmem:[%s196 + $0x78] sm:$0xf]
        %v220 = vld [vmem:[%s196 + $0x7c] sm:$0xf]
        %v221 = vld [vmem:[%s196 + $0x84] sm:$0xf]
        %v222 = vld [vmem:[%s196 + $0x88] sm:$0xf]
        %v223 = vld [vmem:[%s196 + $0x90] sm:$0xf]
        %v224 = vld [vmem:[%s196 + $0x94] sm:$0xf]
        %v225 = vld [vmem:[%s196 + $0x9c] sm:$0xf]
        %v226 = vld [vmem:[%s196 + $0xa0] sm:$0xf]
        %v227 = vld [vmem:[%s196 + $0xa8] sm:$0xf]
        %v228 = vld [vmem:[%s196 + $0xac] sm:$0xf]
        %v229 = vld [vmem:[%s196 + $0xb4] sm:$0xf]
        %v230 = vld [vmem:[%s196 + $0xb8] sm:$0xf]
        %v231 = vld [vmem:[%s196 + $0xc0] sm:$0xf]
        %v232 = vld [vmem:[%s196 + $0xc4] sm:$0xf]
        %v233 = vld [vmem:[%s196 + $0xcc] sm:$0xf]
        %v234 = vld [vmem:[%s196 + $0xd0] sm:$0xf]
        %v235 = vld [vmem:[%s1] sm:$0x3]
        %v236 = vld [vmem:[%s196 + $0x8] sm:$0x1]
        %v237 = vld [vmem:[%s196 + $0x14] sm:$0x1]
        %v238 = vld [vmem:[%s196 + $0x20] sm:$0x1]
        %v239 = vld [vmem:[%s196 + $0x2c] sm:$0x1]
        %v240 = vld [vmem:[%s196 + $0x38] sm:$0x1]
        %v241 = vld [vmem:[%s196 + $0x44] sm:$0x1]
        %v242 = vld [vmem:[%s196 + $0x50] sm:$0x1]
        %v243 = vld [vmem:[%s196 + $0x5c] sm:$0x1]
        %v244 = vld [vmem:[%s196 + $0x68] sm:$0x1]
        %v245 = vld [vmem:[%s196 + $0x74] sm:$0x1]
        %v246 = vld [vmem:[%s196 + $0x80] sm:$0x1]
        %v247 = vld [vmem:[%s196 + $0x8c] sm:$0x1]
        %v248 = vld [vmem:[%s196 + $0x98] sm:$0x1]
        %v249 = vld [vmem:[%s196 + $0xa4] sm:$0x1]
        %v250 = vld [vmem:[%s196 + $0xb0] sm:$0x1]
        %v251 = vld [vmem:[%s196 + $0xbc] sm:$0x1]
        %v252 = vld [vmem:[%s196 + $0xc8] sm:$0x1]
        %v253 = vld [vmem:[%s196 + $0xd4] sm:$0x1]
        %vm254 = vsmask.f32 3328
        %vm255 = vsmask.f32 7440
        %vm256 = vmor %vm254, %vm255
        %v258 = vshrl.u32 %v199, 16
        %v260 = vrot.slane %v258, 4
        %v261 = vshll.u32 %v199, 16
        %v263 = vrot.slane %v261, 5
        %v264 = vor.u32 %v260, %v263
        %v265 = vrot.slane %v264, 4
        %v267 = vshll.u32 %v200, 16
        %v269 = vrot.slane %v267, 5
        %v270 = vsel %vm256, %v265, %v269
        %v271 = vshrl.u32 %v200, 16
        %v273 = vrot.slane %v271, 4
        %v274 = vor.u32 %v273, %v269
        %v275 = vrot.slane %v274, 4
        %v277 = vshll.u32 %v236, 16
        %v279 = vrot.slane %v277, 5
        %v280 = vsel %vm256, %v275, %v279
        %v282 = vshrl.u32 %v201, 16
        %v284 = vrot.slane %v282, 4
        %v285 = vshll.u32 %v201, 16
        %v287 = vrot.slane %v285, 5
        %v288 = vor.u32 %v284, %v287
        %v289 = vrot.slane %v288, 4
        %v291 = vshll.u32 %v202, 16
        %v293 = vrot.slane %v291, 5
        %v294 = vsel %vm256, %v289, %v293
        %v295 = vshrl.u32 %v202, 16
        %v297 = vrot.slane %v295, 4
        %v298 = vor.u32 %v297, %v293
        %v299 = vrot.slane %v298, 4
        %v301 = vshll.u32 %v237, 16
        %v303 = vrot.slane %v301, 5
        %v304 = vsel %vm256, %v299, %v303
        %v306 = vshrl.u32 %v203, 16
        %v308 = vrot.slane %v306, 4
        %v309 = vshll.u32 %v203, 16
        %v311 = vrot.slane %v309, 5
        %v312 = vor.u32 %v308, %v311
        %v313 = vrot.slane %v312, 4
        %v315 = vshll.u32 %v204, 16
        %v317 = vrot.slane %v315, 5
        %v318 = vsel %vm256, %v313, %v317
        %v319 = vshrl.u32 %v204, 16
        %v321 = vrot.slane %v319, 4
        %v322 = vor.u32 %v321, %v317
        %v323 = vrot.slane %v322, 4
        %v325 = vshll.u32 %v238, 16
        %v327 = vrot.slane %v325, 5
        %v328 = vsel %vm256, %v323, %v327
        %v330 = vshrl.u32 %v205, 16
        %v332 = vrot.slane %v330, 4
        %v333 = vshll.u32 %v205, 16
        %v335 = vrot.slane %v333, 5
        %v336 = vor.u32 %v332, %v335
        %v337 = vrot.slane %v336, 4
        %v339 = vshll.u32 %v206, 16
        %v341 = vrot.slane %v339, 5
        %v342 = vsel %vm256, %v337, %v341
        %v343 = vshrl.u32 %v206, 16
        %v345 = vrot.slane %v343, 4
        %v346 = vor.u32 %v345, %v341
        %v347 = vrot.slane %v346, 4
        %v349 = vshll.u32 %v239, 16
        %v351 = vrot.slane %v349, 5
        %v352 = vsel %vm256, %v347, %v351
        %v354 = vshrl.u32 %v207, 16
        %v356 = vrot.slane %v354, 4
        %v357 = vshll.u32 %v207, 16
        %v359 = vrot.slane %v357, 5
        %v360 = vor.u32 %v356, %v359
        %v361 = vrot.slane %v360, 4
        %v363 = vshll.u32 %v208, 16
        %v365 = vrot.slane %v363, 5
        %v366 = vsel %vm256, %v361, %v365
        %v367 = vshrl.u32 %v208, 16
        %v369 = vrot.slane %v367, 4
        %v370 = vor.u32 %v369, %v365
        %v371 = vrot.slane %v370, 4
        %v373 = vshll.u32 %v240, 16
        %v375 = vrot.slane %v373, 5
        %v376 = vsel %vm256, %v371, %v375
        %v378 = vshrl.u32 %v209, 16
        %v380 = vrot.slane %v378, 4
        %v381 = vshll.u32 %v209, 16
        %v383 = vrot.slane %v381, 5
        %v384 = vor.u32 %v380, %v383
        %v385 = vrot.slane %v384, 4
        %v387 = vshll.u32 %v210, 16
        %v389 = vrot.slane %v387, 5
        %v390 = vsel %vm256, %v385, %v389
        %v391 = vshrl.u32 %v210, 16
        %v393 = vrot.slane %v391, 4
        %v394 = vor.u32 %v393, %v389
        %v395 = vrot.slane %v394, 4
        %v397 = vshll.u32 %v241, 16
        %v399 = vrot.slane %v397, 5
        %v400 = vsel %vm256, %v395, %v399
        %v402 = vshrl.u32 %v211, 16
        %v404 = vrot.slane %v402, 4
        %v405 = vshll.u32 %v211, 16
        %v407 = vrot.slane %v405, 5
        %v408 = vor.u32 %v404, %v407
        %v409 = vrot.slane %v408, 4
        %v411 = vshll.u32 %v212, 16
        %v413 = vrot.slane %v411, 5
        %v414 = vsel %vm256, %v409, %v413
        %v415 = vshrl.u32 %v212, 16
        %v417 = vrot.slane %v415, 4
        %v418 = vor.u32 %v417, %v413
        %v419 = vrot.slane %v418, 4
        %v421 = vshll.u32 %v242, 16
        %v423 = vrot.slane %v421, 5
        %v424 = vsel %vm256, %v419, %v423
        %v426 = vshrl.u32 %v213, 16
        %v428 = vrot.slane %v426, 4
        %v429 = vshll.u32 %v213, 16
        %v431 = vrot.slane %v429, 5
        %v432 = vor.u32 %v428, %v431
        %v433 = vrot.slane %v432, 4
        %v435 = vshll.u32 %v214, 16
        %v437 = vrot.slane %v435, 5
        %v438 = vsel %vm256, %v433, %v437
        %v439 = vshrl.u32 %v214, 16
        %v441 = vrot.slane %v439, 4
        %v442 = vor.u32 %v441, %v437
        %v443 = vrot.slane %v442, 4
        %v445 = vshll.u32 %v243, 16
        %v447 = vrot.slane %v445, 5
        %v448 = vsel %vm256, %v443, %v447
        %v450 = vshrl.u32 %v215, 16
        %v452 = vrot.slane %v450, 4
        %v453 = vshll.u32 %v215, 16
        %v455 = vrot.slane %v453, 5
        %v456 = vor.u32 %v452, %v455
        %v457 = vrot.slane %v456, 4
        %v459 = vshll.u32 %v216, 16
        %v461 = vrot.slane %v459, 5
        %v462 = vsel %vm256, %v457, %v461
        %v463 = vshrl.u32 %v216, 16
        %v465 = vrot.slane %v463, 4
        %v466 = vor.u32 %v465, %v461
        %v467 = vrot.slane %v466, 4
        %v469 = vshll.u32 %v244, 16
        %v471 = vrot.slane %v469, 5
        %v472 = vsel %vm256, %v467, %v471
        %v474 = vshrl.u32 %v217, 16
        %v476 = vrot.slane %v474, 4
        %v477 = vshll.u32 %v217, 16
        %v479 = vrot.slane %v477, 5
        %v480 = vor.u32 %v476, %v479
        %v481 = vrot.slane %v480, 4
        %v483 = vshll.u32 %v218, 16
        %v485 = vrot.slane %v483, 5
        %v486 = vsel %vm256, %v481, %v485
        %v487 = vshrl.u32 %v218, 16
        %v489 = vrot.slane %v487, 4
        %v490 = vor.u32 %v489, %v485
        %v491 = vrot.slane %v490, 4
        %v493 = vshll.u32 %v245, 16
        %v495 = vrot.slane %v493, 5
        %v496 = vsel %vm256, %v491, %v495
        %v498 = vshrl.u32 %v219, 16
        %v500 = vrot.slane %v498, 4
        %v501 = vshll.u32 %v219, 16
        %v503 = vrot.slane %v501, 5
        %v504 = vor.u32 %v500, %v503
        %v505 = vrot.slane %v504, 4
        %v507 = vshll.u32 %v220, 16
        %v509 = vrot.slane %v507, 5
        %v510 = vsel %vm256, %v505, %v509
        %v511 = vshrl.u32 %v220, 16
        %v513 = vrot.slane %v511, 4
        %v514 = vor.u32 %v513, %v509
        %v515 = vrot.slane %v514, 4
        %v517 = vshll.u32 %v246, 16
        %v519 = vrot.slane %v517, 5
        %v520 = vsel %vm256, %v515, %v519
        %v522 = vshrl.u32 %v221, 16
        %v524 = vrot.slane %v522, 4
        %v525 = vshll.u32 %v221, 16
        %v527 = vrot.slane %v525, 5
        %v528 = vor.u32 %v524, %v527
        %v529 = vrot.slane %v528, 4
        %v531 = vshll.u32 %v222, 16
        %v533 = vrot.slane %v531, 5
        %v534 = vsel %vm256, %v529, %v533
        %v535 = vshrl.u32 %v222, 16
        %v537 = vrot.slane %v535, 4
        %v538 = vor.u32 %v537, %v533
        %v539 = vrot.slane %v538, 4
        %v541 = vshll.u32 %v247, 16
        %v543 = vrot.slane %v541, 5
        %v544 = vsel %vm256, %v539, %v543
        %v546 = vshrl.u32 %v223, 16
        %v548 = vrot.slane %v546, 4
        %v549 = vshll.u32 %v223, 16
        %v551 = vrot.slane %v549, 5
        %v552 = vor.u32 %v548, %v551
        %v553 = vrot.slane %v552, 4
        %v555 = vshll.u32 %v224, 16
        %v557 = vrot.slane %v555, 5
        %v558 = vsel %vm256, %v553, %v557
        %v559 = vshrl.u32 %v224, 16
        %v561 = vrot.slane %v559, 4
        %v562 = vor.u32 %v561, %v557
        %v563 = vrot.slane %v562, 4
        %v565 = vshll.u32 %v248, 16
        %v567 = vrot.slane %v565, 5
        %v568 = vsel %vm256, %v563, %v567
        %v570 = vshrl.u32 %v225, 16
        %v572 = vrot.slane %v570, 4
        %v573 = vshll.u32 %v225, 16
        %v575 = vrot.slane %v573, 5
        %v576 = vor.u32 %v572, %v575
        %v577 = vrot.slane %v576, 4
        %v579 = vshll.u32 %v226, 16
        %v581 = vrot.slane %v579, 5
        %v582 = vsel %vm256, %v577, %v581
        %v583 = vshrl.u32 %v226, 16
        %v585 = vrot.slane %v583, 4
        %v586 = vor.u32 %v585, %v581
        %v587 = vrot.slane %v586, 4
        %v589 = vshll.u32 %v249, 16
        %v591 = vrot.slane %v589, 5
        %v592 = vsel %vm256, %v587, %v591
        %v594 = vshrl.u32 %v227, 16
        %v596 = vrot.slane %v594, 4
        %v597 = vshll.u32 %v227, 16
        %v599 = vrot.slane %v597, 5
        %v600 = vor.u32 %v596, %v599
        %v601 = vrot.slane %v600, 4
        %v603 = vshll.u32 %v228, 16
        %v605 = vrot.slane %v603, 5
        %v606 = vsel %vm256, %v601, %v605
        %v607 = vshrl.u32 %v228, 16
        %v609 = vrot.slane %v607, 4
        %v610 = vor.u32 %v609, %v605
        %v611 = vrot.slane %v610, 4
        %v613 = vshll.u32 %v250, 16
        %v615 = vrot.slane %v613, 5
        %v616 = vsel %vm256, %v611, %v615
        %v618 = vshrl.u32 %v229, 16
        %v620 = vrot.slane %v618, 4
        %v621 = vshll.u32 %v229, 16
        %v623 = vrot.slane %v621, 5
        %v624 = vor.u32 %v620, %v623
        %v625 = vrot.slane %v624, 4
        %v627 = vshll.u32 %v230, 16
        %v629 = vrot.slane %v627, 5
        %v630 = vsel %vm256, %v625, %v629
        %v631 = vshrl.u32 %v230, 16
        %v633 = vrot.slane %v631, 4
        %v634 = vor.u32 %v633, %v629
        %v635 = vrot.slane %v634, 4
        %v637 = vshll.u32 %v251, 16
        %v639 = vrot.slane %v637, 5
        %v640 = vsel %vm256, %v635, %v639
        %v642 = vshrl.u32 %v231, 16
        %v644 = vrot.slane %v642, 4
        %v645 = vshll.u32 %v231, 16
        %v647 = vrot.slane %v645, 5
        %v648 = vor.u32 %v644, %v647
        %v649 = vrot.slane %v648, 4
        %v651 = vshll.u32 %v232, 16
        %v653 = vrot.slane %v651, 5
        %v654 = vsel %vm256, %v649, %v653
        %v655 = vshrl.u32 %v232, 16
        %v657 = vrot.slane %v655, 4
        %v658 = vor.u32 %v657, %v653
        %v659 = vrot.slane %v658, 4
        %v661 = vshll.u32 %v252, 16
        %v663 = vrot.slane %v661, 5
        %v664 = vsel %vm256, %v659, %v663
        %v666 = vshrl.u32 %v233, 16
        %v668 = vrot.slane %v666, 4
        %v669 = vshll.u32 %v233, 16
        %v671 = vrot.slane %v669, 5
        %v672 = vor.u32 %v668, %v671
        %v673 = vrot.slane %v672, 4
        %v675 = vshll.u32 %v234, 16
        %v677 = vrot.slane %v675, 5
        %v678 = vsel %vm256, %v673, %v677
        %v679 = vshrl.u32 %v234, 16
        %v681 = vrot.slane %v679, 4
        %v682 = vor.u32 %v681, %v677
        %v683 = vrot.slane %v682, 4
        %v685 = vshll.u32 %v253, 16
        %v687 = vrot.slane %v685, 5
        %v688 = vsel %vm256, %v683, %v687
        %s689 = scalar_lea.vmem %s1, 2
        %v690 = vld [vmem:[%s689] sm:$0x3]
        %v691 = vunpack.c.l.b16 %v270
        %v692 = vunpack.c.l.b16 %v280
        %v693 = vunpack.c.l.b16 %v294
        %v694 = vunpack.c.l.b16 %v304
        %v695 = vunpack.c.l.b16 %v318
        %v696 = vunpack.c.l.b16 %v328
        %v697 = vunpack.c.l.b16 %v342
        %v698 = vunpack.c.l.b16 %v352
        %v699 = vunpack.c.l.b16 %v366
        %v700 = vunpack.c.l.b16 %v376
        %v701 = vunpack.c.l.b16 %v390
        %v702 = vunpack.c.l.b16 %v400
        %v703 = vunpack.c.l.b16 %v414
        %v704 = vunpack.c.l.b16 %v424
        %v705 = vunpack.c.l.b16 %v438
        %v706 = vunpack.c.l.b16 %v448
        %v707 = vunpack.c.l.b16 %v462
        %v708 = vunpack.c.l.b16 %v472
        %v709 = vunpack.c.l.b16 %v486
        %v710 = vunpack.c.l.b16 %v496
        %v711 = vunpack.c.l.b16 %v510
        %v712 = vunpack.c.l.b16 %v520
        %v713 = vunpack.c.l.b16 %v534
        %v714 = vunpack.c.l.b16 %v544
        %v715 = vunpack.c.l.b16 %v558
        %v716 = vunpack.c.l.b16 %v568
        %v717 = vunpack.c.l.b16 %v582
        %v718 = vunpack.c.l.b16 %v592
        %v719 = vunpack.c.l.b16 %v606
        %v720 = vunpack.c.l.b16 %v616
        %v721 = vunpack.c.l.b16 %v630
        %v722 = vunpack.c.l.b16 %v640
        %v723 = vunpack.c.l.b16 %v654
        %v724 = vunpack.c.l.b16 %v664
        %v725 = vunpack.c.l.b16 %v678
        %v726 = vunpack.c.l.b16 %v688
        %v727 = vpack.c.b16 %v692, %v691
        %v728 = vpack.c.b16 %v694, %v693
        %v729 = vpack.c.b16 %v696, %v695
        %v730 = vpack.c.b16 %v698, %v697
        %v731 = vpack.c.b16 %v700, %v699
        %v732 = vpack.c.b16 %v702, %v701
        %v733 = vpack.c.b16 %v704, %v703
        %v734 = vpack.c.b16 %v706, %v705
        %v735 = vpack.c.b16 %v708, %v707
        %v736 = vpack.c.b16 %v710, %v709
        %v737 = vpack.c.b16 %v712, %v711
        %v738 = vpack.c.b16 %v714, %v713
        %v739 = vpack.c.b16 %v716, %v715
        %v740 = vpack.c.b16 %v718, %v717
        %v741 = vpack.c.b16 %v720, %v719
        %v742 = vpack.c.b16 %v722, %v721
        %v743 = vpack.c.b16 %v724, %v723
        %v744 = vpack.c.b16 %v726, %v725
        %vm745 = vcmask 31744
        %v747 = vsel %vm745, %v727, 0
        %v750 = vsel %vm745, %v728, 0
        %v753 = vsel %vm745, %v729, 0
        %v756 = vsel %vm745, %v730, 0
        %v759 = vsel %vm745, %v731, 0
        %v762 = vsel %vm745, %v732, 0
        %v765 = vsel %vm745, %v733, 0
        %v768 = vsel %vm745, %v734, 0
        %v771 = vsel %vm745, %v735, 0
        %v774 = vsel %vm745, %v736, 0
        %v777 = vsel %vm745, %v737, 0
        %v780 = vsel %vm745, %v738, 0
        %v783 = vsel %vm745, %v739, 0
        %v786 = vsel %vm745, %v740, 0
        %v789 = vsel %vm745, %v741, 0
        %v792 = vsel %vm745, %v742, 0
        %v795 = vsel %vm745, %v743, 0
        %v798 = vsel %vm745, %v744, 0
        %vm800 = vcmask 1041408
        %v802 = vsel %vm800, %v690, 0
        %804 = vmatprep.subr.bf16.mxu0 0
        %805 = vmatpush1.bf16.msra.mxu0 %v802
        %806 = vmatprep.subr.bf16.mxu0 0
        %807 = vmatpush1.bf16.msra.mxu0 0
        %808 = vmatprep.subr.bf16.mxu0 0
        %809 = vmatpush1.bf16.msra.mxu0 0
        %810 = vmatprep.subr.bf16.mxu0 0
        %811 = vmatpush1.bf16.msra.mxu0 0
        %812 = vmatprep.subr.bf16.mxu0 0
        %813 = vmatpush1.bf16.msra.mxu0 0
        %814 = vmatprep.subr.bf16.mxu0 0
        %815 = vmatpush1.bf16.msra.mxu0 0
        %816 = vmatprep.subr.bf16.mxu0 0
        %817 = vmatpush1.bf16.msra.mxu0 0
        %818 = vmatprep.subr.bf16.mxu0 0
        %819 = vmatpush1.bf16.msra.mxu0 0
        %820 = vmatprep.subr.bf16.mxu0 0
        %821 = vmatpush1.bf16.msra.mxu0 0
        %822 = vmatprep.subr.bf16.mxu0 0
        %823 = vmatpush1.bf16.msra.mxu0 0
        %824 = vmatprep.subr.bf16.mxu0 0
        %825 = vmatpush1.bf16.msra.mxu0 0
        %826 = vmatprep.subr.bf16.mxu0 0
        %827 = vmatpush1.bf16.msra.mxu0 0
        %828 = vmatprep.subr.bf16.mxu0 0
        %829 = vmatpush1.bf16.msra.mxu0 0
        %830 = vmatprep.subr.bf16.mxu0 0
        %831 = vmatpush1.bf16.msra.mxu0 0
        %832 = vmatprep.subr.bf16.mxu0 0
        %833 = vmatpush1.bf16.msra.mxu0 0
        %834 = vmatprep.subr.bf16.mxu0 0
        %835 = vmatpush1.bf16.msra.mxu0 0
        %836 = vmatprep.mubr.bf16.mxu0 0
        %837 = vmatmul.mubr.bf16.gmra.mrb[0].mxu0 %v747
        %v838 = vpop.f32.mrb[0].mxu0
        %v839 = vadd.f32 0.0, %v838
        %v840 = vpop.f32.mrb[0].mxu0
        %v841 = vpop.f32.mrb[0].mxu0
        %v842 = vadd.f32 0.0, %v841
        %v843 = vpop.f32.mrb[0].mxu0
        %844 = vmatprep.mubr.bf16.mxu0 0
        %845 = vmatmul.mubr.bf16.gmra.mrb[0].mxu0 %v750
        %v846 = vpop.f32.mrb[0].mxu0
        %v847 = vadd.f32 0.0, %v846
        %v848 = vpop.f32.mrb[0].mxu0
        %v849 = vpop.f32.mrb[0].mxu0
        %v850 = vadd.f32 0.0, %v849
        %v851 = vpop.f32.mrb[0].mxu0
        %852 = vmatprep.mubr.bf16.mxu0 0
        %853 = vmatmul.mubr.bf16.gmra.mrb[0].mxu0 %v753
        %v854 = vpop.f32.mrb[0].mxu0
        %v855 = vadd.f32 0.0, %v854
        %v856 = vpop.f32.mrb[0].mxu0
        %v857 = vpop.f32.mrb[0].mxu0
        %v858 = vadd.f32 0.0, %v857
        %v859 = vpop.f32.mrb[0].mxu0
        %860 = vmatprep.mubr.bf16.mxu0 0
        %861 = vmatmul.mubr.bf16.gmra.mrb[0].mxu0 %v756
        %v862 = vpop.f32.mrb[0].mxu0
        %v863 = vadd.f32 0.0, %v862
        %v864 = vpop.f32.mrb[0].mxu0
        %v865 = vpop.f32.mrb[0].mxu0
        %v866 = vadd.f32 0.0, %v865
        %v867 = vpop.f32.mrb[0].mxu0
        %868 = vmatprep.mubr.bf16.mxu0 0
        %869 = vmatmul.mubr.bf16.gmra.mrb[0].mxu0 %v759
        %v870 = vpop.f32.mrb[0].mxu0
        %v871 = vadd.f32 0.0, %v870
        %v872 = vpop.f32.mrb[0].mxu0
        %v873 = vpop.f32.mrb[0].mxu0
        %v874 = vadd.f32 0.0, %v873
        %v875 = vpop.f32.mrb[0].mxu0
        %876 = vmatprep.mubr.bf16.mxu0 0
        %877 = vmatmul.mubr.bf16.gmra.mrb[0].mxu0 %v762
        %v878 = vpop.f32.mrb[0].mxu0
        %v879 = vadd.f32 0.0, %v878
        %v880 = vpop.f32.mrb[0].mxu0
        %v881 = vpop.f32.mrb[0].mxu0
        %v882 = vadd.f32 0.0, %v881
        %v883 = vpop.f32.mrb[0].mxu0
        %884 = vmatprep.mubr.bf16.mxu0 0
        %885 = vmatmul.mubr.bf16.gmra.mrb[0].mxu0 %v765
        %v886 = vpop.f32.mrb[0].mxu0
        %v887 = vadd.f32 0.0, %v886
        %v888 = vpop.f32.mrb[0].mxu0
        %v889 = vpop.f32.mrb[0].mxu0
        %v890 = vadd.f32 0.0, %v889
        %v891 = vpop.f32.mrb[0].mxu0
        %892 = vmatprep.mubr.bf16.mxu0 0
        %893 = vmatmul.mubr.bf16.gmra.mrb[0].mxu0 %v768
        %v894 = vpop.f32.mrb[0].mxu0
        %v895 = vadd.f32 0.0, %v894
        %v896 = vpop.f32.mrb[0].mxu0
        %v897 = vpop.f32.mrb[0].mxu0
        %v898 = vadd.f32 0.0, %v897
        %v899 = vpop.f32.mrb[0].mxu0
        %900 = vmatprep.mubr.bf16.mxu0 0
        %901 = vmatmul.mubr.bf16.gmra.mrb[0].mxu0 %v771
        %v902 = vpop.f32.mrb[0].mxu0
        %v903 = vadd.f32 0.0, %v902
        %v904 = vpop.f32.mrb[0].mxu0
        %v905 = vpop.f32.mrb[0].mxu0
        %v906 = vadd.f32 0.0, %v905
        %v907 = vpop.f32.mrb[0].mxu0
        %908 = vmatprep.mubr.bf16.mxu0 0
        %909 = vmatmul.mubr.bf16.gmra.mrb[0].mxu0 %v774
        %v910 = vpop.f32.mrb[0].mxu0
        %v911 = vadd.f32 0.0, %v910
        %v912 = vpop.f32.mrb[0].mxu0
        %v913 = vpop.f32.mrb[0].mxu0
        %v914 = vadd.f32 0.0, %v913
        %v915 = vpop.f32.mrb[0].mxu0
        %916 = vmatprep.mubr.bf16.mxu0 0
        %917 = vmatmul.mubr.bf16.gmra.mrb[0].mxu0 %v777
        %v918 = vpop.f32.mrb[0].mxu0
        %v919 = vadd.f32 0.0, %v918
        %v920 = vpop.f32.mrb[0].mxu0
        %v921 = vpop.f32.mrb[0].mxu0
        %v922 = vadd.f32 0.0, %v921
        %v923 = vpop.f32.mrb[0].mxu0
        %924 = vmatprep.mubr.bf16.mxu0 0
        %925 = vmatmul.mubr.bf16.gmra.mrb[0].mxu0 %v780
        %v926 = vpop.f32.mrb[0].mxu0
        %v927 = vadd.f32 0.0, %v926
        %v928 = vpop.f32.mrb[0].mxu0
        %v929 = vpop.f32.mrb[0].mxu0
        %v930 = vadd.f32 0.0, %v929
        %v931 = vpop.f32.mrb[0].mxu0
        %932 = vmatprep.mubr.bf16.mxu0 0
        %933 = vmatmul.mubr.bf16.gmra.mrb[0].mxu0 %v783
        %v934 = vpop.f32.mrb[0].mxu0
        %v935 = vadd.f32 0.0, %v934
        %v936 = vpop.f32.mrb[0].mxu0
        %v937 = vpop.f32.mrb[0].mxu0
        %v938 = vadd.f32 0.0, %v937
        %v939 = vpop.f32.mrb[0].mxu0
        %940 = vmatprep.mubr.bf16.mxu0 0
        %941 = vmatmul.mubr.bf16.gmra.mrb[0].mxu0 %v786
        %v942 = vpop.f32.mrb[0].mxu0
        %v943 = vadd.f32 0.0, %v942
        %v944 = vpop.f32.mrb[0].mxu0
        %v945 = vpop.f32.mrb[0].mxu0
        %v946 = vadd.f32 0.0, %v945
        %v947 = vpop.f32.mrb[0].mxu0
        %948 = vmatprep.mubr.bf16.mxu0 0
        %949 = vmatmul.mubr.bf16.gmra.mrb[0].mxu0 %v789
        %v950 = vpop.f32.mrb[0].mxu0
        %v951 = vadd.f32 0.0, %v950
        %v952 = vpop.f32.mrb[0].mxu0
        %v953 = vpop.f32.mrb[0].mxu0
        %v954 = vadd.f32 0.0, %v953
        %v955 = vpop.f32.mrb[0].mxu0
        %956 = vmatprep.mubr.bf16.mxu0 0
        %957 = vmatmul.mubr.bf16.gmra.mrb[0].mxu0 %v792
        %v958 = vpop.f32.mrb[0].mxu0
        %v959 = vadd.f32 0.0, %v958
        %v960 = vpop.f32.mrb[0].mxu0
        %v961 = vpop.f32.mrb[0].mxu0
        %v962 = vadd.f32 0.0, %v961
        %v963 = vpop.f32.mrb[0].mxu0
        %964 = vmatprep.mubr.bf16.mxu0 0
        %965 = vmatmul.mubr.bf16.gmra.mrb[0].mxu0 %v795
        %v966 = vpop.f32.mrb[0].mxu0
        %v967 = vadd.f32 0.0, %v966
        %v968 = vpop.f32.mrb[0].mxu0
        %v969 = vpop.f32.mrb[0].mxu0
        %v970 = vadd.f32 0.0, %v969
        %v971 = vpop.f32.mrb[0].mxu0
        %972 = vmatprep.mubr.bf16.mxu0 0
        %973 = vmatmul.mubr.bf16.gmra.mrb[0].mxu0 %v798
        %v974 = vpop.f32.mrb[0].mxu0
        %v975 = vadd.f32 0.0, %v974
        %v976 = vpop.f32.mrb[0].mxu0
        %v977 = vpop.f32.mrb[0].mxu0
        %v978 = vadd.f32 0.0, %v977
        %v979 = vpop.f32.mrb[0].mxu0
        %980 = vdwg.mxu0
        %v1017 = vunpack.c.l.b16 %v199
        %v1018 = vunpack.c.l.b16 %v200
        %v1019 = vunpack.c.l.b16 %v201
        %v1020 = vunpack.c.l.b16 %v202
        %v1021 = vunpack.c.l.b16 %v203
        %v1022 = vunpack.c.l.b16 %v204
        %v1023 = vunpack.c.l.b16 %v205
        %v1024 = vunpack.c.l.b16 %v206
        %v1025 = vunpack.c.l.b16 %v207
        %v1026 = vunpack.c.l.b16 %v208
        %v1027 = vunpack.c.l.b16 %v209
        %v1028 = vunpack.c.l.b16 %v210
        %v1029 = vunpack.c.l.b16 %v211
        %v1030 = vunpack.c.l.b16 %v212
        %v1031 = vunpack.c.l.b16 %v213
        %v1032 = vunpack.c.l.b16 %v214
        %v1033 = vunpack.c.l.b16 %v215
        %v1034 = vunpack.c.l.b16 %v216
        %v1035 = vunpack.c.l.b16 %v217
        %v1036 = vunpack.c.l.b16 %v218
        %v1037 = vunpack.c.l.b16 %v219
        %v1038 = vunpack.c.l.b16 %v220
        %v1039 = vunpack.c.l.b16 %v221
        %v1040 = vunpack.c.l.b16 %v222
        %v1041 = vunpack.c.l.b16 %v223
        %v1042 = vunpack.c.l.b16 %v224
        %v1043 = vunpack.c.l.b16 %v225
        %v1044 = vunpack.c.l.b16 %v226
        %v1045 = vunpack.c.l.b16 %v227
        %v1046 = vunpack.c.l.b16 %v228
        %v1047 = vunpack.c.l.b16 %v229
        %v1048 = vunpack.c.l.b16 %v230
        %v1049 = vunpack.c.l.b16 %v231
        %v1050 = vunpack.c.l.b16 %v232
        %v1051 = vunpack.c.l.b16 %v233
        %v1052 = vunpack.c.l.b16 %v234
        %v1053 = vpack.c.b16 %v1018, %v1017
        %v1054 = vpack.c.b16 %v1020, %v1019
        %v1055 = vpack.c.b16 %v1022, %v1021
        %v1056 = vpack.c.b16 %v1024, %v1023
        %v1057 = vpack.c.b16 %v1026, %v1025
        %v1058 = vpack.c.b16 %v1028, %v1027
        %v1059 = vpack.c.b16 %v1030, %v1029
        %v1060 = vpack.c.b16 %v1032, %v1031
        %v1061 = vpack.c.b16 %v1034, %v1033
        %v1062 = vpack.c.b16 %v1036, %v1035
        %v1063 = vpack.c.b16 %v1038, %v1037
        %v1064 = vpack.c.b16 %v1040, %v1039
        %v1065 = vpack.c.b16 %v1042, %v1041
        %v1066 = vpack.c.b16 %v1044, %v1043
        %v1067 = vpack.c.b16 %v1046, %v1045
        %v1068 = vpack.c.b16 %v1048, %v1047
        %v1069 = vpack.c.b16 %v1050, %v1049
        %v1070 = vpack.c.b16 %v1052, %v1051
        %v1072 = vsel %vm745, %v1053, 0
        %v1075 = vsel %vm745, %v1054, 0
        %v1078 = vsel %vm745, %v1055, 0
        %v1081 = vsel %vm745, %v1056, 0
        %v1084 = vsel %vm745, %v1057, 0
        %v1087 = vsel %vm745, %v1058, 0
        %v1090 = vsel %vm745, %v1059, 0
        %v1093 = vsel %vm745, %v1060, 0
        %v1096 = vsel %vm745, %v1061, 0
        %v1099 = vsel %vm745, %v1062, 0
        %v1102 = vsel %vm745, %v1063, 0
        %v1105 = vsel %vm745, %v1064, 0
        %v1108 = vsel %vm745, %v1065, 0
        %v1111 = vsel %vm745, %v1066, 0
        %v1114 = vsel %vm745, %v1067, 0
        %v1117 = vsel %vm745, %v1068, 0
        %v1120 = vsel %vm745, %v1069, 0
        %v1123 = vsel %vm745, %v1070, 0
        %v1126 = vsel %vm800, %v235, 0
        %1128 = vmatprep.subr.bf16.mxu0 0
        %1129 = vmatpush1.bf16.msra.mxu0 %v1126
        %1130 = vmatprep.subr.bf16.mxu0 0
        %1131 = vmatpush1.bf16.msra.mxu0 0
        %1132 = vmatprep.subr.bf16.mxu0 0
        %1133 = vmatpush1.bf16.msra.mxu0 0
        %1134 = vmatprep.subr.bf16.mxu0 0
        %1135 = vmatpush1.bf16.msra.mxu0 0
        %1136 = vmatprep.subr.bf16.mxu0 0
        %1137 = vmatpush1.bf16.msra.mxu0 0
        %1138 = vmatprep.subr.bf16.mxu0 0
        %1139 = vmatpush1.bf16.msra.mxu0 0
        %1140 = vmatprep.subr.bf16.mxu0 0
        %1141 = vmatpush1.bf16.msra.mxu0 0
        %1142 = vmatprep.subr.bf16.mxu0 0
        %1143 = vmatpush1.bf16.msra.mxu0 0
        %1144 = vmatprep.subr.bf16.mxu0 0
        %1145 = vmatpush1.bf16.msra.mxu0 0
        %1146 = vmatprep.subr.bf16.mxu0 0
        %1147 = vmatpush1.bf16.msra.mxu0 0
        %1148 = vmatprep.subr.bf16.mxu0 0
        %1149 = vmatpush1.bf16.msra.mxu0 0
        %1150 = vmatprep.subr.bf16.mxu0 0
        %1151 = vmatpush1.bf16.msra.mxu0 0
        %1152 = vmatprep.subr.bf16.mxu0 0
        %1153 = vmatpush1.bf16.msra.mxu0 0
        %1154 = vmatprep.subr.bf16.mxu0 0
        %1155 = vmatpush1.bf16.msra.mxu0 0
        %1156 = vmatprep.subr.bf16.mxu0 0
        %1157 = vmatpush1.bf16.msra.mxu0 0
        %1158 = vmatprep.subr.bf16.mxu0 0
        %1159 = vmatpush1.bf16.msra.mxu0 0
        %1160 = vmatprep.mubr.bf16.mxu0 0
        %1161 = vmatmul.mubr.bf16.gmra.mrb[0].mxu0 %v1072
        %v1162 = vpop.f32.mrb[0].mxu0
        %v1163 = vadd.f32 %v839, %v1162
        %v1164 = vpop.f32.mrb[0].mxu0
        %v1165 = vpop.f32.mrb[0].mxu0
        %v1166 = vadd.f32 %v842, %v1165
        %v1167 = vpop.f32.mrb[0].mxu0
        %1168 = vmatprep.mubr.bf16.mxu0 0
        %1169 = vmatmul.mubr.bf16.gmra.mrb[0].mxu0 %v1075
        %v1170 = vpop.f32.mrb[0].mxu0
        %v1171 = vadd.f32 %v847, %v1170
        %v1172 = vpop.f32.mrb[0].mxu0
        %v1173 = vpop.f32.mrb[0].mxu0
        %v1174 = vadd.f32 %v850, %v1173
        %v1175 = vpop.f32.mrb[0].mxu0
        %1176 = vmatprep.mubr.bf16.mxu0 0
        %1177 = vmatmul.mubr.bf16.gmra.mrb[0].mxu0 %v1078
        %v1178 = vpop.f32.mrb[0].mxu0
        %v1179 = vadd.f32 %v855, %v1178
        %v1180 = vpop.f32.mrb[0].mxu0
        %v1181 = vpop.f32.mrb[0].mxu0
        %v1182 = vadd.f32 %v858, %v1181
        %v1183 = vpop.f32.mrb[0].mxu0
        %1184 = vmatprep.mubr.bf16.mxu0 0
        %1185 = vmatmul.mubr.bf16.gmra.mrb[0].mxu0 %v1081
        %v1186 = vpop.f32.mrb[0].mxu0
        %v1187 = vadd.f32 %v863, %v1186
        %v1188 = vpop.f32.mrb[0].mxu0
        %v1189 = vpop.f32.mrb[0].mxu0
        %v1190 = vadd.f32 %v866, %v1189
        %v1191 = vpop.f32.mrb[0].mxu0
        %1192 = vmatprep.mubr.bf16.mxu0 0
        %1193 = vmatmul.mubr.bf16.gmra.mrb[0].mxu0 %v1084
        %v1194 = vpop.f32.mrb[0].mxu0
        %v1195 = vadd.f32 %v871, %v1194
        %v1196 = vpop.f32.mrb[0].mxu0
        %v1197 = vpop.f32.mrb[0].mxu0
        %v1198 = vadd.f32 %v874, %v1197
        %v1199 = vpop.f32.mrb[0].mxu0
        %1200 = vmatprep.mubr.bf16.mxu0 0
        %1201 = vmatmul.mubr.bf16.gmra.mrb[0].mxu0 %v1087
        %v1202 = vpop.f32.mrb[0].mxu0
        %v1203 = vadd.f32 %v879, %v1202
        %v1204 = vpop.f32.mrb[0].mxu0
        %v1205 = vpop.f32.mrb[0].mxu0
        %v1206 = vadd.f32 %v882, %v1205
        %v1207 = vpop.f32.mrb[0].mxu0
        %1208 = vmatprep.mubr.bf16.mxu0 0
        %1209 = vmatmul.mubr.bf16.gmra.mrb[0].mxu0 %v1090
        %v1210 = vpop.f32.mrb[0].mxu0
        %v1211 = vadd.f32 %v887, %v1210
        %v1212 = vpop.f32.mrb[0].mxu0
        %v1213 = vpop.f32.mrb[0].mxu0
        %v1214 = vadd.f32 %v890, %v1213
        %v1215 = vpop.f32.mrb[0].mxu0
        %1216 = vmatprep.mubr.bf16.mxu0 0
        %1217 = vmatmul.mubr.bf16.gmra.mrb[0].mxu0 %v1093
        %v1218 = vpop.f32.mrb[0].mxu0
        %v1219 = vadd.f32 %v895, %v1218
        %v1220 = vpop.f32.mrb[0].mxu0
        %v1221 = vpop.f32.mrb[0].mxu0
        %v1222 = vadd.f32 %v898, %v1221
        %v1223 = vpop.f32.mrb[0].mxu0
        %1224 = vmatprep.mubr.bf16.mxu0 0
        %1225 = vmatmul.mubr.bf16.gmra.mrb[0].mxu0 %v1096
        %v1226 = vpop.f32.mrb[0].mxu0
        %v1227 = vadd.f32 %v903, %v1226
        %v1228 = vpop.f32.mrb[0].mxu0
        %v1229 = vpop.f32.mrb[0].mxu0
        %v1230 = vadd.f32 %v906, %v1229
        %v1231 = vpop.f32.mrb[0].mxu0
        %1232 = vmatprep.mubr.bf16.mxu0 0
        %1233 = vmatmul.mubr.bf16.gmra.mrb[0].mxu0 %v1099
        %v1234 = vpop.f32.mrb[0].mxu0
        %v1235 = vadd.f32 %v911, %v1234
        %v1236 = vpop.f32.mrb[0].mxu0
        %v1237 = vpop.f32.mrb[0].mxu0
        %v1238 = vadd.f32 %v914, %v1237
        %v1239 = vpop.f32.mrb[0].mxu0
        %1240 = vmatprep.mubr.bf16.mxu0 0
        %1241 = vmatmul.mubr.bf16.gmra.mrb[0].mxu0 %v1102
        %v1242 = vpop.f32.mrb[0].mxu0
        %v1243 = vadd.f32 %v919, %v1242
        %v1244 = vpop.f32.mrb[0].mxu0
        %v1245 = vpop.f32.mrb[0].mxu0
        %v1246 = vadd.f32 %v922, %v1245
        %v1247 = vpop.f32.mrb[0].mxu0
        %1248 = vmatprep.mubr.bf16.mxu0 0
        %1249 = vmatmul.mubr.bf16.gmra.mrb[0].mxu0 %v1105
        %v1250 = vpop.f32.mrb[0].mxu0
        %v1251 = vadd.f32 %v927, %v1250
        %v1252 = vpop.f32.mrb[0].mxu0
        %v1253 = vpop.f32.mrb[0].mxu0
        %v1254 = vadd.f32 %v930, %v1253
        %v1255 = vpop.f32.mrb[0].mxu0
        %1256 = vmatprep.mubr.bf16.mxu0 0
        %1257 = vmatmul.mubr.bf16.gmra.mrb[0].mxu0 %v1108
        %v1258 = vpop.f32.mrb[0].mxu0
        %v1259 = vadd.f32 %v935, %v1258
        %v1260 = vpop.f32.mrb[0].mxu0
        %v1261 = vpop.f32.mrb[0].mxu0
        %v1262 = vadd.f32 %v938, %v1261
        %v1263 = vpop.f32.mrb[0].mxu0
        %1264 = vmatprep.mubr.bf16.mxu0 0
        %1265 = vmatmul.mubr.bf16.gmra.mrb[0].mxu0 %v1111
        %v1266 = vpop.f32.mrb[0].mxu0
        %v1267 = vadd.f32 %v943, %v1266
        %v1268 = vpop.f32.mrb[0].mxu0
        %v1269 = vpop.f32.mrb[0].mxu0
        %v1270 = vadd.f32 %v946, %v1269
        %v1271 = vpop.f32.mrb[0].mxu0
        %1272 = vmatprep.mubr.bf16.mxu0 0
        %1273 = vmatmul.mubr.bf16.gmra.mrb[0].mxu0 %v1114
        %v1274 = vpop.f32.mrb[0].mxu0
        %v1275 = vadd.f32 %v951, %v1274
        %v1276 = vpop.f32.mrb[0].mxu0
        %v1277 = vpop.f32.mrb[0].mxu0
        %v1278 = vadd.f32 %v954, %v1277
        %v1279 = vpop.f32.mrb[0].mxu0
        %1280 = vmatprep.mubr.bf16.mxu0 0
        %1281 = vmatmul.mubr.bf16.gmra.mrb[0].mxu0 %v1117
        %v1282 = vpop.f32.mrb[0].mxu0
        %v1283 = vadd.f32 %v959, %v1282
        %v1284 = vpop.f32.mrb[0].mxu0
        %v1285 = vpop.f32.mrb[0].mxu0
        %v1286 = vadd.f32 %v962, %v1285
        %v1287 = vpop.f32.mrb[0].mxu0
        %1288 = vmatprep.mubr.bf16.mxu0 0
        %1289 = vmatmul.mubr.bf16.gmra.mrb[0].mxu0 %v1120
        %v1290 = vpop.f32.mrb[0].mxu0
        %v1291 = vadd.f32 %v967, %v1290
        %v1292 = vpop.f32.mrb[0].mxu0
        %v1293 = vpop.f32.mrb[0].mxu0
        %v1294 = vadd.f32 %v970, %v1293
        %v1295 = vpop.f32.mrb[0].mxu0
        %1296 = vmatprep.mubr.bf16.mxu0 0
        %1297 = vmatmul.mubr.bf16.gmra.mrb[0].mxu0 %v1123
        %v1298 = vpop.f32.mrb[0].mxu0
        %v1299 = vadd.f32 %v975, %v1298
        %v1300 = vpop.f32.mrb[0].mxu0
        %v1301 = vpop.f32.mrb[0].mxu0
        %v1302 = vadd.f32 %v978, %v1301
        %v1303 = vpop.f32.mrb[0].mxu0
        %1304 = vdwg.mxu0
        %v1305 = vld [vmem:[%s196] sm:$0xe]
        %v1306 = vld [vmem:[%s196 + $0xc] sm:$0xe]
        %v1307 = vld [vmem:[%s196 + $0x18] sm:$0xe]
        %v1308 = vld [vmem:[%s196 + $0x24] sm:$0xe]
        %v1309 = vld [vmem:[%s196 + $0x30] sm:$0xe]
        %v1310 = vld [vmem:[%s196 + $0x3c] sm:$0xe]
        %v1311 = vld [vmem:[%s196 + $0x48] sm:$0xe]
        %v1312 = vld [vmem:[%s196 + $0x54] sm:$0xe]
        %v1313 = vld [vmem:[%s196 + $0x60] sm:$0xe]
        %v1314 = vld [vmem:[%s196 + $0x6c] sm:$0xe]
        %v1315 = vld [vmem:[%s196 + $0x78] sm:$0xe]
        %v1316 = vld [vmem:[%s196 + $0x84] sm:$0xe]
        %v1317 = vld [vmem:[%s196 + $0x90] sm:$0xe]
        %v1318 = vld [vmem:[%s196 + $0x9c] sm:$0xe]
        %v1319 = vld [vmem:[%s196 + $0xa8] sm:$0xe]
        %v1320 = vld [vmem:[%s196 + $0xb4] sm:$0xe]
        %v1321 = vld [vmem:[%s196 + $0xc0] sm:$0xe]
        %v1322 = vld [vmem:[%s196 + $0xcc] sm:$0xe]
        %vm1359 = vcmask 1042432
        %vm1360 = vcmask 1046532
        %vm1361 = vmor %vm1359, %vm1360
        %v1362 = vrot.slane %v1305, 5
        %v1363 = vrot.slane %v1362, 4
        %v1364 = vrot.slane %v200, 5
        %v1365 = vsel %vm1361, %v1363, %v1364
        %v1366 = vrot.slane %v1364, 4
        %v1367 = vrot.slane %v236, 5
        %v1368 = vsel %vm1361, %v1366, %v1367
        %v1369 = vrot.slane %v1306, 5
        %v1370 = vrot.slane %v1369, 4
        %v1371 = vrot.slane %v202, 5
        %v1372 = vsel %vm1361, %v1370, %v1371
        %v1373 = vrot.slane %v1371, 4
        %v1374 = vrot.slane %v237, 5
        %v1375 = vsel %vm1361, %v1373, %v1374
        %v1376 = vrot.slane %v1307, 5
        %v1377 = vrot.slane %v1376, 4
        %v1378 = vrot.slane %v204, 5
        %v1379 = vsel %vm1361, %v1377, %v1378
        %v1380 = vrot.slane %v1378, 4
        %v1381 = vrot.slane %v238, 5
        %v1382 = vsel %vm1361, %v1380, %v1381
        %v1383 = vrot.slane %v1308, 5
        %v1384 = vrot.slane %v1383, 4
        %v1385 = vrot.slane %v206, 5
        %v1386 = vsel %vm1361, %v1384, %v1385
        %v1387 = vrot.slane %v1385, 4
        %v1388 = vrot.slane %v239, 5
        %v1389 = vsel %vm1361, %v1387, %v1388
        %v1390 = vrot.slane %v1309, 5
        %v1391 = vrot.slane %v1390, 4
        %v1392 = vrot.slane %v208, 5
        %v1393 = vsel %vm1361, %v1391, %v1392
        %v1394 = vrot.slane %v1392, 4
        %v1395 = vrot.slane %v240, 5
        %v1396 = vsel %vm1361, %v1394, %v1395
        %v1397 = vrot.slane %v1310, 5
        %v1398 = vrot.slane %v1397, 4
        %v1399 = vrot.slane %v210, 5
        %v1400 = vsel %vm1361, %v1398, %v1399
        %v1401 = vrot.slane %v1399, 4
        %v1402 = vrot.slane %v241, 5
        %v1403 = vsel %vm1361, %v1401, %v1402
        %v1404 = vrot.slane %v1311, 5
        %v1405 = vrot.slane %v1404, 4
        %v1406 = vrot.slane %v212, 5
        %v1407 = vsel %vm1361, %v1405, %v1406
        %v1408 = vrot.slane %v1406, 4
        %v1409 = vrot.slane %v242, 5
        %v1410 = vsel %vm1361, %v1408, %v1409
        %v1411 = vrot.slane %v1312, 5
        %v1412 = vrot.slane %v1411, 4
        %v1413 = vrot.slane %v214, 5
        %v1414 = vsel %vm1361, %v1412, %v1413
        %v1415 = vrot.slane %v1413, 4
        %v1416 = vrot.slane %v243, 5
        %v1417 = vsel %vm1361, %v1415, %v1416
        %v1418 = vrot.slane %v1313, 5
        %v1419 = vrot.slane %v1418, 4
        %v1420 = vrot.slane %v216, 5
        %v1421 = vsel %vm1361, %v1419, %v1420
        %v1422 = vrot.slane %v1420, 4
        %v1423 = vrot.slane %v244, 5
        %v1424 = vsel %vm1361, %v1422, %v1423
        %v1425 = vrot.slane %v1314, 5
        %v1426 = vrot.slane %v1425, 4
        %v1427 = vrot.slane %v218, 5
        %v1428 = vsel %vm1361, %v1426, %v1427
        %v1429 = vrot.slane %v1427, 4
        %v1430 = vrot.slane %v245, 5
        %v1431 = vsel %vm1361, %v1429, %v1430
        %v1432 = vrot.slane %v1315, 5
        %v1433 = vrot.slane %v1432, 4
        %v1434 = vrot.slane %v220, 5
        %v1435 = vsel %vm1361, %v1433, %v1434
        %v1436 = vrot.slane %v1434, 4
        %v1437 = vrot.slane %v246, 5
        %v1438 = vsel %vm1361, %v1436, %v1437
        %v1439 = vrot.slane %v1316, 5
        %v1440 = vrot.slane %v1439, 4
        %v1441 = vrot.slane %v222, 5
        %v1442 = vsel %vm1361, %v1440, %v1441
        %v1443 = vrot.slane %v1441, 4
        %v1444 = vrot.slane %v247, 5
        %v1445 = vsel %vm1361, %v1443, %v1444
        %v1446 = vrot.slane %v1317, 5
        %v1447 = vrot.slane %v1446, 4
        %v1448 = vrot.slane %v224, 5
        %v1449 = vsel %vm1361, %v1447, %v1448
        %v1450 = vrot.slane %v1448, 4
        %v1451 = vrot.slane %v248, 5
        %v1452 = vsel %vm1361, %v1450, %v1451
        %v1453 = vrot.slane %v1318, 5
        %v1454 = vrot.slane %v1453, 4
        %v1455 = vrot.slane %v226, 5
        %v1456 = vsel %vm1361, %v1454, %v1455
        %v1457 = vrot.slane %v1455, 4
        %v1458 = vrot.slane %v249, 5
        %v1459 = vsel %vm1361, %v1457, %v1458
        %v1460 = vrot.slane %v1319, 5
        %v1461 = vrot.slane %v1460, 4
        %v1462 = vrot.slane %v228, 5
        %v1463 = vsel %vm1361, %v1461, %v1462
        %v1464 = vrot.slane %v1462, 4
        %v1465 = vrot.slane %v250, 5
        %v1466 = vsel %vm1361, %v1464, %v1465
        %v1467 = vrot.slane %v1320, 5
        %v1468 = vrot.slane %v1467, 4
        %v1469 = vrot.slane %v230, 5
        %v1470 = vsel %vm1361, %v1468, %v1469
        %v1471 = vrot.slane %v1469, 4
        %v1472 = vrot.slane %v251, 5
        %v1473 = vsel %vm1361, %v1471, %v1472
        %v1474 = vrot.slane %v1321, 5
        %v1475 = vrot.slane %v1474, 4
        %v1476 = vrot.slane %v232, 5
        %v1477 = vsel %vm1361, %v1475, %v1476
        %v1478 = vrot.slane %v1476, 4
        %v1479 = vrot.slane %v252, 5
        %v1480 = vsel %vm1361, %v1478, %v1479
        %v1481 = vrot.slane %v1322, 5
        %v1482 = vrot.slane %v1481, 4
        %v1483 = vrot.slane %v234, 5
        %v1484 = vsel %vm1361, %v1482, %v1483
        %v1485 = vrot.slane %v1483, 4
        %v1486 = vrot.slane %v253, 5
        %v1487 = vsel %vm1361, %v1485, %v1486
        %s1488 = scalar_lea.vmem %s1, 4
        %v1489 = vld [vmem:[%s1488] sm:$0x3]
        %v1490 = vunpack.c.l.b16 %v1365
        %v1491 = vunpack.c.l.b16 %v1368
        %v1492 = vunpack.c.l.b16 %v1372
        %v1493 = vunpack.c.l.b16 %v1375
        %v1494 = vunpack.c.l.b16 %v1379
        %v1495 = vunpack.c.l.b16 %v1382
        %v1496 = vunpack.c.l.b16 %v1386
        %v1497 = vunpack.c.l.b16 %v1389
        %v1498 = vunpack.c.l.b16 %v1393
        %v1499 = vunpack.c.l.b16 %v1396
        %v1500 = vunpack.c.l.b16 %v1400
        %v1501 = vunpack.c.l.b16 %v1403
        %v1502 = vunpack.c.l.b16 %v1407
        %v1503 = vunpack.c.l.b16 %v1410
        %v1504 = vunpack.c.l.b16 %v1414
        %v1505 = vunpack.c.l.b16 %v1417
        %v1506 = vunpack.c.l.b16 %v1421
        %v1507 = vunpack.c.l.b16 %v1424
        %v1508 = vunpack.c.l.b16 %v1428
        %v1509 = vunpack.c.l.b16 %v1431
        %v1510 = vunpack.c.l.b16 %v1435
        %v1511 = vunpack.c.l.b16 %v1438
        %v1512 = vunpack.c.l.b16 %v1442
        %v1513 = vunpack.c.l.b16 %v1445
        %v1514 = vunpack.c.l.b16 %v1449
        %v1515 = vunpack.c.l.b16 %v1452
        %v1516 = vunpack.c.l.b16 %v1456
        %v1517 = vunpack.c.l.b16 %v1459
        %v1518 = vunpack.c.l.b16 %v1463
        %v1519 = vunpack.c.l.b16 %v1466
        %v1520 = vunpack.c.l.b16 %v1470
        %v1521 = vunpack.c.l.b16 %v1473
        %v1522 = vunpack.c.l.b16 %v1477
        %v1523 = vunpack.c.l.b16 %v1480
        %v1524 = vunpack.c.l.b16 %v1484
        %v1525 = vunpack.c.l.b16 %v1487
        %v1526 = vpack.c.b16 %v1491, %v1490
        %v1527 = vpack.c.b16 %v1493, %v1492
        %v1528 = vpack.c.b16 %v1495, %v1494
        %v1529 = vpack.c.b16 %v1497, %v1496
        %v1530 = vpack.c.b16 %v1499, %v1498
        %v1531 = vpack.c.b16 %v1501, %v1500
        %v1532 = vpack.c.b16 %v1503, %v1502
        %v1533 = vpack.c.b16 %v1505, %v1504
        %v1534 = vpack.c.b16 %v1507, %v1506
        %v1535 = vpack.c.b16 %v1509, %v1508
        %v1536 = vpack.c.b16 %v1511, %v1510
        %v1537 = vpack.c.b16 %v1513, %v1512
        %v1538 = vpack.c.b16 %v1515, %v1514
        %v1539 = vpack.c.b16 %v1517, %v1516
        %v1540 = vpack.c.b16 %v1519, %v1518
        %v1541 = vpack.c.b16 %v1521, %v1520
        %v1542 = vpack.c.b16 %v1523, %v1522
        %v1543 = vpack.c.b16 %v1525, %v1524
        %v1545 = vsel %vm745, %v1526, 0
        %v1548 = vsel %vm745, %v1527, 0
        %v1551 = vsel %vm745, %v1528, 0
        %v1554 = vsel %vm745, %v1529, 0
        %v1557 = vsel %vm745, %v1530, 0
        %v1560 = vsel %vm745, %v1531, 0
        %v1563 = vsel %vm745, %v1532, 0
        %v1566 = vsel %vm745, %v1533, 0
        %v1569 = vsel %vm745, %v1534, 0
        %v1572 = vsel %vm745, %v1535, 0
        %v1575 = vsel %vm745, %v1536, 0
        %v1578 = vsel %vm745, %v1537, 0
        %v1581 = vsel %vm745, %v1538, 0
        %v1584 = vsel %vm745, %v1539, 0
        %v1587 = vsel %vm745, %v1540, 0
        %v1590 = vsel %vm745, %v1541, 0
        %v1593 = vsel %vm745, %v1542, 0
        %v1596 = vsel %vm745, %v1543, 0
        %v1599 = vsel %vm800, %v1489, 0
        %1601 = vmatprep.subr.bf16.mxu0 0
        %1602 = vmatpush1.bf16.msra.mxu0 %v1599
        %1603 = vmatprep.subr.bf16.mxu0 0
        %1604 = vmatpush1.bf16.msra.mxu0 0
        %1605 = vmatprep.subr.bf16.mxu0 0
        %1606 = vmatpush1.bf16.msra.mxu0 0
        %1607 = vmatprep.subr.bf16.mxu0 0
        %1608 = vmatpush1.bf16.msra.mxu0 0
        %1609 = vmatprep.subr.bf16.mxu0 0
        %1610 = vmatpush1.bf16.msra.mxu0 0
        %1611 = vmatprep.subr.bf16.mxu0 0
        %1612 = vmatpush1.bf16.msra.mxu0 0
        %1613 = vmatprep.subr.bf16.mxu0 0
        %1614 = vmatpush1.bf16.msra.mxu0 0
        %1615 = vmatprep.subr.bf16.mxu0 0
        %1616 = vmatpush1.bf16.msra.mxu0 0
        %1617 = vmatprep.subr.bf16.mxu0 0
        %1618 = vmatpush1.bf16.msra.mxu0 0
        %1619 = vmatprep.subr.bf16.mxu0 0
        %1620 = vmatpush1.bf16.msra.mxu0 0
        %1621 = vmatprep.subr.bf16.mxu0 0
        %1622 = vmatpush1.bf16.msra.mxu0 0
        %1623 = vmatprep.subr.bf16.mxu0 0
        %1624 = vmatpush1.bf16.msra.mxu0 0
        %1625 = vmatprep.subr.bf16.mxu0 0
        %1626 = vmatpush1.bf16.msra.mxu0 0
        %1627 = vmatprep.subr.bf16.mxu0 0
        %1628 = vmatpush1.bf16.msra.mxu0 0
        %1629 = vmatprep.subr.bf16.mxu0 0
        %1630 = vmatpush1.bf16.msra.mxu0 0
        %1631 = vmatprep.subr.bf16.mxu0 0
        %1632 = vmatpush1.bf16.msra.mxu0 0
        %1633 = vmatprep.mubr.bf16.mxu0 0
        %1634 = vmatmul.mubr.bf16.gmra.mrb[0].mxu0 %v1545
        %v1635 = vpop.f32.mrb[0].mxu0
        %v1636 = vadd.f32 0.0, %v1635
        %v1637 = vpop.f32.mrb[0].mxu0
        %v1638 = vpop.f32.mrb[0].mxu0
        %v1639 = vadd.f32 0.0, %v1638
        %v1640 = vpop.f32.mrb[0].mxu0
        %1641 = vmatprep.mubr.bf16.mxu0 0
        %1642 = vmatmul.mubr.bf16.gmra.mrb[0].mxu0 %v1548
        %v1643 = vpop.f32.mrb[0].mxu0
        %v1644 = vadd.f32 0.0, %v1643
        %v1645 = vpop.f32.mrb[0].mxu0
        %v1646 = vpop.f32.mrb[0].mxu0
        %v1647 = vadd.f32 0.0, %v1646
        %v1648 = vpop.f32.mrb[0].mxu0
        %1649 = vmatprep.mubr.bf16.mxu0 0
        %1650 = vmatmul.mubr.bf16.gmra.mrb[0].mxu0 %v1551
        %v1651 = vpop.f32.mrb[0].mxu0
        %v1652 = vadd.f32 0.0, %v1651
        %v1653 = vpop.f32.mrb[0].mxu0
        %v1654 = vpop.f32.mrb[0].mxu0
        %v1655 = vadd.f32 0.0, %v1654
        %v1656 = vpop.f32.mrb[0].mxu0
        %1657 = vmatprep.mubr.bf16.mxu0 0
        %1658 = vmatmul.mubr.bf16.gmra.mrb[0].mxu0 %v1554
        %v1659 = vpop.f32.mrb[0].mxu0
        %v1660 = vadd.f32 0.0, %v1659
        %v1661 = vpop.f32.mrb[0].mxu0
        %v1662 = vpop.f32.mrb[0].mxu0
        %v1663 = vadd.f32 0.0, %v1662
        %v1664 = vpop.f32.mrb[0].mxu0
        %1665 = vmatprep.mubr.bf16.mxu0 0
        %1666 = vmatmul.mubr.bf16.gmra.mrb[0].mxu0 %v1557
        %v1667 = vpop.f32.mrb[0].mxu0
        %v1668 = vadd.f32 0.0, %v1667
        %v1669 = vpop.f32.mrb[0].mxu0
        %v1670 = vpop.f32.mrb[0].mxu0
        %v1671 = vadd.f32 0.0, %v1670
        %v1672 = vpop.f32.mrb[0].mxu0
        %1673 = vmatprep.mubr.bf16.mxu0 0
        %1674 = vmatmul.mubr.bf16.gmra.mrb[0].mxu0 %v1560
        %v1675 = vpop.f32.mrb[0].mxu0
        %v1676 = vadd.f32 0.0, %v1675
        %v1677 = vpop.f32.mrb[0].mxu0
        %v1678 = vpop.f32.mrb[0].mxu0
        %v1679 = vadd.f32 0.0, %v1678
        %v1680 = vpop.f32.mrb[0].mxu0
        %1681 = vmatprep.mubr.bf16.mxu0 0
        %1682 = vmatmul.mubr.bf16.gmra.mrb[0].mxu0 %v1563
        %v1683 = vpop.f32.mrb[0].mxu0
        %v1684 = vadd.f32 0.0, %v1683
        %v1685 = vpop.f32.mrb[0].mxu0
        %v1686 = vpop.f32.mrb[0].mxu0
        %v1687 = vadd.f32 0.0, %v1686
        %v1688 = vpop.f32.mrb[0].mxu0
        %1689 = vmatprep.mubr.bf16.mxu0 0
        %1690 = vmatmul.mubr.bf16.gmra.mrb[0].mxu0 %v1566
        %v1691 = vpop.f32.mrb[0].mxu0
        %v1692 = vadd.f32 0.0, %v1691
        %v1693 = vpop.f32.mrb[0].mxu0
        %v1694 = vpop.f32.mrb[0].mxu0
        %v1695 = vadd.f32 0.0, %v1694
        %v1696 = vpop.f32.mrb[0].mxu0
        %1697 = vmatprep.mubr.bf16.mxu0 0
        %1698 = vmatmul.mubr.bf16.gmra.mrb[0].mxu0 %v1569
        %v1699 = vpop.f32.mrb[0].mxu0
        %v1700 = vadd.f32 0.0, %v1699
        %v1701 = vpop.f32.mrb[0].mxu0
        %v1702 = vpop.f32.mrb[0].mxu0
        %v1703 = vadd.f32 0.0, %v1702
        %v1704 = vpop.f32.mrb[0].mxu0
        %1705 = vmatprep.mubr.bf16.mxu0 0
        %1706 = vmatmul.mubr.bf16.gmra.mrb[0].mxu0 %v1572
        %v1707 = vpop.f32.mrb[0].mxu0
        %v1708 = vadd.f32 0.0, %v1707
        %v1709 = vpop.f32.mrb[0].mxu0
        %v1710 = vpop.f32.mrb[0].mxu0
        %v1711 = vadd.f32 0.0, %v1710
        %v1712 = vpop.f32.mrb[0].mxu0
        %1713 = vmatprep.mubr.bf16.mxu0 0
        %1714 = vmatmul.mubr.bf16.gmra.mrb[0].mxu0 %v1575
        %v1715 = vpop.f32.mrb[0].mxu0
        %v1716 = vadd.f32 0.0, %v1715
        %v1717 = vpop.f32.mrb[0].mxu0
        %v1718 = vpop.f32.mrb[0].mxu0
        %v1719 = vadd.f32 0.0, %v1718
        %v1720 = vpop.f32.mrb[0].mxu0
        %1721 = vmatprep.mubr.bf16.mxu0 0
        %1722 = vmatmul.mubr.bf16.gmra.mrb[0].mxu0 %v1578
        %v1723 = vpop.f32.mrb[0].mxu0
        %v1724 = vadd.f32 0.0, %v1723
        %v1725 = vpop.f32.mrb[0].mxu0
        %v1726 = vpop.f32.mrb[0].mxu0
        %v1727 = vadd.f32 0.0, %v1726
        %v1728 = vpop.f32.mrb[0].mxu0
        %1729 = vmatprep.mubr.bf16.mxu0 0
        %1730 = vmatmul.mubr.bf16.gmra.mrb[0].mxu0 %v1581
        %v1731 = vpop.f32.mrb[0].mxu0
        %v1732 = vadd.f32 0.0, %v1731
        %v1733 = vpop.f32.mrb[0].mxu0
        %v1734 = vpop.f32.mrb[0].mxu0
        %v1735 = vadd.f32 0.0, %v1734
        %v1736 = vpop.f32.mrb[0].mxu0
        %1737 = vmatprep.mubr.bf16.mxu0 0
        %1738 = vmatmul.mubr.bf16.gmra.mrb[0].mxu0 %v1584
        %v1739 = vpop.f32.mrb[0].mxu0
        %v1740 = vadd.f32 0.0, %v1739
        %v1741 = vpop.f32.mrb[0].mxu0
        %v1742 = vpop.f32.mrb[0].mxu0
        %v1743 = vadd.f32 0.0, %v1742
        %v1744 = vpop.f32.mrb[0].mxu0
        %1745 = vmatprep.mubr.bf16.mxu0 0
        %1746 = vmatmul.mubr.bf16.gmra.mrb[0].mxu0 %v1587
        %v1747 = vpop.f32.mrb[0].mxu0
        %v1748 = vadd.f32 0.0, %v1747
        %v1749 = vpop.f32.mrb[0].mxu0
        %v1750 = vpop.f32.mrb[0].mxu0
        %v1751 = vadd.f32 0.0, %v1750
        %v1752 = vpop.f32.mrb[0].mxu0
        %1753 = vmatprep.mubr.bf16.mxu0 0
        %1754 = vmatmul.mubr.bf16.gmra.mrb[0].mxu0 %v1590
        %v1755 = vpop.f32.mrb[0].mxu0
        %v1756 = vadd.f32 0.0, %v1755
        %v1757 = vpop.f32.mrb[0].mxu0
        %v1758 = vpop.f32.mrb[0].mxu0
        %v1759 = vadd.f32 0.0, %v1758
        %v1760 = vpop.f32.mrb[0].mxu0
        %1761 = vmatprep.mubr.bf16.mxu0 0
        %1762 = vmatmul.mubr.bf16.gmra.mrb[0].mxu0 %v1593
        %v1763 = vpop.f32.mrb[0].mxu0
        %v1764 = vadd.f32 0.0, %v1763
        %v1765 = vpop.f32.mrb[0].mxu0
        %v1766 = vpop.f32.mrb[0].mxu0
        %v1767 = vadd.f32 0.0, %v1766
        %v1768 = vpop.f32.mrb[0].mxu0
        %1769 = vmatprep.mubr.bf16.mxu0 0
        %1770 = vmatmul.mubr.bf16.gmra.mrb[0].mxu0 %v1596
        %v1771 = vpop.f32.mrb[0].mxu0
        %v1772 = vadd.f32 0.0, %v1771
        %v1773 = vpop.f32.mrb[0].mxu0
        %v1774 = vpop.f32.mrb[0].mxu0
        %v1775 = vadd.f32 0.0, %v1774
        %v1776 = vpop.f32.mrb[0].mxu0
        %1777 = vdwg.mxu0
        %v1778 = vadd.f32 %v1163, %v1636
        %v1779 = vadd.f32 %v1166, %v1639
        %v1780 = vadd.f32 %v1171, %v1644
        %v1781 = vadd.f32 %v1174, %v1647
        %v1782 = vadd.f32 %v1179, %v1652
        %v1783 = vadd.f32 %v1182, %v1655
        %v1784 = vadd.f32 %v1187, %v1660
        %v1785 = vadd.f32 %v1190, %v1663
        %v1786 = vadd.f32 %v1195, %v1668
        %v1787 = vadd.f32 %v1198, %v1671
        %v1788 = vadd.f32 %v1203, %v1676
        %v1789 = vadd.f32 %v1206, %v1679
        %v1790 = vadd.f32 %v1211, %v1684
        %v1791 = vadd.f32 %v1214, %v1687
        %v1792 = vadd.f32 %v1219, %v1692
        %v1793 = vadd.f32 %v1222, %v1695
        %v1794 = vadd.f32 %v1227, %v1700
        %v1795 = vadd.f32 %v1230, %v1703
        %v1796 = vadd.f32 %v1235, %v1708
        %v1797 = vadd.f32 %v1238, %v1711
        %v1798 = vadd.f32 %v1243, %v1716
        %v1799 = vadd.f32 %v1246, %v1719
        %v1800 = vadd.f32 %v1251, %v1724
        %v1801 = vadd.f32 %v1254, %v1727
        %v1802 = vadd.f32 %v1259, %v1732
        %v1803 = vadd.f32 %v1262, %v1735
        %v1804 = vadd.f32 %v1267, %v1740
        %v1805 = vadd.f32 %v1270, %v1743
        %v1806 = vadd.f32 %v1275, %v1748
        %v1807 = vadd.f32 %v1278, %v1751
        %v1808 = vadd.f32 %v1283, %v1756
        %v1809 = vadd.f32 %v1286, %v1759
        %v1810 = vadd.f32 %v1291, %v1764
        %v1811 = vadd.f32 %v1294, %v1767
        %v1812 = vadd.f32 %v1299, %v1772
        %v1813 = vadd.f32 %v1302, %v1775
        %s1814 = scalar_lea.vmem %s196, 12
        %v1815 = vld [vmem:[%s1814] sm:$0xf]
        %v1816 = vld [vmem:[%s1814 + $0x4] sm:$0xf]
        %v1817 = vld [vmem:[%s1814 + $0xc] sm:$0xf]
        %v1818 = vld [vmem:[%s1814 + $0x10] sm:$0xf]
        %v1819 = vld [vmem:[%s1814 + $0x18] sm:$0xf]
        %v1820 = vld [vmem:[%s1814 + $0x1c] sm:$0xf]
        %v1821 = vld [vmem:[%s1814 + $0x24] sm:$0xf]
        %v1822 = vld [vmem:[%s1814 + $0x28] sm:$0xf]
        %v1823 = vld [vmem:[%s1814 + $0x30] sm:$0xf]
        %v1824 = vld [vmem:[%s1814 + $0x34] sm:$0xf]
        %v1825 = vld [vmem:[%s1814 + $0x3c] sm:$0xf]
        %v1826 = vld [vmem:[%s1814 + $0x40] sm:$0xf]
        %v1827 = vld [vmem:[%s1814 + $0x48] sm:$0xf]
        %v1828 = vld [vmem:[%s1814 + $0x4c] sm:$0xf]
        %v1829 = vld [vmem:[%s1814 + $0x54] sm:$0xf]
        %v1830 = vld [vmem:[%s1814 + $0x58] sm:$0xf]
        %v1831 = vld [vmem:[%s1814 + $0x60] sm:$0xf]
        %v1832 = vld [vmem:[%s1814 + $0x64] sm:$0xf]
        %v1833 = vld [vmem:[%s1814 + $0x6c] sm:$0xf]
        %v1834 = vld [vmem:[%s1814 + $0x70] sm:$0xf]
        %v1835 = vld [vmem:[%s1814 + $0x78] sm:$0xf]
        %v1836 = vld [vmem:[%s1814 + $0x7c] sm:$0xf]
        %v1837 = vld [vmem:[%s1814 + $0x84] sm:$0xf]
        %v1838 = vld [vmem:[%s1814 + $0x88] sm:$0xf]
        %v1839 = vld [vmem:[%s1814 + $0x90] sm:$0xf]
        %v1840 = vld [vmem:[%s1814 + $0x94] sm:$0xf]
        %v1841 = vld [vmem:[%s1814 + $0x9c] sm:$0xf]
        %v1842 = vld [vmem:[%s1814 + $0xa0] sm:$0xf]
        %v1843 = vld [vmem:[%s1814 + $0xa8] sm:$0xf]
        %v1844 = vld [vmem:[%s1814 + $0xac] sm:$0xf]
        %v1845 = vld [vmem:[%s1814 + $0xb4] sm:$0xf]
        %v1846 = vld [vmem:[%s1814 + $0xb8] sm:$0xf]
        %v1847 = vld [vmem:[%s1814 + $0xc0] sm:$0xf]
        %v1848 = vld [vmem:[%s1814 + $0xc4] sm:$0xf]
        %v1849 = vld [vmem:[%s1814 + $0xcc] sm:$0xf]
        %v1850 = vld [vmem:[%s1814 + $0xd0] sm:$0xf]
        %s1851 = scalar_lea.vmem %s1, 6
        %v1852 = vld [vmem:[%s1851] sm:$0x3]
        %v1889 = vunpack.c.l.b16 %v1815
        %v1890 = vunpack.c.l.b16 %v1816
        %v1891 = vunpack.c.l.b16 %v1817
        %v1892 = vunpack.c.l.b16 %v1818
        %v1893 = vunpack.c.l.b16 %v1819
        %v1894 = vunpack.c.l.b16 %v1820
        %v1895 = vunpack.c.l.b16 %v1821
        %v1896 = vunpack.c.l.b16 %v1822
        %v1897 = vunpack.c.l.b16 %v1823
        %v1898 = vunpack.c.l.b16 %v1824
        %v1899 = vunpack.c.l.b16 %v1825
        %v1900 = vunpack.c.l.b16 %v1826
        %v1901 = vunpack.c.l.b16 %v1827
        %v1902 = vunpack.c.l.b16 %v1828
        %v1903 = vunpack.c.l.b16 %v1829
        %v1904 = vunpack.c.l.b16 %v1830
        %v1905 = vunpack.c.l.b16 %v1831
        %v1906 = vunpack.c.l.b16 %v1832
        %v1907 = vunpack.c.l.b16 %v1833
        %v1908 = vunpack.c.l.b16 %v1834
        %v1909 = vunpack.c.l.b16 %v1835
        %v1910 = vunpack.c.l.b16 %v1836
        %v1911 = vunpack.c.l.b16 %v1837
        %v1912 = vunpack.c.l.b16 %v1838
        %v1913 = vunpack.c.l.b16 %v1839
        %v1914 = vunpack.c.l.b16 %v1840
        %v1915 = vunpack.c.l.b16 %v1841
        %v1916 = vunpack.c.l.b16 %v1842
        %v1917 = vunpack.c.l.b16 %v1843
        %v1918 = vunpack.c.l.b16 %v1844
        %v1919 = vunpack.c.l.b16 %v1845
        %v1920 = vunpack.c.l.b16 %v1846
        %v1921 = vunpack.c.l.b16 %v1847
        %v1922 = vunpack.c.l.b16 %v1848
        %v1923 = vunpack.c.l.b16 %v1849
        %v1924 = vunpack.c.l.b16 %v1850
        %v1925 = vpack.c.b16 %v1890, %v1889
        %v1926 = vpack.c.b16 %v1892, %v1891
        %v1927 = vpack.c.b16 %v1894, %v1893
        %v1928 = vpack.c.b16 %v1896, %v1895
        %v1929 = vpack.c.b16 %v1898, %v1897
        %v1930 = vpack.c.b16 %v1900, %v1899
        %v1931 = vpack.c.b16 %v1902, %v1901
        %v1932 = vpack.c.b16 %v1904, %v1903
        %v1933 = vpack.c.b16 %v1906, %v1905
        %v1934 = vpack.c.b16 %v1908, %v1907
        %v1935 = vpack.c.b16 %v1910, %v1909
        %v1936 = vpack.c.b16 %v1912, %v1911
        %v1937 = vpack.c.b16 %v1914, %v1913
        %v1938 = vpack.c.b16 %v1916, %v1915
        %v1939 = vpack.c.b16 %v1918, %v1917
        %v1940 = vpack.c.b16 %v1920, %v1919
        %v1941 = vpack.c.b16 %v1922, %v1921
        %v1942 = vpack.c.b16 %v1924, %v1923
        %v1944 = vsel %vm745, %v1925, 0
        %v1947 = vsel %vm745, %v1926, 0
        %v1950 = vsel %vm745, %v1927, 0
        %v1953 = vsel %vm745, %v1928, 0
        %v1956 = vsel %vm745, %v1929, 0
        %v1959 = vsel %vm745, %v1930, 0
        %v1962 = vsel %vm745, %v1931, 0
        %v1965 = vsel %vm745, %v1932, 0
        %v1968 = vsel %vm745, %v1933, 0
        %v1971 = vsel %vm745, %v1934, 0
        %v1974 = vsel %vm745, %v1935, 0
        %v1977 = vsel %vm745, %v1936, 0
        %v1980 = vsel %vm745, %v1937, 0
        %v1983 = vsel %vm745, %v1938, 0
        %v1986 = vsel %vm745, %v1939, 0
        %v1989 = vsel %vm745, %v1940, 0
        %v1992 = vsel %vm745, %v1941, 0
        %v1995 = vsel %vm745, %v1942, 0
        %v1998 = vsel %vm800, %v1852, 0
        %2000 = vmatprep.subr.bf16.mxu0 0
        %2001 = vmatpush1.bf16.msra.mxu0 %v1998
        %2002 = vmatprep.subr.bf16.mxu0 0
        %2003 = vmatpush1.bf16.msra.mxu0 0
        %2004 = vmatprep.subr.bf16.mxu0 0
        %2005 = vmatpush1.bf16.msra.mxu0 0
        %2006 = vmatprep.subr.bf16.mxu0 0
        %2007 = vmatpush1.bf16.msra.mxu0 0
        %2008 = vmatprep.subr.bf16.mxu0 0
        %2009 = vmatpush1.bf16.msra.mxu0 0
        %2010 = vmatprep.subr.bf16.mxu0 0
        %2011 = vmatpush1.bf16.msra.mxu0 0
        %2012 = vmatprep.subr.bf16.mxu0 0
        %2013 = vmatpush1.bf16.msra.mxu0 0
        %2014 = vmatprep.subr.bf16.mxu0 0
        %2015 = vmatpush1.bf16.msra.mxu0 0
        %2016 = vmatprep.subr.bf16.mxu0 0
        %2017 = vmatpush1.bf16.msra.mxu0 0
        %2018 = vmatprep.subr.bf16.mxu0 0
        %2019 = vmatpush1.bf16.msra.mxu0 0
        %2020 = vmatprep.subr.bf16.mxu0 0
        %2021 = vmatpush1.bf16.msra.mxu0 0
        %2022 = vmatprep.subr.bf16.mxu0 0
        %2023 = vmatpush1.bf16.msra.mxu0 0
        %2024 = vmatprep.subr.bf16.mxu0 0
        %2025 = vmatpush1.bf16.msra.mxu0 0
        %2026 = vmatprep.subr.bf16.mxu0 0
        %2027 = vmatpush1.bf16.msra.mxu0 0
        %2028 = vmatprep.subr.bf16.mxu0 0
        %2029 = vmatpush1.bf16.msra.mxu0 0
        %2030 = vmatprep.subr.bf16.mxu0 0
        %2031 = vmatpush1.bf16.msra.mxu0 0
        %2032 = vmatprep.mubr.bf16.mxu0 0
        %2033 = vmatmul.mubr.bf16.gmra.mrb[0].mxu0 %v1944
        %v2034 = vpop.f32.mrb[0].mxu0
        %v2035 = vadd.f32 0.0, %v2034
        %v2036 = vpop.f32.mrb[0].mxu0
        %v2037 = vpop.f32.mrb[0].mxu0
        %v2038 = vadd.f32 0.0, %v2037
        %v2039 = vpop.f32.mrb[0].mxu0
        %2040 = vmatprep.mubr.bf16.mxu0 0
        %2041 = vmatmul.mubr.bf16.gmra.mrb[0].mxu0 %v1947
        %v2042 = vpop.f32.mrb[0].mxu0
        %v2043 = vadd.f32 0.0, %v2042
        %v2044 = vpop.f32.mrb[0].mxu0
        %v2045 = vpop.f32.mrb[0].mxu0
        %v2046 = vadd.f32 0.0, %v2045
        %v2047 = vpop.f32.mrb[0].mxu0
        %2048 = vmatprep.mubr.bf16.mxu0 0
        %2049 = vmatmul.mubr.bf16.gmra.mrb[0].mxu0 %v1950
        %v2050 = vpop.f32.mrb[0].mxu0
        %v2051 = vadd.f32 0.0, %v2050
        %v2052 = vpop.f32.mrb[0].mxu0
        %v2053 = vpop.f32.mrb[0].mxu0
        %v2054 = vadd.f32 0.0, %v2053
        %v2055 = vpop.f32.mrb[0].mxu0
        %2056 = vmatprep.mubr.bf16.mxu0 0
        %2057 = vmatmul.mubr.bf16.gmra.mrb[0].mxu0 %v1953
        %v2058 = vpop.f32.mrb[0].mxu0
        %v2059 = vadd.f32 0.0, %v2058
        %v2060 = vpop.f32.mrb[0].mxu0
        %v2061 = vpop.f32.mrb[0].mxu0
        %v2062 = vadd.f32 0.0, %v2061
        %v2063 = vpop.f32.mrb[0].mxu0
        %2064 = vmatprep.mubr.bf16.mxu0 0
        %2065 = vmatmul.mubr.bf16.gmra.mrb[0].mxu0 %v1956
        %v2066 = vpop.f32.mrb[0].mxu0
        %v2067 = vadd.f32 0.0, %v2066
        %v2068 = vpop.f32.mrb[0].mxu0
        %v2069 = vpop.f32.mrb[0].mxu0
        %v2070 = vadd.f32 0.0, %v2069
        %v2071 = vpop.f32.mrb[0].mxu0
        %2072 = vmatprep.mubr.bf16.mxu0 0
        %2073 = vmatmul.mubr.bf16.gmra.mrb[0].mxu0 %v1959
        %v2074 = vpop.f32.mrb[0].mxu0
        %v2075 = vadd.f32 0.0, %v2074
        %v2076 = vpop.f32.mrb[0].mxu0
        %v2077 = vpop.f32.mrb[0].mxu0
        %v2078 = vadd.f32 0.0, %v2077
        %v2079 = vpop.f32.mrb[0].mxu0
        %2080 = vmatprep.mubr.bf16.mxu0 0
        %2081 = vmatmul.mubr.bf16.gmra.mrb[0].mxu0 %v1962
        %v2082 = vpop.f32.mrb[0].mxu0
        %v2083 = vadd.f32 0.0, %v2082
        %v2084 = vpop.f32.mrb[0].mxu0
        %v2085 = vpop.f32.mrb[0].mxu0
        %v2086 = vadd.f32 0.0, %v2085
        %v2087 = vpop.f32.mrb[0].mxu0
        %2088 = vmatprep.mubr.bf16.mxu0 0
        %2089 = vmatmul.mubr.bf16.gmra.mrb[0].mxu0 %v1965
        %v2090 = vpop.f32.mrb[0].mxu0
        %v2091 = vadd.f32 0.0, %v2090
        %v2092 = vpop.f32.mrb[0].mxu0
        %v2093 = vpop.f32.mrb[0].mxu0
        %v2094 = vadd.f32 0.0, %v2093
        %v2095 = vpop.f32.mrb[0].mxu0
        %2096 = vmatprep.mubr.bf16.mxu0 0
        %2097 = vmatmul.mubr.bf16.gmra.mrb[0].mxu0 %v1968
        %v2098 = vpop.f32.mrb[0].mxu0
        %v2099 = vadd.f32 0.0, %v2098
        %v2100 = vpop.f32.mrb[0].mxu0
        %v2101 = vpop.f32.mrb[0].mxu0
        %v2102 = vadd.f32 0.0, %v2101
        %v2103 = vpop.f32.mrb[0].mxu0
        %2104 = vmatprep.mubr.bf16.mxu0 0
        %2105 = vmatmul.mubr.bf16.gmra.mrb[0].mxu0 %v1971
        %v2106 = vpop.f32.mrb[0].mxu0
        %v2107 = vadd.f32 0.0, %v2106
        %v2108 = vpop.f32.mrb[0].mxu0
        %v2109 = vpop.f32.mrb[0].mxu0
        %v2110 = vadd.f32 0.0, %v2109
        %v2111 = vpop.f32.mrb[0].mxu0
        %2112 = vmatprep.mubr.bf16.mxu0 0
        %2113 = vmatmul.mubr.bf16.gmra.mrb[0].mxu0 %v1974
        %v2114 = vpop.f32.mrb[0].mxu0
        %v2115 = vadd.f32 0.0, %v2114
        %v2116 = vpop.f32.mrb[0].mxu0
        %v2117 = vpop.f32.mrb[0].mxu0
        %v2118 = vadd.f32 0.0, %v2117
        %v2119 = vpop.f32.mrb[0].mxu0
        %2120 = vmatprep.mubr.bf16.mxu0 0
        %2121 = vmatmul.mubr.bf16.gmra.mrb[0].mxu0 %v1977
        %v2122 = vpop.f32.mrb[0].mxu0
        %v2123 = vadd.f32 0.0, %v2122
        %v2124 = vpop.f32.mrb[0].mxu0
        %v2125 = vpop.f32.mrb[0].mxu0
        %v2126 = vadd.f32 0.0, %v2125
        %v2127 = vpop.f32.mrb[0].mxu0
        %2128 = vmatprep.mubr.bf16.mxu0 0
        %2129 = vmatmul.mubr.bf16.gmra.mrb[0].mxu0 %v1980
        %v2130 = vpop.f32.mrb[0].mxu0
        %v2131 = vadd.f32 0.0, %v2130
        %v2132 = vpop.f32.mrb[0].mxu0
        %v2133 = vpop.f32.mrb[0].mxu0
        %v2134 = vadd.f32 0.0, %v2133
        %v2135 = vpop.f32.mrb[0].mxu0
        %2136 = vmatprep.mubr.bf16.mxu0 0
        %2137 = vmatmul.mubr.bf16.gmra.mrb[0].mxu0 %v1983
        %v2138 = vpop.f32.mrb[0].mxu0
        %v2139 = vadd.f32 0.0, %v2138
        %v2140 = vpop.f32.mrb[0].mxu0
        %v2141 = vpop.f32.mrb[0].mxu0
        %v2142 = vadd.f32 0.0, %v2141
        %v2143 = vpop.f32.mrb[0].mxu0
        %2144 = vmatprep.mubr.bf16.mxu0 0
        %2145 = vmatmul.mubr.bf16.gmra.mrb[0].mxu0 %v1986
        %v2146 = vpop.f32.mrb[0].mxu0
        %v2147 = vadd.f32 0.0, %v2146
        %v2148 = vpop.f32.mrb[0].mxu0
        %v2149 = vpop.f32.mrb[0].mxu0
        %v2150 = vadd.f32 0.0, %v2149
        %v2151 = vpop.f32.mrb[0].mxu0
        %2152 = vmatprep.mubr.bf16.mxu0 0
        %2153 = vmatmul.mubr.bf16.gmra.mrb[0].mxu0 %v1989
        %v2154 = vpop.f32.mrb[0].mxu0
        %v2155 = vadd.f32 0.0, %v2154
        %v2156 = vpop.f32.mrb[0].mxu0
        %v2157 = vpop.f32.mrb[0].mxu0
        %v2158 = vadd.f32 0.0, %v2157
        %v2159 = vpop.f32.mrb[0].mxu0
        %2160 = vmatprep.mubr.bf16.mxu0 0
        %2161 = vmatmul.mubr.bf16.gmra.mrb[0].mxu0 %v1992
        %v2162 = vpop.f32.mrb[0].mxu0
        %v2163 = vadd.f32 0.0, %v2162
        %v2164 = vpop.f32.mrb[0].mxu0
        %v2165 = vpop.f32.mrb[0].mxu0
        %v2166 = vadd.f32 0.0, %v2165
        %v2167 = vpop.f32.mrb[0].mxu0
        %2168 = vmatprep.mubr.bf16.mxu0 0
        %2169 = vmatmul.mubr.bf16.gmra.mrb[0].mxu0 %v1995
        %v2170 = vpop.f32.mrb[0].mxu0
        %v2171 = vadd.f32 0.0, %v2170
        %v2172 = vpop.f32.mrb[0].mxu0
        %v2173 = vpop.f32.mrb[0].mxu0
        %v2174 = vadd.f32 0.0, %v2173
        %v2175 = vpop.f32.mrb[0].mxu0
        %2176 = vdwg.mxu0
        %v2177 = vadd.f32 %v1778, %v2035
        %v2178 = vadd.f32 %v1779, %v2038
        %v2179 = vadd.f32 %v1780, %v2043
        %v2180 = vadd.f32 %v1781, %v2046
        %v2181 = vadd.f32 %v1782, %v2051
        %v2182 = vadd.f32 %v1783, %v2054
        %v2183 = vadd.f32 %v1784, %v2059
        %v2184 = vadd.f32 %v1785, %v2062
        %v2185 = vadd.f32 %v1786, %v2067
        %v2186 = vadd.f32 %v1787, %v2070
        %v2187 = vadd.f32 %v1788, %v2075
        %v2188 = vadd.f32 %v1789, %v2078
        %v2189 = vadd.f32 %v1790, %v2083
        %v2190 = vadd.f32 %v1791, %v2086
        %v2191 = vadd.f32 %v1792, %v2091
        %v2192 = vadd.f32 %v1793, %v2094
        %v2193 = vadd.f32 %v1794, %v2099
        %v2194 = vadd.f32 %v1795, %v2102
        %v2195 = vadd.f32 %v1796, %v2107
        %v2196 = vadd.f32 %v1797, %v2110
        %v2197 = vadd.f32 %v1798, %v2115
        %v2198 = vadd.f32 %v1799, %v2118
        %v2199 = vadd.f32 %v1800, %v2123
        %v2200 = vadd.f32 %v1801, %v2126
        %v2201 = vadd.f32 %v1802, %v2131
        %v2202 = vadd.f32 %v1803, %v2134
        %v2203 = vadd.f32 %v1804, %v2139
        %v2204 = vadd.f32 %v1805, %v2142
        %v2205 = vadd.f32 %v1806, %v2147
        %v2206 = vadd.f32 %v1807, %v2150
        %v2207 = vadd.f32 %v1808, %v2155
        %v2208 = vadd.f32 %v1809, %v2158
        %v2209 = vadd.f32 %v1810, %v2163
        %v2210 = vadd.f32 %v1811, %v2166
        %v2211 = vadd.f32 %v1812, %v2171
        %v2212 = vadd.f32 %v1813, %v2174
        %v2213 = vld [vmem:[%s1814] sm:$0xf]
        %v2214 = vld [vmem:[%s1814 + $0x4] sm:$0xf]
        %v2215 = vld [vmem:[%s1814 + $0x8] sm:$0x1]
        %v2216 = vld [vmem:[%s1814 + $0xc] sm:$0xf]
        %v2217 = vld [vmem:[%s1814 + $0x10] sm:$0xf]
        %v2218 = vld [vmem:[%s1814 + $0x14] sm:$0x1]
        %v2219 = vld [vmem:[%s1814 + $0x18] sm:$0xf]
        %v2220 = vld [vmem:[%s1814 + $0x1c] sm:$0xf]
        %v2221 = vld [vmem:[%s1814 + $0x20] sm:$0x1]
        %v2222 = vld [vmem:[%s1814 + $0x24] sm:$0xf]
        %v2223 = vld [vmem:[%s1814 + $0x28] sm:$0xf]
        %v2224 = vld [vmem:[%s1814 + $0x2c] sm:$0x1]
        %v2225 = vld [vmem:[%s1814 + $0x30] sm:$0xf]
        %v2226 = vld [vmem:[%s1814 + $0x34] sm:$0xf]
        %v2227 = vld [vmem:[%s1814 + $0x38] sm:$0x1]
        %v2228 = vld [vmem:[%s1814 + $0x3c] sm:$0xf]
        %v2229 = vld [vmem:[%s1814 + $0x40] sm:$0xf]
        %v2230 = vld [vmem:[%s1814 + $0x44] sm:$0x1]
        %v2231 = vld [vmem:[%s1814 + $0x48] sm:$0xf]
        %v2232 = vld [vmem:[%s1814 + $0x4c] sm:$0xf]
        %v2233 = vld [vmem:[%s1814 + $0x50] sm:$0x1]
        %v2234 = vld [vmem:[%s1814 + $0x54] sm:$0xf]
        %v2235 = vld [vmem:[%s1814 + $0x58] sm:$0xf]
        %v2236 = vld [vmem:[%s1814 + $0x5c] sm:$0x1]
        %v2237 = vld [vmem:[%s1814 + $0x60] sm:$0xf]
        %v2238 = vld [vmem:[%s1814 + $0x64] sm:$0xf]
        %v2239 = vld [vmem:[%s1814 + $0x68] sm:$0x1]
        %v2240 = vld [vmem:[%s1814 + $0x6c] sm:$0xf]
        %v2241 = vld [vmem:[%s1814 + $0x70] sm:$0xf]
        %v2242 = vld [vmem:[%s1814 + $0x74] sm:$0x1]
        %v2243 = vld [vmem:[%s1814 + $0x78] sm:$0xf]
        %v2244 = vld [vmem:[%s1814 + $0x7c] sm:$0xf]
        %v2245 = vld [vmem:[%s1814 + $0x80] sm:$0x1]
        %v2246 = vld [vmem:[%s1814 + $0x84] sm:$0xf]
        %v2247 = vld [vmem:[%s1814 + $0x88] sm:$0xf]
        %v2248 = vld [vmem:[%s1814 + $0x8c] sm:$0x1]
        %v2249 = vld [vmem:[%s1814 + $0x90] sm:$0xf]
        %v2250 = vld [vmem:[%s1814 + $0x94] sm:$0xf]
        %v2251 = vld [vmem:[%s1814 + $0x98] sm:$0x1]
        %v2252 = vld [vmem:[%s1814 + $0x9c] sm:$0xf]
        %v2253 = vld [vmem:[%s1814 + $0xa0] sm:$0xf]
        %v2254 = vld [vmem:[%s1814 + $0xa4] sm:$0x1]
        %v2255 = vld [vmem:[%s1814 + $0xa8] sm:$0xf]
        %v2256 = vld [vmem:[%s1814 + $0xac] sm:$0xf]
        %v2257 = vld [vmem:[%s1814 + $0xb0] sm:$0x1]
        %v2258 = vld [vmem:[%s1814 + $0xb4] sm:$0xf]
        %v2259 = vld [vmem:[%s1814 + $0xb8] sm:$0xf]
        %v2260 = vld [vmem:[%s1814 + $0xbc] sm:$0x1]
        %v2261 = vld [vmem:[%s1814 + $0xc0] sm:$0xf]
        %v2262 = vld [vmem:[%s1814 + $0xc4] sm:$0xf]
        %v2263 = vld [vmem:[%s1814 + $0xc8] sm:$0x1]
        %v2264 = vld [vmem:[%s1814 + $0xcc] sm:$0xf]
        %v2265 = vld [vmem:[%s1814 + $0xd0] sm:$0xf]
        %v2266 = vld [vmem:[%s1814 + $0xd4] sm:$0x1]
        %v2268 = vshrl.u32 %v2213, 16
        %v2270 = vrot.slane %v2268, 4
        %v2271 = vshll.u32 %v2213, 16
        %v2273 = vrot.slane %v2271, 5
        %v2274 = vor.u32 %v2270, %v2273
        %v2275 = vrot.slane %v2274, 4
        %v2277 = vshll.u32 %v2214, 16
        %v2279 = vrot.slane %v2277, 5
        %v2280 = vsel %vm256, %v2275, %v2279
        %v2281 = vshrl.u32 %v2214, 16
        %v2283 = vrot.slane %v2281, 4
        %v2284 = vor.u32 %v2283, %v2279
        %v2285 = vrot.slane %v2284, 4
        %v2287 = vshll.u32 %v2215, 16
        %v2289 = vrot.slane %v2287, 5
        %v2290 = vsel %vm256, %v2285, %v2289
        %v2292 = vshrl.u32 %v2216, 16
        %v2294 = vrot.slane %v2292, 4
        %v2295 = vshll.u32 %v2216, 16
        %v2297 = vrot.slane %v2295, 5
        %v2298 = vor.u32 %v2294, %v2297
        %v2299 = vrot.slane %v2298, 4
        %v2301 = vshll.u32 %v2217, 16
        %v2303 = vrot.slane %v2301, 5
        %v2304 = vsel %vm256, %v2299, %v2303
        %v2305 = vshrl.u32 %v2217, 16
        %v2307 = vrot.slane %v2305, 4
        %v2308 = vor.u32 %v2307, %v2303
        %v2309 = vrot.slane %v2308, 4
        %v2311 = vshll.u32 %v2218, 16
        %v2313 = vrot.slane %v2311, 5
        %v2314 = vsel %vm256, %v2309, %v2313
        %v2316 = vshrl.u32 %v2219, 16
        %v2318 = vrot.slane %v2316, 4
        %v2319 = vshll.u32 %v2219, 16
        %v2321 = vrot.slane %v2319, 5
        %v2322 = vor.u32 %v2318, %v2321
        %v2323 = vrot.slane %v2322, 4
        %v2325 = vshll.u32 %v2220, 16
        %v2327 = vrot.slane %v2325, 5
        %v2328 = vsel %vm256, %v2323, %v2327
        %v2329 = vshrl.u32 %v2220, 16
        %v2331 = vrot.slane %v2329, 4
        %v2332 = vor.u32 %v2331, %v2327
        %v2333 = vrot.slane %v2332, 4
        %v2335 = vshll.u32 %v2221, 16
        %v2337 = vrot.slane %v2335, 5
        %v2338 = vsel %vm256, %v2333, %v2337
        %v2340 = vshrl.u32 %v2222, 16
        %v2342 = vrot.slane %v2340, 4
        %v2343 = vshll.u32 %v2222, 16
        %v2345 = vrot.slane %v2343, 5
        %v2346 = vor.u32 %v2342, %v2345
        %v2347 = vrot.slane %v2346, 4
        %v2349 = vshll.u32 %v2223, 16
        %v2351 = vrot.slane %v2349, 5
        %v2352 = vsel %vm256, %v2347, %v2351
        %v2353 = vshrl.u32 %v2223, 16
        %v2355 = vrot.slane %v2353, 4
        %v2356 = vor.u32 %v2355, %v2351
        %v2357 = vrot.slane %v2356, 4
        %v2359 = vshll.u32 %v2224, 16
        %v2361 = vrot.slane %v2359, 5
        %v2362 = vsel %vm256, %v2357, %v2361
        %v2364 = vshrl.u32 %v2225, 16
        %v2366 = vrot.slane %v2364, 4
        %v2367 = vshll.u32 %v2225, 16
        %v2369 = vrot.slane %v2367, 5
        %v2370 = vor.u32 %v2366, %v2369
        %v2371 = vrot.slane %v2370, 4
        %v2373 = vshll.u32 %v2226, 16
        %v2375 = vrot.slane %v2373, 5
        %v2376 = vsel %vm256, %v2371, %v2375
        %v2377 = vshrl.u32 %v2226, 16
        %v2379 = vrot.slane %v2377, 4
        %v2380 = vor.u32 %v2379, %v2375
        %v2381 = vrot.slane %v2380, 4
        %v2383 = vshll.u32 %v2227, 16
        %v2385 = vrot.slane %v2383, 5
        %v2386 = vsel %vm256, %v2381, %v2385
        %v2388 = vshrl.u32 %v2228, 16
        %v2390 = vrot.slane %v2388, 4
        %v2391 = vshll.u32 %v2228, 16
        %v2393 = vrot.slane %v2391, 5
        %v2394 = vor.u32 %v2390, %v2393
        %v2395 = vrot.slane %v2394, 4
        %v2397 = vshll.u32 %v2229, 16
        %v2399 = vrot.slane %v2397, 5
        %v2400 = vsel %vm256, %v2395, %v2399
        %v2401 = vshrl.u32 %v2229, 16
        %v2403 = vrot.slane %v2401, 4
        %v2404 = vor.u32 %v2403, %v2399
        %v2405 = vrot.slane %v2404, 4
        %v2407 = vshll.u32 %v2230, 16
        %v2409 = vrot.slane %v2407, 5
        %v2410 = vsel %vm256, %v2405, %v2409
        %v2412 = vshrl.u32 %v2231, 16
        %v2414 = vrot.slane %v2412, 4
        %v2415 = vshll.u32 %v2231, 16
        %v2417 = vrot.slane %v2415, 5
        %v2418 = vor.u32 %v2414, %v2417
        %v2419 = vrot.slane %v2418, 4
        %v2421 = vshll.u32 %v2232, 16
        %v2423 = vrot.slane %v2421, 5
        %v2424 = vsel %vm256, %v2419, %v2423
        %v2425 = vshrl.u32 %v2232, 16
        %v2427 = vrot.slane %v2425, 4
        %v2428 = vor.u32 %v2427, %v2423
        %v2429 = vrot.slane %v2428, 4
        %v2431 = vshll.u32 %v2233, 16
        %v2433 = vrot.slane %v2431, 5
        %v2434 = vsel %vm256, %v2429, %v2433
        %v2436 = vshrl.u32 %v2234, 16
        %v2438 = vrot.slane %v2436, 4
        %v2439 = vshll.u32 %v2234, 16
        %v2441 = vrot.slane %v2439, 5
        %v2442 = vor.u32 %v2438, %v2441
        %v2443 = vrot.slane %v2442, 4
        %v2445 = vshll.u32 %v2235, 16
        %v2447 = vrot.slane %v2445, 5
        %v2448 = vsel %vm256, %v2443, %v2447
        %v2449 = vshrl.u32 %v2235, 16
        %v2451 = vrot.slane %v2449, 4
        %v2452 = vor.u32 %v2451, %v2447
        %v2453 = vrot.slane %v2452, 4
        %v2455 = vshll.u32 %v2236, 16
        %v2457 = vrot.slane %v2455, 5
        %v2458 = vsel %vm256, %v2453, %v2457
        %v2460 = vshrl.u32 %v2237, 16
        %v2462 = vrot.slane %v2460, 4
        %v2463 = vshll.u32 %v2237, 16
        %v2465 = vrot.slane %v2463, 5
        %v2466 = vor.u32 %v2462, %v2465
        %v2467 = vrot.slane %v2466, 4
        %v2469 = vshll.u32 %v2238, 16
        %v2471 = vrot.slane %v2469, 5
        %v2472 = vsel %vm256, %v2467, %v2471
        %v2473 = vshrl.u32 %v2238, 16
        %v2475 = vrot.slane %v2473, 4
        %v2476 = vor.u32 %v2475, %v2471
        %v2477 = vrot.slane %v2476, 4
        %v2479 = vshll.u32 %v2239, 16
        %v2481 = vrot.slane %v2479, 5
        %v2482 = vsel %vm256, %v2477, %v2481
        %v2484 = vshrl.u32 %v2240, 16
        %v2486 = vrot.slane %v2484, 4
        %v2487 = vshll.u32 %v2240, 16
        %v2489 = vrot.slane %v2487, 5
        %v2490 = vor.u32 %v2486, %v2489
        %v2491 = vrot.slane %v2490, 4
        %v2493 = vshll.u32 %v2241, 16
        %v2495 = vrot.slane %v2493, 5
        %v2496 = vsel %vm256, %v2491, %v2495
        %v2497 = vshrl.u32 %v2241, 16
        %v2499 = vrot.slane %v2497, 4
        %v2500 = vor.u32 %v2499, %v2495
        %v2501 = vrot.slane %v2500, 4
        %v2503 = vshll.u32 %v2242, 16
        %v2505 = vrot.slane %v2503, 5
        %v2506 = vsel %vm256, %v2501, %v2505
        %v2508 = vshrl.u32 %v2243, 16
        %v2510 = vrot.slane %v2508, 4
        %v2511 = vshll.u32 %v2243, 16
        %v2513 = vrot.slane %v2511, 5
        %v2514 = vor.u32 %v2510, %v2513
        %v2515 = vrot.slane %v2514, 4
        %v2517 = vshll.u32 %v2244, 16
        %v2519 = vrot.slane %v2517, 5
        %v2520 = vsel %vm256, %v2515, %v2519
        %v2521 = vshrl.u32 %v2244, 16
        %v2523 = vrot.slane %v2521, 4
        %v2524 = vor.u32 %v2523, %v2519
        %v2525 = vrot.slane %v2524, 4
        %v2527 = vshll.u32 %v2245, 16
        %v2529 = vrot.slane %v2527, 5
        %v2530 = vsel %vm256, %v2525, %v2529
        %v2532 = vshrl.u32 %v2246, 16
        %v2534 = vrot.slane %v2532, 4
        %v2535 = vshll.u32 %v2246, 16
        %v2537 = vrot.slane %v2535, 5
        %v2538 = vor.u32 %v2534, %v2537
        %v2539 = vrot.slane %v2538, 4
        %v2541 = vshll.u32 %v2247, 16
        %v2543 = vrot.slane %v2541, 5
        %v2544 = vsel %vm256, %v2539, %v2543
        %v2545 = vshrl.u32 %v2247, 16
        %v2547 = vrot.slane %v2545, 4
        %v2548 = vor.u32 %v2547, %v2543
        %v2549 = vrot.slane %v2548, 4
        %v2551 = vshll.u32 %v2248, 16
        %v2553 = vrot.slane %v2551, 5
        %v2554 = vsel %vm256, %v2549, %v2553
        %v2556 = vshrl.u32 %v2249, 16
        %v2558 = vrot.slane %v2556, 4
        %v2559 = vshll.u32 %v2249, 16
        %v2561 = vrot.slane %v2559, 5
        %v2562 = vor.u32 %v2558, %v2561
        %v2563 = vrot.slane %v2562, 4
        %v2565 = vshll.u32 %v2250, 16
        %v2567 = vrot.slane %v2565, 5
        %v2568 = vsel %vm256, %v2563, %v2567
        %v2569 = vshrl.u32 %v2250, 16
        %v2571 = vrot.slane %v2569, 4
        %v2572 = vor.u32 %v2571, %v2567
        %v2573 = vrot.slane %v2572, 4
        %v2575 = vshll.u32 %v2251, 16
        %v2577 = vrot.slane %v2575, 5
        %v2578 = vsel %vm256, %v2573, %v2577
        %v2580 = vshrl.u32 %v2252, 16
        %v2582 = vrot.slane %v2580, 4
        %v2583 = vshll.u32 %v2252, 16
        %v2585 = vrot.slane %v2583, 5
        %v2586 = vor.u32 %v2582, %v2585
        %v2587 = vrot.slane %v2586, 4
        %v2589 = vshll.u32 %v2253, 16
        %v2591 = vrot.slane %v2589, 5
        %v2592 = vsel %vm256, %v2587, %v2591
        %v2593 = vshrl.u32 %v2253, 16
        %v2595 = vrot.slane %v2593, 4
        %v2596 = vor.u32 %v2595, %v2591
        %v2597 = vrot.slane %v2596, 4
        %v2599 = vshll.u32 %v2254, 16
        %v2601 = vrot.slane %v2599, 5
        %v2602 = vsel %vm256, %v2597, %v2601
        %v2604 = vshrl.u32 %v2255, 16
        %v2606 = vrot.slane %v2604, 4
        %v2607 = vshll.u32 %v2255, 16
        %v2609 = vrot.slane %v2607, 5
        %v2610 = vor.u32 %v2606, %v2609
        %v2611 = vrot.slane %v2610, 4
        %v2613 = vshll.u32 %v2256, 16
        %v2615 = vrot.slane %v2613, 5
        %v2616 = vsel %vm256, %v2611, %v2615
        %v2617 = vshrl.u32 %v2256, 16
        %v2619 = vrot.slane %v2617, 4
        %v2620 = vor.u32 %v2619, %v2615
        %v2621 = vrot.slane %v2620, 4
        %v2623 = vshll.u32 %v2257, 16
        %v2625 = vrot.slane %v2623, 5
        %v2626 = vsel %vm256, %v2621, %v2625
        %v2628 = vshrl.u32 %v2258, 16
        %v2630 = vrot.slane %v2628, 4
        %v2631 = vshll.u32 %v2258, 16
        %v2633 = vrot.slane %v2631, 5
        %v2634 = vor.u32 %v2630, %v2633
        %v2635 = vrot.slane %v2634, 4
        %v2637 = vshll.u32 %v2259, 16
        %v2639 = vrot.slane %v2637, 5
        %v2640 = vsel %vm256, %v2635, %v2639
        %v2641 = vshrl.u32 %v2259, 16
        %v2643 = vrot.slane %v2641, 4
        %v2644 = vor.u32 %v2643, %v2639
        %v2645 = vrot.slane %v2644, 4
        %v2647 = vshll.u32 %v2260, 16
        %v2649 = vrot.slane %v2647, 5
        %v2650 = vsel %vm256, %v2645, %v2649
        %v2652 = vshrl.u32 %v2261, 16
        %v2654 = vrot.slane %v2652, 4
        %v2655 = vshll.u32 %v2261, 16
        %v2657 = vrot.slane %v2655, 5
        %v2658 = vor.u32 %v2654, %v2657
        %v2659 = vrot.slane %v2658, 4
        %v2661 = vshll.u32 %v2262, 16
        %v2663 = vrot.slane %v2661, 5
        %v2664 = vsel %vm256, %v2659, %v2663
        %v2665 = vshrl.u32 %v2262, 16
        %v2667 = vrot.slane %v2665, 4
        %v2668 = vor.u32 %v2667, %v2663
        %v2669 = vrot.slane %v2668, 4
        %v2671 = vshll.u32 %v2263, 16
        %v2673 = vrot.slane %v2671, 5
        %v2674 = vsel %vm256, %v2669, %v2673
        %v2676 = vshrl.u32 %v2264, 16
        %v2678 = vrot.slane %v2676, 4
        %v2679 = vshll.u32 %v2264, 16
        %v2681 = vrot.slane %v2679, 5
        %v2682 = vor.u32 %v2678, %v2681
        %v2683 = vrot.slane %v2682, 4
        %v2685 = vshll.u32 %v2265, 16
        %v2687 = vrot.slane %v2685, 5
        %v2688 = vsel %vm256, %v2683, %v2687
        %v2689 = vshrl.u32 %v2265, 16
        %v2691 = vrot.slane %v2689, 4
        %v2692 = vor.u32 %v2691, %v2687
        %v2693 = vrot.slane %v2692, 4
        %v2695 = vshll.u32 %v2266, 16
        %v2697 = vrot.slane %v2695, 5
        %v2698 = vsel %vm256, %v2693, %v2697
        %s2699 = scalar_lea.vmem %s1, 8
        %v2700 = vld [vmem:[%s2699] sm:$0x3]
        %v2701 = vunpack.c.l.b16 %v2280
        %v2702 = vunpack.c.l.b16 %v2290
        %v2703 = vunpack.c.l.b16 %v2304
        %v2704 = vunpack.c.l.b16 %v2314
        %v2705 = vunpack.c.l.b16 %v2328
        %v2706 = vunpack.c.l.b16 %v2338
        %v2707 = vunpack.c.l.b16 %v2352
        %v2708 = vunpack.c.l.b16 %v2362
        %v2709 = vunpack.c.l.b16 %v2376
        %v2710 = vunpack.c.l.b16 %v2386
        %v2711 = vunpack.c.l.b16 %v2400
        %v2712 = vunpack.c.l.b16 %v2410
        %v2713 = vunpack.c.l.b16 %v2424
        %v2714 = vunpack.c.l.b16 %v2434
        %v2715 = vunpack.c.l.b16 %v2448
        %v2716 = vunpack.c.l.b16 %v2458
        %v2717 = vunpack.c.l.b16 %v2472
        %v2718 = vunpack.c.l.b16 %v2482
        %v2719 = vunpack.c.l.b16 %v2496
        %v2720 = vunpack.c.l.b16 %v2506
        %v2721 = vunpack.c.l.b16 %v2520
        %v2722 = vunpack.c.l.b16 %v2530
        %v2723 = vunpack.c.l.b16 %v2544
        %v2724 = vunpack.c.l.b16 %v2554
        %v2725 = vunpack.c.l.b16 %v2568
        %v2726 = vunpack.c.l.b16 %v2578
        %v2727 = vunpack.c.l.b16 %v2592
        %v2728 = vunpack.c.l.b16 %v2602
        %v2729 = vunpack.c.l.b16 %v2616
        %v2730 = vunpack.c.l.b16 %v2626
        %v2731 = vunpack.c.l.b16 %v2640
        %v2732 = vunpack.c.l.b16 %v2650
        %v2733 = vunpack.c.l.b16 %v2664
        %v2734 = vunpack.c.l.b16 %v2674
        %v2735 = vunpack.c.l.b16 %v2688
        %v2736 = vunpack.c.l.b16 %v2698
        %v2737 = vpack.c.b16 %v2702, %v2701
        %v2738 = vpack.c.b16 %v2704, %v2703
        %v2739 = vpack.c.b16 %v2706, %v2705
        %v2740 = vpack.c.b16 %v2708, %v2707
        %v2741 = vpack.c.b16 %v2710, %v2709
        %v2742 = vpack.c.b16 %v2712, %v2711
        %v2743 = vpack.c.b16 %v2714, %v2713
        %v2744 = vpack.c.b16 %v2716, %v2715
        %v2745 = vpack.c.b16 %v2718, %v2717
        %v2746 = vpack.c.b16 %v2720, %v2719
        %v2747 = vpack.c.b16 %v2722, %v2721
        %v2748 = vpack.c.b16 %v2724, %v2723
        %v2749 = vpack.c.b16 %v2726, %v2725
        %v2750 = vpack.c.b16 %v2728, %v2727
        %v2751 = vpack.c.b16 %v2730, %v2729
        %v2752 = vpack.c.b16 %v2732, %v2731
        %v2753 = vpack.c.b16 %v2734, %v2733
        %v2754 = vpack.c.b16 %v2736, %v2735
        %v2756 = vsel %vm745, %v2737, 0
        %v2759 = vsel %vm745, %v2738, 0
        %v2762 = vsel %vm745, %v2739, 0
        %v2765 = vsel %vm745, %v2740, 0
        %v2768 = vsel %vm745, %v2741, 0
        %v2771 = vsel %vm745, %v2742, 0
        %v2774 = vsel %vm745, %v2743, 0
        %v2777 = vsel %vm745, %v2744, 0
        %v2780 = vsel %vm745, %v2745, 0
        %v2783 = vsel %vm745, %v2746, 0
        %v2786 = vsel %vm745, %v2747, 0
        %v2789 = vsel %vm745, %v2748, 0
        %v2792 = vsel %vm745, %v2749, 0
        %v2795 = vsel %vm745, %v2750, 0
        %v2798 = vsel %vm745, %v2751, 0
        %v2801 = vsel %vm745, %v2752, 0
        %v2804 = vsel %vm745, %v2753, 0
        %v2807 = vsel %vm745, %v2754, 0
        %v2810 = vsel %vm800, %v2700, 0
        %2812 = vmatprep.subr.bf16.mxu0 0
        %2813 = vmatpush1.bf16.msra.mxu0 %v2810
        %2814 = vmatprep.subr.bf16.mxu0 0
        %2815 = vmatpush1.bf16.msra.mxu0 0
        %2816 = vmatprep.subr.bf16.mxu0 0
        %2817 = vmatpush1.bf16.msra.mxu0 0
        %2818 = vmatprep.subr.bf16.mxu0 0
        %2819 = vmatpush1.bf16.msra.mxu0 0
        %2820 = vmatprep.subr.bf16.mxu0 0
        %2821 = vmatpush1.bf16.msra.mxu0 0
        %2822 = vmatprep.subr.bf16.mxu0 0
        %2823 = vmatpush1.bf16.msra.mxu0 0
        %2824 = vmatprep.subr.bf16.mxu0 0
        %2825 = vmatpush1.bf16.msra.mxu0 0
        %2826 = vmatprep.subr.bf16.mxu0 0
        %2827 = vmatpush1.bf16.msra.mxu0 0
        %2828 = vmatprep.subr.bf16.mxu0 0
        %2829 = vmatpush1.bf16.msra.mxu0 0
        %2830 = vmatprep.subr.bf16.mxu0 0
        %2831 = vmatpush1.bf16.msra.mxu0 0
        %2832 = vmatprep.subr.bf16.mxu0 0
        %2833 = vmatpush1.bf16.msra.mxu0 0
        %2834 = vmatprep.subr.bf16.mxu0 0
        %2835 = vmatpush1.bf16.msra.mxu0 0
        %2836 = vmatprep.subr.bf16.mxu0 0
        %2837 = vmatpush1.bf16.msra.mxu0 0
        %2838 = vmatprep.subr.bf16.mxu0 0
        %2839 = vmatpush1.bf16.msra.mxu0 0
        %2840 = vmatprep.subr.bf16.mxu0 0
        %2841 = vmatpush1.bf16.msra.mxu0 0
        %2842 = vmatprep.subr.bf16.mxu0 0
        %2843 = vmatpush1.bf16.msra.mxu0 0
        %2844 = vmatprep.mubr.bf16.mxu0 0
        %2845 = vmatmul.mubr.bf16.gmra.mrb[0].mxu0 %v2756
        %v2846 = vpop.f32.mrb[0].mxu0
        %v2847 = vadd.f32 0.0, %v2846
        %v2848 = vpop.f32.mrb[0].mxu0
        %v2849 = vpop.f32.mrb[0].mxu0
        %v2850 = vadd.f32 0.0, %v2849
        %v2851 = vpop.f32.mrb[0].mxu0
        %2852 = vmatprep.mubr.bf16.mxu0 0
        %2853 = vmatmul.mubr.bf16.gmra.mrb[0].mxu0 %v2759
        %v2854 = vpop.f32.mrb[0].mxu0
        %v2855 = vadd.f32 0.0, %v2854
        %v2856 = vpop.f32.mrb[0].mxu0
        %v2857 = vpop.f32.mrb[0].mxu0
        %v2858 = vadd.f32 0.0, %v2857
        %v2859 = vpop.f32.mrb[0].mxu0
        %2860 = vmatprep.mubr.bf16.mxu0 0
        %2861 = vmatmul.mubr.bf16.gmra.mrb[0].mxu0 %v2762
        %v2862 = vpop.f32.mrb[0].mxu0
        %v2863 = vadd.f32 0.0, %v2862
        %v2864 = vpop.f32.mrb[0].mxu0
        %v2865 = vpop.f32.mrb[0].mxu0
        %v2866 = vadd.f32 0.0, %v2865
        %v2867 = vpop.f32.mrb[0].mxu0
        %2868 = vmatprep.mubr.bf16.mxu0 0
        %2869 = vmatmul.mubr.bf16.gmra.mrb[0].mxu0 %v2765
        %v2870 = vpop.f32.mrb[0].mxu0
        %v2871 = vadd.f32 0.0, %v2870
        %v2872 = vpop.f32.mrb[0].mxu0
        %v2873 = vpop.f32.mrb[0].mxu0
        %v2874 = vadd.f32 0.0, %v2873
        %v2875 = vpop.f32.mrb[0].mxu0
        %2876 = vmatprep.mubr.bf16.mxu0 0
        %2877 = vmatmul.mubr.bf16.gmra.mrb[0].mxu0 %v2768
        %v2878 = vpop.f32.mrb[0].mxu0
        %v2879 = vadd.f32 0.0, %v2878
        %v2880 = vpop.f32.mrb[0].mxu0
        %v2881 = vpop.f32.mrb[0].mxu0
        %v2882 = vadd.f32 0.0, %v2881
        %v2883 = vpop.f32.mrb[0].mxu0
        %2884 = vmatprep.mubr.bf16.mxu0 0
        %2885 = vmatmul.mubr.bf16.gmra.mrb[0].mxu0 %v2771
        %v2886 = vpop.f32.mrb[0].mxu0
        %v2887 = vadd.f32 0.0, %v2886
        %v2888 = vpop.f32.mrb[0].mxu0
        %v2889 = vpop.f32.mrb[0].mxu0
        %v2890 = vadd.f32 0.0, %v2889
        %v2891 = vpop.f32.mrb[0].mxu0
        %2892 = vmatprep.mubr.bf16.mxu0 0
        %2893 = vmatmul.mubr.bf16.gmra.mrb[0].mxu0 %v2774
        %v2894 = vpop.f32.mrb[0].mxu0
        %v2895 = vadd.f32 0.0, %v2894
        %v2896 = vpop.f32.mrb[0].mxu0
        %v2897 = vpop.f32.mrb[0].mxu0
        %v2898 = vadd.f32 0.0, %v2897
        %v2899 = vpop.f32.mrb[0].mxu0
        %2900 = vmatprep.mubr.bf16.mxu0 0
        %2901 = vmatmul.mubr.bf16.gmra.mrb[0].mxu0 %v2777
        %v2902 = vpop.f32.mrb[0].mxu0
        %v2903 = vadd.f32 0.0, %v2902
        %v2904 = vpop.f32.mrb[0].mxu0
        %v2905 = vpop.f32.mrb[0].mxu0
        %v2906 = vadd.f32 0.0, %v2905
        %v2907 = vpop.f32.mrb[0].mxu0
        %2908 = vmatprep.mubr.bf16.mxu0 0
        %2909 = vmatmul.mubr.bf16.gmra.mrb[0].mxu0 %v2780
        %v2910 = vpop.f32.mrb[0].mxu0
        %v2911 = vadd.f32 0.0, %v2910
        %v2912 = vpop.f32.mrb[0].mxu0
        %v2913 = vpop.f32.mrb[0].mxu0
        %v2914 = vadd.f32 0.0, %v2913
        %v2915 = vpop.f32.mrb[0].mxu0
        %2916 = vmatprep.mubr.bf16.mxu0 0
        %2917 = vmatmul.mubr.bf16.gmra.mrb[0].mxu0 %v2783
        %v2918 = vpop.f32.mrb[0].mxu0
        %v2919 = vadd.f32 0.0, %v2918
        %v2920 = vpop.f32.mrb[0].mxu0
        %v2921 = vpop.f32.mrb[0].mxu0
        %v2922 = vadd.f32 0.0, %v2921
        %v2923 = vpop.f32.mrb[0].mxu0
        %2924 = vmatprep.mubr.bf16.mxu0 0
        %2925 = vmatmul.mubr.bf16.gmra.mrb[0].mxu0 %v2786
        %v2926 = vpop.f32.mrb[0].mxu0
        %v2927 = vadd.f32 0.0, %v2926
        %v2928 = vpop.f32.mrb[0].mxu0
        %v2929 = vpop.f32.mrb[0].mxu0
        %v2930 = vadd.f32 0.0, %v2929
        %v2931 = vpop.f32.mrb[0].mxu0
        %2932 = vmatprep.mubr.bf16.mxu0 0
        %2933 = vmatmul.mubr.bf16.gmra.mrb[0].mxu0 %v2789
        %v2934 = vpop.f32.mrb[0].mxu0
        %v2935 = vadd.f32 0.0, %v2934
        %v2936 = vpop.f32.mrb[0].mxu0
        %v2937 = vpop.f32.mrb[0].mxu0
        %v2938 = vadd.f32 0.0, %v2937
        %v2939 = vpop.f32.mrb[0].mxu0
        %2940 = vmatprep.mubr.bf16.mxu0 0
        %2941 = vmatmul.mubr.bf16.gmra.mrb[0].mxu0 %v2792
        %v2942 = vpop.f32.mrb[0].mxu0
        %v2943 = vadd.f32 0.0, %v2942
        %v2944 = vpop.f32.mrb[0].mxu0
        %v2945 = vpop.f32.mrb[0].mxu0
        %v2946 = vadd.f32 0.0, %v2945
        %v2947 = vpop.f32.mrb[0].mxu0
        %2948 = vmatprep.mubr.bf16.mxu0 0
        %2949 = vmatmul.mubr.bf16.gmra.mrb[0].mxu0 %v2795
        %v2950 = vpop.f32.mrb[0].mxu0
        %v2951 = vadd.f32 0.0, %v2950
        %v2952 = vpop.f32.mrb[0].mxu0
        %v2953 = vpop.f32.mrb[0].mxu0
        %v2954 = vadd.f32 0.0, %v2953
        %v2955 = vpop.f32.mrb[0].mxu0
        %2956 = vmatprep.mubr.bf16.mxu0 0
        %2957 = vmatmul.mubr.bf16.gmra.mrb[0].mxu0 %v2798
        %v2958 = vpop.f32.mrb[0].mxu0
        %v2959 = vadd.f32 0.0, %v2958
        %v2960 = vpop.f32.mrb[0].mxu0
        %v2961 = vpop.f32.mrb[0].mxu0
        %v2962 = vadd.f32 0.0, %v2961
        %v2963 = vpop.f32.mrb[0].mxu0
        %2964 = vmatprep.mubr.bf16.mxu0 0
        %2965 = vmatmul.mubr.bf16.gmra.mrb[0].mxu0 %v2801
        %v2966 = vpop.f32.mrb[0].mxu0
        %v2967 = vadd.f32 0.0, %v2966
        %v2968 = vpop.f32.mrb[0].mxu0
        %v2969 = vpop.f32.mrb[0].mxu0
        %v2970 = vadd.f32 0.0, %v2969
        %v2971 = vpop.f32.mrb[0].mxu0
        %2972 = vmatprep.mubr.bf16.mxu0 0
        %2973 = vmatmul.mubr.bf16.gmra.mrb[0].mxu0 %v2804
        %v2974 = vpop.f32.mrb[0].mxu0
        %v2975 = vadd.f32 0.0, %v2974
        %v2976 = vpop.f32.mrb[0].mxu0
        %v2977 = vpop.f32.mrb[0].mxu0
        %v2978 = vadd.f32 0.0, %v2977
        %v2979 = vpop.f32.mrb[0].mxu0
        %2980 = vmatprep.mubr.bf16.mxu0 0
        %2981 = vmatmul.mubr.bf16.gmra.mrb[0].mxu0 %v2807
        %v2982 = vpop.f32.mrb[0].mxu0
        %v2983 = vadd.f32 0.0, %v2982
        %v2984 = vpop.f32.mrb[0].mxu0
        %v2985 = vpop.f32.mrb[0].mxu0
        %v2986 = vadd.f32 0.0, %v2985
        %v2987 = vpop.f32.mrb[0].mxu0
        %2988 = vdwg.mxu0
        %v2989 = vadd.f32 %v2177, %v2847
        %v2990 = vadd.f32 %v2178, %v2850
        %v2991 = vadd.f32 %v2179, %v2855
        %v2992 = vadd.f32 %v2180, %v2858
        %v2993 = vadd.f32 %v2181, %v2863
        %v2994 = vadd.f32 %v2182, %v2866
        %v2995 = vadd.f32 %v2183, %v2871
        %v2996 = vadd.f32 %v2184, %v2874
        %v2997 = vadd.f32 %v2185, %v2879
        %v2998 = vadd.f32 %v2186, %v2882
        %v2999 = vadd.f32 %v2187, %v2887
        %v3000 = vadd.f32 %v2188, %v2890
        %v3001 = vadd.f32 %v2189, %v2895
        %v3002 = vadd.f32 %v2190, %v2898
        %v3003 = vadd.f32 %v2191, %v2903
        %v3004 = vadd.f32 %v2192, %v2906
        %v3005 = vadd.f32 %v2193, %v2911
        %v3006 = vadd.f32 %v2194, %v2914
        %v3007 = vadd.f32 %v2195, %v2919
        %v3008 = vadd.f32 %v2196, %v2922
        %v3009 = vadd.f32 %v2197, %v2927
        %v3010 = vadd.f32 %v2198, %v2930
        %v3011 = vadd.f32 %v2199, %v2935
        %v3012 = vadd.f32 %v2200, %v2938
        %v3013 = vadd.f32 %v2201, %v2943
        %v3014 = vadd.f32 %v2202, %v2946
        %v3015 = vadd.f32 %v2203, %v2951
        %v3016 = vadd.f32 %v2204, %v2954
        %v3017 = vadd.f32 %v2205, %v2959
        %v3018 = vadd.f32 %v2206, %v2962
        %v3019 = vadd.f32 %v2207, %v2967
        %v3020 = vadd.f32 %v2208, %v2970
        %v3021 = vadd.f32 %v2209, %v2975
        %v3022 = vadd.f32 %v2210, %v2978
        %v3023 = vadd.f32 %v2211, %v2983
        %v3024 = vadd.f32 %v2212, %v2986
        %v3025 = vld [vmem:[%s1814] sm:$0xe]
        %v3026 = vld [vmem:[%s1814 + $0xc] sm:$0xe]
        %v3027 = vld [vmem:[%s1814 + $0x18] sm:$0xe]
        %v3028 = vld [vmem:[%s1814 + $0x24] sm:$0xe]
        %v3029 = vld [vmem:[%s1814 + $0x30] sm:$0xe]
        %v3030 = vld [vmem:[%s1814 + $0x3c] sm:$0xe]
        %v3031 = vld [vmem:[%s1814 + $0x48] sm:$0xe]
        %v3032 = vld [vmem:[%s1814 + $0x54] sm:$0xe]
        %v3033 = vld [vmem:[%s1814 + $0x60] sm:$0xe]
        %v3034 = vld [vmem:[%s1814 + $0x6c] sm:$0xe]
        %v3035 = vld [vmem:[%s1814 + $0x78] sm:$0xe]
        %v3036 = vld [vmem:[%s1814 + $0x84] sm:$0xe]
        %v3037 = vld [vmem:[%s1814 + $0x90] sm:$0xe]
        %v3038 = vld [vmem:[%s1814 + $0x9c] sm:$0xe]
        %v3039 = vld [vmem:[%s1814 + $0xa8] sm:$0xe]
        %v3040 = vld [vmem:[%s1814 + $0xb4] sm:$0xe]
        %v3041 = vld [vmem:[%s1814 + $0xc0] sm:$0xe]
        %v3042 = vld [vmem:[%s1814 + $0xcc] sm:$0xe]
        %v3097 = vrot.slane %v3025, 5
        %v3098 = vrot.slane %v3097, 4
        %v3099 = vrot.slane %v2214, 5
        %v3100 = vsel %vm1361, %v3098, %v3099
        %v3101 = vrot.slane %v3099, 4
        %v3102 = vrot.slane %v2215, 5
        %v3103 = vsel %vm1361, %v3101, %v3102
        %v3104 = vrot.slane %v3026, 5
        %v3105 = vrot.slane %v3104, 4
        %v3106 = vrot.slane %v2217, 5
        %v3107 = vsel %vm1361, %v3105, %v3106
        %v3108 = vrot.slane %v3106, 4
        %v3109 = vrot.slane %v2218, 5
        %v3110 = vsel %vm1361, %v3108, %v3109
        %v3111 = vrot.slane %v3027, 5
        %v3112 = vrot.slane %v3111, 4
        %v3113 = vrot.slane %v2220, 5
        %v3114 = vsel %vm1361, %v3112, %v3113
        %v3115 = vrot.slane %v3113, 4
        %v3116 = vrot.slane %v2221, 5
        %v3117 = vsel %vm1361, %v3115, %v3116
        %v3118 = vrot.slane %v3028, 5
        %v3119 = vrot.slane %v3118, 4
        %v3120 = vrot.slane %v2223, 5
        %v3121 = vsel %vm1361, %v3119, %v3120
        %v3122 = vrot.slane %v3120, 4
        %v3123 = vrot.slane %v2224, 5
        %v3124 = vsel %vm1361, %v3122, %v3123
        %v3125 = vrot.slane %v3029, 5
        %v3126 = vrot.slane %v3125, 4
        %v3127 = vrot.slane %v2226, 5
        %v3128 = vsel %vm1361, %v3126, %v3127
        %v3129 = vrot.slane %v3127, 4
        %v3130 = vrot.slane %v2227, 5
        %v3131 = vsel %vm1361, %v3129, %v3130
        %v3132 = vrot.slane %v3030, 5
        %v3133 = vrot.slane %v3132, 4
        %v3134 = vrot.slane %v2229, 5
        %v3135 = vsel %vm1361, %v3133, %v3134
        %v3136 = vrot.slane %v3134, 4
        %v3137 = vrot.slane %v2230, 5
        %v3138 = vsel %vm1361, %v3136, %v3137
        %v3139 = vrot.slane %v3031, 5
        %v3140 = vrot.slane %v3139, 4
        %v3141 = vrot.slane %v2232, 5
        %v3142 = vsel %vm1361, %v3140, %v3141
        %v3143 = vrot.slane %v3141, 4
        %v3144 = vrot.slane %v2233, 5
        %v3145 = vsel %vm1361, %v3143, %v3144
        %v3146 = vrot.slane %v3032, 5
        %v3147 = vrot.slane %v3146, 4
        %v3148 = vrot.slane %v2235, 5
        %v3149 = vsel %vm1361, %v3147, %v3148
        %v3150 = vrot.slane %v3148, 4
        %v3151 = vrot.slane %v2236, 5
        %v3152 = vsel %vm1361, %v3150, %v3151
        %v3153 = vrot.slane %v3033, 5
        %v3154 = vrot.slane %v3153, 4
        %v3155 = vrot.slane %v2238, 5
        %v3156 = vsel %vm1361, %v3154, %v3155
        %v3157 = vrot.slane %v3155, 4
        %v3158 = vrot.slane %v2239, 5
        %v3159 = vsel %vm1361, %v3157, %v3158
        %v3160 = vrot.slane %v3034, 5
        %v3161 = vrot.slane %v3160, 4
        %v3162 = vrot.slane %v2241, 5
        %v3163 = vsel %vm1361, %v3161, %v3162
        %v3164 = vrot.slane %v3162, 4
        %v3165 = vrot.slane %v2242, 5
        %v3166 = vsel %vm1361, %v3164, %v3165
        %v3167 = vrot.slane %v3035, 5
        %v3168 = vrot.slane %v3167, 4
        %v3169 = vrot.slane %v2244, 5
        %v3170 = vsel %vm1361, %v3168, %v3169
        %v3171 = vrot.slane %v3169, 4
        %v3172 = vrot.slane %v2245, 5
        %v3173 = vsel %vm1361, %v3171, %v3172
        %v3174 = vrot.slane %v3036, 5
        %v3175 = vrot.slane %v3174, 4
        %v3176 = vrot.slane %v2247, 5
        %v3177 = vsel %vm1361, %v3175, %v3176
        %v3178 = vrot.slane %v3176, 4
        %v3179 = vrot.slane %v2248, 5
        %v3180 = vsel %vm1361, %v3178, %v3179
        %v3181 = vrot.slane %v3037, 5
        %v3182 = vrot.slane %v3181, 4
        %v3183 = vrot.slane %v2250, 5
        %v3184 = vsel %vm1361, %v3182, %v3183
        %v3185 = vrot.slane %v3183, 4
        %v3186 = vrot.slane %v2251, 5
        %v3187 = vsel %vm1361, %v3185, %v3186
        %v3188 = vrot.slane %v3038, 5
        %v3189 = vrot.slane %v3188, 4
        %v3190 = vrot.slane %v2253, 5
        %v3191 = vsel %vm1361, %v3189, %v3190
        %v3192 = vrot.slane %v3190, 4
        %v3193 = vrot.slane %v2254, 5
        %v3194 = vsel %vm1361, %v3192, %v3193
        %v3195 = vrot.slane %v3039, 5
        %v3196 = vrot.slane %v3195, 4
        %v3197 = vrot.slane %v2256, 5
        %v3198 = vsel %vm1361, %v3196, %v3197
        %v3199 = vrot.slane %v3197, 4
        %v3200 = vrot.slane %v2257, 5
        %v3201 = vsel %vm1361, %v3199, %v3200
        %v3202 = vrot.slane %v3040, 5
        %v3203 = vrot.slane %v3202, 4
        %v3204 = vrot.slane %v2259, 5
        %v3205 = vsel %vm1361, %v3203, %v3204
        %v3206 = vrot.slane %v3204, 4
        %v3207 = vrot.slane %v2260, 5
        %v3208 = vsel %vm1361, %v3206, %v3207
        %v3209 = vrot.slane %v3041, 5
        %v3210 = vrot.slane %v3209, 4
        %v3211 = vrot.slane %v2262, 5
        %v3212 = vsel %vm1361, %v3210, %v3211
        %v3213 = vrot.slane %v3211, 4
        %v3214 = vrot.slane %v2263, 5
        %v3215 = vsel %vm1361, %v3213, %v3214
        %v3216 = vrot.slane %v3042, 5
        %v3217 = vrot.slane %v3216, 4
        %v3218 = vrot.slane %v2265, 5
        %v3219 = vsel %vm1361, %v3217, %v3218
        %v3220 = vrot.slane %v3218, 4
        %v3221 = vrot.slane %v2266, 5
        %v3222 = vsel %vm1361, %v3220, %v3221
        %s3223 = scalar_lea.vmem %s1, 10
        %v3224 = vld [vmem:[%s3223] sm:$0x3]
        %v3225 = vunpack.c.l.b16 %v3100
        %v3226 = vunpack.c.l.b16 %v3103
        %v3227 = vunpack.c.l.b16 %v3107
        %v3228 = vunpack.c.l.b16 %v3110
        %v3229 = vunpack.c.l.b16 %v3114
        %v3230 = vunpack.c.l.b16 %v3117
        %v3231 = vunpack.c.l.b16 %v3121
        %v3232 = vunpack.c.l.b16 %v3124
        %v3233 = vunpack.c.l.b16 %v3128
        %v3234 = vunpack.c.l.b16 %v3131
        %v3235 = vunpack.c.l.b16 %v3135
        %v3236 = vunpack.c.l.b16 %v3138
        %v3237 = vunpack.c.l.b16 %v3142
        %v3238 = vunpack.c.l.b16 %v3145
        %v3239 = vunpack.c.l.b16 %v3149
        %v3240 = vunpack.c.l.b16 %v3152
        %v3241 = vunpack.c.l.b16 %v3156
        %v3242 = vunpack.c.l.b16 %v3159
        %v3243 = vunpack.c.l.b16 %v3163
        %v3244 = vunpack.c.l.b16 %v3166
        %v3245 = vunpack.c.l.b16 %v3170
        %v3246 = vunpack.c.l.b16 %v3173
        %v3247 = vunpack.c.l.b16 %v3177
        %v3248 = vunpack.c.l.b16 %v3180
        %v3249 = vunpack.c.l.b16 %v3184
        %v3250 = vunpack.c.l.b16 %v3187
        %v3251 = vunpack.c.l.b16 %v3191
        %v3252 = vunpack.c.l.b16 %v3194
        %v3253 = vunpack.c.l.b16 %v3198
        %v3254 = vunpack.c.l.b16 %v3201
        %v3255 = vunpack.c.l.b16 %v3205
        %v3256 = vunpack.c.l.b16 %v3208
        %v3257 = vunpack.c.l.b16 %v3212
        %v3258 = vunpack.c.l.b16 %v3215
        %v3259 = vunpack.c.l.b16 %v3219
        %v3260 = vunpack.c.l.b16 %v3222
        %v3261 = vpack.c.b16 %v3226, %v3225
        %v3262 = vpack.c.b16 %v3228, %v3227
        %v3263 = vpack.c.b16 %v3230, %v3229
        %v3264 = vpack.c.b16 %v3232, %v3231
        %v3265 = vpack.c.b16 %v3234, %v3233
        %v3266 = vpack.c.b16 %v3236, %v3235
        %v3267 = vpack.c.b16 %v3238, %v3237
        %v3268 = vpack.c.b16 %v3240, %v3239
        %v3269 = vpack.c.b16 %v3242, %v3241
        %v3270 = vpack.c.b16 %v3244, %v3243
        %v3271 = vpack.c.b16 %v3246, %v3245
        %v3272 = vpack.c.b16 %v3248, %v3247
        %v3273 = vpack.c.b16 %v3250, %v3249
        %v3274 = vpack.c.b16 %v3252, %v3251
        %v3275 = vpack.c.b16 %v3254, %v3253
        %v3276 = vpack.c.b16 %v3256, %v3255
        %v3277 = vpack.c.b16 %v3258, %v3257
        %v3278 = vpack.c.b16 %v3260, %v3259
        %v3280 = vsel %vm745, %v3261, 0
        %v3283 = vsel %vm745, %v3262, 0
        %v3286 = vsel %vm745, %v3263, 0
        %v3289 = vsel %vm745, %v3264, 0
        %v3292 = vsel %vm745, %v3265, 0
        %v3295 = vsel %vm745, %v3266, 0
        %v3298 = vsel %vm745, %v3267, 0
        %v3301 = vsel %vm745, %v3268, 0
        %v3304 = vsel %vm745, %v3269, 0
        %v3307 = vsel %vm745, %v3270, 0
        %v3310 = vsel %vm745, %v3271, 0
        %v3313 = vsel %vm745, %v3272, 0
        %v3316 = vsel %vm745, %v3273, 0
        %v3319 = vsel %vm745, %v3274, 0
        %v3322 = vsel %vm745, %v3275, 0
        %v3325 = vsel %vm745, %v3276, 0
        %v3328 = vsel %vm745, %v3277, 0
        %v3331 = vsel %vm745, %v3278, 0
        %v3334 = vsel %vm800, %v3224, 0
        %3336 = vmatprep.subr.bf16.mxu0 0
        %3337 = vmatpush1.bf16.msra.mxu0 %v3334
        %3338 = vmatprep.subr.bf16.mxu0 0
        %3339 = vmatpush1.bf16.msra.mxu0 0
        %3340 = vmatprep.subr.bf16.mxu0 0
        %3341 = vmatpush1.bf16.msra.mxu0 0
        %3342 = vmatprep.subr.bf16.mxu0 0
        %3343 = vmatpush1.bf16.msra.mxu0 0
        %3344 = vmatprep.subr.bf16.mxu0 0
        %3345 = vmatpush1.bf16.msra.mxu0 0
        %3346 = vmatprep.subr.bf16.mxu0 0
        %3347 = vmatpush1.bf16.msra.mxu0 0
        %3348 = vmatprep.subr.bf16.mxu0 0
        %3349 = vmatpush1.bf16.msra.mxu0 0
        %3350 = vmatprep.subr.bf16.mxu0 0
        %3351 = vmatpush1.bf16.msra.mxu0 0
        %3352 = vmatprep.subr.bf16.mxu0 0
        %3353 = vmatpush1.bf16.msra.mxu0 0
        %3354 = vmatprep.subr.bf16.mxu0 0
        %3355 = vmatpush1.bf16.msra.mxu0 0
        %3356 = vmatprep.subr.bf16.mxu0 0
        %3357 = vmatpush1.bf16.msra.mxu0 0
        %3358 = vmatprep.subr.bf16.mxu0 0
        %3359 = vmatpush1.bf16.msra.mxu0 0
        %3360 = vmatprep.subr.bf16.mxu0 0
        %3361 = vmatpush1.bf16.msra.mxu0 0
        %3362 = vmatprep.subr.bf16.mxu0 0
        %3363 = vmatpush1.bf16.msra.mxu0 0
        %3364 = vmatprep.subr.bf16.mxu0 0
        %3365 = vmatpush1.bf16.msra.mxu0 0
        %3366 = vmatprep.subr.bf16.mxu0 0
        %3367 = vmatpush1.bf16.msra.mxu0 0
        %3368 = vmatprep.mubr.bf16.mxu0 0
        %3369 = vmatmul.mubr.bf16.gmra.mrb[0].mxu0 %v3280
        %v3370 = vpop.f32.mrb[0].mxu0
        %v3371 = vadd.f32 0.0, %v3370
        %v3372 = vpop.f32.mrb[0].mxu0
        %v3373 = vpop.f32.mrb[0].mxu0
        %v3374 = vadd.f32 0.0, %v3373
        %v3375 = vpop.f32.mrb[0].mxu0
        %3376 = vmatprep.mubr.bf16.mxu0 0
        %3377 = vmatmul.mubr.bf16.gmra.mrb[0].mxu0 %v3283
        %v3378 = vpop.f32.mrb[0].mxu0
        %v3379 = vadd.f32 0.0, %v3378
        %v3380 = vpop.f32.mrb[0].mxu0
        %v3381 = vpop.f32.mrb[0].mxu0
        %v3382 = vadd.f32 0.0, %v3381
        %v3383 = vpop.f32.mrb[0].mxu0
        %3384 = vmatprep.mubr.bf16.mxu0 0
        %3385 = vmatmul.mubr.bf16.gmra.mrb[0].mxu0 %v3286
        %v3386 = vpop.f32.mrb[0].mxu0
        %v3387 = vadd.f32 0.0, %v3386
        %v3388 = vpop.f32.mrb[0].mxu0
        %v3389 = vpop.f32.mrb[0].mxu0
        %v3390 = vadd.f32 0.0, %v3389
        %v3391 = vpop.f32.mrb[0].mxu0
        %3392 = vmatprep.mubr.bf16.mxu0 0
        %3393 = vmatmul.mubr.bf16.gmra.mrb[0].mxu0 %v3289
        %v3394 = vpop.f32.mrb[0].mxu0
        %v3395 = vadd.f32 0.0, %v3394
        %v3396 = vpop.f32.mrb[0].mxu0
        %v3397 = vpop.f32.mrb[0].mxu0
        %v3398 = vadd.f32 0.0, %v3397
        %v3399 = vpop.f32.mrb[0].mxu0
        %3400 = vmatprep.mubr.bf16.mxu0 0
        %3401 = vmatmul.mubr.bf16.gmra.mrb[0].mxu0 %v3292
        %v3402 = vpop.f32.mrb[0].mxu0
        %v3403 = vadd.f32 0.0, %v3402
        %v3404 = vpop.f32.mrb[0].mxu0
        %v3405 = vpop.f32.mrb[0].mxu0
        %v3406 = vadd.f32 0.0, %v3405
        %v3407 = vpop.f32.mrb[0].mxu0
        %3408 = vmatprep.mubr.bf16.mxu0 0
        %3409 = vmatmul.mubr.bf16.gmra.mrb[0].mxu0 %v3295
        %v3410 = vpop.f32.mrb[0].mxu0
        %v3411 = vadd.f32 0.0, %v3410
        %v3412 = vpop.f32.mrb[0].mxu0
        %v3413 = vpop.f32.mrb[0].mxu0
        %v3414 = vadd.f32 0.0, %v3413
        %v3415 = vpop.f32.mrb[0].mxu0
        %3416 = vmatprep.mubr.bf16.mxu0 0
        %3417 = vmatmul.mubr.bf16.gmra.mrb[0].mxu0 %v3298
        %v3418 = vpop.f32.mrb[0].mxu0
        %v3419 = vadd.f32 0.0, %v3418
        %v3420 = vpop.f32.mrb[0].mxu0
        %v3421 = vpop.f32.mrb[0].mxu0
        %v3422 = vadd.f32 0.0, %v3421
        %v3423 = vpop.f32.mrb[0].mxu0
        %3424 = vmatprep.mubr.bf16.mxu0 0
        %3425 = vmatmul.mubr.bf16.gmra.mrb[0].mxu0 %v3301
        %v3426 = vpop.f32.mrb[0].mxu0
        %v3427 = vadd.f32 0.0, %v3426
        %v3428 = vpop.f32.mrb[0].mxu0
        %v3429 = vpop.f32.mrb[0].mxu0
        %v3430 = vadd.f32 0.0, %v3429
        %v3431 = vpop.f32.mrb[0].mxu0
        %3432 = vmatprep.mubr.bf16.mxu0 0
        %3433 = vmatmul.mubr.bf16.gmra.mrb[0].mxu0 %v3304
        %v3434 = vpop.f32.mrb[0].mxu0
        %v3435 = vadd.f32 0.0, %v3434
        %v3436 = vpop.f32.mrb[0].mxu0
        %v3437 = vpop.f32.mrb[0].mxu0
        %v3438 = vadd.f32 0.0, %v3437
        %v3439 = vpop.f32.mrb[0].mxu0
        %3440 = vmatprep.mubr.bf16.mxu0 0
        %3441 = vmatmul.mubr.bf16.gmra.mrb[0].mxu0 %v3307
        %v3442 = vpop.f32.mrb[0].mxu0
        %v3443 = vadd.f32 0.0, %v3442
        %v3444 = vpop.f32.mrb[0].mxu0
        %v3445 = vpop.f32.mrb[0].mxu0
        %v3446 = vadd.f32 0.0, %v3445
        %v3447 = vpop.f32.mrb[0].mxu0
        %3448 = vmatprep.mubr.bf16.mxu0 0
        %3449 = vmatmul.mubr.bf16.gmra.mrb[0].mxu0 %v3310
        %v3450 = vpop.f32.mrb[0].mxu0
        %v3451 = vadd.f32 0.0, %v3450
        %v3452 = vpop.f32.mrb[0].mxu0
        %v3453 = vpop.f32.mrb[0].mxu0
        %v3454 = vadd.f32 0.0, %v3453
        %v3455 = vpop.f32.mrb[0].mxu0
        %3456 = vmatprep.mubr.bf16.mxu0 0
        %3457 = vmatmul.mubr.bf16.gmra.mrb[0].mxu0 %v3313
        %v3458 = vpop.f32.mrb[0].mxu0
        %v3459 = vadd.f32 0.0, %v3458
        %v3460 = vpop.f32.mrb[0].mxu0
        %v3461 = vpop.f32.mrb[0].mxu0
        %v3462 = vadd.f32 0.0, %v3461
        %v3463 = vpop.f32.mrb[0].mxu0
        %3464 = vmatprep.mubr.bf16.mxu0 0
        %3465 = vmatmul.mubr.bf16.gmra.mrb[0].mxu0 %v3316
        %v3466 = vpop.f32.mrb[0].mxu0
        %v3467 = vadd.f32 0.0, %v3466
        %v3468 = vpop.f32.mrb[0].mxu0
        %v3469 = vpop.f32.mrb[0].mxu0
        %v3470 = vadd.f32 0.0, %v3469
        %v3471 = vpop.f32.mrb[0].mxu0
        %3472 = vmatprep.mubr.bf16.mxu0 0
        %3473 = vmatmul.mubr.bf16.gmra.mrb[0].mxu0 %v3319
        %v3474 = vpop.f32.mrb[0].mxu0
        %v3475 = vadd.f32 0.0, %v3474
        %v3476 = vpop.f32.mrb[0].mxu0
        %v3477 = vpop.f32.mrb[0].mxu0
        %v3478 = vadd.f32 0.0, %v3477
        %v3479 = vpop.f32.mrb[0].mxu0
        %3480 = vmatprep.mubr.bf16.mxu0 0
        %3481 = vmatmul.mubr.bf16.gmra.mrb[0].mxu0 %v3322
        %v3482 = vpop.f32.mrb[0].mxu0
        %v3483 = vadd.f32 0.0, %v3482
        %v3484 = vpop.f32.mrb[0].mxu0
        %v3485 = vpop.f32.mrb[0].mxu0
        %v3486 = vadd.f32 0.0, %v3485
        %v3487 = vpop.f32.mrb[0].mxu0
        %3488 = vmatprep.mubr.bf16.mxu0 0
        %3489 = vmatmul.mubr.bf16.gmra.mrb[0].mxu0 %v3325
        %v3490 = vpop.f32.mrb[0].mxu0
        %v3491 = vadd.f32 0.0, %v3490
        %v3492 = vpop.f32.mrb[0].mxu0
        %v3493 = vpop.f32.mrb[0].mxu0
        %v3494 = vadd.f32 0.0, %v3493
        %v3495 = vpop.f32.mrb[0].mxu0
        %3496 = vmatprep.mubr.bf16.mxu0 0
        %3497 = vmatmul.mubr.bf16.gmra.mrb[0].mxu0 %v3328
        %v3498 = vpop.f32.mrb[0].mxu0
        %v3499 = vadd.f32 0.0, %v3498
        %v3500 = vpop.f32.mrb[0].mxu0
        %v3501 = vpop.f32.mrb[0].mxu0
        %v3502 = vadd.f32 0.0, %v3501
        %v3503 = vpop.f32.mrb[0].mxu0
        %3504 = vmatprep.mubr.bf16.mxu0 0
        %3505 = vmatmul.mubr.bf16.gmra.mrb[0].mxu0 %v3331
        %v3506 = vpop.f32.mrb[0].mxu0
        %v3507 = vadd.f32 0.0, %v3506
        %v3508 = vpop.f32.mrb[0].mxu0
        %v3509 = vpop.f32.mrb[0].mxu0
        %v3510 = vadd.f32 0.0, %v3509
        %v3511 = vpop.f32.mrb[0].mxu0
        %3512 = vdwg.mxu0
        %v3513 = vadd.f32 %v2989, %v3371
        %v3514 = vadd.f32 %v2990, %v3374
        %v3515 = vadd.f32 %v2991, %v3379
        %v3516 = vadd.f32 %v2992, %v3382
        %v3517 = vadd.f32 %v2993, %v3387
        %v3518 = vadd.f32 %v2994, %v3390
        %v3519 = vadd.f32 %v2995, %v3395
        %v3520 = vadd.f32 %v2996, %v3398
        %v3521 = vadd.f32 %v2997, %v3403
        %v3522 = vadd.f32 %v2998, %v3406
        %v3523 = vadd.f32 %v2999, %v3411
        %v3524 = vadd.f32 %v3000, %v3414
        %v3525 = vadd.f32 %v3001, %v3419
        %v3526 = vadd.f32 %v3002, %v3422
        %v3527 = vadd.f32 %v3003, %v3427
        %v3528 = vadd.f32 %v3004, %v3430
        %v3529 = vadd.f32 %v3005, %v3435
        %v3530 = vadd.f32 %v3006, %v3438
        %v3531 = vadd.f32 %v3007, %v3443
        %v3532 = vadd.f32 %v3008, %v3446
        %v3533 = vadd.f32 %v3009, %v3451
        %v3534 = vadd.f32 %v3010, %v3454
        %v3535 = vadd.f32 %v3011, %v3459
        %v3536 = vadd.f32 %v3012, %v3462
        %v3537 = vadd.f32 %v3013, %v3467
        %v3538 = vadd.f32 %v3014, %v3470
        %v3539 = vadd.f32 %v3015, %v3475
        %v3540 = vadd.f32 %v3016, %v3478
        %v3541 = vadd.f32 %v3017, %v3483
        %v3542 = vadd.f32 %v3018, %v3486
        %v3543 = vadd.f32 %v3019, %v3491
        %v3544 = vadd.f32 %v3020, %v3494
        %v3545 = vadd.f32 %v3021, %v3499
        %v3546 = vadd.f32 %v3022, %v3502
        %v3547 = vadd.f32 %v3023, %v3507
        %v3548 = vadd.f32 %v3024, %v3510
        %s3549 = scalar_lea.vmem %s196, 24
        %v3550 = vld [vmem:[%s3549] sm:$0xf]
        %v3551 = vld [vmem:[%s3549 + $0x4] sm:$0xf]
        %v3552 = vld [vmem:[%s3549 + $0xc] sm:$0xf]
        %v3553 = vld [vmem:[%s3549 + $0x10] sm:$0xf]
        %v3554 = vld [vmem:[%s3549 + $0x18] sm:$0xf]
        %v3555 = vld [vmem:[%s3549 + $0x1c] sm:$0xf]
        %v3556 = vld [vmem:[%s3549 + $0x24] sm:$0xf]
        %v3557 = vld [vmem:[%s3549 + $0x28] sm:$0xf]
        %v3558 = vld [vmem:[%s3549 + $0x30] sm:$0xf]
        %v3559 = vld [vmem:[%s3549 + $0x34] sm:$0xf]
        %v3560 = vld [vmem:[%s3549 + $0x3c] sm:$0xf]
        %v3561 = vld [vmem:[%s3549 + $0x40] sm:$0xf]
        %v3562 = vld [vmem:[%s3549 + $0x48] sm:$0xf]
        %v3563 = vld [vmem:[%s3549 + $0x4c] sm:$0xf]
        %v3564 = vld [vmem:[%s3549 + $0x54] sm:$0xf]
        %v3565 = vld [vmem:[%s3549 + $0x58] sm:$0xf]
        %v3566 = vld [vmem:[%s3549 + $0x60] sm:$0xf]
        %v3567 = vld [vmem:[%s3549 + $0x64] sm:$0xf]
        %v3568 = vld [vmem:[%s3549 + $0x6c] sm:$0xf]
        %v3569 = vld [vmem:[%s3549 + $0x70] sm:$0xf]
        %v3570 = vld [vmem:[%s3549 + $0x78] sm:$0xf]
        %v3571 = vld [vmem:[%s3549 + $0x7c] sm:$0xf]
        %v3572 = vld [vmem:[%s3549 + $0x84] sm:$0xf]
        %v3573 = vld [vmem:[%s3549 + $0x88] sm:$0xf]
        %v3574 = vld [vmem:[%s3549 + $0x90] sm:$0xf]
        %v3575 = vld [vmem:[%s3549 + $0x94] sm:$0xf]
        %v3576 = vld [vmem:[%s3549 + $0x9c] sm:$0xf]
        %v3577 = vld [vmem:[%s3549 + $0xa0] sm:$0xf]
        %v3578 = vld [vmem:[%s3549 + $0xa8] sm:$0xf]
        %v3579 = vld [vmem:[%s3549 + $0xac] sm:$0xf]
        %v3580 = vld [vmem:[%s3549 + $0xb4] sm:$0xf]
        %v3581 = vld [vmem:[%s3549 + $0xb8] sm:$0xf]
        %v3582 = vld [vmem:[%s3549 + $0xc0] sm:$0xf]
        %v3583 = vld [vmem:[%s3549 + $0xc4] sm:$0xf]
        %v3584 = vld [vmem:[%s3549 + $0xcc] sm:$0xf]
        %v3585 = vld [vmem:[%s3549 + $0xd0] sm:$0xf]
        %s3586 = scalar_lea.vmem %s1, 12
        %v3587 = vld [vmem:[%s3586] sm:$0x3]
        %v3624 = vunpack.c.l.b16 %v3550
        %v3625 = vunpack.c.l.b16 %v3551
        %v3626 = vunpack.c.l.b16 %v3552
        %v3627 = vunpack.c.l.b16 %v3553
        %v3628 = vunpack.c.l.b16 %v3554
        %v3629 = vunpack.c.l.b16 %v3555
        %v3630 = vunpack.c.l.b16 %v3556
        %v3631 = vunpack.c.l.b16 %v3557
        %v3632 = vunpack.c.l.b16 %v3558
        %v3633 = vunpack.c.l.b16 %v3559
        %v3634 = vunpack.c.l.b16 %v3560
        %v3635 = vunpack.c.l.b16 %v3561
        %v3636 = vunpack.c.l.b16 %v3562
        %v3637 = vunpack.c.l.b16 %v3563
        %v3638 = vunpack.c.l.b16 %v3564
        %v3639 = vunpack.c.l.b16 %v3565
        %v3640 = vunpack.c.l.b16 %v3566
        %v3641 = vunpack.c.l.b16 %v3567
        %v3642 = vunpack.c.l.b16 %v3568
        %v3643 = vunpack.c.l.b16 %v3569
        %v3644 = vunpack.c.l.b16 %v3570
        %v3645 = vunpack.c.l.b16 %v3571
        %v3646 = vunpack.c.l.b16 %v3572
        %v3647 = vunpack.c.l.b16 %v3573
        %v3648 = vunpack.c.l.b16 %v3574
        %v3649 = vunpack.c.l.b16 %v3575
        %v3650 = vunpack.c.l.b16 %v3576
        %v3651 = vunpack.c.l.b16 %v3577
        %v3652 = vunpack.c.l.b16 %v3578
        %v3653 = vunpack.c.l.b16 %v3579
        %v3654 = vunpack.c.l.b16 %v3580
        %v3655 = vunpack.c.l.b16 %v3581
        %v3656 = vunpack.c.l.b16 %v3582
        %v3657 = vunpack.c.l.b16 %v3583
        %v3658 = vunpack.c.l.b16 %v3584
        %v3659 = vunpack.c.l.b16 %v3585
        %v3660 = vpack.c.b16 %v3625, %v3624
        %v3661 = vpack.c.b16 %v3627, %v3626
        %v3662 = vpack.c.b16 %v3629, %v3628
        %v3663 = vpack.c.b16 %v3631, %v3630
        %v3664 = vpack.c.b16 %v3633, %v3632
        %v3665 = vpack.c.b16 %v3635, %v3634
        %v3666 = vpack.c.b16 %v3637, %v3636
        %v3667 = vpack.c.b16 %v3639, %v3638
        %v3668 = vpack.c.b16 %v3641, %v3640
        %v3669 = vpack.c.b16 %v3643, %v3642
        %v3670 = vpack.c.b16 %v3645, %v3644
        %v3671 = vpack.c.b16 %v3647, %v3646
        %v3672 = vpack.c.b16 %v3649, %v3648
        %v3673 = vpack.c.b16 %v3651, %v3650
        %v3674 = vpack.c.b16 %v3653, %v3652
        %v3675 = vpack.c.b16 %v3655, %v3654
        %v3676 = vpack.c.b16 %v3657, %v3656
        %v3677 = vpack.c.b16 %v3659, %v3658
        %v3679 = vsel %vm745, %v3660, 0
        %v3682 = vsel %vm745, %v3661, 0
        %v3685 = vsel %vm745, %v3662, 0
        %v3688 = vsel %vm745, %v3663, 0
        %v3691 = vsel %vm745, %v3664, 0
        %v3694 = vsel %vm745, %v3665, 0
        %v3697 = vsel %vm745, %v3666, 0
        %v3700 = vsel %vm745, %v3667, 0
        %v3703 = vsel %vm745, %v3668, 0
        %v3706 = vsel %vm745, %v3669, 0
        %v3709 = vsel %vm745, %v3670, 0
        %v3712 = vsel %vm745, %v3671, 0
        %v3715 = vsel %vm745, %v3672, 0
        %v3718 = vsel %vm745, %v3673, 0
        %v3721 = vsel %vm745, %v3674, 0
        %v3724 = vsel %vm745, %v3675, 0
        %v3727 = vsel %vm745, %v3676, 0
        %v3730 = vsel %vm745, %v3677, 0
        %v3733 = vsel %vm800, %v3587, 0
        %3735 = vmatprep.subr.bf16.mxu0 0
        %3736 = vmatpush1.bf16.msra.mxu0 %v3733
        %3737 = vmatprep.subr.bf16.mxu0 0
        %3738 = vmatpush1.bf16.msra.mxu0 0
        %3739 = vmatprep.subr.bf16.mxu0 0
        %3740 = vmatpush1.bf16.msra.mxu0 0
        %3741 = vmatprep.subr.bf16.mxu0 0
        %3742 = vmatpush1.bf16.msra.mxu0 0
        %3743 = vmatprep.subr.bf16.mxu0 0
        %3744 = vmatpush1.bf16.msra.mxu0 0
        %3745 = vmatprep.subr.bf16.mxu0 0
        %3746 = vmatpush1.bf16.msra.mxu0 0
        %3747 = vmatprep.subr.bf16.mxu0 0
        %3748 = vmatpush1.bf16.msra.mxu0 0
        %3749 = vmatprep.subr.bf16.mxu0 0
        %3750 = vmatpush1.bf16.msra.mxu0 0
        %3751 = vmatprep.subr.bf16.mxu0 0
        %3752 = vmatpush1.bf16.msra.mxu0 0
        %3753 = vmatprep.subr.bf16.mxu0 0
        %3754 = vmatpush1.bf16.msra.mxu0 0
        %3755 = vmatprep.subr.bf16.mxu0 0
        %3756 = vmatpush1.bf16.msra.mxu0 0
        %3757 = vmatprep.subr.bf16.mxu0 0
        %3758 = vmatpush1.bf16.msra.mxu0 0
        %3759 = vmatprep.subr.bf16.mxu0 0
        %3760 = vmatpush1.bf16.msra.mxu0 0
        %3761 = vmatprep.subr.bf16.mxu0 0
        %3762 = vmatpush1.bf16.msra.mxu0 0
        %3763 = vmatprep.subr.bf16.mxu0 0
        %3764 = vmatpush1.bf16.msra.mxu0 0
        %3765 = vmatprep.subr.bf16.mxu0 0
        %3766 = vmatpush1.bf16.msra.mxu0 0
        %3767 = vmatprep.mubr.bf16.mxu0 0
        %3768 = vmatmul.mubr.bf16.gmra.mrb[0].mxu0 %v3679
        %v3769 = vpop.f32.mrb[0].mxu0
        %v3770 = vadd.f32 0.0, %v3769
        %v3771 = vpop.f32.mrb[0].mxu0
        %v3772 = vpop.f32.mrb[0].mxu0
        %v3773 = vadd.f32 0.0, %v3772
        %v3774 = vpop.f32.mrb[0].mxu0
        %3775 = vmatprep.mubr.bf16.mxu0 0
        %3776 = vmatmul.mubr.bf16.gmra.mrb[0].mxu0 %v3682
        %v3777 = vpop.f32.mrb[0].mxu0
        %v3778 = vadd.f32 0.0, %v3777
        %v3779 = vpop.f32.mrb[0].mxu0
        %v3780 = vpop.f32.mrb[0].mxu0
        %v3781 = vadd.f32 0.0, %v3780
        %v3782 = vpop.f32.mrb[0].mxu0
        %3783 = vmatprep.mubr.bf16.mxu0 0
        %3784 = vmatmul.mubr.bf16.gmra.mrb[0].mxu0 %v3685
        %v3785 = vpop.f32.mrb[0].mxu0
        %v3786 = vadd.f32 0.0, %v3785
        %v3787 = vpop.f32.mrb[0].mxu0
        %v3788 = vpop.f32.mrb[0].mxu0
        %v3789 = vadd.f32 0.0, %v3788
        %v3790 = vpop.f32.mrb[0].mxu0
        %3791 = vmatprep.mubr.bf16.mxu0 0
        %3792 = vmatmul.mubr.bf16.gmra.mrb[0].mxu0 %v3688
        %v3793 = vpop.f32.mrb[0].mxu0
        %v3794 = vadd.f32 0.0, %v3793
        %v3795 = vpop.f32.mrb[0].mxu0
        %v3796 = vpop.f32.mrb[0].mxu0
        %v3797 = vadd.f32 0.0, %v3796
        %v3798 = vpop.f32.mrb[0].mxu0
        %3799 = vmatprep.mubr.bf16.mxu0 0
        %3800 = vmatmul.mubr.bf16.gmra.mrb[0].mxu0 %v3691
        %v3801 = vpop.f32.mrb[0].mxu0
        %v3802 = vadd.f32 0.0, %v3801
        %v3803 = vpop.f32.mrb[0].mxu0
        %v3804 = vpop.f32.mrb[0].mxu0
        %v3805 = vadd.f32 0.0, %v3804
        %v3806 = vpop.f32.mrb[0].mxu0
        %3807 = vmatprep.mubr.bf16.mxu0 0
        %3808 = vmatmul.mubr.bf16.gmra.mrb[0].mxu0 %v3694
        %v3809 = vpop.f32.mrb[0].mxu0
        %v3810 = vadd.f32 0.0, %v3809
        %v3811 = vpop.f32.mrb[0].mxu0
        %v3812 = vpop.f32.mrb[0].mxu0
        %v3813 = vadd.f32 0.0, %v3812
        %v3814 = vpop.f32.mrb[0].mxu0
        %3815 = vmatprep.mubr.bf16.mxu0 0
        %3816 = vmatmul.mubr.bf16.gmra.mrb[0].mxu0 %v3697
        %v3817 = vpop.f32.mrb[0].mxu0
        %v3818 = vadd.f32 0.0, %v3817
        %v3819 = vpop.f32.mrb[0].mxu0
        %v3820 = vpop.f32.mrb[0].mxu0
        %v3821 = vadd.f32 0.0, %v3820
        %v3822 = vpop.f32.mrb[0].mxu0
        %3823 = vmatprep.mubr.bf16.mxu0 0
        %3824 = vmatmul.mubr.bf16.gmra.mrb[0].mxu0 %v3700
        %v3825 = vpop.f32.mrb[0].mxu0
        %v3826 = vadd.f32 0.0, %v3825
        %v3827 = vpop.f32.mrb[0].mxu0
        %v3828 = vpop.f32.mrb[0].mxu0
        %v3829 = vadd.f32 0.0, %v3828
        %v3830 = vpop.f32.mrb[0].mxu0
        %3831 = vmatprep.mubr.bf16.mxu0 0
        %3832 = vmatmul.mubr.bf16.gmra.mrb[0].mxu0 %v3703
        %v3833 = vpop.f32.mrb[0].mxu0
        %v3834 = vadd.f32 0.0, %v3833
        %v3835 = vpop.f32.mrb[0].mxu0
        %v3836 = vpop.f32.mrb[0].mxu0
        %v3837 = vadd.f32 0.0, %v3836
        %v3838 = vpop.f32.mrb[0].mxu0
        %3839 = vmatprep.mubr.bf16.mxu0 0
        %3840 = vmatmul.mubr.bf16.gmra.mrb[0].mxu0 %v3706
        %v3841 = vpop.f32.mrb[0].mxu0
        %v3842 = vadd.f32 0.0, %v3841
        %v3843 = vpop.f32.mrb[0].mxu0
        %v3844 = vpop.f32.mrb[0].mxu0
        %v3845 = vadd.f32 0.0, %v3844
        %v3846 = vpop.f32.mrb[0].mxu0
        %3847 = vmatprep.mubr.bf16.mxu0 0
        %3848 = vmatmul.mubr.bf16.gmra.mrb[0].mxu0 %v3709
        %v3849 = vpop.f32.mrb[0].mxu0
        %v3850 = vadd.f32 0.0, %v3849
        %v3851 = vpop.f32.mrb[0].mxu0
        %v3852 = vpop.f32.mrb[0].mxu0
        %v3853 = vadd.f32 0.0, %v3852
        %v3854 = vpop.f32.mrb[0].mxu0
        %3855 = vmatprep.mubr.bf16.mxu0 0
        %3856 = vmatmul.mubr.bf16.gmra.mrb[0].mxu0 %v3712
        %v3857 = vpop.f32.mrb[0].mxu0
        %v3858 = vadd.f32 0.0, %v3857
        %v3859 = vpop.f32.mrb[0].mxu0
        %v3860 = vpop.f32.mrb[0].mxu0
        %v3861 = vadd.f32 0.0, %v3860
        %v3862 = vpop.f32.mrb[0].mxu0
        %3863 = vmatprep.mubr.bf16.mxu0 0
        %3864 = vmatmul.mubr.bf16.gmra.mrb[0].mxu0 %v3715
        %v3865 = vpop.f32.mrb[0].mxu0
        %v3866 = vadd.f32 0.0, %v3865
        %v3867 = vpop.f32.mrb[0].mxu0
        %v3868 = vpop.f32.mrb[0].mxu0
        %v3869 = vadd.f32 0.0, %v3868
        %v3870 = vpop.f32.mrb[0].mxu0
        %3871 = vmatprep.mubr.bf16.mxu0 0
        %3872 = vmatmul.mubr.bf16.gmra.mrb[0].mxu0 %v3718
        %v3873 = vpop.f32.mrb[0].mxu0
        %v3874 = vadd.f32 0.0, %v3873
        %v3875 = vpop.f32.mrb[0].mxu0
        %v3876 = vpop.f32.mrb[0].mxu0
        %v3877 = vadd.f32 0.0, %v3876
        %v3878 = vpop.f32.mrb[0].mxu0
        %3879 = vmatprep.mubr.bf16.mxu0 0
        %3880 = vmatmul.mubr.bf16.gmra.mrb[0].mxu0 %v3721
        %v3881 = vpop.f32.mrb[0].mxu0
        %v3882 = vadd.f32 0.0, %v3881
        %v3883 = vpop.f32.mrb[0].mxu0
        %v3884 = vpop.f32.mrb[0].mxu0
        %v3885 = vadd.f32 0.0, %v3884
        %v3886 = vpop.f32.mrb[0].mxu0
        %3887 = vmatprep.mubr.bf16.mxu0 0
        %3888 = vmatmul.mubr.bf16.gmra.mrb[0].mxu0 %v3724
        %v3889 = vpop.f32.mrb[0].mxu0
        %v3890 = vadd.f32 0.0, %v3889
        %v3891 = vpop.f32.mrb[0].mxu0
        %v3892 = vpop.f32.mrb[0].mxu0
        %v3893 = vadd.f32 0.0, %v3892
        %v3894 = vpop.f32.mrb[0].mxu0
        %3895 = vmatprep.mubr.bf16.mxu0 0
        %3896 = vmatmul.mubr.bf16.gmra.mrb[0].mxu0 %v3727
        %v3897 = vpop.f32.mrb[0].mxu0
        %v3898 = vadd.f32 0.0, %v3897
        %v3899 = vpop.f32.mrb[0].mxu0
        %v3900 = vpop.f32.mrb[0].mxu0
        %v3901 = vadd.f32 0.0, %v3900
        %v3902 = vpop.f32.mrb[0].mxu0
        %3903 = vmatprep.mubr.bf16.mxu0 0
        %3904 = vmatmul.mubr.bf16.gmra.mrb[0].mxu0 %v3730
        %v3905 = vpop.f32.mrb[0].mxu0
        %v3906 = vadd.f32 0.0, %v3905
        %v3907 = vpop.f32.mrb[0].mxu0
        %v3908 = vpop.f32.mrb[0].mxu0
        %v3909 = vadd.f32 0.0, %v3908
        %v3910 = vpop.f32.mrb[0].mxu0
        %3911 = vdwg.mxu0
        %v3912 = vadd.f32 %v3513, %v3770
        %v3913 = vadd.f32 %v3514, %v3773
        %v3914 = vadd.f32 %v3515, %v3778
        %v3915 = vadd.f32 %v3516, %v3781
        %v3916 = vadd.f32 %v3517, %v3786
        %v3917 = vadd.f32 %v3518, %v3789
        %v3918 = vadd.f32 %v3519, %v3794
        %v3919 = vadd.f32 %v3520, %v3797
        %v3920 = vadd.f32 %v3521, %v3802
        %v3921 = vadd.f32 %v3522, %v3805
        %v3922 = vadd.f32 %v3523, %v3810
        %v3923 = vadd.f32 %v3524, %v3813
        %v3924 = vadd.f32 %v3525, %v3818
        %v3925 = vadd.f32 %v3526, %v3821
        %v3926 = vadd.f32 %v3527, %v3826
        %v3927 = vadd.f32 %v3528, %v3829
        %v3928 = vadd.f32 %v3529, %v3834
        %v3929 = vadd.f32 %v3530, %v3837
        %v3930 = vadd.f32 %v3531, %v3842
        %v3931 = vadd.f32 %v3532, %v3845
        %v3932 = vadd.f32 %v3533, %v3850
        %v3933 = vadd.f32 %v3534, %v3853
        %v3934 = vadd.f32 %v3535, %v3858
        %v3935 = vadd.f32 %v3536, %v3861
        %v3936 = vadd.f32 %v3537, %v3866
        %v3937 = vadd.f32 %v3538, %v3869
        %v3938 = vadd.f32 %v3539, %v3874
        %v3939 = vadd.f32 %v3540, %v3877
        %v3940 = vadd.f32 %v3541, %v3882
        %v3941 = vadd.f32 %v3542, %v3885
        %v3942 = vadd.f32 %v3543, %v3890
        %v3943 = vadd.f32 %v3544, %v3893
        %v3944 = vadd.f32 %v3545, %v3898
        %v3945 = vadd.f32 %v3546, %v3901
        %v3946 = vadd.f32 %v3547, %v3906
        %v3947 = vadd.f32 %v3548, %v3909
        %v3948 = vld [vmem:[%s3549] sm:$0xf]
        %v3949 = vld [vmem:[%s3549 + $0x4] sm:$0xf]
        %v3950 = vld [vmem:[%s3549 + $0x8] sm:$0x1]
        %v3951 = vld [vmem:[%s3549 + $0xc] sm:$0xf]
        %v3952 = vld [vmem:[%s3549 + $0x10] sm:$0xf]
        %v3953 = vld [vmem:[%s3549 + $0x14] sm:$0x1]
        %v3954 = vld [vmem:[%s3549 + $0x18] sm:$0xf]
        %v3955 = vld [vmem:[%s3549 + $0x1c] sm:$0xf]
        %v3956 = vld [vmem:[%s3549 + $0x20] sm:$0x1]
        %v3957 = vld [vmem:[%s3549 + $0x24] sm:$0xf]
        %v3958 = vld [vmem:[%s3549 + $0x28] sm:$0xf]
        %v3959 = vld [vmem:[%s3549 + $0x2c] sm:$0x1]
        %v3960 = vld [vmem:[%s3549 + $0x30] sm:$0xf]
        %v3961 = vld [vmem:[%s3549 + $0x34] sm:$0xf]
        %v3962 = vld [vmem:[%s3549 + $0x38] sm:$0x1]
        %v3963 = vld [vmem:[%s3549 + $0x3c] sm:$0xf]
        %v3964 = vld [vmem:[%s3549 + $0x40] sm:$0xf]
        %v3965 = vld [vmem:[%s3549 + $0x44] sm:$0x1]
        %v3966 = vld [vmem:[%s3549 + $0x48] sm:$0xf]
        %v3967 = vld [vmem:[%s3549 + $0x4c] sm:$0xf]
        %v3968 = vld [vmem:[%s3549 + $0x50] sm:$0x1]
        %v3969 = vld [vmem:[%s3549 + $0x54] sm:$0xf]
        %v3970 = vld [vmem:[%s3549 + $0x58] sm:$0xf]
        %v3971 = vld [vmem:[%s3549 + $0x5c] sm:$0x1]
        %v3972 = vld [vmem:[%s3549 + $0x60] sm:$0xf]
        %v3973 = vld [vmem:[%s3549 + $0x64] sm:$0xf]
        %v3974 = vld [vmem:[%s3549 + $0x68] sm:$0x1]
        %v3975 = vld [vmem:[%s3549 + $0x6c] sm:$0xf]
        %v3976 = vld [vmem:[%s3549 + $0x70] sm:$0xf]
        %v3977 = vld [vmem:[%s3549 + $0x74] sm:$0x1]
        %v3978 = vld [vmem:[%s3549 + $0x78] sm:$0xf]
        %v3979 = vld [vmem:[%s3549 + $0x7c] sm:$0xf]
        %v3980 = vld [vmem:[%s3549 + $0x80] sm:$0x1]
        %v3981 = vld [vmem:[%s3549 + $0x84] sm:$0xf]
        %v3982 = vld [vmem:[%s3549 + $0x88] sm:$0xf]
        %v3983 = vld [vmem:[%s3549 + $0x8c] sm:$0x1]
        %v3984 = vld [vmem:[%s3549 + $0x90] sm:$0xf]
        %v3985 = vld [vmem:[%s3549 + $0x94] sm:$0xf]
        %v3986 = vld [vmem:[%s3549 + $0x98] sm:$0x1]
        %v3987 = vld [vmem:[%s3549 + $0x9c] sm:$0xf]
        %v3988 = vld [vmem:[%s3549 + $0xa0] sm:$0xf]
        %v3989 = vld [vmem:[%s3549 + $0xa4] sm:$0x1]
        %v3990 = vld [vmem:[%s3549 + $0xa8] sm:$0xf]
        %v3991 = vld [vmem:[%s3549 + $0xac] sm:$0xf]
        %v3992 = vld [vmem:[%s3549 + $0xb0] sm:$0x1]
        %v3993 = vld [vmem:[%s3549 + $0xb4] sm:$0xf]
        %v3994 = vld [vmem:[%s3549 + $0xb8] sm:$0xf]
        %v3995 = vld [vmem:[%s3549 + $0xbc] sm:$0x1]
        %v3996 = vld [vmem:[%s3549 + $0xc0] sm:$0xf]
        %v3997 = vld [vmem:[%s3549 + $0xc4] sm:$0xf]
        %v3998 = vld [vmem:[%s3549 + $0xc8] sm:$0x1]
        %v3999 = vld [vmem:[%s3549 + $0xcc] sm:$0xf]
        %v4000 = vld [vmem:[%s3549 + $0xd0] sm:$0xf]
        %v4001 = vld [vmem:[%s3549 + $0xd4] sm:$0x1]
        %v4003 = vshrl.u32 %v3948, 16
        %v4005 = vrot.slane %v4003, 4
        %v4006 = vshll.u32 %v3948, 16
        %v4008 = vrot.slane %v4006, 5
        %v4009 = vor.u32 %v4005, %v4008
        %v4010 = vrot.slane %v4009, 4
        %v4012 = vshll.u32 %v3949, 16
        %v4014 = vrot.slane %v4012, 5
        %v4015 = vsel %vm256, %v4010, %v4014
        %v4016 = vshrl.u32 %v3949, 16
        %v4018 = vrot.slane %v4016, 4
        %v4019 = vor.u32 %v4018, %v4014
        %v4020 = vrot.slane %v4019, 4
        %v4022 = vshll.u32 %v3950, 16
        %v4024 = vrot.slane %v4022, 5
        %v4025 = vsel %vm256, %v4020, %v4024
        %v4027 = vshrl.u32 %v3951, 16
        %v4029 = vrot.slane %v4027, 4
        %v4030 = vshll.u32 %v3951, 16
        %v4032 = vrot.slane %v4030, 5
        %v4033 = vor.u32 %v4029, %v4032
        %v4034 = vrot.slane %v4033, 4
        %v4036 = vshll.u32 %v3952, 16
        %v4038 = vrot.slane %v4036, 5
        %v4039 = vsel %vm256, %v4034, %v4038
        %v4040 = vshrl.u32 %v3952, 16
        %v4042 = vrot.slane %v4040, 4
        %v4043 = vor.u32 %v4042, %v4038
        %v4044 = vrot.slane %v4043, 4
        %v4046 = vshll.u32 %v3953, 16
        %v4048 = vrot.slane %v4046, 5
        %v4049 = vsel %vm256, %v4044, %v4048
        %v4051 = vshrl.u32 %v3954, 16
        %v4053 = vrot.slane %v4051, 4
        %v4054 = vshll.u32 %v3954, 16
        %v4056 = vrot.slane %v4054, 5
        %v4057 = vor.u32 %v4053, %v4056
        %v4058 = vrot.slane %v4057, 4
        %v4060 = vshll.u32 %v3955, 16
        %v4062 = vrot.slane %v4060, 5
        %v4063 = vsel %vm256, %v4058, %v4062
        %v4064 = vshrl.u32 %v3955, 16
        %v4066 = vrot.slane %v4064, 4
        %v4067 = vor.u32 %v4066, %v4062
        %v4068 = vrot.slane %v4067, 4
        %v4070 = vshll.u32 %v3956, 16
        %v4072 = vrot.slane %v4070, 5
        %v4073 = vsel %vm256, %v4068, %v4072
        %v4075 = vshrl.u32 %v3957, 16
        %v4077 = vrot.slane %v4075, 4
        %v4078 = vshll.u32 %v3957, 16
        %v4080 = vrot.slane %v4078, 5
        %v4081 = vor.u32 %v4077, %v4080
        %v4082 = vrot.slane %v4081, 4
        %v4084 = vshll.u32 %v3958, 16
        %v4086 = vrot.slane %v4084, 5
        %v4087 = vsel %vm256, %v4082, %v4086
        %v4088 = vshrl.u32 %v3958, 16
        %v4090 = vrot.slane %v4088, 4
        %v4091 = vor.u32 %v4090, %v4086
        %v4092 = vrot.slane %v4091, 4
        %v4094 = vshll.u32 %v3959, 16
        %v4096 = vrot.slane %v4094, 5
        %v4097 = vsel %vm256, %v4092, %v4096
        %v4099 = vshrl.u32 %v3960, 16
        %v4101 = vrot.slane %v4099, 4
        %v4102 = vshll.u32 %v3960, 16
        %v4104 = vrot.slane %v4102, 5
        %v4105 = vor.u32 %v4101, %v4104
        %v4106 = vrot.slane %v4105, 4
        %v4108 = vshll.u32 %v3961, 16
        %v4110 = vrot.slane %v4108, 5
        %v4111 = vsel %vm256, %v4106, %v4110
        %v4112 = vshrl.u32 %v3961, 16
        %v4114 = vrot.slane %v4112, 4
        %v4115 = vor.u32 %v4114, %v4110
        %v4116 = vrot.slane %v4115, 4
        %v4118 = vshll.u32 %v3962, 16
        %v4120 = vrot.slane %v4118, 5
        %v4121 = vsel %vm256, %v4116, %v4120
        %v4123 = vshrl.u32 %v3963, 16
        %v4125 = vrot.slane %v4123, 4
        %v4126 = vshll.u32 %v3963, 16
        %v4128 = vrot.slane %v4126, 5
        %v4129 = vor.u32 %v4125, %v4128
        %v4130 = vrot.slane %v4129, 4
        %v4132 = vshll.u32 %v3964, 16
        %v4134 = vrot.slane %v4132, 5
        %v4135 = vsel %vm256, %v4130, %v4134
        %v4136 = vshrl.u32 %v3964, 16
        %v4138 = vrot.slane %v4136, 4
        %v4139 = vor.u32 %v4138, %v4134
        %v4140 = vrot.slane %v4139, 4
        %v4142 = vshll.u32 %v3965, 16
        %v4144 = vrot.slane %v4142, 5
        %v4145 = vsel %vm256, %v4140, %v4144
        %v4147 = vshrl.u32 %v3966, 16
        %v4149 = vrot.slane %v4147, 4
        %v4150 = vshll.u32 %v3966, 16
        %v4152 = vrot.slane %v4150, 5
        %v4153 = vor.u32 %v4149, %v4152
        %v4154 = vrot.slane %v4153, 4
        %v4156 = vshll.u32 %v3967, 16
        %v4158 = vrot.slane %v4156, 5
        %v4159 = vsel %vm256, %v4154, %v4158
        %v4160 = vshrl.u32 %v3967, 16
        %v4162 = vrot.slane %v4160, 4
        %v4163 = vor.u32 %v4162, %v4158
        %v4164 = vrot.slane %v4163, 4
        %v4166 = vshll.u32 %v3968, 16
        %v4168 = vrot.slane %v4166, 5
        %v4169 = vsel %vm256, %v4164, %v4168
        %v4171 = vshrl.u32 %v3969, 16
        %v4173 = vrot.slane %v4171, 4
        %v4174 = vshll.u32 %v3969, 16
        %v4176 = vrot.slane %v4174, 5
        %v4177 = vor.u32 %v4173, %v4176
        %v4178 = vrot.slane %v4177, 4
        %v4180 = vshll.u32 %v3970, 16
        %v4182 = vrot.slane %v4180, 5
        %v4183 = vsel %vm256, %v4178, %v4182
        %v4184 = vshrl.u32 %v3970, 16
        %v4186 = vrot.slane %v4184, 4
        %v4187 = vor.u32 %v4186, %v4182
        %v4188 = vrot.slane %v4187, 4
        %v4190 = vshll.u32 %v3971, 16
        %v4192 = vrot.slane %v4190, 5
        %v4193 = vsel %vm256, %v4188, %v4192
        %v4195 = vshrl.u32 %v3972, 16
        %v4197 = vrot.slane %v4195, 4
        %v4198 = vshll.u32 %v3972, 16
        %v4200 = vrot.slane %v4198, 5
        %v4201 = vor.u32 %v4197, %v4200
        %v4202 = vrot.slane %v4201, 4
        %v4204 = vshll.u32 %v3973, 16
        %v4206 = vrot.slane %v4204, 5
        %v4207 = vsel %vm256, %v4202, %v4206
        %v4208 = vshrl.u32 %v3973, 16
        %v4210 = vrot.slane %v4208, 4
        %v4211 = vor.u32 %v4210, %v4206
        %v4212 = vrot.slane %v4211, 4
        %v4214 = vshll.u32 %v3974, 16
        %v4216 = vrot.slane %v4214, 5
        %v4217 = vsel %vm256, %v4212, %v4216
        %v4219 = vshrl.u32 %v3975, 16
        %v4221 = vrot.slane %v4219, 4
        %v4222 = vshll.u32 %v3975, 16
        %v4224 = vrot.slane %v4222, 5
        %v4225 = vor.u32 %v4221, %v4224
        %v4226 = vrot.slane %v4225, 4
        %v4228 = vshll.u32 %v3976, 16
        %v4230 = vrot.slane %v4228, 5
        %v4231 = vsel %vm256, %v4226, %v4230
        %v4232 = vshrl.u32 %v3976, 16
        %v4234 = vrot.slane %v4232, 4
        %v4235 = vor.u32 %v4234, %v4230
        %v4236 = vrot.slane %v4235, 4
        %v4238 = vshll.u32 %v3977, 16
        %v4240 = vrot.slane %v4238, 5
        %v4241 = vsel %vm256, %v4236, %v4240
        %v4243 = vshrl.u32 %v3978, 16
        %v4245 = vrot.slane %v4243, 4
        %v4246 = vshll.u32 %v3978, 16
        %v4248 = vrot.slane %v4246, 5
        %v4249 = vor.u32 %v4245, %v4248
        %v4250 = vrot.slane %v4249, 4
        %v4252 = vshll.u32 %v3979, 16
        %v4254 = vrot.slane %v4252, 5
        %v4255 = vsel %vm256, %v4250, %v4254
        %v4256 = vshrl.u32 %v3979, 16
        %v4258 = vrot.slane %v4256, 4
        %v4259 = vor.u32 %v4258, %v4254
        %v4260 = vrot.slane %v4259, 4
        %v4262 = vshll.u32 %v3980, 16
        %v4264 = vrot.slane %v4262, 5
        %v4265 = vsel %vm256, %v4260, %v4264
        %v4267 = vshrl.u32 %v3981, 16
        %v4269 = vrot.slane %v4267, 4
        %v4270 = vshll.u32 %v3981, 16
        %v4272 = vrot.slane %v4270, 5
        %v4273 = vor.u32 %v4269, %v4272
        %v4274 = vrot.slane %v4273, 4
        %v4276 = vshll.u32 %v3982, 16
        %v4278 = vrot.slane %v4276, 5
        %v4279 = vsel %vm256, %v4274, %v4278
        %v4280 = vshrl.u32 %v3982, 16
        %v4282 = vrot.slane %v4280, 4
        %v4283 = vor.u32 %v4282, %v4278
        %v4284 = vrot.slane %v4283, 4
        %v4286 = vshll.u32 %v3983, 16
        %v4288 = vrot.slane %v4286, 5
        %v4289 = vsel %vm256, %v4284, %v4288
        %v4291 = vshrl.u32 %v3984, 16
        %v4293 = vrot.slane %v4291, 4
        %v4294 = vshll.u32 %v3984, 16
        %v4296 = vrot.slane %v4294, 5
        %v4297 = vor.u32 %v4293, %v4296
        %v4298 = vrot.slane %v4297, 4
        %v4300 = vshll.u32 %v3985, 16
        %v4302 = vrot.slane %v4300, 5
        %v4303 = vsel %vm256, %v4298, %v4302
        %v4304 = vshrl.u32 %v3985, 16
        %v4306 = vrot.slane %v4304, 4
        %v4307 = vor.u32 %v4306, %v4302
        %v4308 = vrot.slane %v4307, 4
        %v4310 = vshll.u32 %v3986, 16
        %v4312 = vrot.slane %v4310, 5
        %v4313 = vsel %vm256, %v4308, %v4312
        %v4315 = vshrl.u32 %v3987, 16
        %v4317 = vrot.slane %v4315, 4
        %v4318 = vshll.u32 %v3987, 16
        %v4320 = vrot.slane %v4318, 5
        %v4321 = vor.u32 %v4317, %v4320
        %v4322 = vrot.slane %v4321, 4
        %v4324 = vshll.u32 %v3988, 16
        %v4326 = vrot.slane %v4324, 5
        %v4327 = vsel %vm256, %v4322, %v4326
        %v4328 = vshrl.u32 %v3988, 16
        %v4330 = vrot.slane %v4328, 4
        %v4331 = vor.u32 %v4330, %v4326
        %v4332 = vrot.slane %v4331, 4
        %v4334 = vshll.u32 %v3989, 16
        %v4336 = vrot.slane %v4334, 5
        %v4337 = vsel %vm256, %v4332, %v4336
        %v4339 = vshrl.u32 %v3990, 16
        %v4341 = vrot.slane %v4339, 4
        %v4342 = vshll.u32 %v3990, 16
        %v4344 = vrot.slane %v4342, 5
        %v4345 = vor.u32 %v4341, %v4344
        %v4346 = vrot.slane %v4345, 4
        %v4348 = vshll.u32 %v3991, 16
        %v4350 = vrot.slane %v4348, 5
        %v4351 = vsel %vm256, %v4346, %v4350
        %v4352 = vshrl.u32 %v3991, 16
        %v4354 = vrot.slane %v4352, 4
        %v4355 = vor.u32 %v4354, %v4350
        %v4356 = vrot.slane %v4355, 4
        %v4358 = vshll.u32 %v3992, 16
        %v4360 = vrot.slane %v4358, 5
        %v4361 = vsel %vm256, %v4356, %v4360
        %v4363 = vshrl.u32 %v3993, 16
        %v4365 = vrot.slane %v4363, 4
        %v4366 = vshll.u32 %v3993, 16
        %v4368 = vrot.slane %v4366, 5
        %v4369 = vor.u32 %v4365, %v4368
        %v4370 = vrot.slane %v4369, 4
        %v4372 = vshll.u32 %v3994, 16
        %v4374 = vrot.slane %v4372, 5
        %v4375 = vsel %vm256, %v4370, %v4374
        %v4376 = vshrl.u32 %v3994, 16
        %v4378 = vrot.slane %v4376, 4
        %v4379 = vor.u32 %v4378, %v4374
        %v4380 = vrot.slane %v4379, 4
        %v4382 = vshll.u32 %v3995, 16
        %v4384 = vrot.slane %v4382, 5
        %v4385 = vsel %vm256, %v4380, %v4384
        %v4387 = vshrl.u32 %v3996, 16
        %v4389 = vrot.slane %v4387, 4
        %v4390 = vshll.u32 %v3996, 16
        %v4392 = vrot.slane %v4390, 5
        %v4393 = vor.u32 %v4389, %v4392
        %v4394 = vrot.slane %v4393, 4
        %v4396 = vshll.u32 %v3997, 16
        %v4398 = vrot.slane %v4396, 5
        %v4399 = vsel %vm256, %v4394, %v4398
        %v4400 = vshrl.u32 %v3997, 16
        %v4402 = vrot.slane %v4400, 4
        %v4403 = vor.u32 %v4402, %v4398
        %v4404 = vrot.slane %v4403, 4
        %v4406 = vshll.u32 %v3998, 16
        %v4408 = vrot.slane %v4406, 5
        %v4409 = vsel %vm256, %v4404, %v4408
        %v4411 = vshrl.u32 %v3999, 16
        %v4413 = vrot.slane %v4411, 4
        %v4414 = vshll.u32 %v3999, 16
        %v4416 = vrot.slane %v4414, 5
        %v4417 = vor.u32 %v4413, %v4416
        %v4418 = vrot.slane %v4417, 4
        %v4420 = vshll.u32 %v4000, 16
        %v4422 = vrot.slane %v4420, 5
        %v4423 = vsel %vm256, %v4418, %v4422
        %v4424 = vshrl.u32 %v4000, 16
        %v4426 = vrot.slane %v4424, 4
        %v4427 = vor.u32 %v4426, %v4422
        %v4428 = vrot.slane %v4427, 4
        %v4430 = vshll.u32 %v4001, 16
        %v4432 = vrot.slane %v4430, 5
        %v4433 = vsel %vm256, %v4428, %v4432
        %s4434 = scalar_lea.vmem %s1, 14
        %v4435 = vld [vmem:[%s4434] sm:$0x3]
        %v4436 = vunpack.c.l.b16 %v4015
        %v4437 = vunpack.c.l.b16 %v4025
        %v4438 = vunpack.c.l.b16 %v4039
        %v4439 = vunpack.c.l.b16 %v4049
        %v4440 = vunpack.c.l.b16 %v4063
        %v4441 = vunpack.c.l.b16 %v4073
        %v4442 = vunpack.c.l.b16 %v4087
        %v4443 = vunpack.c.l.b16 %v4097
        %v4444 = vunpack.c.l.b16 %v4111
        %v4445 = vunpack.c.l.b16 %v4121
        %v4446 = vunpack.c.l.b16 %v4135
        %v4447 = vunpack.c.l.b16 %v4145
        %v4448 = vunpack.c.l.b16 %v4159
        %v4449 = vunpack.c.l.b16 %v4169
        %v4450 = vunpack.c.l.b16 %v4183
        %v4451 = vunpack.c.l.b16 %v4193
        %v4452 = vunpack.c.l.b16 %v4207
        %v4453 = vunpack.c.l.b16 %v4217
        %v4454 = vunpack.c.l.b16 %v4231
        %v4455 = vunpack.c.l.b16 %v4241
        %v4456 = vunpack.c.l.b16 %v4255
        %v4457 = vunpack.c.l.b16 %v4265
        %v4458 = vunpack.c.l.b16 %v4279
        %v4459 = vunpack.c.l.b16 %v4289
        %v4460 = vunpack.c.l.b16 %v4303
        %v4461 = vunpack.c.l.b16 %v4313
        %v4462 = vunpack.c.l.b16 %v4327
        %v4463 = vunpack.c.l.b16 %v4337
        %v4464 = vunpack.c.l.b16 %v4351
        %v4465 = vunpack.c.l.b16 %v4361
        %v4466 = vunpack.c.l.b16 %v4375
        %v4467 = vunpack.c.l.b16 %v4385
        %v4468 = vunpack.c.l.b16 %v4399
        %v4469 = vunpack.c.l.b16 %v4409
        %v4470 = vunpack.c.l.b16 %v4423
        %v4471 = vunpack.c.l.b16 %v4433
        %v4472 = vpack.c.b16 %v4437, %v4436
        %v4473 = vpack.c.b16 %v4439, %v4438
        %v4474 = vpack.c.b16 %v4441, %v4440
        %v4475 = vpack.c.b16 %v4443, %v4442
        %v4476 = vpack.c.b16 %v4445, %v4444
        %v4477 = vpack.c.b16 %v4447, %v4446
        %v4478 = vpack.c.b16 %v4449, %v4448
        %v4479 = vpack.c.b16 %v4451, %v4450
        %v4480 = vpack.c.b16 %v4453, %v4452
        %v4481 = vpack.c.b16 %v4455, %v4454
        %v4482 = vpack.c.b16 %v4457, %v4456
        %v4483 = vpack.c.b16 %v4459, %v4458
        %v4484 = vpack.c.b16 %v4461, %v4460
        %v4485 = vpack.c.b16 %v4463, %v4462
        %v4486 = vpack.c.b16 %v4465, %v4464
        %v4487 = vpack.c.b16 %v4467, %v4466
        %v4488 = vpack.c.b16 %v4469, %v4468
        %v4489 = vpack.c.b16 %v4471, %v4470
        %v4491 = vsel %vm745, %v4472, 0
        %v4494 = vsel %vm745, %v4473, 0
        %v4497 = vsel %vm745, %v4474, 0
        %v4500 = vsel %vm745, %v4475, 0
        %v4503 = vsel %vm745, %v4476, 0
        %v4506 = vsel %vm745, %v4477, 0
        %v4509 = vsel %vm745, %v4478, 0
        %v4512 = vsel %vm745, %v4479, 0
        %v4515 = vsel %vm745, %v4480, 0
        %v4518 = vsel %vm745, %v4481, 0
        %v4521 = vsel %vm745, %v4482, 0
        %v4524 = vsel %vm745, %v4483, 0
        %v4527 = vsel %vm745, %v4484, 0
        %v4530 = vsel %vm745, %v4485, 0
        %v4533 = vsel %vm745, %v4486, 0
        %v4536 = vsel %vm745, %v4487, 0
        %v4539 = vsel %vm745, %v4488, 0
        %v4542 = vsel %vm745, %v4489, 0
        %v4545 = vsel %vm800, %v4435, 0
        %4547 = vmatprep.subr.bf16.mxu0 0
        %4548 = vmatpush1.bf16.msra.mxu0 %v4545
        %4549 = vmatprep.subr.bf16.mxu0 0
        %4550 = vmatpush1.bf16.msra.mxu0 0
        %4551 = vmatprep.subr.bf16.mxu0 0
        %4552 = vmatpush1.bf16.msra.mxu0 0
        %4553 = vmatprep.subr.bf16.mxu0 0
        %4554 = vmatpush1.bf16.msra.mxu0 0
        %4555 = vmatprep.subr.bf16.mxu0 0
        %4556 = vmatpush1.bf16.msra.mxu0 0
        %4557 = vmatprep.subr.bf16.mxu0 0
        %4558 = vmatpush1.bf16.msra.mxu0 0
        %4559 = vmatprep.subr.bf16.mxu0 0
        %4560 = vmatpush1.bf16.msra.mxu0 0
        %4561 = vmatprep.subr.bf16.mxu0 0
        %4562 = vmatpush1.bf16.msra.mxu0 0
        %4563 = vmatprep.subr.bf16.mxu0 0
        %4564 = vmatpush1.bf16.msra.mxu0 0
        %4565 = vmatprep.subr.bf16.mxu0 0
        %4566 = vmatpush1.bf16.msra.mxu0 0
        %4567 = vmatprep.subr.bf16.mxu0 0
        %4568 = vmatpush1.bf16.msra.mxu0 0
        %4569 = vmatprep.subr.bf16.mxu0 0
        %4570 = vmatpush1.bf16.msra.mxu0 0
        %4571 = vmatprep.subr.bf16.mxu0 0
        %4572 = vmatpush1.bf16.msra.mxu0 0
        %4573 = vmatprep.subr.bf16.mxu0 0
        %4574 = vmatpush1.bf16.msra.mxu0 0
        %4575 = vmatprep.subr.bf16.mxu0 0
        %4576 = vmatpush1.bf16.msra.mxu0 0
        %4577 = vmatprep.subr.bf16.mxu0 0
        %4578 = vmatpush1.bf16.msra.mxu0 0
        %4579 = vmatprep.mubr.bf16.mxu0 0
        %4580 = vmatmul.mubr.bf16.gmra.mrb[0].mxu0 %v4491
        %v4581 = vpop.f32.mrb[0].mxu0
        %v4582 = vadd.f32 0.0, %v4581
        %v4583 = vpop.f32.mrb[0].mxu0
        %v4584 = vpop.f32.mrb[0].mxu0
        %v4585 = vadd.f32 0.0, %v4584
        %v4586 = vpop.f32.mrb[0].mxu0
        %4587 = vmatprep.mubr.bf16.mxu0 0
        %4588 = vmatmul.mubr.bf16.gmra.mrb[0].mxu0 %v4494
        %v4589 = vpop.f32.mrb[0].mxu0
        %v4590 = vadd.f32 0.0, %v4589
        %v4591 = vpop.f32.mrb[0].mxu0
        %v4592 = vpop.f32.mrb[0].mxu0
        %v4593 = vadd.f32 0.0, %v4592
        %v4594 = vpop.f32.mrb[0].mxu0
        %4595 = vmatprep.mubr.bf16.mxu0 0
        %4596 = vmatmul.mubr.bf16.gmra.mrb[0].mxu0 %v4497
        %v4597 = vpop.f32.mrb[0].mxu0
        %v4598 = vadd.f32 0.0, %v4597
        %v4599 = vpop.f32.mrb[0].mxu0
        %v4600 = vpop.f32.mrb[0].mxu0
        %v4601 = vadd.f32 0.0, %v4600
        %v4602 = vpop.f32.mrb[0].mxu0
        %4603 = vmatprep.mubr.bf16.mxu0 0
        %4604 = vmatmul.mubr.bf16.gmra.mrb[0].mxu0 %v4500
        %v4605 = vpop.f32.mrb[0].mxu0
        %v4606 = vadd.f32 0.0, %v4605
        %v4607 = vpop.f32.mrb[0].mxu0
        %v4608 = vpop.f32.mrb[0].mxu0
        %v4609 = vadd.f32 0.0, %v4608
        %v4610 = vpop.f32.mrb[0].mxu0
        %4611 = vmatprep.mubr.bf16.mxu0 0
        %4612 = vmatmul.mubr.bf16.gmra.mrb[0].mxu0 %v4503
        %v4613 = vpop.f32.mrb[0].mxu0
        %v4614 = vadd.f32 0.0, %v4613
        %v4615 = vpop.f32.mrb[0].mxu0
        %v4616 = vpop.f32.mrb[0].mxu0
        %v4617 = vadd.f32 0.0, %v4616
        %v4618 = vpop.f32.mrb[0].mxu0
        %4619 = vmatprep.mubr.bf16.mxu0 0
        %4620 = vmatmul.mubr.bf16.gmra.mrb[0].mxu0 %v4506
        %v4621 = vpop.f32.mrb[0].mxu0
        %v4622 = vadd.f32 0.0, %v4621
        %v4623 = vpop.f32.mrb[0].mxu0
        %v4624 = vpop.f32.mrb[0].mxu0
        %v4625 = vadd.f32 0.0, %v4624
        %v4626 = vpop.f32.mrb[0].mxu0
        %4627 = vmatprep.mubr.bf16.mxu0 0
        %4628 = vmatmul.mubr.bf16.gmra.mrb[0].mxu0 %v4509
        %v4629 = vpop.f32.mrb[0].mxu0
        %v4630 = vadd.f32 0.0, %v4629
        %v4631 = vpop.f32.mrb[0].mxu0
        %v4632 = vpop.f32.mrb[0].mxu0
        %v4633 = vadd.f32 0.0, %v4632
        %v4634 = vpop.f32.mrb[0].mxu0
        %4635 = vmatprep.mubr.bf16.mxu0 0
        %4636 = vmatmul.mubr.bf16.gmra.mrb[0].mxu0 %v4512
        %v4637 = vpop.f32.mrb[0].mxu0
        %v4638 = vadd.f32 0.0, %v4637
        %v4639 = vpop.f32.mrb[0].mxu0
        %v4640 = vpop.f32.mrb[0].mxu0
        %v4641 = vadd.f32 0.0, %v4640
        %v4642 = vpop.f32.mrb[0].mxu0
        %4643 = vmatprep.mubr.bf16.mxu0 0
        %4644 = vmatmul.mubr.bf16.gmra.mrb[0].mxu0 %v4515
        %v4645 = vpop.f32.mrb[0].mxu0
        %v4646 = vadd.f32 0.0, %v4645
        %v4647 = vpop.f32.mrb[0].mxu0
        %v4648 = vpop.f32.mrb[0].mxu0
        %v4649 = vadd.f32 0.0, %v4648
        %v4650 = vpop.f32.mrb[0].mxu0
        %4651 = vmatprep.mubr.bf16.mxu0 0
        %4652 = vmatmul.mubr.bf16.gmra.mrb[0].mxu0 %v4518
        %v4653 = vpop.f32.mrb[0].mxu0
        %v4654 = vadd.f32 0.0, %v4653
        %v4655 = vpop.f32.mrb[0].mxu0
        %v4656 = vpop.f32.mrb[0].mxu0
        %v4657 = vadd.f32 0.0, %v4656
        %v4658 = vpop.f32.mrb[0].mxu0
        %4659 = vmatprep.mubr.bf16.mxu0 0
        %4660 = vmatmul.mubr.bf16.gmra.mrb[0].mxu0 %v4521
        %v4661 = vpop.f32.mrb[0].mxu0
        %v4662 = vadd.f32 0.0, %v4661
        %v4663 = vpop.f32.mrb[0].mxu0
        %v4664 = vpop.f32.mrb[0].mxu0
        %v4665 = vadd.f32 0.0, %v4664
        %v4666 = vpop.f32.mrb[0].mxu0
        %4667 = vmatprep.mubr.bf16.mxu0 0
        %4668 = vmatmul.mubr.bf16.gmra.mrb[0].mxu0 %v4524
        %v4669 = vpop.f32.mrb[0].mxu0
        %v4670 = vadd.f32 0.0, %v4669
        %v4671 = vpop.f32.mrb[0].mxu0
        %v4672 = vpop.f32.mrb[0].mxu0
        %v4673 = vadd.f32 0.0, %v4672
        %v4674 = vpop.f32.mrb[0].mxu0
        %4675 = vmatprep.mubr.bf16.mxu0 0
        %4676 = vmatmul.mubr.bf16.gmra.mrb[0].mxu0 %v4527
        %v4677 = vpop.f32.mrb[0].mxu0
        %v4678 = vadd.f32 0.0, %v4677
        %v4679 = vpop.f32.mrb[0].mxu0
        %v4680 = vpop.f32.mrb[0].mxu0
        %v4681 = vadd.f32 0.0, %v4680
        %v4682 = vpop.f32.mrb[0].mxu0
        %4683 = vmatprep.mubr.bf16.mxu0 0
        %4684 = vmatmul.mubr.bf16.gmra.mrb[0].mxu0 %v4530
        %v4685 = vpop.f32.mrb[0].mxu0
        %v4686 = vadd.f32 0.0, %v4685
        %v4687 = vpop.f32.mrb[0].mxu0
        %v4688 = vpop.f32.mrb[0].mxu0
        %v4689 = vadd.f32 0.0, %v4688
        %v4690 = vpop.f32.mrb[0].mxu0
        %4691 = vmatprep.mubr.bf16.mxu0 0
        %4692 = vmatmul.mubr.bf16.gmra.mrb[0].mxu0 %v4533
        %v4693 = vpop.f32.mrb[0].mxu0
        %v4694 = vadd.f32 0.0, %v4693
        %v4695 = vpop.f32.mrb[0].mxu0
        %v4696 = vpop.f32.mrb[0].mxu0
        %v4697 = vadd.f32 0.0, %v4696
        %v4698 = vpop.f32.mrb[0].mxu0
        %4699 = vmatprep.mubr.bf16.mxu0 0
        %4700 = vmatmul.mubr.bf16.gmra.mrb[0].mxu0 %v4536
        %v4701 = vpop.f32.mrb[0].mxu0
        %v4702 = vadd.f32 0.0, %v4701
        %v4703 = vpop.f32.mrb[0].mxu0
        %v4704 = vpop.f32.mrb[0].mxu0
        %v4705 = vadd.f32 0.0, %v4704
        %v4706 = vpop.f32.mrb[0].mxu0
        %4707 = vmatprep.mubr.bf16.mxu0 0
        %4708 = vmatmul.mubr.bf16.gmra.mrb[0].mxu0 %v4539
        %v4709 = vpop.f32.mrb[0].mxu0
        %v4710 = vadd.f32 0.0, %v4709
        %v4711 = vpop.f32.mrb[0].mxu0
        %v4712 = vpop.f32.mrb[0].mxu0
        %v4713 = vadd.f32 0.0, %v4712
        %v4714 = vpop.f32.mrb[0].mxu0
        %4715 = vmatprep.mubr.bf16.mxu0 0
        %4716 = vmatmul.mubr.bf16.gmra.mrb[0].mxu0 %v4542
        %v4717 = vpop.f32.mrb[0].mxu0
        %v4718 = vadd.f32 0.0, %v4717
        %v4719 = vpop.f32.mrb[0].mxu0
        %v4720 = vpop.f32.mrb[0].mxu0
        %v4721 = vadd.f32 0.0, %v4720
        %v4722 = vpop.f32.mrb[0].mxu0
        %4723 = vdwg.mxu0
        %v4724 = vadd.f32 %v3912, %v4582
        %v4725 = vadd.f32 %v3913, %v4585
        %v4726 = vadd.f32 %v3914, %v4590
        %v4727 = vadd.f32 %v3915, %v4593
        %v4728 = vadd.f32 %v3916, %v4598
        %v4729 = vadd.f32 %v3917, %v4601
        %v4730 = vadd.f32 %v3918, %v4606
        %v4731 = vadd.f32 %v3919, %v4609
        %v4732 = vadd.f32 %v3920, %v4614
        %v4733 = vadd.f32 %v3921, %v4617
        %v4734 = vadd.f32 %v3922, %v4622
        %v4735 = vadd.f32 %v3923, %v4625
        %v4736 = vadd.f32 %v3924, %v4630
        %v4737 = vadd.f32 %v3925, %v4633
        %v4738 = vadd.f32 %v3926, %v4638
        %v4739 = vadd.f32 %v3927, %v4641
        %v4740 = vadd.f32 %v3928, %v4646
        %v4741 = vadd.f32 %v3929, %v4649
        %v4742 = vadd.f32 %v3930, %v4654
        %v4743 = vadd.f32 %v3931, %v4657
        %v4744 = vadd.f32 %v3932, %v4662
        %v4745 = vadd.f32 %v3933, %v4665
        %v4746 = vadd.f32 %v3934, %v4670
        %v4747 = vadd.f32 %v3935, %v4673
        %v4748 = vadd.f32 %v3936, %v4678
        %v4749 = vadd.f32 %v3937, %v4681
        %v4750 = vadd.f32 %v3938, %v4686
        %v4751 = vadd.f32 %v3939, %v4689
        %v4752 = vadd.f32 %v3940, %v4694
        %v4753 = vadd.f32 %v3941, %v4697
        %v4754 = vadd.f32 %v3942, %v4702
        %v4755 = vadd.f32 %v3943, %v4705
        %v4756 = vadd.f32 %v3944, %v4710
        %v4757 = vadd.f32 %v3945, %v4713
        %v4758 = vadd.f32 %v3946, %v4718
        %v4759 = vadd.f32 %v3947, %v4721
        %v4760 = vld [vmem:[%s3549] sm:$0xe]
        %v4761 = vld [vmem:[%s3549 + $0xc] sm:$0xe]
        %v4762 = vld [vmem:[%s3549 + $0x18] sm:$0xe]
        %v4763 = vld [vmem:[%s3549 + $0x24] sm:$0xe]
        %v4764 = vld [vmem:[%s3549 + $0x30] sm:$0xe]
        %v4765 = vld [vmem:[%s3549 + $0x3c] sm:$0xe]
        %v4766 = vld [vmem:[%s3549 + $0x48] sm:$0xe]
        %v4767 = vld [vmem:[%s3549 + $0x54] sm:$0xe]
        %v4768 = vld [vmem:[%s3549 + $0x60] sm:$0xe]
        %v4769 = vld [vmem:[%s3549 + $0x6c] sm:$0xe]
        %v4770 = vld [vmem:[%s3549 + $0x78] sm:$0xe]
        %v4771 = vld [vmem:[%s3549 + $0x84] sm:$0xe]
        %v4772 = vld [vmem:[%s3549 + $0x90] sm:$0xe]
        %v4773 = vld [vmem:[%s3549 + $0x9c] sm:$0xe]
        %v4774 = vld [vmem:[%s3549 + $0xa8] sm:$0xe]
        %v4775 = vld [vmem:[%s3549 + $0xb4] sm:$0xe]
        %v4776 = vld [vmem:[%s3549 + $0xc0] sm:$0xe]
        %v4777 = vld [vmem:[%s3549 + $0xcc] sm:$0xe]
        %v4832 = vrot.slane %v4760, 5
        %v4833 = vrot.slane %v4832, 4
        %v4834 = vrot.slane %v3949, 5
        %v4835 = vsel %vm1361, %v4833, %v4834
        %v4836 = vrot.slane %v4834, 4
        %v4837 = vrot.slane %v3950, 5
        %v4838 = vsel %vm1361, %v4836, %v4837
        %v4839 = vrot.slane %v4761, 5
        %v4840 = vrot.slane %v4839, 4
        %v4841 = vrot.slane %v3952, 5
        %v4842 = vsel %vm1361, %v4840, %v4841
        %v4843 = vrot.slane %v4841, 4
        %v4844 = vrot.slane %v3953, 5
        %v4845 = vsel %vm1361, %v4843, %v4844
        %v4846 = vrot.slane %v4762, 5
        %v4847 = vrot.slane %v4846, 4
        %v4848 = vrot.slane %v3955, 5
        %v4849 = vsel %vm1361, %v4847, %v4848
        %v4850 = vrot.slane %v4848, 4
        %v4851 = vrot.slane %v3956, 5
        %v4852 = vsel %vm1361, %v4850, %v4851
        %v4853 = vrot.slane %v4763, 5
        %v4854 = vrot.slane %v4853, 4
        %v4855 = vrot.slane %v3958, 5
        %v4856 = vsel %vm1361, %v4854, %v4855
        %v4857 = vrot.slane %v4855, 4
        %v4858 = vrot.slane %v3959, 5
        %v4859 = vsel %vm1361, %v4857, %v4858
        %v4860 = vrot.slane %v4764, 5
        %v4861 = vrot.slane %v4860, 4
        %v4862 = vrot.slane %v3961, 5
        %v4863 = vsel %vm1361, %v4861, %v4862
        %v4864 = vrot.slane %v4862, 4
        %v4865 = vrot.slane %v3962, 5
        %v4866 = vsel %vm1361, %v4864, %v4865
        %v4867 = vrot.slane %v4765, 5
        %v4868 = vrot.slane %v4867, 4
        %v4869 = vrot.slane %v3964, 5
        %v4870 = vsel %vm1361, %v4868, %v4869
        %v4871 = vrot.slane %v4869, 4
        %v4872 = vrot.slane %v3965, 5
        %v4873 = vsel %vm1361, %v4871, %v4872
        %v4874 = vrot.slane %v4766, 5
        %v4875 = vrot.slane %v4874, 4
        %v4876 = vrot.slane %v3967, 5
        %v4877 = vsel %vm1361, %v4875, %v4876
        %v4878 = vrot.slane %v4876, 4
        %v4879 = vrot.slane %v3968, 5
        %v4880 = vsel %vm1361, %v4878, %v4879
        %v4881 = vrot.slane %v4767, 5
        %v4882 = vrot.slane %v4881, 4
        %v4883 = vrot.slane %v3970, 5
        %v4884 = vsel %vm1361, %v4882, %v4883
        %v4885 = vrot.slane %v4883, 4
        %v4886 = vrot.slane %v3971, 5
        %v4887 = vsel %vm1361, %v4885, %v4886
        %v4888 = vrot.slane %v4768, 5
        %v4889 = vrot.slane %v4888, 4
        %v4890 = vrot.slane %v3973, 5
        %v4891 = vsel %vm1361, %v4889, %v4890
        %v4892 = vrot.slane %v4890, 4
        %v4893 = vrot.slane %v3974, 5
        %v4894 = vsel %vm1361, %v4892, %v4893
        %v4895 = vrot.slane %v4769, 5
        %v4896 = vrot.slane %v4895, 4
        %v4897 = vrot.slane %v3976, 5
        %v4898 = vsel %vm1361, %v4896, %v4897
        %v4899 = vrot.slane %v4897, 4
        %v4900 = vrot.slane %v3977, 5
        %v4901 = vsel %vm1361, %v4899, %v4900
        %v4902 = vrot.slane %v4770, 5
        %v4903 = vrot.slane %v4902, 4
        %v4904 = vrot.slane %v3979, 5
        %v4905 = vsel %vm1361, %v4903, %v4904
        %v4906 = vrot.slane %v4904, 4
        %v4907 = vrot.slane %v3980, 5
        %v4908 = vsel %vm1361, %v4906, %v4907
        %v4909 = vrot.slane %v4771, 5
        %v4910 = vrot.slane %v4909, 4
        %v4911 = vrot.slane %v3982, 5
        %v4912 = vsel %vm1361, %v4910, %v4911
        %v4913 = vrot.slane %v4911, 4
        %v4914 = vrot.slane %v3983, 5
        %v4915 = vsel %vm1361, %v4913, %v4914
        %v4916 = vrot.slane %v4772, 5
        %v4917 = vrot.slane %v4916, 4
        %v4918 = vrot.slane %v3985, 5
        %v4919 = vsel %vm1361, %v4917, %v4918
        %v4920 = vrot.slane %v4918, 4
        %v4921 = vrot.slane %v3986, 5
        %v4922 = vsel %vm1361, %v4920, %v4921
        %v4923 = vrot.slane %v4773, 5
        %v4924 = vrot.slane %v4923, 4
        %v4925 = vrot.slane %v3988, 5
        %v4926 = vsel %vm1361, %v4924, %v4925
        %v4927 = vrot.slane %v4925, 4
        %v4928 = vrot.slane %v3989, 5
        %v4929 = vsel %vm1361, %v4927, %v4928
        %v4930 = vrot.slane %v4774, 5
        %v4931 = vrot.slane %v4930, 4
        %v4932 = vrot.slane %v3991, 5
        %v4933 = vsel %vm1361, %v4931, %v4932
        %v4934 = vrot.slane %v4932, 4
        %v4935 = vrot.slane %v3992, 5
        %v4936 = vsel %vm1361, %v4934, %v4935
        %v4937 = vrot.slane %v4775, 5
        %v4938 = vrot.slane %v4937, 4
        %v4939 = vrot.slane %v3994, 5
        %v4940 = vsel %vm1361, %v4938, %v4939
        %v4941 = vrot.slane %v4939, 4
        %v4942 = vrot.slane %v3995, 5
        %v4943 = vsel %vm1361, %v4941, %v4942
        %v4944 = vrot.slane %v4776, 5
        %v4945 = vrot.slane %v4944, 4
        %v4946 = vrot.slane %v3997, 5
        %v4947 = vsel %vm1361, %v4945, %v4946
        %v4948 = vrot.slane %v4946, 4
        %v4949 = vrot.slane %v3998, 5
        %v4950 = vsel %vm1361, %v4948, %v4949
        %v4951 = vrot.slane %v4777, 5
        %v4952 = vrot.slane %v4951, 4
        %v4953 = vrot.slane %v4000, 5
        %v4954 = vsel %vm1361, %v4952, %v4953
        %v4955 = vrot.slane %v4953, 4
        %v4956 = vrot.slane %v4001, 5
        %v4957 = vsel %vm1361, %v4955, %v4956
        %s4958 = scalar_lea.vmem %s1, 16
        %v4959 = vld [vmem:[%s4958] sm:$0x3]
        %v4960 = vunpack.c.l.b16 %v4835
        %v4961 = vunpack.c.l.b16 %v4838
        %v4962 = vunpack.c.l.b16 %v4842
        %v4963 = vunpack.c.l.b16 %v4845
        %v4964 = vunpack.c.l.b16 %v4849
        %v4965 = vunpack.c.l.b16 %v4852
        %v4966 = vunpack.c.l.b16 %v4856
        %v4967 = vunpack.c.l.b16 %v4859
        %v4968 = vunpack.c.l.b16 %v4863
        %v4969 = vunpack.c.l.b16 %v4866
        %v4970 = vunpack.c.l.b16 %v4870
        %v4971 = vunpack.c.l.b16 %v4873
        %v4972 = vunpack.c.l.b16 %v4877
        %v4973 = vunpack.c.l.b16 %v4880
        %v4974 = vunpack.c.l.b16 %v4884
        %v4975 = vunpack.c.l.b16 %v4887
        %v4976 = vunpack.c.l.b16 %v4891
        %v4977 = vunpack.c.l.b16 %v4894
        %v4978 = vunpack.c.l.b16 %v4898
        %v4979 = vunpack.c.l.b16 %v4901
        %v4980 = vunpack.c.l.b16 %v4905
        %v4981 = vunpack.c.l.b16 %v4908
        %v4982 = vunpack.c.l.b16 %v4912
        %v4983 = vunpack.c.l.b16 %v4915
        %v4984 = vunpack.c.l.b16 %v4919
        %v4985 = vunpack.c.l.b16 %v4922
        %v4986 = vunpack.c.l.b16 %v4926
        %v4987 = vunpack.c.l.b16 %v4929
        %v4988 = vunpack.c.l.b16 %v4933
        %v4989 = vunpack.c.l.b16 %v4936
        %v4990 = vunpack.c.l.b16 %v4940
        %v4991 = vunpack.c.l.b16 %v4943
        %v4992 = vunpack.c.l.b16 %v4947
        %v4993 = vunpack.c.l.b16 %v4950
        %v4994 = vunpack.c.l.b16 %v4954
        %v4995 = vunpack.c.l.b16 %v4957
        %v4996 = vpack.c.b16 %v4961, %v4960
        %v4997 = vpack.c.b16 %v4963, %v4962
        %v4998 = vpack.c.b16 %v4965, %v4964
        %v4999 = vpack.c.b16 %v4967, %v4966
        %v5000 = vpack.c.b16 %v4969, %v4968
        %v5001 = vpack.c.b16 %v4971, %v4970
        %v5002 = vpack.c.b16 %v4973, %v4972
        %v5003 = vpack.c.b16 %v4975, %v4974
        %v5004 = vpack.c.b16 %v4977, %v4976
        %v5005 = vpack.c.b16 %v4979, %v4978
        %v5006 = vpack.c.b16 %v4981, %v4980
        %v5007 = vpack.c.b16 %v4983, %v4982
        %v5008 = vpack.c.b16 %v4985, %v4984
        %v5009 = vpack.c.b16 %v4987, %v4986
        %v5010 = vpack.c.b16 %v4989, %v4988
        %v5011 = vpack.c.b16 %v4991, %v4990
        %v5012 = vpack.c.b16 %v4993, %v4992
        %v5013 = vpack.c.b16 %v4995, %v4994
        %v5015 = vsel %vm745, %v4996, 0
        %v5018 = vsel %vm745, %v4997, 0
        %v5021 = vsel %vm745, %v4998, 0
        %v5024 = vsel %vm745, %v4999, 0
        %v5027 = vsel %vm745, %v5000, 0
        %v5030 = vsel %vm745, %v5001, 0
        %v5033 = vsel %vm745, %v5002, 0
        %v5036 = vsel %vm745, %v5003, 0
        %v5039 = vsel %vm745, %v5004, 0
        %v5042 = vsel %vm745, %v5005, 0
        %v5045 = vsel %vm745, %v5006, 0
        %v5048 = vsel %vm745, %v5007, 0
        %v5051 = vsel %vm745, %v5008, 0
        %v5054 = vsel %vm745, %v5009, 0
        %v5057 = vsel %vm745, %v5010, 0
        %v5060 = vsel %vm745, %v5011, 0
        %v5063 = vsel %vm745, %v5012, 0
        %v5066 = vsel %vm745, %v5013, 0
        %v5069 = vsel %vm800, %v4959, 0
        %5071 = vmatprep.subr.bf16.mxu0 0
        %5072 = vmatpush1.bf16.msra.mxu0 %v5069
        %5073 = vmatprep.subr.bf16.mxu0 0
        %5074 = vmatpush1.bf16.msra.mxu0 0
        %5075 = vmatprep.subr.bf16.mxu0 0
        %5076 = vmatpush1.bf16.msra.mxu0 0
        %5077 = vmatprep.subr.bf16.mxu0 0
        %5078 = vmatpush1.bf16.msra.mxu0 0
        %5079 = vmatprep.subr.bf16.mxu0 0
        %5080 = vmatpush1.bf16.msra.mxu0 0
        %5081 = vmatprep.subr.bf16.mxu0 0
        %5082 = vmatpush1.bf16.msra.mxu0 0
        %5083 = vmatprep.subr.bf16.mxu0 0
        %5084 = vmatpush1.bf16.msra.mxu0 0
        %5085 = vmatprep.subr.bf16.mxu0 0
        %5086 = vmatpush1.bf16.msra.mxu0 0
        %5087 = vmatprep.subr.bf16.mxu0 0
        %5088 = vmatpush1.bf16.msra.mxu0 0
        %5089 = vmatprep.subr.bf16.mxu0 0
        %5090 = vmatpush1.bf16.msra.mxu0 0
        %5091 = vmatprep.subr.bf16.mxu0 0
        %5092 = vmatpush1.bf16.msra.mxu0 0
        %5093 = vmatprep.subr.bf16.mxu0 0
        %5094 = vmatpush1.bf16.msra.mxu0 0
        %5095 = vmatprep.subr.bf16.mxu0 0
        %5096 = vmatpush1.bf16.msra.mxu0 0
        %5097 = vmatprep.subr.bf16.mxu0 0
        %5098 = vmatpush1.bf16.msra.mxu0 0
        %5099 = vmatprep.subr.bf16.mxu0 0
        %5100 = vmatpush1.bf16.msra.mxu0 0
        %5101 = vmatprep.subr.bf16.mxu0 0
        %5102 = vmatpush1.bf16.msra.mxu0 0
        %5103 = vmatprep.mubr.bf16.mxu0 0
        %5104 = vmatmul.mubr.bf16.gmra.mrb[0].mxu0 %v5015
        %v5105 = vpop.f32.mrb[0].mxu0
        %v5106 = vadd.f32 0.0, %v5105
        %v5107 = vpop.f32.mrb[0].mxu0
        %v5108 = vpop.f32.mrb[0].mxu0
        %v5109 = vadd.f32 0.0, %v5108
        %v5110 = vpop.f32.mrb[0].mxu0
        %5111 = vmatprep.mubr.bf16.mxu0 0
        %5112 = vmatmul.mubr.bf16.gmra.mrb[0].mxu0 %v5018
        %v5113 = vpop.f32.mrb[0].mxu0
        %v5114 = vadd.f32 0.0, %v5113
        %v5115 = vpop.f32.mrb[0].mxu0
        %v5116 = vpop.f32.mrb[0].mxu0
        %v5117 = vadd.f32 0.0, %v5116
        %v5118 = vpop.f32.mrb[0].mxu0
        %5119 = vmatprep.mubr.bf16.mxu0 0
        %5120 = vmatmul.mubr.bf16.gmra.mrb[0].mxu0 %v5021
        %v5121 = vpop.f32.mrb[0].mxu0
        %v5122 = vadd.f32 0.0, %v5121
        %v5123 = vpop.f32.mrb[0].mxu0
        %v5124 = vpop.f32.mrb[0].mxu0
        %v5125 = vadd.f32 0.0, %v5124
        %v5126 = vpop.f32.mrb[0].mxu0
        %5127 = vmatprep.mubr.bf16.mxu0 0
        %5128 = vmatmul.mubr.bf16.gmra.mrb[0].mxu0 %v5024
        %v5129 = vpop.f32.mrb[0].mxu0
        %v5130 = vadd.f32 0.0, %v5129
        %v5131 = vpop.f32.mrb[0].mxu0
        %v5132 = vpop.f32.mrb[0].mxu0
        %v5133 = vadd.f32 0.0, %v5132
        %v5134 = vpop.f32.mrb[0].mxu0
        %5135 = vmatprep.mubr.bf16.mxu0 0
        %5136 = vmatmul.mubr.bf16.gmra.mrb[0].mxu0 %v5027
        %v5137 = vpop.f32.mrb[0].mxu0
        %v5138 = vadd.f32 0.0, %v5137
        %v5139 = vpop.f32.mrb[0].mxu0
        %v5140 = vpop.f32.mrb[0].mxu0
        %v5141 = vadd.f32 0.0, %v5140
        %v5142 = vpop.f32.mrb[0].mxu0
        %5143 = vmatprep.mubr.bf16.mxu0 0
        %5144 = vmatmul.mubr.bf16.gmra.mrb[0].mxu0 %v5030
        %v5145 = vpop.f32.mrb[0].mxu0
        %v5146 = vadd.f32 0.0, %v5145
        %v5147 = vpop.f32.mrb[0].mxu0
        %v5148 = vpop.f32.mrb[0].mxu0
        %v5149 = vadd.f32 0.0, %v5148
        %v5150 = vpop.f32.mrb[0].mxu0
        %5151 = vmatprep.mubr.bf16.mxu0 0
        %5152 = vmatmul.mubr.bf16.gmra.mrb[0].mxu0 %v5033
        %v5153 = vpop.f32.mrb[0].mxu0
        %v5154 = vadd.f32 0.0, %v5153
        %v5155 = vpop.f32.mrb[0].mxu0
        %v5156 = vpop.f32.mrb[0].mxu0
        %v5157 = vadd.f32 0.0, %v5156
        %v5158 = vpop.f32.mrb[0].mxu0
        %5159 = vmatprep.mubr.bf16.mxu0 0
        %5160 = vmatmul.mubr.bf16.gmra.mrb[0].mxu0 %v5036
        %v5161 = vpop.f32.mrb[0].mxu0
        %v5162 = vadd.f32 0.0, %v5161
        %v5163 = vpop.f32.mrb[0].mxu0
        %v5164 = vpop.f32.mrb[0].mxu0
        %v5165 = vadd.f32 0.0, %v5164
        %v5166 = vpop.f32.mrb[0].mxu0
        %5167 = vmatprep.mubr.bf16.mxu0 0
        %5168 = vmatmul.mubr.bf16.gmra.mrb[0].mxu0 %v5039
        %v5169 = vpop.f32.mrb[0].mxu0
        %v5170 = vadd.f32 0.0, %v5169
        %v5171 = vpop.f32.mrb[0].mxu0
        %v5172 = vpop.f32.mrb[0].mxu0
        %v5173 = vadd.f32 0.0, %v5172
        %v5174 = vpop.f32.mrb[0].mxu0
        %5175 = vmatprep.mubr.bf16.mxu0 0
        %5176 = vmatmul.mubr.bf16.gmra.mrb[0].mxu0 %v5042
        %v5177 = vpop.f32.mrb[0].mxu0
        %v5178 = vadd.f32 0.0, %v5177
        %v5179 = vpop.f32.mrb[0].mxu0
        %v5180 = vpop.f32.mrb[0].mxu0
        %v5181 = vadd.f32 0.0, %v5180
        %v5182 = vpop.f32.mrb[0].mxu0
        %5183 = vmatprep.mubr.bf16.mxu0 0
        %5184 = vmatmul.mubr.bf16.gmra.mrb[0].mxu0 %v5045
        %v5185 = vpop.f32.mrb[0].mxu0
        %v5186 = vadd.f32 0.0, %v5185
        %v5187 = vpop.f32.mrb[0].mxu0
        %v5188 = vpop.f32.mrb[0].mxu0
        %v5189 = vadd.f32 0.0, %v5188
        %v5190 = vpop.f32.mrb[0].mxu0
        %5191 = vmatprep.mubr.bf16.mxu0 0
        %5192 = vmatmul.mubr.bf16.gmra.mrb[0].mxu0 %v5048
        %v5193 = vpop.f32.mrb[0].mxu0
        %v5194 = vadd.f32 0.0, %v5193
        %v5195 = vpop.f32.mrb[0].mxu0
        %v5196 = vpop.f32.mrb[0].mxu0
        %v5197 = vadd.f32 0.0, %v5196
        %v5198 = vpop.f32.mrb[0].mxu0
        %5199 = vmatprep.mubr.bf16.mxu0 0
        %5200 = vmatmul.mubr.bf16.gmra.mrb[0].mxu0 %v5051
        %v5201 = vpop.f32.mrb[0].mxu0
        %v5202 = vadd.f32 0.0, %v5201
        %v5203 = vpop.f32.mrb[0].mxu0
        %v5204 = vpop.f32.mrb[0].mxu0
        %v5205 = vadd.f32 0.0, %v5204
        %v5206 = vpop.f32.mrb[0].mxu0
        %5207 = vmatprep.mubr.bf16.mxu0 0
        %5208 = vmatmul.mubr.bf16.gmra.mrb[0].mxu0 %v5054
        %v5209 = vpop.f32.mrb[0].mxu0
        %v5210 = vadd.f32 0.0, %v5209
        %v5211 = vpop.f32.mrb[0].mxu0
        %v5212 = vpop.f32.mrb[0].mxu0
        %v5213 = vadd.f32 0.0, %v5212
        %v5214 = vpop.f32.mrb[0].mxu0
        %5215 = vmatprep.mubr.bf16.mxu0 0
        %5216 = vmatmul.mubr.bf16.gmra.mrb[0].mxu0 %v5057
        %v5217 = vpop.f32.mrb[0].mxu0
        %v5218 = vadd.f32 0.0, %v5217
        %v5219 = vpop.f32.mrb[0].mxu0
        %v5220 = vpop.f32.mrb[0].mxu0
        %v5221 = vadd.f32 0.0, %v5220
        %v5222 = vpop.f32.mrb[0].mxu0
        %5223 = vmatprep.mubr.bf16.mxu0 0
        %5224 = vmatmul.mubr.bf16.gmra.mrb[0].mxu0 %v5060
        %v5225 = vpop.f32.mrb[0].mxu0
        %v5226 = vadd.f32 0.0, %v5225
        %v5227 = vpop.f32.mrb[0].mxu0
        %v5228 = vpop.f32.mrb[0].mxu0
        %v5229 = vadd.f32 0.0, %v5228
        %v5230 = vpop.f32.mrb[0].mxu0
        %5231 = vmatprep.mubr.bf16.mxu0 0
        %5232 = vmatmul.mubr.bf16.gmra.mrb[0].mxu0 %v5063
        %v5233 = vpop.f32.mrb[0].mxu0
        %v5234 = vadd.f32 0.0, %v5233
        %v5235 = vpop.f32.mrb[0].mxu0
        %v5236 = vpop.f32.mrb[0].mxu0
        %v5237 = vadd.f32 0.0, %v5236
        %v5238 = vpop.f32.mrb[0].mxu0
        %5239 = vmatprep.mubr.bf16.mxu0 0
        %5240 = vmatmul.mubr.bf16.gmra.mrb[0].mxu0 %v5066
        %v5241 = vpop.f32.mrb[0].mxu0
        %v5242 = vadd.f32 0.0, %v5241
        %v5243 = vpop.f32.mrb[0].mxu0
        %v5244 = vpop.f32.mrb[0].mxu0
        %v5245 = vadd.f32 0.0, %v5244
        %v5246 = vpop.f32.mrb[0].mxu0
        %5247 = vdwg.mxu0
        %v5248 = vadd.f32 %v4724, %v5106
        %v5249 = vadd.f32 %v4725, %v5109
        %v5250 = vadd.f32 %v4726, %v5114
        %v5251 = vadd.f32 %v4727, %v5117
        %v5252 = vadd.f32 %v4728, %v5122
        %v5253 = vadd.f32 %v4729, %v5125
        %v5254 = vadd.f32 %v4730, %v5130
        %v5255 = vadd.f32 %v4731, %v5133
        %v5256 = vadd.f32 %v4732, %v5138
        %v5257 = vadd.f32 %v4733, %v5141
        %v5258 = vadd.f32 %v4734, %v5146
        %v5259 = vadd.f32 %v4735, %v5149
        %v5260 = vadd.f32 %v4736, %v5154
        %v5261 = vadd.f32 %v4737, %v5157
        %v5262 = vadd.f32 %v4738, %v5162
        %v5263 = vadd.f32 %v4739, %v5165
        %v5264 = vadd.f32 %v4740, %v5170
        %v5265 = vadd.f32 %v4741, %v5173
        %v5266 = vadd.f32 %v4742, %v5178
        %v5267 = vadd.f32 %v4743, %v5181
        %v5268 = vadd.f32 %v4744, %v5186
        %v5269 = vadd.f32 %v4745, %v5189
        %v5270 = vadd.f32 %v4746, %v5194
        %v5271 = vadd.f32 %v4747, %v5197
        %v5272 = vadd.f32 %v4748, %v5202
        %v5273 = vadd.f32 %v4749, %v5205
        %v5274 = vadd.f32 %v4750, %v5210
        %v5275 = vadd.f32 %v4751, %v5213
        %v5276 = vadd.f32 %v4752, %v5218
        %v5277 = vadd.f32 %v4753, %v5221
        %v5278 = vadd.f32 %v4754, %v5226
        %v5279 = vadd.f32 %v4755, %v5229
        %v5280 = vadd.f32 %v4756, %v5234
        %v5281 = vadd.f32 %v4757, %v5237
        %v5282 = vadd.f32 %v4758, %v5242
        %v5283 = vadd.f32 %v4759, %v5245
        %v5284 = vmax.f32 %v5248, 0.0
        %v5285 = vmax.f32 %v5249, 0.0
        %v5286 = vmax.f32 %v5250, 0.0
        %v5287 = vmax.f32 %v5251, 0.0
        %v5288 = vmax.f32 %v5252, 0.0
        %v5289 = vmax.f32 %v5253, 0.0
        %v5290 = vmax.f32 %v5254, 0.0
        %v5291 = vmax.f32 %v5255, 0.0
        %v5292 = vmax.f32 %v5256, 0.0
        %v5293 = vmax.f32 %v5257, 0.0
        %v5294 = vmax.f32 %v5258, 0.0
        %v5295 = vmax.f32 %v5259, 0.0
        %v5296 = vmax.f32 %v5260, 0.0
        %v5297 = vmax.f32 %v5261, 0.0
        %v5298 = vmax.f32 %v5262, 0.0
        %v5299 = vmax.f32 %v5263, 0.0
        %v5300 = vmax.f32 %v5264, 0.0
        %v5301 = vmax.f32 %v5265, 0.0
        %v5302 = vmax.f32 %v5266, 0.0
        %v5303 = vmax.f32 %v5267, 0.0
        %v5304 = vmax.f32 %v5268, 0.0
        %v5305 = vmax.f32 %v5269, 0.0
        %v5306 = vmax.f32 %v5270, 0.0
        %v5307 = vmax.f32 %v5271, 0.0
        %v5308 = vmax.f32 %v5272, 0.0
        %v5309 = vmax.f32 %v5273, 0.0
        %v5310 = vmax.f32 %v5274, 0.0
        %v5311 = vmax.f32 %v5275, 0.0
        %v5312 = vmax.f32 %v5276, 0.0
        %v5313 = vmax.f32 %v5277, 0.0
        %v5314 = vmax.f32 %v5278, 0.0
        %v5315 = vmax.f32 %v5279, 0.0
        %v5316 = vmax.f32 %v5280, 0.0
        %v5317 = vmax.f32 %v5281, 0.0
        %v5318 = vmax.f32 %v5282, 0.0
        %v5319 = vmax.f32 %v5283, 0.0
        %v5320 = vpack.c.bf16 %v5285, %v5284
        %v5321 = vpack.c.bf16 %v5287, %v5286
        %v5322 = vpack.c.bf16 %v5289, %v5288
        %v5323 = vpack.c.bf16 %v5291, %v5290
        %v5324 = vpack.c.bf16 %v5293, %v5292
        %v5325 = vpack.c.bf16 %v5295, %v5294
        %v5326 = vpack.c.bf16 %v5297, %v5296
        %v5327 = vpack.c.bf16 %v5299, %v5298
        %v5328 = vpack.c.bf16 %v5301, %v5300
        %v5329 = vpack.c.bf16 %v5303, %v5302
        %v5330 = vpack.c.bf16 %v5305, %v5304
        %v5331 = vpack.c.bf16 %v5307, %v5306
        %v5332 = vpack.c.bf16 %v5309, %v5308
        %v5333 = vpack.c.bf16 %v5311, %v5310
        %v5334 = vpack.c.bf16 %v5313, %v5312
        %v5335 = vpack.c.bf16 %v5315, %v5314
        %v5336 = vpack.c.bf16 %v5317, %v5316
        %v5337 = vpack.c.bf16 %v5319, %v5318
        %vm5338 = vcmask 57344
        %vm5339 = vsmask.f32 256
        %vm5340 = vmand %vm5338, %vm5339
        %v5341 = vld [vmem:[#allocation2] sm:$0x1]
        %v5342 = vsel %vm5340, 0, %v5341
        %5343 = vst [vmem:[#allocation2] sm:$0x1] %v5342
        %v5344 = vld [vmem:[#allocation2 + $0xc] sm:$0x1]
        %v5345 = vsel %vm5340, 0, %v5344
        %5346 = vst [vmem:[#allocation2 + $0xc] sm:$0x1] %v5345
        %v5347 = vld [vmem:[#allocation2 + $0x18] sm:$0x1]
        %v5348 = vsel %vm5340, 0, %v5347
        %5349 = vst [vmem:[#allocation2 + $0x18] sm:$0x1] %v5348
        %v5350 = vld [vmem:[#allocation2 + $0x24] sm:$0x1]
        %v5351 = vsel %vm5340, 0, %v5350
        %5352 = vst [vmem:[#allocation2 + $0x24] sm:$0x1] %v5351
        %v5353 = vld [vmem:[#allocation2 + $0x30] sm:$0x1]
        %v5354 = vsel %vm5340, 0, %v5353
        %5355 = vst [vmem:[#allocation2 + $0x30] sm:$0x1] %v5354
        %v5356 = vld [vmem:[#allocation2 + $0x3c] sm:$0x1]
        %v5357 = vsel %vm5340, 0, %v5356
        %5358 = vst [vmem:[#allocation2 + $0x3c] sm:$0x1] %v5357
        %v5359 = vld [vmem:[#allocation2 + $0x48] sm:$0x1]
        %v5360 = vsel %vm5340, 0, %v5359
        %5361 = vst [vmem:[#allocation2 + $0x48] sm:$0x1] %v5360
        %v5362 = vld [vmem:[#allocation2 + $0x54] sm:$0x1]
        %v5363 = vsel %vm5340, 0, %v5362
        %5364 = vst [vmem:[#allocation2 + $0x54] sm:$0x1] %v5363
        %v5365 = vld [vmem:[#allocation2 + $0x60] sm:$0x1]
        %v5366 = vsel %vm5340, 0, %v5365
        %5367 = vst [vmem:[#allocation2 + $0x60] sm:$0x1] %v5366
        %v5368 = vld [vmem:[#allocation2 + $0x6c] sm:$0x1]
        %v5369 = vsel %vm5340, 0, %v5368
        %5370 = vst [vmem:[#allocation2 + $0x6c] sm:$0x1] %v5369
        %v5371 = vld [vmem:[#allocation2 + $0x78] sm:$0x1]
        %v5372 = vsel %vm5340, 0, %v5371
        %5373 = vst [vmem:[#allocation2 + $0x78] sm:$0x1] %v5372
        %v5374 = vld [vmem:[#allocation2 + $0x84] sm:$0x1]
        %v5375 = vsel %vm5340, 0, %v5374
        %5376 = vst [vmem:[#allocation2 + $0x84] sm:$0x1] %v5375
        %v5377 = vld [vmem:[#allocation2 + $0x90] sm:$0x1]
        %v5378 = vsel %vm5340, 0, %v5377
        %5379 = vst [vmem:[#allocation2 + $0x90] sm:$0x1] %v5378
        %v5380 = vld [vmem:[#allocation2 + $0x9c] sm:$0x1]
        %v5381 = vsel %vm5340, 0, %v5380
        %5382 = vst [vmem:[#allocation2 + $0x9c] sm:$0x1] %v5381
        %v5383 = vld [vmem:[#allocation2 + $0xa8] sm:$0x1]
        %v5384 = vsel %vm5340, 0, %v5383
        %5385 = vst [vmem:[#allocation2 + $0xa8] sm:$0x1] %v5384
        %v5386 = vld [vmem:[#allocation2 + $0xb4] sm:$0x1]
        %v5387 = vsel %vm5340, 0, %v5386
        %5388 = vst [vmem:[#allocation2 + $0xb4] sm:$0x1] %v5387
        %v5389 = vld [vmem:[#allocation2 + $0xc0] sm:$0x1]
        %v5390 = vsel %vm5340, 0, %v5389
        %5391 = vst [vmem:[#allocation2 + $0xc0] sm:$0x1] %v5390
        %v5392 = vld [vmem:[#allocation2 + $0xcc] sm:$0x1]
        %v5393 = vsel %vm5340, 0, %v5392
        %5394 = vst [vmem:[#allocation2 + $0xcc] sm:$0x1] %v5393
        %vm5395 = vsmask.f32 7938
        %vm5396 = vmand %vm5338, %vm5395
        %v5397 = vld [vmem:[#allocation2 + $0x8] sm:$0x1]
        %v5398 = vsel %vm5396, 0, %v5397
        %5399 = vst [vmem:[#allocation2 + $0x8] sm:$0x1] %v5398
        %v5400 = vld [vmem:[#allocation2 + $0x14] sm:$0x1]
        %v5401 = vsel %vm5396, 0, %v5400
        %5402 = vst [vmem:[#allocation2 + $0x14] sm:$0x1] %v5401
        %v5403 = vld [vmem:[#allocation2 + $0x20] sm:$0x1]
        %v5404 = vsel %vm5396, 0, %v5403
        %5405 = vst [vmem:[#allocation2 + $0x20] sm:$0x1] %v5404
        %v5406 = vld [vmem:[#allocation2 + $0x2c] sm:$0x1]
        %v5407 = vsel %vm5396, 0, %v5406
        %5408 = vst [vmem:[#allocation2 + $0x2c] sm:$0x1] %v5407
        %v5409 = vld [vmem:[#allocation2 + $0x38] sm:$0x1]
        %v5410 = vsel %vm5396, 0, %v5409
        %5411 = vst [vmem:[#allocation2 + $0x38] sm:$0x1] %v5410
        %v5412 = vld [vmem:[#allocation2 + $0x44] sm:$0x1]
        %v5413 = vsel %vm5396, 0, %v5412
        %5414 = vst [vmem:[#allocation2 + $0x44] sm:$0x1] %v5413
        %v5415 = vld [vmem:[#allocation2 + $0x50] sm:$0x1]
        %v5416 = vsel %vm5396, 0, %v5415
        %5417 = vst [vmem:[#allocation2 + $0x50] sm:$0x1] %v5416
        %v5418 = vld [vmem:[#allocation2 + $0x5c] sm:$0x1]
        %v5419 = vsel %vm5396, 0, %v5418
        %5420 = vst [vmem:[#allocation2 + $0x5c] sm:$0x1] %v5419
        %v5421 = vld [vmem:[#allocation2 + $0x68] sm:$0x1]
        %v5422 = vsel %vm5396, 0, %v5421
        %5423 = vst [vmem:[#allocation2 + $0x68] sm:$0x1] %v5422
        %v5424 = vld [vmem:[#allocation2 + $0x74] sm:$0x1]
        %v5425 = vsel %vm5396, 0, %v5424
        %5426 = vst [vmem:[#allocation2 + $0x74] sm:$0x1] %v5425
        %v5427 = vld [vmem:[#allocation2 + $0x80] sm:$0x1]
        %v5428 = vsel %vm5396, 0, %v5427
        %5429 = vst [vmem:[#allocation2 + $0x80] sm:$0x1] %v5428
        %v5430 = vld [vmem:[#allocation2 + $0x8c] sm:$0x1]
        %v5431 = vsel %vm5396, 0, %v5430
        %5432 = vst [vmem:[#allocation2 + $0x8c] sm:$0x1] %v5431
        %v5433 = vld [vmem:[#allocation2 + $0x98] sm:$0x1]
        %v5434 = vsel %vm5396, 0, %v5433
        %5435 = vst [vmem:[#allocation2 + $0x98] sm:$0x1] %v5434
        %v5436 = vld [vmem:[#allocation2 + $0xa4] sm:$0x1]
        %v5437 = vsel %vm5396, 0, %v5436
        %5438 = vst [vmem:[#allocation2 + $0xa4] sm:$0x1] %v5437
        %v5439 = vld [vmem:[#allocation2 + $0xb0] sm:$0x1]
        %v5440 = vsel %vm5396, 0, %v5439
        %5441 = vst [vmem:[#allocation2 + $0xb0] sm:$0x1] %v5440
        %v5442 = vld [vmem:[#allocation2 + $0xbc] sm:$0x1]
        %v5443 = vsel %vm5396, 0, %v5442
        %5444 = vst [vmem:[#allocation2 + $0xbc] sm:$0x1] %v5443
        %v5445 = vld [vmem:[#allocation2 + $0xc8] sm:$0x1]
        %v5446 = vsel %vm5396, 0, %v5445
        %5447 = vst [vmem:[#allocation2 + $0xc8] sm:$0x1] %v5446
        %v5448 = vld [vmem:[#allocation2 + $0xd4] sm:$0x1]
        %v5449 = vsel %vm5396, 0, %v5448
        %5450 = vst [vmem:[#allocation2 + $0xd4] sm:$0x1] %v5449
        %v5469 = vunpack.c.l.b16 %v5320
        %v5470 = vunpack.c.h.b16 %v5320
        %v5471 = vunpack.c.l.b16 %v5321
        %v5472 = vunpack.c.h.b16 %v5321
        %v5473 = vunpack.c.l.b16 %v5322
        %v5474 = vunpack.c.h.b16 %v5322
        %v5475 = vunpack.c.l.b16 %v5323
        %v5476 = vunpack.c.h.b16 %v5323
        %v5477 = vunpack.c.l.b16 %v5324
        %v5478 = vunpack.c.h.b16 %v5324
        %v5479 = vunpack.c.l.b16 %v5325
        %v5480 = vunpack.c.h.b16 %v5325
        %v5481 = vunpack.c.l.b16 %v5326
        %v5482 = vunpack.c.h.b16 %v5326
        %v5483 = vunpack.c.l.b16 %v5327
        %v5484 = vunpack.c.h.b16 %v5327
        %v5485 = vunpack.c.l.b16 %v5328
        %v5486 = vunpack.c.h.b16 %v5328
        %v5487 = vunpack.c.l.b16 %v5329
        %v5488 = vunpack.c.h.b16 %v5329
        %v5489 = vunpack.c.l.b16 %v5330
        %v5490 = vunpack.c.h.b16 %v5330
        %v5491 = vunpack.c.l.b16 %v5331
        %v5492 = vunpack.c.h.b16 %v5331
        %v5493 = vunpack.c.l.b16 %v5332
        %v5494 = vunpack.c.h.b16 %v5332
        %v5495 = vunpack.c.l.b16 %v5333
        %v5496 = vunpack.c.h.b16 %v5333
        %v5497 = vunpack.c.l.b16 %v5334
        %v5498 = vunpack.c.h.b16 %v5334
        %v5499 = vunpack.c.l.b16 %v5335
        %v5500 = vunpack.c.h.b16 %v5335
        %v5501 = vunpack.c.l.b16 %v5336
        %v5502 = vunpack.c.h.b16 %v5336
        %v5503 = vunpack.c.l.b16 %v5337
        %v5504 = vunpack.c.h.b16 %v5337
        %v5505 = vpack.c.b16 %v5469, %v5469
        %v5506 = vpack.c.b16 %v5470, %v5470
        %v5507 = vpack.c.b16 %v5471, %v5471
        %v5508 = vpack.c.b16 %v5472, %v5472
        %v5509 = vpack.c.b16 %v5473, %v5473
        %v5510 = vpack.c.b16 %v5474, %v5474
        %v5511 = vpack.c.b16 %v5475, %v5475
        %v5512 = vpack.c.b16 %v5476, %v5476
        %v5513 = vpack.c.b16 %v5477, %v5477
        %v5514 = vpack.c.b16 %v5478, %v5478
        %v5515 = vpack.c.b16 %v5479, %v5479
        %v5516 = vpack.c.b16 %v5480, %v5480
        %v5517 = vpack.c.b16 %v5481, %v5481
        %v5518 = vpack.c.b16 %v5482, %v5482
        %v5519 = vpack.c.b16 %v5483, %v5483
        %v5520 = vpack.c.b16 %v5484, %v5484
        %v5521 = vpack.c.b16 %v5485, %v5485
        %v5522 = vpack.c.b16 %v5486, %v5486
        %v5523 = vpack.c.b16 %v5487, %v5487
        %v5524 = vpack.c.b16 %v5488, %v5488
        %v5525 = vpack.c.b16 %v5489, %v5489
        %v5526 = vpack.c.b16 %v5490, %v5490
        %v5527 = vpack.c.b16 %v5491, %v5491
        %v5528 = vpack.c.b16 %v5492, %v5492
        %v5529 = vpack.c.b16 %v5493, %v5493
        %v5530 = vpack.c.b16 %v5494, %v5494
        %v5531 = vpack.c.b16 %v5495, %v5495
        %v5532 = vpack.c.b16 %v5496, %v5496
        %v5533 = vpack.c.b16 %v5497, %v5497
        %v5534 = vpack.c.b16 %v5498, %v5498
        %v5535 = vpack.c.b16 %v5499, %v5499
        %v5536 = vpack.c.b16 %v5500, %v5500
        %v5537 = vpack.c.b16 %v5501, %v5501
        %v5538 = vpack.c.b16 %v5502, %v5502
        %v5539 = vpack.c.b16 %v5503, %v5503
        %v5540 = vpack.c.b16 %v5504, %v5504
        %vm5541 = vsmask.f32 4368
        %vm5542 = vmor %vm5339, %vm5541
        %v5544 = vshrl.u32 %v5505, 16
        %v5546 = vrot.slane %v5544, 7
        %v5547 = vshll.u32 %v5505, 16
        %v5549 = vor.u32 %v5546, %v5547
        %v5550 = vrot.slane %v5546, 4
        %v5552 = vshrl.u32 %v5506, 16
        %v5554 = vrot.slane %v5552, 7
        %v5555 = vshll.u32 %v5506, 16
        %v5557 = vor.u32 %v5554, %v5555
        %v5558 = vsel %vm5542, %v5550, %v5557
        %v5559 = vrot.slane %v5554, 4
        %v5561 = vshrl.u32 %v5507, 16
        %v5563 = vrot.slane %v5561, 7
        %v5564 = vshll.u32 %v5507, 16
        %v5566 = vor.u32 %v5563, %v5564
        %v5567 = vrot.slane %v5563, 4
        %v5569 = vshrl.u32 %v5508, 16
        %v5571 = vrot.slane %v5569, 7
        %v5572 = vshll.u32 %v5508, 16
        %v5574 = vor.u32 %v5571, %v5572
        %v5575 = vsel %vm5542, %v5567, %v5574
        %v5576 = vrot.slane %v5571, 4
        %v5578 = vshrl.u32 %v5509, 16
        %v5580 = vrot.slane %v5578, 7
        %v5581 = vshll.u32 %v5509, 16
        %v5583 = vor.u32 %v5580, %v5581
        %v5584 = vrot.slane %v5580, 4
        %v5586 = vshrl.u32 %v5510, 16
        %v5588 = vrot.slane %v5586, 7
        %v5589 = vshll.u32 %v5510, 16
        %v5591 = vor.u32 %v5588, %v5589
        %v5592 = vsel %vm5542, %v5584, %v5591
        %v5593 = vrot.slane %v5588, 4
        %v5595 = vshrl.u32 %v5511, 16
        %v5597 = vrot.slane %v5595, 7
        %v5598 = vshll.u32 %v5511, 16
        %v5600 = vor.u32 %v5597, %v5598
        %v5601 = vrot.slane %v5597, 4
        %v5603 = vshrl.u32 %v5512, 16
        %v5605 = vrot.slane %v5603, 7
        %v5606 = vshll.u32 %v5512, 16
        %v5608 = vor.u32 %v5605, %v5606
        %v5609 = vsel %vm5542, %v5601, %v5608
        %v5610 = vrot.slane %v5605, 4
        %v5612 = vshrl.u32 %v5513, 16
        %v5614 = vrot.slane %v5612, 7
        %v5615 = vshll.u32 %v5513, 16
        %v5617 = vor.u32 %v5614, %v5615
        %v5618 = vrot.slane %v5614, 4
        %v5620 = vshrl.u32 %v5514, 16
        %v5622 = vrot.slane %v5620, 7
        %v5623 = vshll.u32 %v5514, 16
        %v5625 = vor.u32 %v5622, %v5623
        %v5626 = vsel %vm5542, %v5618, %v5625
        %v5627 = vrot.slane %v5622, 4
        %v5629 = vshrl.u32 %v5515, 16
        %v5631 = vrot.slane %v5629, 7
        %v5632 = vshll.u32 %v5515, 16
        %v5634 = vor.u32 %v5631, %v5632
        %v5635 = vrot.slane %v5631, 4
        %v5637 = vshrl.u32 %v5516, 16
        %v5639 = vrot.slane %v5637, 7
        %v5640 = vshll.u32 %v5516, 16
        %v5642 = vor.u32 %v5639, %v5640
        %v5643 = vsel %vm5542, %v5635, %v5642
        %v5644 = vrot.slane %v5639, 4
        %v5646 = vshrl.u32 %v5517, 16
        %v5648 = vrot.slane %v5646, 7
        %v5649 = vshll.u32 %v5517, 16
        %v5651 = vor.u32 %v5648, %v5649
        %v5652 = vrot.slane %v5648, 4
        %v5654 = vshrl.u32 %v5518, 16
        %v5656 = vrot.slane %v5654, 7
        %v5657 = vshll.u32 %v5518, 16
        %v5659 = vor.u32 %v5656, %v5657
        %v5660 = vsel %vm5542, %v5652, %v5659
        %v5661 = vrot.slane %v5656, 4
        %v5663 = vshrl.u32 %v5519, 16
        %v5665 = vrot.slane %v5663, 7
        %v5666 = vshll.u32 %v5519, 16
        %v5668 = vor.u32 %v5665, %v5666
        %v5669 = vrot.slane %v5665, 4
        %v5671 = vshrl.u32 %v5520, 16
        %v5673 = vrot.slane %v5671, 7
        %v5674 = vshll.u32 %v5520, 16
        %v5676 = vor.u32 %v5673, %v5674
        %v5677 = vsel %vm5542, %v5669, %v5676
        %v5678 = vrot.slane %v5673, 4
        %v5680 = vshrl.u32 %v5521, 16
        %v5682 = vrot.slane %v5680, 7
        %v5683 = vshll.u32 %v5521, 16
        %v5685 = vor.u32 %v5682, %v5683
        %v5686 = vrot.slane %v5682, 4
        %v5688 = vshrl.u32 %v5522, 16
        %v5690 = vrot.slane %v5688, 7
        %v5691 = vshll.u32 %v5522, 16
        %v5693 = vor.u32 %v5690, %v5691
        %v5694 = vsel %vm5542, %v5686, %v5693
        %v5695 = vrot.slane %v5690, 4
        %v5697 = vshrl.u32 %v5523, 16
        %v5699 = vrot.slane %v5697, 7
        %v5700 = vshll.u32 %v5523, 16
        %v5702 = vor.u32 %v5699, %v5700
        %v5703 = vrot.slane %v5699, 4
        %v5705 = vshrl.u32 %v5524, 16
        %v5707 = vrot.slane %v5705, 7
        %v5708 = vshll.u32 %v5524, 16
        %v5710 = vor.u32 %v5707, %v5708
        %v5711 = vsel %vm5542, %v5703, %v5710
        %v5712 = vrot.slane %v5707, 4
        %v5714 = vshrl.u32 %v5525, 16
        %v5716 = vrot.slane %v5714, 7
        %v5717 = vshll.u32 %v5525, 16
        %v5719 = vor.u32 %v5716, %v5717
        %v5720 = vrot.slane %v5716, 4
        %v5722 = vshrl.u32 %v5526, 16
        %v5724 = vrot.slane %v5722, 7
        %v5725 = vshll.u32 %v5526, 16
        %v5727 = vor.u32 %v5724, %v5725
        %v5728 = vsel %vm5542, %v5720, %v5727
        %v5729 = vrot.slane %v5724, 4
        %v5731 = vshrl.u32 %v5527, 16
        %v5733 = vrot.slane %v5731, 7
        %v5734 = vshll.u32 %v5527, 16
        %v5736 = vor.u32 %v5733, %v5734
        %v5737 = vrot.slane %v5733, 4
        %v5739 = vshrl.u32 %v5528, 16
        %v5741 = vrot.slane %v5739, 7
        %v5742 = vshll.u32 %v5528, 16
        %v5744 = vor.u32 %v5741, %v5742
        %v5745 = vsel %vm5542, %v5737, %v5744
        %v5746 = vrot.slane %v5741, 4
        %v5748 = vshrl.u32 %v5529, 16
        %v5750 = vrot.slane %v5748, 7
        %v5751 = vshll.u32 %v5529, 16
        %v5753 = vor.u32 %v5750, %v5751
        %v5754 = vrot.slane %v5750, 4
        %v5756 = vshrl.u32 %v5530, 16
        %v5758 = vrot.slane %v5756, 7
        %v5759 = vshll.u32 %v5530, 16
        %v5761 = vor.u32 %v5758, %v5759
        %v5762 = vsel %vm5542, %v5754, %v5761
        %v5763 = vrot.slane %v5758, 4
        %v5765 = vshrl.u32 %v5531, 16
        %v5767 = vrot.slane %v5765, 7
        %v5768 = vshll.u32 %v5531, 16
        %v5770 = vor.u32 %v5767, %v5768
        %v5771 = vrot.slane %v5767, 4
        %v5773 = vshrl.u32 %v5532, 16
        %v5775 = vrot.slane %v5773, 7
        %v5776 = vshll.u32 %v5532, 16
        %v5778 = vor.u32 %v5775, %v5776
        %v5779 = vsel %vm5542, %v5771, %v5778
        %v5780 = vrot.slane %v5775, 4
        %v5782 = vshrl.u32 %v5533, 16
        %v5784 = vrot.slane %v5782, 7
        %v5785 = vshll.u32 %v5533, 16
        %v5787 = vor.u32 %v5784, %v5785
        %v5788 = vrot.slane %v5784, 4
        %v5790 = vshrl.u32 %v5534, 16
        %v5792 = vrot.slane %v5790, 7
        %v5793 = vshll.u32 %v5534, 16
        %v5795 = vor.u32 %v5792, %v5793
        %v5796 = vsel %vm5542, %v5788, %v5795
        %v5797 = vrot.slane %v5792, 4
        %v5799 = vshrl.u32 %v5535, 16
        %v5801 = vrot.slane %v5799, 7
        %v5802 = vshll.u32 %v5535, 16
        %v5804 = vor.u32 %v5801, %v5802
        %v5805 = vrot.slane %v5801, 4
        %v5807 = vshrl.u32 %v5536, 16
        %v5809 = vrot.slane %v5807, 7
        %v5810 = vshll.u32 %v5536, 16
        %v5812 = vor.u32 %v5809, %v5810
        %v5813 = vsel %vm5542, %v5805, %v5812
        %v5814 = vrot.slane %v5809, 4
        %v5816 = vshrl.u32 %v5537, 16
        %v5818 = vrot.slane %v5816, 7
        %v5819 = vshll.u32 %v5537, 16
        %v5821 = vor.u32 %v5818, %v5819
        %v5822 = vrot.slane %v5818, 4
        %v5824 = vshrl.u32 %v5538, 16
        %v5826 = vrot.slane %v5824, 7
        %v5827 = vshll.u32 %v5538, 16
        %v5829 = vor.u32 %v5826, %v5827
        %v5830 = vsel %vm5542, %v5822, %v5829
        %v5831 = vrot.slane %v5826, 4
        %v5833 = vshrl.u32 %v5539, 16
        %v5835 = vrot.slane %v5833, 7
        %v5836 = vshll.u32 %v5539, 16
        %v5838 = vor.u32 %v5835, %v5836
        %v5839 = vrot.slane %v5835, 4
        %v5841 = vshrl.u32 %v5540, 16
        %v5843 = vrot.slane %v5841, 7
        %v5844 = vshll.u32 %v5540, 16
        %v5846 = vor.u32 %v5843, %v5844
        %v5847 = vsel %vm5542, %v5839, %v5846
        %v5848 = vrot.slane %v5843, 4
        %vm5903 = vcmask 60416
        %vm5904 = vmand %vm5903, %vm5395
        %v5905 = vld [vmem:[#allocation2] sm:$0xf]
        %v5906 = vsel %vm5904, %v5549, %v5905
        %5907 = vst [vmem:[#allocation2] sm:$0xf] %v5906
        %vm5908 = vcmask 60416
        %5909 = vst.msk [vmem:[#allocation2 + $0x4] sm:$0xf] %vm5908, %v5558
        %v5910 = vld [vmem:[#allocation2 + $0x8] sm:$0x1]
        %v5911 = vsel %vm5340, %v5559, %v5910
        %5912 = vst [vmem:[#allocation2 + $0x8] sm:$0x1] %v5911
        %v5913 = vld [vmem:[#allocation2 + $0xc] sm:$0xf]
        %v5914 = vsel %vm5904, %v5566, %v5913
        %5915 = vst [vmem:[#allocation2 + $0xc] sm:$0xf] %v5914
        %5916 = vst.msk [vmem:[#allocation2 + $0x10] sm:$0xf] %vm5908, %v5575
        %v5917 = vld [vmem:[#allocation2 + $0x14] sm:$0x1]
        %v5918 = vsel %vm5340, %v5576, %v5917
        %5919 = vst [vmem:[#allocation2 + $0x14] sm:$0x1] %v5918
        %v5920 = vld [vmem:[#allocation2 + $0x18] sm:$0xf]
        %v5921 = vsel %vm5904, %v5583, %v5920
        %5922 = vst [vmem:[#allocation2 + $0x18] sm:$0xf] %v5921
        %5923 = vst.msk [vmem:[#allocation2 + $0x1c] sm:$0xf] %vm5908, %v5592
        %v5924 = vld [vmem:[#allocation2 + $0x20] sm:$0x1]
        %v5925 = vsel %vm5340, %v5593, %v5924
        %5926 = vst [vmem:[#allocation2 + $0x20] sm:$0x1] %v5925
        %v5927 = vld [vmem:[#allocation2 + $0x24] sm:$0xf]
        %v5928 = vsel %vm5904, %v5600, %v5927
        %5929 = vst [vmem:[#allocation2 + $0x24] sm:$0xf] %v5928
        %5930 = vst.msk [vmem:[#allocation2 + $0x28] sm:$0xf] %vm5908, %v5609
        %v5931 = vld [vmem:[#allocation2 + $0x2c] sm:$0x1]
        %v5932 = vsel %vm5340, %v5610, %v5931
        %5933 = vst [vmem:[#allocation2 + $0x2c] sm:$0x1] %v5932
        %v5934 = vld [vmem:[#allocation2 + $0x30] sm:$0xf]
        %v5935 = vsel %vm5904, %v5617, %v5934
        %5936 = vst [vmem:[#allocation2 + $0x30] sm:$0xf] %v5935
        %5937 = vst.msk [vmem:[#allocation2 + $0x34] sm:$0xf] %vm5908, %v5626
        %v5938 = vld [vmem:[#allocation2 + $0x38] sm:$0x1]
        %v5939 = vsel %vm5340, %v5627, %v5938
        %5940 = vst [vmem:[#allocation2 + $0x38] sm:$0x1] %v5939
        %v5941 = vld [vmem:[#allocation2 + $0x3c] sm:$0xf]
        %v5942 = vsel %vm5904, %v5634, %v5941
        %5943 = vst [vmem:[#allocation2 + $0x3c] sm:$0xf] %v5942
        %5944 = vst.msk [vmem:[#allocation2 + $0x40] sm:$0xf] %vm5908, %v5643
        %v5945 = vld [vmem:[#allocation2 + $0x44] sm:$0x1]
        %v5946 = vsel %vm5340, %v5644, %v5945
        %5947 = vst [vmem:[#allocation2 + $0x44] sm:$0x1] %v5946
        %v5948 = vld [vmem:[#allocation2 + $0x48] sm:$0xf]
        %v5949 = vsel %vm5904, %v5651, %v5948
        %5950 = vst [vmem:[#allocation2 + $0x48] sm:$0xf] %v5949
        %5951 = vst.msk [vmem:[#allocation2 + $0x4c] sm:$0xf] %vm5908, %v5660
        %v5952 = vld [vmem:[#allocation2 + $0x50] sm:$0x1]
        %v5953 = vsel %vm5340, %v5661, %v5952
        %5954 = vst [vmem:[#allocation2 + $0x50] sm:$0x1] %v5953
        %v5955 = vld [vmem:[#allocation2 + $0x54] sm:$0xf]
        %v5956 = vsel %vm5904, %v5668, %v5955
        %5957 = vst [vmem:[#allocation2 + $0x54] sm:$0xf] %v5956
        %5958 = vst.msk [vmem:[#allocation2 + $0x58] sm:$0xf] %vm5908, %v5677
        %v5959 = vld [vmem:[#allocation2 + $0x5c] sm:$0x1]
        %v5960 = vsel %vm5340, %v5678, %v5959
        %5961 = vst [vmem:[#allocation2 + $0x5c] sm:$0x1] %v5960
        %v5962 = vld [vmem:[#allocation2 + $0x60] sm:$0xf]
        %v5963 = vsel %vm5904, %v5685, %v5962
        %5964 = vst [vmem:[#allocation2 + $0x60] sm:$0xf] %v5963
        %5965 = vst.msk [vmem:[#allocation2 + $0x64] sm:$0xf] %vm5908, %v5694
        %v5966 = vld [vmem:[#allocation2 + $0x68] sm:$0x1]
        %v5967 = vsel %vm5340, %v5695, %v5966
        %5968 = vst [vmem:[#allocation2 + $0x68] sm:$0x1] %v5967
        %v5969 = vld [vmem:[#allocation2 + $0x6c] sm:$0xf]
        %v5970 = vsel %vm5904, %v5702, %v5969
        %5971 = vst [vmem:[#allocation2 + $0x6c] sm:$0xf] %v5970
        %5972 = vst.msk [vmem:[#allocation2 + $0x70] sm:$0xf] %vm5908, %v5711
        %v5973 = vld [vmem:[#allocation2 + $0x74] sm:$0x1]
        %v5974 = vsel %vm5340, %v5712, %v5973
        %5975 = vst [vmem:[#allocation2 + $0x74] sm:$0x1] %v5974
        %v5976 = vld [vmem:[#allocation2 + $0x78] sm:$0xf]
        %v5977 = vsel %vm5904, %v5719, %v5976
        %5978 = vst [vmem:[#allocation2 + $0x78] sm:$0xf] %v5977
        %5979 = vst.msk [vmem:[#allocation2 + $0x7c] sm:$0xf] %vm5908, %v5728
        %v5980 = vld [vmem:[#allocation2 + $0x80] sm:$0x1]
        %v5981 = vsel %vm5340, %v5729, %v5980
        %5982 = vst [vmem:[#allocation2 + $0x80] sm:$0x1] %v5981
        %v5983 = vld [vmem:[#allocation2 + $0x84] sm:$0xf]
        %v5984 = vsel %vm5904, %v5736, %v5983
        %5985 = vst [vmem:[#allocation2 + $0x84] sm:$0xf] %v5984
        %5986 = vst.msk [vmem:[#allocation2 + $0x88] sm:$0xf] %vm5908, %v5745
        %v5987 = vld [vmem:[#allocation2 + $0x8c] sm:$0x1]
        %v5988 = vsel %vm5340, %v5746, %v5987
        %5989 = vst [vmem:[#allocation2 + $0x8c] sm:$0x1] %v5988
        %v5990 = vld [vmem:[#allocation2 + $0x90] sm:$0xf]
        %v5991 = vsel %vm5904, %v5753, %v5990
        %5992 = vst [vmem:[#allocation2 + $0x90] sm:$0xf] %v5991
        %5993 = vst.msk [vmem:[#allocation2 + $0x94] sm:$0xf] %vm5908, %v5762
        %v5994 = vld [vmem:[#allocation2 + $0x98] sm:$0x1]
        %v5995 = vsel %vm5340, %v5763, %v5994
        %5996 = vst [vmem:[#allocation2 + $0x98] sm:$0x1] %v5995
        %v5997 = vld [vmem:[#allocation2 + $0x9c] sm:$0xf]
        %v5998 = vsel %vm5904, %v5770, %v5997
        %5999 = vst [vmem:[#allocation2 + $0x9c] sm:$0xf] %v5998
        %6000 = vst.msk [vmem:[#allocation2 + $0xa0] sm:$0xf] %vm5908, %v5779
        %v6001 = vld [vmem:[#allocation2 + $0xa4] sm:$0x1]
        %v6002 = vsel %vm5340, %v5780, %v6001
        %6003 = vst [vmem:[#allocation2 + $0xa4] sm:$0x1] %v6002
        %v6004 = vld [vmem:[#allocation2 + $0xa8] sm:$0xf]
        %v6005 = vsel %vm5904, %v5787, %v6004
        %6006 = vst [vmem:[#allocation2 + $0xa8] sm:$0xf] %v6005
        %6007 = vst.msk [vmem:[#allocation2 + $0xac] sm:$0xf] %vm5908, %v5796
        %v6008 = vld [vmem:[#allocation2 + $0xb0] sm:$0x1]
        %v6009 = vsel %vm5340, %v5797, %v6008
        %6010 = vst [vmem:[#allocation2 + $0xb0] sm:$0x1] %v6009
        %v6011 = vld [vmem:[#allocation2 + $0xb4] sm:$0xf]
        %v6012 = vsel %vm5904, %v5804, %v6011
        %6013 = vst [vmem:[#allocation2 + $0xb4] sm:$0xf] %v6012
        %6014 = vst.msk [vmem:[#allocation2 + $0xb8] sm:$0xf] %vm5908, %v5813
        %v6015 = vld [vmem:[#allocation2 + $0xbc] sm:$0x1]
        %v6016 = vsel %vm5340, %v5814, %v6015
        %6017 = vst [vmem:[#allocation2 + $0xbc] sm:$0x1] %v6016
        %v6018 = vld [vmem:[#allocation2 + $0xc0] sm:$0xf]
        %v6019 = vsel %vm5904, %v5821, %v6018
        %6020 = vst [vmem:[#allocation2 + $0xc0] sm:$0xf] %v6019
        %6021 = vst.msk [vmem:[#allocation2 + $0xc4] sm:$0xf] %vm5908, %v5830
        %v6022 = vld [vmem:[#allocation2 + $0xc8] sm:$0x1]
        %v6023 = vsel %vm5340, %v5831, %v6022
        %6024 = vst [vmem:[#allocation2 + $0xc8] sm:$0x1] %v6023
        %v6025 = vld [vmem:[#allocation2 + $0xcc] sm:$0xf]
        %v6026 = vsel %vm5904, %v5838, %v6025
        %6027 = vst [vmem:[#allocation2 + $0xcc] sm:$0xf] %v6026
        %6028 = vst.msk [vmem:[#allocation2 + $0xd0] sm:$0xf] %vm5908, %v5847
        %v6029 = vld [vmem:[#allocation2 + $0xd4] sm:$0x1]
        %v6030 = vsel %vm5340, %v5848, %v6029
        %6031 = vst [vmem:[#allocation2 + $0xd4] sm:$0x1] %v6030
        %p6032 = scmp.eq.s32.totalorder %s22, 0
        // Predicated region
        $region33: #{tpu_custom_call.1} parent=31 // pred_check
          %p6033 = pneg %p6032
        $region34: #{tpu_custom_call.1} parent=31 // pred_check_branch
          %6035 = sbr.rel (%p6033) target = $region36
        $region35: #{tpu_custom_call.1} parent=31 // pred_region
          %6036 = vst.msk [vmem:[#allocation2] sm:$0xf] %vm5908, 0
          %6037 = vst.msk [vmem:[#allocation2 + $0x4] sm:$0xf] %vm5908, 0
          %vm6038 = vcmask 57344
          %6039 = vst.msk [vmem:[#allocation2 + $0x8] sm:$0x1] %vm6038, 0
          %s6040 = scalar_lea.vmem [#allocation2], 204
          %6041 = vst.msk [vmem:[%s6040] sm:$0xf] %vm5908, 0
          %6042 = vst.msk [vmem:[%s6040 + $0x4] sm:$0xf] %vm5908, 0
          %6043 = vst.msk [vmem:[%s6040 + $0x8] sm:$0x1] %vm6038, 0
        $region36: #{tpu_custom_call.1} parent=31 // pred_fallthru
          _
        %v6044 = vld [vmem:[#allocation2] sm:$0xf]
        %v6045 = vld [vmem:[#allocation2 + $0x4] sm:$0xf]
        %v6046 = vld [vmem:[#allocation2 + $0xc] sm:$0xf]
        %v6047 = vld [vmem:[#allocation2 + $0x10] sm:$0xf]
        %v6048 = vld [vmem:[#allocation2 + $0x18] sm:$0xf]
        %v6049 = vld [vmem:[#allocation2 + $0x1c] sm:$0xf]
        %v6050 = vld [vmem:[#allocation2 + $0x24] sm:$0xf]
        %v6051 = vld [vmem:[#allocation2 + $0x28] sm:$0xf]
        %v6052 = vld [vmem:[#allocation2 + $0x30] sm:$0xf]
        %v6053 = vld [vmem:[#allocation2 + $0x34] sm:$0xf]
        %v6054 = vld [vmem:[#allocation2 + $0x3c] sm:$0xf]
        %v6055 = vld [vmem:[#allocation2 + $0x40] sm:$0xf]
        %v6056 = vld [vmem:[#allocation2 + $0x48] sm:$0xf]
        %v6057 = vld [vmem:[#allocation2 + $0x4c] sm:$0xf]
        %v6058 = vld [vmem:[#allocation2 + $0x54] sm:$0xf]
        %v6059 = vld [vmem:[#allocation2 + $0x58] sm:$0xf]
        %v6060 = vld [vmem:[#allocation2 + $0x60] sm:$0xf]
        %v6061 = vld [vmem:[#allocation2 + $0x64] sm:$0xf]
        %v6062 = vld [vmem:[#allocation2 + $0x6c] sm:$0xf]
        %v6063 = vld [vmem:[#allocation2 + $0x70] sm:$0xf]
        %v6064 = vld [vmem:[#allocation2 + $0x78] sm:$0xf]
        %v6065 = vld [vmem:[#allocation2 + $0x7c] sm:$0xf]
        %v6066 = vld [vmem:[#allocation2 + $0x84] sm:$0xf]
        %v6067 = vld [vmem:[#allocation2 + $0x88] sm:$0xf]
        %v6068 = vld [vmem:[#allocation2 + $0x90] sm:$0xf]
        %v6069 = vld [vmem:[#allocation2 + $0x94] sm:$0xf]
        %v6070 = vld [vmem:[#allocation2 + $0x9c] sm:$0xf]
        %v6071 = vld [vmem:[#allocation2 + $0xa0] sm:$0xf]
        %v6072 = vld [vmem:[#allocation2 + $0xa8] sm:$0xf]
        %v6073 = vld [vmem:[#allocation2 + $0xac] sm:$0xf]
        %v6074 = vld [vmem:[#allocation2 + $0xb4] sm:$0xf]
        %v6075 = vld [vmem:[#allocation2 + $0xb8] sm:$0xf]
        %v6076 = vld [vmem:[%s2] sm:$0xf]
        %v6077 = vld [vmem:[#allocation2 + $0x8] sm:$0x1]
        %v6078 = vld [vmem:[#allocation2 + $0x14] sm:$0x1]
        %v6079 = vld [vmem:[#allocation2 + $0x20] sm:$0x1]
        %v6080 = vld [vmem:[#allocation2 + $0x2c] sm:$0x1]
        %v6081 = vld [vmem:[#allocation2 + $0x38] sm:$0x1]
        %v6082 = vld [vmem:[#allocation2 + $0x44] sm:$0x1]
        %v6083 = vld [vmem:[#allocation2 + $0x50] sm:$0x1]
        %v6084 = vld [vmem:[#allocation2 + $0x5c] sm:$0x1]
        %v6085 = vld [vmem:[#allocation2 + $0x68] sm:$0x1]
        %v6086 = vld [vmem:[#allocation2 + $0x74] sm:$0x1]
        %v6087 = vld [vmem:[#allocation2 + $0x80] sm:$0x1]
        %v6088 = vld [vmem:[#allocation2 + $0x8c] sm:$0x1]
        %v6089 = vld [vmem:[#allocation2 + $0x98] sm:$0x1]
        %v6090 = vld [vmem:[#allocation2 + $0xa4] sm:$0x1]
        %v6091 = vld [vmem:[#allocation2 + $0xb0] sm:$0x1]
        %v6092 = vld [vmem:[#allocation2 + $0xbc] sm:$0x1]
        %v6094 = vshrl.u32 %v6044, 16
        %v6096 = vrot.slane %v6094, 4
        %v6097 = vshll.u32 %v6044, 16
        %v6099 = vrot.slane %v6097, 5
        %v6100 = vor.u32 %v6096, %v6099
        %v6101 = vrot.slane %v6100, 4
        %v6103 = vshll.u32 %v6045, 16
        %v6105 = vrot.slane %v6103, 5
        %v6106 = vsel %vm256, %v6101, %v6105
        %v6107 = vshrl.u32 %v6045, 16
        %v6109 = vrot.slane %v6107, 4
        %v6110 = vor.u32 %v6109, %v6105
        %v6111 = vrot.slane %v6110, 4
        %v6113 = vshll.u32 %v6077, 16
        %v6115 = vrot.slane %v6113, 5
        %v6116 = vsel %vm256, %v6111, %v6115
        %v6118 = vshrl.u32 %v6046, 16
        %v6120 = vrot.slane %v6118, 4
        %v6121 = vshll.u32 %v6046, 16
        %v6123 = vrot.slane %v6121, 5
        %v6124 = vor.u32 %v6120, %v6123
        %v6125 = vrot.slane %v6124, 4
        %v6127 = vshll.u32 %v6047, 16
        %v6129 = vrot.slane %v6127, 5
        %v6130 = vsel %vm256, %v6125, %v6129
        %v6131 = vshrl.u32 %v6047, 16
        %v6133 = vrot.slane %v6131, 4
        %v6134 = vor.u32 %v6133, %v6129
        %v6135 = vrot.slane %v6134, 4
        %v6137 = vshll.u32 %v6078, 16
        %v6139 = vrot.slane %v6137, 5
        %v6140 = vsel %vm256, %v6135, %v6139
        %v6142 = vshrl.u32 %v6048, 16
        %v6144 = vrot.slane %v6142, 4
        %v6145 = vshll.u32 %v6048, 16
        %v6147 = vrot.slane %v6145, 5
        %v6148 = vor.u32 %v6144, %v6147
        %v6149 = vrot.slane %v6148, 4
        %v6151 = vshll.u32 %v6049, 16
        %v6153 = vrot.slane %v6151, 5
        %v6154 = vsel %vm256, %v6149, %v6153
        %v6155 = vshrl.u32 %v6049, 16
        %v6157 = vrot.slane %v6155, 4
        %v6158 = vor.u32 %v6157, %v6153
        %v6159 = vrot.slane %v6158, 4
        %v6161 = vshll.u32 %v6079, 16
        %v6163 = vrot.slane %v6161, 5
        %v6164 = vsel %vm256, %v6159, %v6163
        %v6166 = vshrl.u32 %v6050, 16
        %v6168 = vrot.slane %v6166, 4
        %v6169 = vshll.u32 %v6050, 16
        %v6171 = vrot.slane %v6169, 5
        %v6172 = vor.u32 %v6168, %v6171
        %v6173 = vrot.slane %v6172, 4
        %v6175 = vshll.u32 %v6051, 16
        %v6177 = vrot.slane %v6175, 5
        %v6178 = vsel %vm256, %v6173, %v6177
        %v6179 = vshrl.u32 %v6051, 16
        %v6181 = vrot.slane %v6179, 4
        %v6182 = vor.u32 %v6181, %v6177
        %v6183 = vrot.slane %v6182, 4
        %v6185 = vshll.u32 %v6080, 16
        %v6187 = vrot.slane %v6185, 5
        %v6188 = vsel %vm256, %v6183, %v6187
        %v6190 = vshrl.u32 %v6052, 16
        %v6192 = vrot.slane %v6190, 4
        %v6193 = vshll.u32 %v6052, 16
        %v6195 = vrot.slane %v6193, 5
        %v6196 = vor.u32 %v6192, %v6195
        %v6197 = vrot.slane %v6196, 4
        %v6199 = vshll.u32 %v6053, 16
        %v6201 = vrot.slane %v6199, 5
        %v6202 = vsel %vm256, %v6197, %v6201
        %v6203 = vshrl.u32 %v6053, 16
        %v6205 = vrot.slane %v6203, 4
        %v6206 = vor.u32 %v6205, %v6201
        %v6207 = vrot.slane %v6206, 4
        %v6209 = vshll.u32 %v6081, 16
        %v6211 = vrot.slane %v6209, 5
        %v6212 = vsel %vm256, %v6207, %v6211
        %v6214 = vshrl.u32 %v6054, 16
        %v6216 = vrot.slane %v6214, 4
        %v6217 = vshll.u32 %v6054, 16
        %v6219 = vrot.slane %v6217, 5
        %v6220 = vor.u32 %v6216, %v6219
        %v6221 = vrot.slane %v6220, 4
        %v6223 = vshll.u32 %v6055, 16
        %v6225 = vrot.slane %v6223, 5
        %v6226 = vsel %vm256, %v6221, %v6225
        %v6227 = vshrl.u32 %v6055, 16
        %v6229 = vrot.slane %v6227, 4
        %v6230 = vor.u32 %v6229, %v6225
        %v6231 = vrot.slane %v6230, 4
        %v6233 = vshll.u32 %v6082, 16
        %v6235 = vrot.slane %v6233, 5
        %v6236 = vsel %vm256, %v6231, %v6235
        %v6238 = vshrl.u32 %v6056, 16
        %v6240 = vrot.slane %v6238, 4
        %v6241 = vshll.u32 %v6056, 16
        %v6243 = vrot.slane %v6241, 5
        %v6244 = vor.u32 %v6240, %v6243
        %v6245 = vrot.slane %v6244, 4
        %v6247 = vshll.u32 %v6057, 16
        %v6249 = vrot.slane %v6247, 5
        %v6250 = vsel %vm256, %v6245, %v6249
        %v6251 = vshrl.u32 %v6057, 16
        %v6253 = vrot.slane %v6251, 4
        %v6254 = vor.u32 %v6253, %v6249
        %v6255 = vrot.slane %v6254, 4
        %v6257 = vshll.u32 %v6083, 16
        %v6259 = vrot.slane %v6257, 5
        %v6260 = vsel %vm256, %v6255, %v6259
        %v6262 = vshrl.u32 %v6058, 16
        %v6264 = vrot.slane %v6262, 4
        %v6265 = vshll.u32 %v6058, 16
        %v6267 = vrot.slane %v6265, 5
        %v6268 = vor.u32 %v6264, %v6267
        %v6269 = vrot.slane %v6268, 4
        %v6271 = vshll.u32 %v6059, 16
        %v6273 = vrot.slane %v6271, 5
        %v6274 = vsel %vm256, %v6269, %v6273
        %v6275 = vshrl.u32 %v6059, 16
        %v6277 = vrot.slane %v6275, 4
        %v6278 = vor.u32 %v6277, %v6273
        %v6279 = vrot.slane %v6278, 4
        %v6281 = vshll.u32 %v6084, 16
        %v6283 = vrot.slane %v6281, 5
        %v6284 = vsel %vm256, %v6279, %v6283
        %v6286 = vshrl.u32 %v6060, 16
        %v6288 = vrot.slane %v6286, 4
        %v6289 = vshll.u32 %v6060, 16
        %v6291 = vrot.slane %v6289, 5
        %v6292 = vor.u32 %v6288, %v6291
        %v6293 = vrot.slane %v6292, 4
        %v6295 = vshll.u32 %v6061, 16
        %v6297 = vrot.slane %v6295, 5
        %v6298 = vsel %vm256, %v6293, %v6297
        %v6299 = vshrl.u32 %v6061, 16
        %v6301 = vrot.slane %v6299, 4
        %v6302 = vor.u32 %v6301, %v6297
        %v6303 = vrot.slane %v6302, 4
        %v6305 = vshll.u32 %v6085, 16
        %v6307 = vrot.slane %v6305, 5
        %v6308 = vsel %vm256, %v6303, %v6307
        %v6310 = vshrl.u32 %v6062, 16
        %v6312 = vrot.slane %v6310, 4
        %v6313 = vshll.u32 %v6062, 16
        %v6315 = vrot.slane %v6313, 5
        %v6316 = vor.u32 %v6312, %v6315
        %v6317 = vrot.slane %v6316, 4
        %v6319 = vshll.u32 %v6063, 16
        %v6321 = vrot.slane %v6319, 5
        %v6322 = vsel %vm256, %v6317, %v6321
        %v6323 = vshrl.u32 %v6063, 16
        %v6325 = vrot.slane %v6323, 4
        %v6326 = vor.u32 %v6325, %v6321
        %v6327 = vrot.slane %v6326, 4
        %v6329 = vshll.u32 %v6086, 16
        %v6331 = vrot.slane %v6329, 5
        %v6332 = vsel %vm256, %v6327, %v6331
        %v6334 = vshrl.u32 %v6064, 16
        %v6336 = vrot.slane %v6334, 4
        %v6337 = vshll.u32 %v6064, 16
        %v6339 = vrot.slane %v6337, 5
        %v6340 = vor.u32 %v6336, %v6339
        %v6341 = vrot.slane %v6340, 4
        %v6343 = vshll.u32 %v6065, 16
        %v6345 = vrot.slane %v6343, 5
        %v6346 = vsel %vm256, %v6341, %v6345
        %v6347 = vshrl.u32 %v6065, 16
        %v6349 = vrot.slane %v6347, 4
        %v6350 = vor.u32 %v6349, %v6345
        %v6351 = vrot.slane %v6350, 4
        %v6353 = vshll.u32 %v6087, 16
        %v6355 = vrot.slane %v6353, 5
        %v6356 = vsel %vm256, %v6351, %v6355
        %v6358 = vshrl.u32 %v6066, 16
        %v6360 = vrot.slane %v6358, 4
        %v6361 = vshll.u32 %v6066, 16
        %v6363 = vrot.slane %v6361, 5
        %v6364 = vor.u32 %v6360, %v6363
        %v6365 = vrot.slane %v6364, 4
        %v6367 = vshll.u32 %v6067, 16
        %v6369 = vrot.slane %v6367, 5
        %v6370 = vsel %vm256, %v6365, %v6369
        %v6371 = vshrl.u32 %v6067, 16
        %v6373 = vrot.slane %v6371, 4
        %v6374 = vor.u32 %v6373, %v6369
        %v6375 = vrot.slane %v6374, 4
        %v6377 = vshll.u32 %v6088, 16
        %v6379 = vrot.slane %v6377, 5
        %v6380 = vsel %vm256, %v6375, %v6379
        %v6382 = vshrl.u32 %v6068, 16
        %v6384 = vrot.slane %v6382, 4
        %v6385 = vshll.u32 %v6068, 16
        %v6387 = vrot.slane %v6385, 5
        %v6388 = vor.u32 %v6384, %v6387
        %v6389 = vrot.slane %v6388, 4
        %v6391 = vshll.u32 %v6069, 16
        %v6393 = vrot.slane %v6391, 5
        %v6394 = vsel %vm256, %v6389, %v6393
        %v6395 = vshrl.u32 %v6069, 16
        %v6397 = vrot.slane %v6395, 4
        %v6398 = vor.u32 %v6397, %v6393
        %v6399 = vrot.slane %v6398, 4
        %v6401 = vshll.u32 %v6089, 16
        %v6403 = vrot.slane %v6401, 5
        %v6404 = vsel %vm256, %v6399, %v6403
        %v6406 = vshrl.u32 %v6070, 16
        %v6408 = vrot.slane %v6406, 4
        %v6409 = vshll.u32 %v6070, 16
        %v6411 = vrot.slane %v6409, 5
        %v6412 = vor.u32 %v6408, %v6411
        %v6413 = vrot.slane %v6412, 4
        %v6415 = vshll.u32 %v6071, 16
        %v6417 = vrot.slane %v6415, 5
        %v6418 = vsel %vm256, %v6413, %v6417
        %v6419 = vshrl.u32 %v6071, 16
        %v6421 = vrot.slane %v6419, 4
        %v6422 = vor.u32 %v6421, %v6417
        %v6423 = vrot.slane %v6422, 4
        %v6425 = vshll.u32 %v6090, 16
        %v6427 = vrot.slane %v6425, 5
        %v6428 = vsel %vm256, %v6423, %v6427
        %v6430 = vshrl.u32 %v6072, 16
        %v6432 = vrot.slane %v6430, 4
        %v6433 = vshll.u32 %v6072, 16
        %v6435 = vrot.slane %v6433, 5
        %v6436 = vor.u32 %v6432, %v6435
        %v6437 = vrot.slane %v6436, 4
        %v6439 = vshll.u32 %v6073, 16
        %v6441 = vrot.slane %v6439, 5
        %v6442 = vsel %vm256, %v6437, %v6441
        %v6443 = vshrl.u32 %v6073, 16
        %v6445 = vrot.slane %v6443, 4
        %v6446 = vor.u32 %v6445, %v6441
        %v6447 = vrot.slane %v6446, 4
        %v6449 = vshll.u32 %v6091, 16
        %v6451 = vrot.slane %v6449, 5
        %v6452 = vsel %vm256, %v6447, %v6451
        %v6454 = vshrl.u32 %v6074, 16
        %v6456 = vrot.slane %v6454, 4
        %v6457 = vshll.u32 %v6074, 16
        %v6459 = vrot.slane %v6457, 5
        %v6460 = vor.u32 %v6456, %v6459
        %v6461 = vrot.slane %v6460, 4
        %v6463 = vshll.u32 %v6075, 16
        %v6465 = vrot.slane %v6463, 5
        %v6466 = vsel %vm256, %v6461, %v6465
        %v6467 = vshrl.u32 %v6075, 16
        %v6469 = vrot.slane %v6467, 4
        %v6470 = vor.u32 %v6469, %v6465
        %v6471 = vrot.slane %v6470, 4
        %v6473 = vshll.u32 %v6092, 16
        %v6475 = vrot.slane %v6473, 5
        %v6476 = vsel %vm256, %v6471, %v6475
        %s6477 = scalar_lea.vmem %s2, 4
        %v6478 = vld [vmem:[%s6477] sm:$0xf]
        %v6479 = vunpack.c.l.b16 %v6106
        %v6480 = vunpack.c.l.b16 %v6116
        %v6481 = vunpack.c.l.b16 %v6130
        %v6482 = vunpack.c.l.b16 %v6140
        %v6483 = vunpack.c.l.b16 %v6154
        %v6484 = vunpack.c.l.b16 %v6164
        %v6485 = vunpack.c.l.b16 %v6178
        %v6486 = vunpack.c.l.b16 %v6188
        %v6487 = vunpack.c.l.b16 %v6202
        %v6488 = vunpack.c.l.b16 %v6212
        %v6489 = vunpack.c.l.b16 %v6226
        %v6490 = vunpack.c.l.b16 %v6236
        %v6491 = vunpack.c.l.b16 %v6250
        %v6492 = vunpack.c.l.b16 %v6260
        %v6493 = vunpack.c.l.b16 %v6274
        %v6494 = vunpack.c.l.b16 %v6284
        %v6495 = vunpack.c.l.b16 %v6298
        %v6496 = vunpack.c.l.b16 %v6308
        %v6497 = vunpack.c.l.b16 %v6322
        %v6498 = vunpack.c.l.b16 %v6332
        %v6499 = vunpack.c.l.b16 %v6346
        %v6500 = vunpack.c.l.b16 %v6356
        %v6501 = vunpack.c.l.b16 %v6370
        %v6502 = vunpack.c.l.b16 %v6380
        %v6503 = vunpack.c.l.b16 %v6394
        %v6504 = vunpack.c.l.b16 %v6404
        %v6505 = vunpack.c.l.b16 %v6418
        %v6506 = vunpack.c.l.b16 %v6428
        %v6507 = vunpack.c.l.b16 %v6442
        %v6508 = vunpack.c.l.b16 %v6452
        %v6509 = vunpack.c.l.b16 %v6466
        %v6510 = vunpack.c.l.b16 %v6476
        %v6511 = vpack.c.b16 %v6480, %v6479
        %v6512 = vpack.c.b16 %v6482, %v6481
        %v6513 = vpack.c.b16 %v6484, %v6483
        %v6514 = vpack.c.b16 %v6486, %v6485
        %v6515 = vpack.c.b16 %v6488, %v6487
        %v6516 = vpack.c.b16 %v6490, %v6489
        %v6517 = vpack.c.b16 %v6492, %v6491
        %v6518 = vpack.c.b16 %v6494, %v6493
        %v6519 = vpack.c.b16 %v6496, %v6495
        %v6520 = vpack.c.b16 %v6498, %v6497
        %v6521 = vpack.c.b16 %v6500, %v6499
        %v6522 = vpack.c.b16 %v6502, %v6501
        %v6523 = vpack.c.b16 %v6504, %v6503
        %v6524 = vpack.c.b16 %v6506, %v6505
        %v6525 = vpack.c.b16 %v6508, %v6507
        %v6526 = vpack.c.b16 %v6510, %v6509
        %vm6527 = vcmask 64512
        %v6529 = vsel %vm6527, %v6511, 0
        %v6532 = vsel %vm6527, %v6512, 0
        %v6535 = vsel %vm6527, %v6513, 0
        %v6538 = vsel %vm6527, %v6514, 0
        %v6541 = vsel %vm6527, %v6515, 0
        %v6544 = vsel %vm6527, %v6516, 0
        %v6547 = vsel %vm6527, %v6517, 0
        %v6550 = vsel %vm6527, %v6518, 0
        %v6553 = vsel %vm6527, %v6519, 0
        %v6556 = vsel %vm6527, %v6520, 0
        %v6559 = vsel %vm6527, %v6521, 0
        %v6562 = vsel %vm6527, %v6522, 0
        %v6565 = vsel %vm6527, %v6523, 0
        %v6568 = vsel %vm6527, %v6524, 0
        %v6571 = vsel %vm6527, %v6525, 0
        %v6574 = vsel %vm6527, %v6526, 0
        %vm6576 = vcmask 1043456
        %v6578 = vsel %vm6576, %v6478, 0
        %6580 = vmatprep.subr.bf16.mxu0 0
        %6581 = vmatpush1.bf16.msra.mxu0 %v6578
        %6582 = vmatprep.subr.bf16.mxu0 0
        %6583 = vmatpush1.bf16.msra.mxu0 0
        %6584 = vmatprep.subr.bf16.mxu0 0
        %6585 = vmatpush1.bf16.msra.mxu0 0
        %6586 = vmatprep.subr.bf16.mxu0 0
        %6587 = vmatpush1.bf16.msra.mxu0 0
        %6588 = vmatprep.subr.bf16.mxu0 0
        %6589 = vmatpush1.bf16.msra.mxu0 0
        %6590 = vmatprep.subr.bf16.mxu0 0
        %6591 = vmatpush1.bf16.msra.mxu0 0
        %6592 = vmatprep.subr.bf16.mxu0 0
        %6593 = vmatpush1.bf16.msra.mxu0 0
        %6594 = vmatprep.subr.bf16.mxu0 0
        %6595 = vmatpush1.bf16.msra.mxu0 0
        %6596 = vmatprep.subr.bf16.mxu0 0
        %6597 = vmatpush1.bf16.msra.mxu0 0
        %6598 = vmatprep.subr.bf16.mxu0 0
        %6599 = vmatpush1.bf16.msra.mxu0 0
        %6600 = vmatprep.subr.bf16.mxu0 0
        %6601 = vmatpush1.bf16.msra.mxu0 0
        %6602 = vmatprep.subr.bf16.mxu0 0
        %6603 = vmatpush1.bf16.msra.mxu0 0
        %6604 = vmatprep.subr.bf16.mxu0 0
        %6605 = vmatpush1.bf16.msra.mxu0 0
        %6606 = vmatprep.subr.bf16.mxu0 0
        %6607 = vmatpush1.bf16.msra.mxu0 0
        %6608 = vmatprep.subr.bf16.mxu0 0
        %6609 = vmatpush1.bf16.msra.mxu0 0
        %6610 = vmatprep.subr.bf16.mxu0 0
        %6611 = vmatpush1.bf16.msra.mxu0 0
        %6612 = vmatprep.mubr.bf16.mxu0 0
        %6613 = vmatmul.mubr.bf16.gmra.mrb[0].mxu0 %v6529
        %v6614 = vpop.f32.mrb[0].mxu0
        %v6615 = vadd.f32 0.0, %v6614
        %v6616 = vpop.f32.mrb[0].mxu0
        %v6617 = vpop.f32.mrb[0].mxu0
        %v6618 = vadd.f32 0.0, %v6617
        %v6619 = vpop.f32.mrb[0].mxu0
        %6620 = vmatprep.mubr.bf16.mxu0 0
        %6621 = vmatmul.mubr.bf16.gmra.mrb[0].mxu0 %v6532
        %v6622 = vpop.f32.mrb[0].mxu0
        %v6623 = vadd.f32 0.0, %v6622
        %v6624 = vpop.f32.mrb[0].mxu0
        %v6625 = vpop.f32.mrb[0].mxu0
        %v6626 = vadd.f32 0.0, %v6625
        %v6627 = vpop.f32.mrb[0].mxu0
        %6628 = vmatprep.mubr.bf16.mxu0 0
        %6629 = vmatmul.mubr.bf16.gmra.mrb[0].mxu0 %v6535
        %v6630 = vpop.f32.mrb[0].mxu0
        %v6631 = vadd.f32 0.0, %v6630
        %v6632 = vpop.f32.mrb[0].mxu0
        %v6633 = vpop.f32.mrb[0].mxu0
        %v6634 = vadd.f32 0.0, %v6633
        %v6635 = vpop.f32.mrb[0].mxu0
        %6636 = vmatprep.mubr.bf16.mxu0 0
        %6637 = vmatmul.mubr.bf16.gmra.mrb[0].mxu0 %v6538
        %v6638 = vpop.f32.mrb[0].mxu0
        %v6639 = vadd.f32 0.0, %v6638
        %v6640 = vpop.f32.mrb[0].mxu0
        %v6641 = vpop.f32.mrb[0].mxu0
        %v6642 = vadd.f32 0.0, %v6641
        %v6643 = vpop.f32.mrb[0].mxu0
        %6644 = vmatprep.mubr.bf16.mxu0 0
        %6645 = vmatmul.mubr.bf16.gmra.mrb[0].mxu0 %v6541
        %v6646 = vpop.f32.mrb[0].mxu0
        %v6647 = vadd.f32 0.0, %v6646
        %v6648 = vpop.f32.mrb[0].mxu0
        %v6649 = vpop.f32.mrb[0].mxu0
        %v6650 = vadd.f32 0.0, %v6649
        %v6651 = vpop.f32.mrb[0].mxu0
        %6652 = vmatprep.mubr.bf16.mxu0 0
        %6653 = vmatmul.mubr.bf16.gmra.mrb[0].mxu0 %v6544
        %v6654 = vpop.f32.mrb[0].mxu0
        %v6655 = vadd.f32 0.0, %v6654
        %v6656 = vpop.f32.mrb[0].mxu0
        %v6657 = vpop.f32.mrb[0].mxu0
        %v6658 = vadd.f32 0.0, %v6657
        %v6659 = vpop.f32.mrb[0].mxu0
        %6660 = vmatprep.mubr.bf16.mxu0 0
        %6661 = vmatmul.mubr.bf16.gmra.mrb[0].mxu0 %v6547
        %v6662 = vpop.f32.mrb[0].mxu0
        %v6663 = vadd.f32 0.0, %v6662
        %v6664 = vpop.f32.mrb[0].mxu0
        %v6665 = vpop.f32.mrb[0].mxu0
        %v6666 = vadd.f32 0.0, %v6665
        %v6667 = vpop.f32.mrb[0].mxu0
        %6668 = vmatprep.mubr.bf16.mxu0 0
        %6669 = vmatmul.mubr.bf16.gmra.mrb[0].mxu0 %v6550
        %v6670 = vpop.f32.mrb[0].mxu0
        %v6671 = vadd.f32 0.0, %v6670
        %v6672 = vpop.f32.mrb[0].mxu0
        %v6673 = vpop.f32.mrb[0].mxu0
        %v6674 = vadd.f32 0.0, %v6673
        %v6675 = vpop.f32.mrb[0].mxu0
        %6676 = vmatprep.mubr.bf16.mxu0 0
        %6677 = vmatmul.mubr.bf16.gmra.mrb[0].mxu0 %v6553
        %v6678 = vpop.f32.mrb[0].mxu0
        %v6679 = vadd.f32 0.0, %v6678
        %v6680 = vpop.f32.mrb[0].mxu0
        %v6681 = vpop.f32.mrb[0].mxu0
        %v6682 = vadd.f32 0.0, %v6681
        %v6683 = vpop.f32.mrb[0].mxu0
        %6684 = vmatprep.mubr.bf16.mxu0 0
        %6685 = vmatmul.mubr.bf16.gmra.mrb[0].mxu0 %v6556
        %v6686 = vpop.f32.mrb[0].mxu0
        %v6687 = vadd.f32 0.0, %v6686
        %v6688 = vpop.f32.mrb[0].mxu0
        %v6689 = vpop.f32.mrb[0].mxu0
        %v6690 = vadd.f32 0.0, %v6689
        %v6691 = vpop.f32.mrb[0].mxu0
        %6692 = vmatprep.mubr.bf16.mxu0 0
        %6693 = vmatmul.mubr.bf16.gmra.mrb[0].mxu0 %v6559
        %v6694 = vpop.f32.mrb[0].mxu0
        %v6695 = vadd.f32 0.0, %v6694
        %v6696 = vpop.f32.mrb[0].mxu0
        %v6697 = vpop.f32.mrb[0].mxu0
        %v6698 = vadd.f32 0.0, %v6697
        %v6699 = vpop.f32.mrb[0].mxu0
        %6700 = vmatprep.mubr.bf16.mxu0 0
        %6701 = vmatmul.mubr.bf16.gmra.mrb[0].mxu0 %v6562
        %v6702 = vpop.f32.mrb[0].mxu0
        %v6703 = vadd.f32 0.0, %v6702
        %v6704 = vpop.f32.mrb[0].mxu0
        %v6705 = vpop.f32.mrb[0].mxu0
        %v6706 = vadd.f32 0.0, %v6705
        %v6707 = vpop.f32.mrb[0].mxu0
        %6708 = vmatprep.mubr.bf16.mxu0 0
        %6709 = vmatmul.mubr.bf16.gmra.mrb[0].mxu0 %v6565
        %v6710 = vpop.f32.mrb[0].mxu0
        %v6711 = vadd.f32 0.0, %v6710
        %v6712 = vpop.f32.mrb[0].mxu0
        %v6713 = vpop.f32.mrb[0].mxu0
        %v6714 = vadd.f32 0.0, %v6713
        %v6715 = vpop.f32.mrb[0].mxu0
        %6716 = vmatprep.mubr.bf16.mxu0 0
        %6717 = vmatmul.mubr.bf16.gmra.mrb[0].mxu0 %v6568
        %v6718 = vpop.f32.mrb[0].mxu0
        %v6719 = vadd.f32 0.0, %v6718
        %v6720 = vpop.f32.mrb[0].mxu0
        %v6721 = vpop.f32.mrb[0].mxu0
        %v6722 = vadd.f32 0.0, %v6721
        %v6723 = vpop.f32.mrb[0].mxu0
        %6724 = vmatprep.mubr.bf16.mxu0 0
        %6725 = vmatmul.mubr.bf16.gmra.mrb[0].mxu0 %v6571
        %v6726 = vpop.f32.mrb[0].mxu0
        %v6727 = vadd.f32 0.0, %v6726
        %v6728 = vpop.f32.mrb[0].mxu0
        %v6729 = vpop.f32.mrb[0].mxu0
        %v6730 = vadd.f32 0.0, %v6729
        %v6731 = vpop.f32.mrb[0].mxu0
        %6732 = vmatprep.mubr.bf16.mxu0 0
        %6733 = vmatmul.mubr.bf16.gmra.mrb[0].mxu0 %v6574
        %v6734 = vpop.f32.mrb[0].mxu0
        %v6735 = vadd.f32 0.0, %v6734
        %v6736 = vpop.f32.mrb[0].mxu0
        %v6737 = vpop.f32.mrb[0].mxu0
        %v6738 = vadd.f32 0.0, %v6737
        %v6739 = vpop.f32.mrb[0].mxu0
        %6740 = vdwg.mxu0
        %v6773 = vunpack.c.l.b16 %v6044
        %v6774 = vunpack.c.l.b16 %v6045
        %v6775 = vunpack.c.l.b16 %v6046
        %v6776 = vunpack.c.l.b16 %v6047
        %v6777 = vunpack.c.l.b16 %v6048
        %v6778 = vunpack.c.l.b16 %v6049
        %v6779 = vunpack.c.l.b16 %v6050
        %v6780 = vunpack.c.l.b16 %v6051
        %v6781 = vunpack.c.l.b16 %v6052
        %v6782 = vunpack.c.l.b16 %v6053
        %v6783 = vunpack.c.l.b16 %v6054
        %v6784 = vunpack.c.l.b16 %v6055
        %v6785 = vunpack.c.l.b16 %v6056
        %v6786 = vunpack.c.l.b16 %v6057
        %v6787 = vunpack.c.l.b16 %v6058
        %v6788 = vunpack.c.l.b16 %v6059
        %v6789 = vunpack.c.l.b16 %v6060
        %v6790 = vunpack.c.l.b16 %v6061
        %v6791 = vunpack.c.l.b16 %v6062
        %v6792 = vunpack.c.l.b16 %v6063
        %v6793 = vunpack.c.l.b16 %v6064
        %v6794 = vunpack.c.l.b16 %v6065
        %v6795 = vunpack.c.l.b16 %v6066
        %v6796 = vunpack.c.l.b16 %v6067
        %v6797 = vunpack.c.l.b16 %v6068
        %v6798 = vunpack.c.l.b16 %v6069
        %v6799 = vunpack.c.l.b16 %v6070
        %v6800 = vunpack.c.l.b16 %v6071
        %v6801 = vunpack.c.l.b16 %v6072
        %v6802 = vunpack.c.l.b16 %v6073
        %v6803 = vunpack.c.l.b16 %v6074
        %v6804 = vunpack.c.l.b16 %v6075
        %v6805 = vpack.c.b16 %v6774, %v6773
        %v6806 = vpack.c.b16 %v6776, %v6775
        %v6807 = vpack.c.b16 %v6778, %v6777
        %v6808 = vpack.c.b16 %v6780, %v6779
        %v6809 = vpack.c.b16 %v6782, %v6781
        %v6810 = vpack.c.b16 %v6784, %v6783
        %v6811 = vpack.c.b16 %v6786, %v6785
        %v6812 = vpack.c.b16 %v6788, %v6787
        %v6813 = vpack.c.b16 %v6790, %v6789
        %v6814 = vpack.c.b16 %v6792, %v6791
        %v6815 = vpack.c.b16 %v6794, %v6793
        %v6816 = vpack.c.b16 %v6796, %v6795
        %v6817 = vpack.c.b16 %v6798, %v6797
        %v6818 = vpack.c.b16 %v6800, %v6799
        %v6819 = vpack.c.b16 %v6802, %v6801
        %v6820 = vpack.c.b16 %v6804, %v6803
        %v6822 = vsel %vm6527, %v6805, 0
        %v6825 = vsel %vm6527, %v6806, 0
        %v6828 = vsel %vm6527, %v6807, 0
        %v6831 = vsel %vm6527, %v6808, 0
        %v6834 = vsel %vm6527, %v6809, 0
        %v6837 = vsel %vm6527, %v6810, 0
        %v6840 = vsel %vm6527, %v6811, 0
        %v6843 = vsel %vm6527, %v6812, 0
        %v6846 = vsel %vm6527, %v6813, 0
        %v6849 = vsel %vm6527, %v6814, 0
        %v6852 = vsel %vm6527, %v6815, 0
        %v6855 = vsel %vm6527, %v6816, 0
        %v6858 = vsel %vm6527, %v6817, 0
        %v6861 = vsel %vm6527, %v6818, 0
        %v6864 = vsel %vm6527, %v6819, 0
        %v6867 = vsel %vm6527, %v6820, 0
        %v6870 = vsel %vm6576, %v6076, 0
        %6872 = vmatprep.subr.bf16.mxu0 0
        %6873 = vmatpush1.bf16.msra.mxu0 %v6870
        %6874 = vmatprep.subr.bf16.mxu0 0
        %6875 = vmatpush1.bf16.msra.mxu0 0
        %6876 = vmatprep.subr.bf16.mxu0 0
        %6877 = vmatpush1.bf16.msra.mxu0 0
        %6878 = vmatprep.subr.bf16.mxu0 0
        %6879 = vmatpush1.bf16.msra.mxu0 0
        %6880 = vmatprep.subr.bf16.mxu0 0
        %6881 = vmatpush1.bf16.msra.mxu0 0
        %6882 = vmatprep.subr.bf16.mxu0 0
        %6883 = vmatpush1.bf16.msra.mxu0 0
        %6884 = vmatprep.subr.bf16.mxu0 0
        %6885 = vmatpush1.bf16.msra.mxu0 0
        %6886 = vmatprep.subr.bf16.mxu0 0
        %6887 = vmatpush1.bf16.msra.mxu0 0
        %6888 = vmatprep.subr.bf16.mxu0 0
        %6889 = vmatpush1.bf16.msra.mxu0 0
        %6890 = vmatprep.subr.bf16.mxu0 0
        %6891 = vmatpush1.bf16.msra.mxu0 0
        %6892 = vmatprep.subr.bf16.mxu0 0
        %6893 = vmatpush1.bf16.msra.mxu0 0
        %6894 = vmatprep.subr.bf16.mxu0 0
        %6895 = vmatpush1.bf16.msra.mxu0 0
        %6896 = vmatprep.subr.bf16.mxu0 0
        %6897 = vmatpush1.bf16.msra.mxu0 0
        %6898 = vmatprep.subr.bf16.mxu0 0
        %6899 = vmatpush1.bf16.msra.mxu0 0
        %6900 = vmatprep.subr.bf16.mxu0 0
        %6901 = vmatpush1.bf16.msra.mxu0 0
        %6902 = vmatprep.subr.bf16.mxu0 0
        %6903 = vmatpush1.bf16.msra.mxu0 0
        %6904 = vmatprep.mubr.bf16.mxu0 0
        %6905 = vmatmul.mubr.bf16.gmra.mrb[0].mxu0 %v6822
        %v6906 = vpop.f32.mrb[0].mxu0
        %v6907 = vadd.f32 %v6615, %v6906
        %v6908 = vpop.f32.mrb[0].mxu0
        %v6909 = vpop.f32.mrb[0].mxu0
        %v6910 = vadd.f32 %v6618, %v6909
        %v6911 = vpop.f32.mrb[0].mxu0
        %6912 = vmatprep.mubr.bf16.mxu0 0
        %6913 = vmatmul.mubr.bf16.gmra.mrb[0].mxu0 %v6825
        %v6914 = vpop.f32.mrb[0].mxu0
        %v6915 = vadd.f32 %v6623, %v6914
        %v6916 = vpop.f32.mrb[0].mxu0
        %v6917 = vpop.f32.mrb[0].mxu0
        %v6918 = vadd.f32 %v6626, %v6917
        %v6919 = vpop.f32.mrb[0].mxu0
        %6920 = vmatprep.mubr.bf16.mxu0 0
        %6921 = vmatmul.mubr.bf16.gmra.mrb[0].mxu0 %v6828
        %v6922 = vpop.f32.mrb[0].mxu0
        %v6923 = vadd.f32 %v6631, %v6922
        %v6924 = vpop.f32.mrb[0].mxu0
        %v6925 = vpop.f32.mrb[0].mxu0
        %v6926 = vadd.f32 %v6634, %v6925
        %v6927 = vpop.f32.mrb[0].mxu0
        %6928 = vmatprep.mubr.bf16.mxu0 0
        %6929 = vmatmul.mubr.bf16.gmra.mrb[0].mxu0 %v6831
        %v6930 = vpop.f32.mrb[0].mxu0
        %v6931 = vadd.f32 %v6639, %v6930
        %v6932 = vpop.f32.mrb[0].mxu0
        %v6933 = vpop.f32.mrb[0].mxu0
        %v6934 = vadd.f32 %v6642, %v6933
        %v6935 = vpop.f32.mrb[0].mxu0
        %6936 = vmatprep.mubr.bf16.mxu0 0
        %6937 = vmatmul.mubr.bf16.gmra.mrb[0].mxu0 %v6834
        %v6938 = vpop.f32.mrb[0].mxu0
        %v6939 = vadd.f32 %v6647, %v6938
        %v6940 = vpop.f32.mrb[0].mxu0
        %v6941 = vpop.f32.mrb[0].mxu0
        %v6942 = vadd.f32 %v6650, %v6941
        %v6943 = vpop.f32.mrb[0].mxu0
        %6944 = vmatprep.mubr.bf16.mxu0 0
        %6945 = vmatmul.mubr.bf16.gmra.mrb[0].mxu0 %v6837
        %v6946 = vpop.f32.mrb[0].mxu0
        %v6947 = vadd.f32 %v6655, %v6946
        %v6948 = vpop.f32.mrb[0].mxu0
        %v6949 = vpop.f32.mrb[0].mxu0
        %v6950 = vadd.f32 %v6658, %v6949
        %v6951 = vpop.f32.mrb[0].mxu0
        %6952 = vmatprep.mubr.bf16.mxu0 0
        %6953 = vmatmul.mubr.bf16.gmra.mrb[0].mxu0 %v6840
        %v6954 = vpop.f32.mrb[0].mxu0
        %v6955 = vadd.f32 %v6663, %v6954
        %v6956 = vpop.f32.mrb[0].mxu0
        %v6957 = vpop.f32.mrb[0].mxu0
        %v6958 = vadd.f32 %v6666, %v6957
        %v6959 = vpop.f32.mrb[0].mxu0
        %6960 = vmatprep.mubr.bf16.mxu0 0
        %6961 = vmatmul.mubr.bf16.gmra.mrb[0].mxu0 %v6843
        %v6962 = vpop.f32.mrb[0].mxu0
        %v6963 = vadd.f32 %v6671, %v6962
        %v6964 = vpop.f32.mrb[0].mxu0
        %v6965 = vpop.f32.mrb[0].mxu0
        %v6966 = vadd.f32 %v6674, %v6965
        %v6967 = vpop.f32.mrb[0].mxu0
        %6968 = vmatprep.mubr.bf16.mxu0 0
        %6969 = vmatmul.mubr.bf16.gmra.mrb[0].mxu0 %v6846
        %v6970 = vpop.f32.mrb[0].mxu0
        %v6971 = vadd.f32 %v6679, %v6970
        %v6972 = vpop.f32.mrb[0].mxu0
        %v6973 = vpop.f32.mrb[0].mxu0
        %v6974 = vadd.f32 %v6682, %v6973
        %v6975 = vpop.f32.mrb[0].mxu0
        %6976 = vmatprep.mubr.bf16.mxu0 0
        %6977 = vmatmul.mubr.bf16.gmra.mrb[0].mxu0 %v6849
        %v6978 = vpop.f32.mrb[0].mxu0
        %v6979 = vadd.f32 %v6687, %v6978
        %v6980 = vpop.f32.mrb[0].mxu0
        %v6981 = vpop.f32.mrb[0].mxu0
        %v6982 = vadd.f32 %v6690, %v6981
        %v6983 = vpop.f32.mrb[0].mxu0
        %6984 = vmatprep.mubr.bf16.mxu0 0
        %6985 = vmatmul.mubr.bf16.gmra.mrb[0].mxu0 %v6852
        %v6986 = vpop.f32.mrb[0].mxu0
        %v6987 = vadd.f32 %v6695, %v6986
        %v6988 = vpop.f32.mrb[0].mxu0
        %v6989 = vpop.f32.mrb[0].mxu0
        %v6990 = vadd.f32 %v6698, %v6989
        %v6991 = vpop.f32.mrb[0].mxu0
        %6992 = vmatprep.mubr.bf16.mxu0 0
        %6993 = vmatmul.mubr.bf16.gmra.mrb[0].mxu0 %v6855
        %v6994 = vpop.f32.mrb[0].mxu0
        %v6995 = vadd.f32 %v6703, %v6994
        %v6996 = vpop.f32.mrb[0].mxu0
        %v6997 = vpop.f32.mrb[0].mxu0
        %v6998 = vadd.f32 %v6706, %v6997
        %v6999 = vpop.f32.mrb[0].mxu0
        %7000 = vmatprep.mubr.bf16.mxu0 0
        %7001 = vmatmul.mubr.bf16.gmra.mrb[0].mxu0 %v6858
        %v7002 = vpop.f32.mrb[0].mxu0
        %v7003 = vadd.f32 %v6711, %v7002
        %v7004 = vpop.f32.mrb[0].mxu0
        %v7005 = vpop.f32.mrb[0].mxu0
        %v7006 = vadd.f32 %v6714, %v7005
        %v7007 = vpop.f32.mrb[0].mxu0
        %7008 = vmatprep.mubr.bf16.mxu0 0
        %7009 = vmatmul.mubr.bf16.gmra.mrb[0].mxu0 %v6861
        %v7010 = vpop.f32.mrb[0].mxu0
        %v7011 = vadd.f32 %v6719, %v7010
        %v7012 = vpop.f32.mrb[0].mxu0
        %v7013 = vpop.f32.mrb[0].mxu0
        %v7014 = vadd.f32 %v6722, %v7013
        %v7015 = vpop.f32.mrb[0].mxu0
        %7016 = vmatprep.mubr.bf16.mxu0 0
        %7017 = vmatmul.mubr.bf16.gmra.mrb[0].mxu0 %v6864
        %v7018 = vpop.f32.mrb[0].mxu0
        %v7019 = vadd.f32 %v6727, %v7018
        %v7020 = vpop.f32.mrb[0].mxu0
        %v7021 = vpop.f32.mrb[0].mxu0
        %v7022 = vadd.f32 %v6730, %v7021
        %v7023 = vpop.f32.mrb[0].mxu0
        %7024 = vmatprep.mubr.bf16.mxu0 0
        %7025 = vmatmul.mubr.bf16.gmra.mrb[0].mxu0 %v6867
        %v7026 = vpop.f32.mrb[0].mxu0
        %v7027 = vadd.f32 %v6735, %v7026
        %v7028 = vpop.f32.mrb[0].mxu0
        %v7029 = vpop.f32.mrb[0].mxu0
        %v7030 = vadd.f32 %v6738, %v7029
        %v7031 = vpop.f32.mrb[0].mxu0
        %7032 = vdwg.mxu0
        %v7033 = vld [vmem:[#allocation2] sm:$0xe]
        %v7034 = vld [vmem:[#allocation2 + $0xc] sm:$0xe]
        %v7035 = vld [vmem:[#allocation2 + $0x18] sm:$0xe]
        %v7036 = vld [vmem:[#allocation2 + $0x24] sm:$0xe]
        %v7037 = vld [vmem:[#allocation2 + $0x30] sm:$0xe]
        %v7038 = vld [vmem:[#allocation2 + $0x3c] sm:$0xe]
        %v7039 = vld [vmem:[#allocation2 + $0x48] sm:$0xe]
        %v7040 = vld [vmem:[#allocation2 + $0x54] sm:$0xe]
        %v7041 = vld [vmem:[#allocation2 + $0x60] sm:$0xe]
        %v7042 = vld [vmem:[#allocation2 + $0x6c] sm:$0xe]
        %v7043 = vld [vmem:[#allocation2 + $0x78] sm:$0xe]
        %v7044 = vld [vmem:[#allocation2 + $0x84] sm:$0xe]
        %v7045 = vld [vmem:[#allocation2 + $0x90] sm:$0xe]
        %v7046 = vld [vmem:[#allocation2 + $0x9c] sm:$0xe]
        %v7047 = vld [vmem:[#allocation2 + $0xa8] sm:$0xe]
        %v7048 = vld [vmem:[#allocation2 + $0xb4] sm:$0xe]
        %v7081 = vrot.slane %v7033, 5
        %v7082 = vrot.slane %v7081, 4
        %v7083 = vrot.slane %v6045, 5
        %v7084 = vsel %vm1361, %v7082, %v7083
        %v7085 = vrot.slane %v7083, 4
        %v7086 = vrot.slane %v6077, 5
        %v7087 = vsel %vm1361, %v7085, %v7086
        %v7088 = vrot.slane %v7034, 5
        %v7089 = vrot.slane %v7088, 4
        %v7090 = vrot.slane %v6047, 5
        %v7091 = vsel %vm1361, %v7089, %v7090
        %v7092 = vrot.slane %v7090, 4
        %v7093 = vrot.slane %v6078, 5
        %v7094 = vsel %vm1361, %v7092, %v7093
        %v7095 = vrot.slane %v7035, 5
        %v7096 = vrot.slane %v7095, 4
        %v7097 = vrot.slane %v6049, 5
        %v7098 = vsel %vm1361, %v7096, %v7097
        %v7099 = vrot.slane %v7097, 4
        %v7100 = vrot.slane %v6079, 5
        %v7101 = vsel %vm1361, %v7099, %v7100
        %v7102 = vrot.slane %v7036, 5
        %v7103 = vrot.slane %v7102, 4
        %v7104 = vrot.slane %v6051, 5
        %v7105 = vsel %vm1361, %v7103, %v7104
        %v7106 = vrot.slane %v7104, 4
        %v7107 = vrot.slane %v6080, 5
        %v7108 = vsel %vm1361, %v7106, %v7107
        %v7109 = vrot.slane %v7037, 5
        %v7110 = vrot.slane %v7109, 4
        %v7111 = vrot.slane %v6053, 5
        %v7112 = vsel %vm1361, %v7110, %v7111
        %v7113 = vrot.slane %v7111, 4
        %v7114 = vrot.slane %v6081, 5
        %v7115 = vsel %vm1361, %v7113, %v7114
        %v7116 = vrot.slane %v7038, 5
        %v7117 = vrot.slane %v7116, 4
        %v7118 = vrot.slane %v6055, 5
        %v7119 = vsel %vm1361, %v7117, %v7118
        %v7120 = vrot.slane %v7118, 4
        %v7121 = vrot.slane %v6082, 5
        %v7122 = vsel %vm1361, %v7120, %v7121
        %v7123 = vrot.slane %v7039, 5
        %v7124 = vrot.slane %v7123, 4
        %v7125 = vrot.slane %v6057, 5
        %v7126 = vsel %vm1361, %v7124, %v7125
        %v7127 = vrot.slane %v7125, 4
        %v7128 = vrot.slane %v6083, 5
        %v7129 = vsel %vm1361, %v7127, %v7128
        %v7130 = vrot.slane %v7040, 5
        %v7131 = vrot.slane %v7130, 4
        %v7132 = vrot.slane %v6059, 5
        %v7133 = vsel %vm1361, %v7131, %v7132
        %v7134 = vrot.slane %v7132, 4
        %v7135 = vrot.slane %v6084, 5
        %v7136 = vsel %vm1361, %v7134, %v7135
        %v7137 = vrot.slane %v7041, 5
        %v7138 = vrot.slane %v7137, 4
        %v7139 = vrot.slane %v6061, 5
        %v7140 = vsel %vm1361, %v7138, %v7139
        %v7141 = vrot.slane %v7139, 4
        %v7142 = vrot.slane %v6085, 5
        %v7143 = vsel %vm1361, %v7141, %v7142
        %v7144 = vrot.slane %v7042, 5
        %v7145 = vrot.slane %v7144, 4
        %v7146 = vrot.slane %v6063, 5
        %v7147 = vsel %vm1361, %v7145, %v7146
        %v7148 = vrot.slane %v7146, 4
        %v7149 = vrot.slane %v6086, 5
        %v7150 = vsel %vm1361, %v7148, %v7149
        %v7151 = vrot.slane %v7043, 5
        %v7152 = vrot.slane %v7151, 4
        %v7153 = vrot.slane %v6065, 5
        %v7154 = vsel %vm1361, %v7152, %v7153
        %v7155 = vrot.slane %v7153, 4
        %v7156 = vrot.slane %v6087, 5
        %v7157 = vsel %vm1361, %v7155, %v7156
        %v7158 = vrot.slane %v7044, 5
        %v7159 = vrot.slane %v7158, 4
        %v7160 = vrot.slane %v6067, 5
        %v7161 = vsel %vm1361, %v7159, %v7160
        %v7162 = vrot.slane %v7160, 4
        %v7163 = vrot.slane %v6088, 5
        %v7164 = vsel %vm1361, %v7162, %v7163
        %v7165 = vrot.slane %v7045, 5
        %v7166 = vrot.slane %v7165, 4
        %v7167 = vrot.slane %v6069, 5
        %v7168 = vsel %vm1361, %v7166, %v7167
        %v7169 = vrot.slane %v7167, 4
        %v7170 = vrot.slane %v6089, 5
        %v7171 = vsel %vm1361, %v7169, %v7170
        %v7172 = vrot.slane %v7046, 5
        %v7173 = vrot.slane %v7172, 4
        %v7174 = vrot.slane %v6071, 5
        %v7175 = vsel %vm1361, %v7173, %v7174
        %v7176 = vrot.slane %v7174, 4
        %v7177 = vrot.slane %v6090, 5
        %v7178 = vsel %vm1361, %v7176, %v7177
        %v7179 = vrot.slane %v7047, 5
        %v7180 = vrot.slane %v7179, 4
        %v7181 = vrot.slane %v6073, 5
        %v7182 = vsel %vm1361, %v7180, %v7181
        %v7183 = vrot.slane %v7181, 4
        %v7184 = vrot.slane %v6091, 5
        %v7185 = vsel %vm1361, %v7183, %v7184
        %v7186 = vrot.slane %v7048, 5
        %v7187 = vrot.slane %v7186, 4
        %v7188 = vrot.slane %v6075, 5
        %v7189 = vsel %vm1361, %v7187, %v7188
        %v7190 = vrot.slane %v7188, 4
        %v7191 = vrot.slane %v6092, 5
        %v7192 = vsel %vm1361, %v7190, %v7191
        %s7193 = scalar_lea.vmem %s2, 8
        %v7194 = vld [vmem:[%s7193] sm:$0xf]
        %v7195 = vunpack.c.l.b16 %v7084
        %v7196 = vunpack.c.l.b16 %v7087
        %v7197 = vunpack.c.l.b16 %v7091
        %v7198 = vunpack.c.l.b16 %v7094
        %v7199 = vunpack.c.l.b16 %v7098
        %v7200 = vunpack.c.l.b16 %v7101
        %v7201 = vunpack.c.l.b16 %v7105
        %v7202 = vunpack.c.l.b16 %v7108
        %v7203 = vunpack.c.l.b16 %v7112
        %v7204 = vunpack.c.l.b16 %v7115
        %v7205 = vunpack.c.l.b16 %v7119
        %v7206 = vunpack.c.l.b16 %v7122
        %v7207 = vunpack.c.l.b16 %v7126
        %v7208 = vunpack.c.l.b16 %v7129
        %v7209 = vunpack.c.l.b16 %v7133
        %v7210 = vunpack.c.l.b16 %v7136
        %v7211 = vunpack.c.l.b16 %v7140
        %v7212 = vunpack.c.l.b16 %v7143
        %v7213 = vunpack.c.l.b16 %v7147
        %v7214 = vunpack.c.l.b16 %v7150
        %v7215 = vunpack.c.l.b16 %v7154
        %v7216 = vunpack.c.l.b16 %v7157
        %v7217 = vunpack.c.l.b16 %v7161
        %v7218 = vunpack.c.l.b16 %v7164
        %v7219 = vunpack.c.l.b16 %v7168
        %v7220 = vunpack.c.l.b16 %v7171
        %v7221 = vunpack.c.l.b16 %v7175
        %v7222 = vunpack.c.l.b16 %v7178
        %v7223 = vunpack.c.l.b16 %v7182
        %v7224 = vunpack.c.l.b16 %v7185
        %v7225 = vunpack.c.l.b16 %v7189
        %v7226 = vunpack.c.l.b16 %v7192
        %v7227 = vpack.c.b16 %v7196, %v7195
        %v7228 = vpack.c.b16 %v7198, %v7197
        %v7229 = vpack.c.b16 %v7200, %v7199
        %v7230 = vpack.c.b16 %v7202, %v7201
        %v7231 = vpack.c.b16 %v7204, %v7203
        %v7232 = vpack.c.b16 %v7206, %v7205
        %v7233 = vpack.c.b16 %v7208, %v7207
        %v7234 = vpack.c.b16 %v7210, %v7209
        %v7235 = vpack.c.b16 %v7212, %v7211
        %v7236 = vpack.c.b16 %v7214, %v7213
        %v7237 = vpack.c.b16 %v7216, %v7215
        %v7238 = vpack.c.b16 %v7218, %v7217
        %v7239 = vpack.c.b16 %v7220, %v7219
        %v7240 = vpack.c.b16 %v7222, %v7221
        %v7241 = vpack.c.b16 %v7224, %v7223
        %v7242 = vpack.c.b16 %v7226, %v7225
        %v7244 = vsel %vm6527, %v7227, 0
        %v7247 = vsel %vm6527, %v7228, 0
        %v7250 = vsel %vm6527, %v7229, 0
        %v7253 = vsel %vm6527, %v7230, 0
        %v7256 = vsel %vm6527, %v7231, 0
        %v7259 = vsel %vm6527, %v7232, 0
        %v7262 = vsel %vm6527, %v7233, 0
        %v7265 = vsel %vm6527, %v7234, 0
        %v7268 = vsel %vm6527, %v7235, 0
        %v7271 = vsel %vm6527, %v7236, 0
        %v7274 = vsel %vm6527, %v7237, 0
        %v7277 = vsel %vm6527, %v7238, 0
        %v7280 = vsel %vm6527, %v7239, 0
        %v7283 = vsel %vm6527, %v7240, 0
        %v7286 = vsel %vm6527, %v7241, 0
        %v7289 = vsel %vm6527, %v7242, 0
        %v7292 = vsel %vm6576, %v7194, 0
        %7294 = vmatprep.subr.bf16.mxu0 0
        %7295 = vmatpush1.bf16.msra.mxu0 %v7292
        %7296 = vmatprep.subr.bf16.mxu0 0
        %7297 = vmatpush1.bf16.msra.mxu0 0
        %7298 = vmatprep.subr.bf16.mxu0 0
        %7299 = vmatpush1.bf16.msra.mxu0 0
        %7300 = vmatprep.subr.bf16.mxu0 0
        %7301 = vmatpush1.bf16.msra.mxu0 0
        %7302 = vmatprep.subr.bf16.mxu0 0
        %7303 = vmatpush1.bf16.msra.mxu0 0
        %7304 = vmatprep.subr.bf16.mxu0 0
        %7305 = vmatpush1.bf16.msra.mxu0 0
        %7306 = vmatprep.subr.bf16.mxu0 0
        %7307 = vmatpush1.bf16.msra.mxu0 0
        %7308 = vmatprep.subr.bf16.mxu0 0
        %7309 = vmatpush1.bf16.msra.mxu0 0
        %7310 = vmatprep.subr.bf16.mxu0 0
        %7311 = vmatpush1.bf16.msra.mxu0 0
        %7312 = vmatprep.subr.bf16.mxu0 0
        %7313 = vmatpush1.bf16.msra.mxu0 0
        %7314 = vmatprep.subr.bf16.mxu0 0
        %7315 = vmatpush1.bf16.msra.mxu0 0
        %7316 = vmatprep.subr.bf16.mxu0 0
        %7317 = vmatpush1.bf16.msra.mxu0 0
        %7318 = vmatprep.subr.bf16.mxu0 0
        %7319 = vmatpush1.bf16.msra.mxu0 0
        %7320 = vmatprep.subr.bf16.mxu0 0
        %7321 = vmatpush1.bf16.msra.mxu0 0
        %7322 = vmatprep.subr.bf16.mxu0 0
        %7323 = vmatpush1.bf16.msra.mxu0 0
        %7324 = vmatprep.subr.bf16.mxu0 0
        %7325 = vmatpush1.bf16.msra.mxu0 0
        %7326 = vmatprep.mubr.bf16.mxu0 0
        %7327 = vmatmul.mubr.bf16.gmra.mrb[0].mxu0 %v7244
        %v7328 = vpop.f32.mrb[0].mxu0
        %v7329 = vadd.f32 0.0, %v7328
        %v7330 = vpop.f32.mrb[0].mxu0
        %v7331 = vpop.f32.mrb[0].mxu0
        %v7332 = vadd.f32 0.0, %v7331
        %v7333 = vpop.f32.mrb[0].mxu0
        %7334 = vmatprep.mubr.bf16.mxu0 0
        %7335 = vmatmul.mubr.bf16.gmra.mrb[0].mxu0 %v7247
        %v7336 = vpop.f32.mrb[0].mxu0
        %v7337 = vadd.f32 0.0, %v7336
        %v7338 = vpop.f32.mrb[0].mxu0
        %v7339 = vpop.f32.mrb[0].mxu0
        %v7340 = vadd.f32 0.0, %v7339
        %v7341 = vpop.f32.mrb[0].mxu0
        %7342 = vmatprep.mubr.bf16.mxu0 0
        %7343 = vmatmul.mubr.bf16.gmra.mrb[0].mxu0 %v7250
        %v7344 = vpop.f32.mrb[0].mxu0
        %v7345 = vadd.f32 0.0, %v7344
        %v7346 = vpop.f32.mrb[0].mxu0
        %v7347 = vpop.f32.mrb[0].mxu0
        %v7348 = vadd.f32 0.0, %v7347
        %v7349 = vpop.f32.mrb[0].mxu0
        %7350 = vmatprep.mubr.bf16.mxu0 0
        %7351 = vmatmul.mubr.bf16.gmra.mrb[0].mxu0 %v7253
        %v7352 = vpop.f32.mrb[0].mxu0
        %v7353 = vadd.f32 0.0, %v7352
        %v7354 = vpop.f32.mrb[0].mxu0
        %v7355 = vpop.f32.mrb[0].mxu0
        %v7356 = vadd.f32 0.0, %v7355
        %v7357 = vpop.f32.mrb[0].mxu0
        %7358 = vmatprep.mubr.bf16.mxu0 0
        %7359 = vmatmul.mubr.bf16.gmra.mrb[0].mxu0 %v7256
        %v7360 = vpop.f32.mrb[0].mxu0
        %v7361 = vadd.f32 0.0, %v7360
        %v7362 = vpop.f32.mrb[0].mxu0
        %v7363 = vpop.f32.mrb[0].mxu0
        %v7364 = vadd.f32 0.0, %v7363
        %v7365 = vpop.f32.mrb[0].mxu0
        %7366 = vmatprep.mubr.bf16.mxu0 0
        %7367 = vmatmul.mubr.bf16.gmra.mrb[0].mxu0 %v7259
        %v7368 = vpop.f32.mrb[0].mxu0
        %v7369 = vadd.f32 0.0, %v7368
        %v7370 = vpop.f32.mrb[0].mxu0
        %v7371 = vpop.f32.mrb[0].mxu0
        %v7372 = vadd.f32 0.0, %v7371
        %v7373 = vpop.f32.mrb[0].mxu0
        %7374 = vmatprep.mubr.bf16.mxu0 0
        %7375 = vmatmul.mubr.bf16.gmra.mrb[0].mxu0 %v7262
        %v7376 = vpop.f32.mrb[0].mxu0
        %v7377 = vadd.f32 0.0, %v7376
        %v7378 = vpop.f32.mrb[0].mxu0
        %v7379 = vpop.f32.mrb[0].mxu0
        %v7380 = vadd.f32 0.0, %v7379
        %v7381 = vpop.f32.mrb[0].mxu0
        %7382 = vmatprep.mubr.bf16.mxu0 0
        %7383 = vmatmul.mubr.bf16.gmra.mrb[0].mxu0 %v7265
        %v7384 = vpop.f32.mrb[0].mxu0
        %v7385 = vadd.f32 0.0, %v7384
        %v7386 = vpop.f32.mrb[0].mxu0
        %v7387 = vpop.f32.mrb[0].mxu0
        %v7388 = vadd.f32 0.0, %v7387
        %v7389 = vpop.f32.mrb[0].mxu0
        %7390 = vmatprep.mubr.bf16.mxu0 0
        %7391 = vmatmul.mubr.bf16.gmra.mrb[0].mxu0 %v7268
        %v7392 = vpop.f32.mrb[0].mxu0
        %v7393 = vadd.f32 0.0, %v7392
        %v7394 = vpop.f32.mrb[0].mxu0
        %v7395 = vpop.f32.mrb[0].mxu0
        %v7396 = vadd.f32 0.0, %v7395
        %v7397 = vpop.f32.mrb[0].mxu0
        %7398 = vmatprep.mubr.bf16.mxu0 0
        %7399 = vmatmul.mubr.bf16.gmra.mrb[0].mxu0 %v7271
        %v7400 = vpop.f32.mrb[0].mxu0
        %v7401 = vadd.f32 0.0, %v7400
        %v7402 = vpop.f32.mrb[0].mxu0
        %v7403 = vpop.f32.mrb[0].mxu0
        %v7404 = vadd.f32 0.0, %v7403
        %v7405 = vpop.f32.mrb[0].mxu0
        %7406 = vmatprep.mubr.bf16.mxu0 0
        %7407 = vmatmul.mubr.bf16.gmra.mrb[0].mxu0 %v7274
        %v7408 = vpop.f32.mrb[0].mxu0
        %v7409 = vadd.f32 0.0, %v7408
        %v7410 = vpop.f32.mrb[0].mxu0
        %v7411 = vpop.f32.mrb[0].mxu0
        %v7412 = vadd.f32 0.0, %v7411
        %v7413 = vpop.f32.mrb[0].mxu0
        %7414 = vmatprep.mubr.bf16.mxu0 0
        %7415 = vmatmul.mubr.bf16.gmra.mrb[0].mxu0 %v7277
        %v7416 = vpop.f32.mrb[0].mxu0
        %v7417 = vadd.f32 0.0, %v7416
        %v7418 = vpop.f32.mrb[0].mxu0
        %v7419 = vpop.f32.mrb[0].mxu0
        %v7420 = vadd.f32 0.0, %v7419
        %v7421 = vpop.f32.mrb[0].mxu0
        %7422 = vmatprep.mubr.bf16.mxu0 0
        %7423 = vmatmul.mubr.bf16.gmra.mrb[0].mxu0 %v7280
        %v7424 = vpop.f32.mrb[0].mxu0
        %v7425 = vadd.f32 0.0, %v7424
        %v7426 = vpop.f32.mrb[0].mxu0
        %v7427 = vpop.f32.mrb[0].mxu0
        %v7428 = vadd.f32 0.0, %v7427
        %v7429 = vpop.f32.mrb[0].mxu0
        %7430 = vmatprep.mubr.bf16.mxu0 0
        %7431 = vmatmul.mubr.bf16.gmra.mrb[0].mxu0 %v7283
        %v7432 = vpop.f32.mrb[0].mxu0
        %v7433 = vadd.f32 0.0, %v7432
        %v7434 = vpop.f32.mrb[0].mxu0
        %v7435 = vpop.f32.mrb[0].mxu0
        %v7436 = vadd.f32 0.0, %v7435
        %v7437 = vpop.f32.mrb[0].mxu0
        %7438 = vmatprep.mubr.bf16.mxu0 0
        %7439 = vmatmul.mubr.bf16.gmra.mrb[0].mxu0 %v7286
        %v7440 = vpop.f32.mrb[0].mxu0
        %v7441 = vadd.f32 0.0, %v7440
        %v7442 = vpop.f32.mrb[0].mxu0
        %v7443 = vpop.f32.mrb[0].mxu0
        %v7444 = vadd.f32 0.0, %v7443
        %v7445 = vpop.f32.mrb[0].mxu0
        %7446 = vmatprep.mubr.bf16.mxu0 0
        %7447 = vmatmul.mubr.bf16.gmra.mrb[0].mxu0 %v7289
        %v7448 = vpop.f32.mrb[0].mxu0
        %v7449 = vadd.f32 0.0, %v7448
        %v7450 = vpop.f32.mrb[0].mxu0
        %v7451 = vpop.f32.mrb[0].mxu0
        %v7452 = vadd.f32 0.0, %v7451
        %v7453 = vpop.f32.mrb[0].mxu0
        %7454 = vdwg.mxu0
        %v7455 = vadd.f32 %v6907, %v7329
        %v7456 = vadd.f32 %v6910, %v7332
        %v7457 = vadd.f32 %v6915, %v7337
        %v7458 = vadd.f32 %v6918, %v7340
        %v7459 = vadd.f32 %v6923, %v7345
        %v7460 = vadd.f32 %v6926, %v7348
        %v7461 = vadd.f32 %v6931, %v7353
        %v7462 = vadd.f32 %v6934, %v7356
        %v7463 = vadd.f32 %v6939, %v7361
        %v7464 = vadd.f32 %v6942, %v7364
        %v7465 = vadd.f32 %v6947, %v7369
        %v7466 = vadd.f32 %v6950, %v7372
        %v7467 = vadd.f32 %v6955, %v7377
        %v7468 = vadd.f32 %v6958, %v7380
        %v7469 = vadd.f32 %v6963, %v7385
        %v7470 = vadd.f32 %v6966, %v7388
        %v7471 = vadd.f32 %v6971, %v7393
        %v7472 = vadd.f32 %v6974, %v7396
        %v7473 = vadd.f32 %v6979, %v7401
        %v7474 = vadd.f32 %v6982, %v7404
        %v7475 = vadd.f32 %v6987, %v7409
        %v7476 = vadd.f32 %v6990, %v7412
        %v7477 = vadd.f32 %v6995, %v7417
        %v7478 = vadd.f32 %v6998, %v7420
        %v7479 = vadd.f32 %v7003, %v7425
        %v7480 = vadd.f32 %v7006, %v7428
        %v7481 = vadd.f32 %v7011, %v7433
        %v7482 = vadd.f32 %v7014, %v7436
        %v7483 = vadd.f32 %v7019, %v7441
        %v7484 = vadd.f32 %v7022, %v7444
        %v7485 = vadd.f32 %v7027, %v7449
        %v7486 = vadd.f32 %v7030, %v7452
        %s7487 = scalar_lea.vmem [#allocation2], 12
        %v7488 = vld [vmem:[%s7487] sm:$0xf]
        %v7489 = vld [vmem:[%s7487 + $0x4] sm:$0xf]
        %v7490 = vld [vmem:[%s7487 + $0xc] sm:$0xf]
        %v7491 = vld [vmem:[%s7487 + $0x10] sm:$0xf]
        %v7492 = vld [vmem:[%s7487 + $0x18] sm:$0xf]
        %v7493 = vld [vmem:[%s7487 + $0x1c] sm:$0xf]
        %v7494 = vld [vmem:[%s7487 + $0x24] sm:$0xf]
        %v7495 = vld [vmem:[%s7487 + $0x28] sm:$0xf]
        %v7496 = vld [vmem:[%s7487 + $0x30] sm:$0xf]
        %v7497 = vld [vmem:[%s7487 + $0x34] sm:$0xf]
        %v7498 = vld [vmem:[%s7487 + $0x3c] sm:$0xf]
        %v7499 = vld [vmem:[%s7487 + $0x40] sm:$0xf]
        %v7500 = vld [vmem:[%s7487 + $0x48] sm:$0xf]
        %v7501 = vld [vmem:[%s7487 + $0x4c] sm:$0xf]
        %v7502 = vld [vmem:[%s7487 + $0x54] sm:$0xf]
        %v7503 = vld [vmem:[%s7487 + $0x58] sm:$0xf]
        %v7504 = vld [vmem:[%s7487 + $0x60] sm:$0xf]
        %v7505 = vld [vmem:[%s7487 + $0x64] sm:$0xf]
        %v7506 = vld [vmem:[%s7487 + $0x6c] sm:$0xf]
        %v7507 = vld [vmem:[%s7487 + $0x70] sm:$0xf]
        %v7508 = vld [vmem:[%s7487 + $0x78] sm:$0xf]
        %v7509 = vld [vmem:[%s7487 + $0x7c] sm:$0xf]
        %v7510 = vld [vmem:[%s7487 + $0x84] sm:$0xf]
        %v7511 = vld [vmem:[%s7487 + $0x88] sm:$0xf]
        %v7512 = vld [vmem:[%s7487 + $0x90] sm:$0xf]
        %v7513 = vld [vmem:[%s7487 + $0x94] sm:$0xf]
        %v7514 = vld [vmem:[%s7487 + $0x9c] sm:$0xf]
        %v7515 = vld [vmem:[%s7487 + $0xa0] sm:$0xf]
        %v7516 = vld [vmem:[%s7487 + $0xa8] sm:$0xf]
        %v7517 = vld [vmem:[%s7487 + $0xac] sm:$0xf]
        %v7518 = vld [vmem:[%s7487 + $0xb4] sm:$0xf]
        %v7519 = vld [vmem:[%s7487 + $0xb8] sm:$0xf]
        %s7520 = scalar_lea.vmem %s2, 12
        %v7521 = vld [vmem:[%s7520] sm:$0xf]
        %v7554 = vunpack.c.l.b16 %v7488
        %v7555 = vunpack.c.l.b16 %v7489
        %v7556 = vunpack.c.l.b16 %v7490
        %v7557 = vunpack.c.l.b16 %v7491
        %v7558 = vunpack.c.l.b16 %v7492
        %v7559 = vunpack.c.l.b16 %v7493
        %v7560 = vunpack.c.l.b16 %v7494
        %v7561 = vunpack.c.l.b16 %v7495
        %v7562 = vunpack.c.l.b16 %v7496
        %v7563 = vunpack.c.l.b16 %v7497
        %v7564 = vunpack.c.l.b16 %v7498
        %v7565 = vunpack.c.l.b16 %v7499
        %v7566 = vunpack.c.l.b16 %v7500
        %v7567 = vunpack.c.l.b16 %v7501
        %v7568 = vunpack.c.l.b16 %v7502
        %v7569 = vunpack.c.l.b16 %v7503
        %v7570 = vunpack.c.l.b16 %v7504
        %v7571 = vunpack.c.l.b16 %v7505
        %v7572 = vunpack.c.l.b16 %v7506
        %v7573 = vunpack.c.l.b16 %v7507
        %v7574 = vunpack.c.l.b16 %v7508
        %v7575 = vunpack.c.l.b16 %v7509
        %v7576 = vunpack.c.l.b16 %v7510
        %v7577 = vunpack.c.l.b16 %v7511
        %v7578 = vunpack.c.l.b16 %v7512
        %v7579 = vunpack.c.l.b16 %v7513
        %v7580 = vunpack.c.l.b16 %v7514
        %v7581 = vunpack.c.l.b16 %v7515
        %v7582 = vunpack.c.l.b16 %v7516
        %v7583 = vunpack.c.l.b16 %v7517
        %v7584 = vunpack.c.l.b16 %v7518
        %v7585 = vunpack.c.l.b16 %v7519
        %v7586 = vpack.c.b16 %v7555, %v7554
        %v7587 = vpack.c.b16 %v7557, %v7556
        %v7588 = vpack.c.b16 %v7559, %v7558
        %v7589 = vpack.c.b16 %v7561, %v7560
        %v7590 = vpack.c.b16 %v7563, %v7562
        %v7591 = vpack.c.b16 %v7565, %v7564
        %v7592 = vpack.c.b16 %v7567, %v7566
        %v7593 = vpack.c.b16 %v7569, %v7568
        %v7594 = vpack.c.b16 %v7571, %v7570
        %v7595 = vpack.c.b16 %v7573, %v7572
        %v7596 = vpack.c.b16 %v7575, %v7574
        %v7597 = vpack.c.b16 %v7577, %v7576
        %v7598 = vpack.c.b16 %v7579, %v7578
        %v7599 = vpack.c.b16 %v7581, %v7580
        %v7600 = vpack.c.b16 %v7583, %v7582
        %v7601 = vpack.c.b16 %v7585, %v7584
        %v7603 = vsel %vm6527, %v7586, 0
        %v7606 = vsel %vm6527, %v7587, 0
        %v7609 = vsel %vm6527, %v7588, 0
        %v7612 = vsel %vm6527, %v7589, 0
        %v7615 = vsel %vm6527, %v7590, 0
        %v7618 = vsel %vm6527, %v7591, 0
        %v7621 = vsel %vm6527, %v7592, 0
        %v7624 = vsel %vm6527, %v7593, 0
        %v7627 = vsel %vm6527, %v7594, 0
        %v7630 = vsel %vm6527, %v7595, 0
        %v7633 = vsel %vm6527, %v7596, 0
        %v7636 = vsel %vm6527, %v7597, 0
        %v7639 = vsel %vm6527, %v7598, 0
        %v7642 = vsel %vm6527, %v7599, 0
        %v7645 = vsel %vm6527, %v7600, 0
        %v7648 = vsel %vm6527, %v7601, 0
        %v7651 = vsel %vm6576, %v7521, 0
        %7653 = vmatprep.subr.bf16.mxu0 0
        %7654 = vmatpush1.bf16.msra.mxu0 %v7651
        %7655 = vmatprep.subr.bf16.mxu0 0
        %7656 = vmatpush1.bf16.msra.mxu0 0
        %7657 = vmatprep.subr.bf16.mxu0 0
        %7658 = vmatpush1.bf16.msra.mxu0 0
        %7659 = vmatprep.subr.bf16.mxu0 0
        %7660 = vmatpush1.bf16.msra.mxu0 0
        %7661 = vmatprep.subr.bf16.mxu0 0
        %7662 = vmatpush1.bf16.msra.mxu0 0
        %7663 = vmatprep.subr.bf16.mxu0 0
        %7664 = vmatpush1.bf16.msra.mxu0 0
        %7665 = vmatprep.subr.bf16.mxu0 0
        %7666 = vmatpush1.bf16.msra.mxu0 0
        %7667 = vmatprep.subr.bf16.mxu0 0
        %7668 = vmatpush1.bf16.msra.mxu0 0
        %7669 = vmatprep.subr.bf16.mxu0 0
        %7670 = vmatpush1.bf16.msra.mxu0 0
        %7671 = vmatprep.subr.bf16.mxu0 0
        %7672 = vmatpush1.bf16.msra.mxu0 0
        %7673 = vmatprep.subr.bf16.mxu0 0
        %7674 = vmatpush1.bf16.msra.mxu0 0
        %7675 = vmatprep.subr.bf16.mxu0 0
        %7676 = vmatpush1.bf16.msra.mxu0 0
        %7677 = vmatprep.subr.bf16.mxu0 0
        %7678 = vmatpush1.bf16.msra.mxu0 0
        %7679 = vmatprep.subr.bf16.mxu0 0
        %7680 = vmatpush1.bf16.msra.mxu0 0
        %7681 = vmatprep.subr.bf16.mxu0 0
        %7682 = vmatpush1.bf16.msra.mxu0 0
        %7683 = vmatprep.subr.bf16.mxu0 0
        %7684 = vmatpush1.bf16.msra.mxu0 0
        %7685 = vmatprep.mubr.bf16.mxu0 0
        %7686 = vmatmul.mubr.bf16.gmra.mrb[0].mxu0 %v7603
        %v7687 = vpop.f32.mrb[0].mxu0
        %v7688 = vadd.f32 0.0, %v7687
        %v7689 = vpop.f32.mrb[0].mxu0
        %v7690 = vpop.f32.mrb[0].mxu0
        %v7691 = vadd.f32 0.0, %v7690
        %v7692 = vpop.f32.mrb[0].mxu0
        %7693 = vmatprep.mubr.bf16.mxu0 0
        %7694 = vmatmul.mubr.bf16.gmra.mrb[0].mxu0 %v7606
        %v7695 = vpop.f32.mrb[0].mxu0
        %v7696 = vadd.f32 0.0, %v7695
        %v7697 = vpop.f32.mrb[0].mxu0
        %v7698 = vpop.f32.mrb[0].mxu0
        %v7699 = vadd.f32 0.0, %v7698
        %v7700 = vpop.f32.mrb[0].mxu0
        %7701 = vmatprep.mubr.bf16.mxu0 0
        %7702 = vmatmul.mubr.bf16.gmra.mrb[0].mxu0 %v7609
        %v7703 = vpop.f32.mrb[0].mxu0
        %v7704 = vadd.f32 0.0, %v7703
        %v7705 = vpop.f32.mrb[0].mxu0
        %v7706 = vpop.f32.mrb[0].mxu0
        %v7707 = vadd.f32 0.0, %v7706
        %v7708 = vpop.f32.mrb[0].mxu0
        %7709 = vmatprep.mubr.bf16.mxu0 0
        %7710 = vmatmul.mubr.bf16.gmra.mrb[0].mxu0 %v7612
        %v7711 = vpop.f32.mrb[0].mxu0
        %v7712 = vadd.f32 0.0, %v7711
        %v7713 = vpop.f32.mrb[0].mxu0
        %v7714 = vpop.f32.mrb[0].mxu0
        %v7715 = vadd.f32 0.0, %v7714
        %v7716 = vpop.f32.mrb[0].mxu0
        %7717 = vmatprep.mubr.bf16.mxu0 0
        %7718 = vmatmul.mubr.bf16.gmra.mrb[0].mxu0 %v7615
        %v7719 = vpop.f32.mrb[0].mxu0
        %v7720 = vadd.f32 0.0, %v7719
        %v7721 = vpop.f32.mrb[0].mxu0
        %v7722 = vpop.f32.mrb[0].mxu0
        %v7723 = vadd.f32 0.0, %v7722
        %v7724 = vpop.f32.mrb[0].mxu0
        %7725 = vmatprep.mubr.bf16.mxu0 0
        %7726 = vmatmul.mubr.bf16.gmra.mrb[0].mxu0 %v7618
        %v7727 = vpop.f32.mrb[0].mxu0
        %v7728 = vadd.f32 0.0, %v7727
        %v7729 = vpop.f32.mrb[0].mxu0
        %v7730 = vpop.f32.mrb[0].mxu0
        %v7731 = vadd.f32 0.0, %v7730
        %v7732 = vpop.f32.mrb[0].mxu0
        %7733 = vmatprep.mubr.bf16.mxu0 0
        %7734 = vmatmul.mubr.bf16.gmra.mrb[0].mxu0 %v7621
        %v7735 = vpop.f32.mrb[0].mxu0
        %v7736 = vadd.f32 0.0, %v7735
        %v7737 = vpop.f32.mrb[0].mxu0
        %v7738 = vpop.f32.mrb[0].mxu0
        %v7739 = vadd.f32 0.0, %v7738
        %v7740 = vpop.f32.mrb[0].mxu0
        %7741 = vmatprep.mubr.bf16.mxu0 0
        %7742 = vmatmul.mubr.bf16.gmra.mrb[0].mxu0 %v7624
        %v7743 = vpop.f32.mrb[0].mxu0
        %v7744 = vadd.f32 0.0, %v7743
        %v7745 = vpop.f32.mrb[0].mxu0
        %v7746 = vpop.f32.mrb[0].mxu0
        %v7747 = vadd.f32 0.0, %v7746
        %v7748 = vpop.f32.mrb[0].mxu0
        %7749 = vmatprep.mubr.bf16.mxu0 0
        %7750 = vmatmul.mubr.bf16.gmra.mrb[0].mxu0 %v7627
        %v7751 = vpop.f32.mrb[0].mxu0
        %v7752 = vadd.f32 0.0, %v7751
        %v7753 = vpop.f32.mrb[0].mxu0
        %v7754 = vpop.f32.mrb[0].mxu0
        %v7755 = vadd.f32 0.0, %v7754
        %v7756 = vpop.f32.mrb[0].mxu0
        %7757 = vmatprep.mubr.bf16.mxu0 0
        %7758 = vmatmul.mubr.bf16.gmra.mrb[0].mxu0 %v7630
        %v7759 = vpop.f32.mrb[0].mxu0
        %v7760 = vadd.f32 0.0, %v7759
        %v7761 = vpop.f32.mrb[0].mxu0
        %v7762 = vpop.f32.mrb[0].mxu0
        %v7763 = vadd.f32 0.0, %v7762
        %v7764 = vpop.f32.mrb[0].mxu0
        %7765 = vmatprep.mubr.bf16.mxu0 0
        %7766 = vmatmul.mubr.bf16.gmra.mrb[0].mxu0 %v7633
        %v7767 = vpop.f32.mrb[0].mxu0
        %v7768 = vadd.f32 0.0, %v7767
        %v7769 = vpop.f32.mrb[0].mxu0
        %v7770 = vpop.f32.mrb[0].mxu0
        %v7771 = vadd.f32 0.0, %v7770
        %v7772 = vpop.f32.mrb[0].mxu0
        %7773 = vmatprep.mubr.bf16.mxu0 0
        %7774 = vmatmul.mubr.bf16.gmra.mrb[0].mxu0 %v7636
        %v7775 = vpop.f32.mrb[0].mxu0
        %v7776 = vadd.f32 0.0, %v7775
        %v7777 = vpop.f32.mrb[0].mxu0
        %v7778 = vpop.f32.mrb[0].mxu0
        %v7779 = vadd.f32 0.0, %v7778
        %v7780 = vpop.f32.mrb[0].mxu0
        %7781 = vmatprep.mubr.bf16.mxu0 0
        %7782 = vmatmul.mubr.bf16.gmra.mrb[0].mxu0 %v7639
        %v7783 = vpop.f32.mrb[0].mxu0
        %v7784 = vadd.f32 0.0, %v7783
        %v7785 = vpop.f32.mrb[0].mxu0
        %v7786 = vpop.f32.mrb[0].mxu0
        %v7787 = vadd.f32 0.0, %v7786
        %v7788 = vpop.f32.mrb[0].mxu0
        %7789 = vmatprep.mubr.bf16.mxu0 0
        %7790 = vmatmul.mubr.bf16.gmra.mrb[0].mxu0 %v7642
        %v7791 = vpop.f32.mrb[0].mxu0
        %v7792 = vadd.f32 0.0, %v7791
        %v7793 = vpop.f32.mrb[0].mxu0
        %v7794 = vpop.f32.mrb[0].mxu0
        %v7795 = vadd.f32 0.0, %v7794
        %v7796 = vpop.f32.mrb[0].mxu0
        %7797 = vmatprep.mubr.bf16.mxu0 0
        %7798 = vmatmul.mubr.bf16.gmra.mrb[0].mxu0 %v7645
        %v7799 = vpop.f32.mrb[0].mxu0
        %v7800 = vadd.f32 0.0, %v7799
        %v7801 = vpop.f32.mrb[0].mxu0
        %v7802 = vpop.f32.mrb[0].mxu0
        %v7803 = vadd.f32 0.0, %v7802
        %v7804 = vpop.f32.mrb[0].mxu0
        %7805 = vmatprep.mubr.bf16.mxu0 0
        %7806 = vmatmul.mubr.bf16.gmra.mrb[0].mxu0 %v7648
        %v7807 = vpop.f32.mrb[0].mxu0
        %v7808 = vadd.f32 0.0, %v7807
        %v7809 = vpop.f32.mrb[0].mxu0
        %v7810 = vpop.f32.mrb[0].mxu0
        %v7811 = vadd.f32 0.0, %v7810
        %v7812 = vpop.f32.mrb[0].mxu0
        %7813 = vdwg.mxu0
        %v7814 = vadd.f32 %v7455, %v7688
        %v7815 = vadd.f32 %v7456, %v7691
        %v7816 = vadd.f32 %v7457, %v7696
        %v7817 = vadd.f32 %v7458, %v7699
        %v7818 = vadd.f32 %v7459, %v7704
        %v7819 = vadd.f32 %v7460, %v7707
        %v7820 = vadd.f32 %v7461, %v7712
        %v7821 = vadd.f32 %v7462, %v7715
        %v7822 = vadd.f32 %v7463, %v7720
        %v7823 = vadd.f32 %v7464, %v7723
        %v7824 = vadd.f32 %v7465, %v7728
        %v7825 = vadd.f32 %v7466, %v7731
        %v7826 = vadd.f32 %v7467, %v7736
        %v7827 = vadd.f32 %v7468, %v7739
        %v7828 = vadd.f32 %v7469, %v7744
        %v7829 = vadd.f32 %v7470, %v7747
        %v7830 = vadd.f32 %v7471, %v7752
        %v7831 = vadd.f32 %v7472, %v7755
        %v7832 = vadd.f32 %v7473, %v7760
        %v7833 = vadd.f32 %v7474, %v7763
        %v7834 = vadd.f32 %v7475, %v7768
        %v7835 = vadd.f32 %v7476, %v7771
        %v7836 = vadd.f32 %v7477, %v7776
        %v7837 = vadd.f32 %v7478, %v7779
        %v7838 = vadd.f32 %v7479, %v7784
        %v7839 = vadd.f32 %v7480, %v7787
        %v7840 = vadd.f32 %v7481, %v7792
        %v7841 = vadd.f32 %v7482, %v7795
        %v7842 = vadd.f32 %v7483, %v7800
        %v7843 = vadd.f32 %v7484, %v7803
        %v7844 = vadd.f32 %v7485, %v7808
        %v7845 = vadd.f32 %v7486, %v7811
        %v7846 = vld [vmem:[%s7487] sm:$0xf]
        %v7847 = vld [vmem:[%s7487 + $0x4] sm:$0xf]
        %v7848 = vld [vmem:[%s7487 + $0x8] sm:$0x1]
        %v7849 = vld [vmem:[%s7487 + $0xc] sm:$0xf]
        %v7850 = vld [vmem:[%s7487 + $0x10] sm:$0xf]
        %v7851 = vld [vmem:[%s7487 + $0x14] sm:$0x1]
        %v7852 = vld [vmem:[%s7487 + $0x18] sm:$0xf]
        %v7853 = vld [vmem:[%s7487 + $0x1c] sm:$0xf]
        %v7854 = vld [vmem:[%s7487 + $0x20] sm:$0x1]
        %v7855 = vld [vmem:[%s7487 + $0x24] sm:$0xf]
        %v7856 = vld [vmem:[%s7487 + $0x28] sm:$0xf]
        %v7857 = vld [vmem:[%s7487 + $0x2c] sm:$0x1]
        %v7858 = vld [vmem:[%s7487 + $0x30] sm:$0xf]
        %v7859 = vld [vmem:[%s7487 + $0x34] sm:$0xf]
        %v7860 = vld [vmem:[%s7487 + $0x38] sm:$0x1]
        %v7861 = vld [vmem:[%s7487 + $0x3c] sm:$0xf]
        %v7862 = vld [vmem:[%s7487 + $0x40] sm:$0xf]
        %v7863 = vld [vmem:[%s7487 + $0x44] sm:$0x1]
        %v7864 = vld [vmem:[%s7487 + $0x48] sm:$0xf]
        %v7865 = vld [vmem:[%s7487 + $0x4c] sm:$0xf]
        %v7866 = vld [vmem:[%s7487 + $0x50] sm:$0x1]
        %v7867 = vld [vmem:[%s7487 + $0x54] sm:$0xf]
        %v7868 = vld [vmem:[%s7487 + $0x58] sm:$0xf]
        %v7869 = vld [vmem:[%s7487 + $0x5c] sm:$0x1]
        %v7870 = vld [vmem:[%s7487 + $0x60] sm:$0xf]
        %v7871 = vld [vmem:[%s7487 + $0x64] sm:$0xf]
        %v7872 = vld [vmem:[%s7487 + $0x68] sm:$0x1]
        %v7873 = vld [vmem:[%s7487 + $0x6c] sm:$0xf]
        %v7874 = vld [vmem:[%s7487 + $0x70] sm:$0xf]
        %v7875 = vld [vmem:[%s7487 + $0x74] sm:$0x1]
        %v7876 = vld [vmem:[%s7487 + $0x78] sm:$0xf]
        %v7877 = vld [vmem:[%s7487 + $0x7c] sm:$0xf]
        %v7878 = vld [vmem:[%s7487 + $0x80] sm:$0x1]
        %v7879 = vld [vmem:[%s7487 + $0x84] sm:$0xf]
        %v7880 = vld [vmem:[%s7487 + $0x88] sm:$0xf]
        %v7881 = vld [vmem:[%s7487 + $0x8c] sm:$0x1]
        %v7882 = vld [vmem:[%s7487 + $0x90] sm:$0xf]
        %v7883 = vld [vmem:[%s7487 + $0x94] sm:$0xf]
        %v7884 = vld [vmem:[%s7487 + $0x98] sm:$0x1]
        %v7885 = vld [vmem:[%s7487 + $0x9c] sm:$0xf]
        %v7886 = vld [vmem:[%s7487 + $0xa0] sm:$0xf]
        %v7887 = vld [vmem:[%s7487 + $0xa4] sm:$0x1]
        %v7888 = vld [vmem:[%s7487 + $0xa8] sm:$0xf]
        %v7889 = vld [vmem:[%s7487 + $0xac] sm:$0xf]
        %v7890 = vld [vmem:[%s7487 + $0xb0] sm:$0x1]
        %v7891 = vld [vmem:[%s7487 + $0xb4] sm:$0xf]
        %v7892 = vld [vmem:[%s7487 + $0xb8] sm:$0xf]
        %v7893 = vld [vmem:[%s7487 + $0xbc] sm:$0x1]
        %v7895 = vshrl.u32 %v7846, 16
        %v7897 = vrot.slane %v7895, 4
        %v7898 = vshll.u32 %v7846, 16
        %v7900 = vrot.slane %v7898, 5
        %v7901 = vor.u32 %v7897, %v7900
        %v7902 = vrot.slane %v7901, 4
        %v7904 = vshll.u32 %v7847, 16
        %v7906 = vrot.slane %v7904, 5
        %v7907 = vsel %vm256, %v7902, %v7906
        %v7908 = vshrl.u32 %v7847, 16
        %v7910 = vrot.slane %v7908, 4
        %v7911 = vor.u32 %v7910, %v7906
        %v7912 = vrot.slane %v7911, 4
        %v7914 = vshll.u32 %v7848, 16
        %v7916 = vrot.slane %v7914, 5
        %v7917 = vsel %vm256, %v7912, %v7916
        %v7919 = vshrl.u32 %v7849, 16
        %v7921 = vrot.slane %v7919, 4
        %v7922 = vshll.u32 %v7849, 16
        %v7924 = vrot.slane %v7922, 5
        %v7925 = vor.u32 %v7921, %v7924
        %v7926 = vrot.slane %v7925, 4
        %v7928 = vshll.u32 %v7850, 16
        %v7930 = vrot.slane %v7928, 5
        %v7931 = vsel %vm256, %v7926, %v7930
        %v7932 = vshrl.u32 %v7850, 16
        %v7934 = vrot.slane %v7932, 4
        %v7935 = vor.u32 %v7934, %v7930
        %v7936 = vrot.slane %v7935, 4
        %v7938 = vshll.u32 %v7851, 16
        %v7940 = vrot.slane %v7938, 5
        %v7941 = vsel %vm256, %v7936, %v7940
        %v7943 = vshrl.u32 %v7852, 16
        %v7945 = vrot.slane %v7943, 4
        %v7946 = vshll.u32 %v7852, 16
        %v7948 = vrot.slane %v7946, 5
        %v7949 = vor.u32 %v7945, %v7948
        %v7950 = vrot.slane %v7949, 4
        %v7952 = vshll.u32 %v7853, 16
        %v7954 = vrot.slane %v7952, 5
        %v7955 = vsel %vm256, %v7950, %v7954
        %v7956 = vshrl.u32 %v7853, 16
        %v7958 = vrot.slane %v7956, 4
        %v7959 = vor.u32 %v7958, %v7954
        %v7960 = vrot.slane %v7959, 4
        %v7962 = vshll.u32 %v7854, 16
        %v7964 = vrot.slane %v7962, 5
        %v7965 = vsel %vm256, %v7960, %v7964
        %v7967 = vshrl.u32 %v7855, 16
        %v7969 = vrot.slane %v7967, 4
        %v7970 = vshll.u32 %v7855, 16
        %v7972 = vrot.slane %v7970, 5
        %v7973 = vor.u32 %v7969, %v7972
        %v7974 = vrot.slane %v7973, 4
        %v7976 = vshll.u32 %v7856, 16
        %v7978 = vrot.slane %v7976, 5
        %v7979 = vsel %vm256, %v7974, %v7978
        %v7980 = vshrl.u32 %v7856, 16
        %v7982 = vrot.slane %v7980, 4
        %v7983 = vor.u32 %v7982, %v7978
        %v7984 = vrot.slane %v7983, 4
        %v7986 = vshll.u32 %v7857, 16
        %v7988 = vrot.slane %v7986, 5
        %v7989 = vsel %vm256, %v7984, %v7988
        %v7991 = vshrl.u32 %v7858, 16
        %v7993 = vrot.slane %v7991, 4
        %v7994 = vshll.u32 %v7858, 16
        %v7996 = vrot.slane %v7994, 5
        %v7997 = vor.u32 %v7993, %v7996
        %v7998 = vrot.slane %v7997, 4
        %v8000 = vshll.u32 %v7859, 16
        %v8002 = vrot.slane %v8000, 5
        %v8003 = vsel %vm256, %v7998, %v8002
        %v8004 = vshrl.u32 %v7859, 16
        %v8006 = vrot.slane %v8004, 4
        %v8007 = vor.u32 %v8006, %v8002
        %v8008 = vrot.slane %v8007, 4
        %v8010 = vshll.u32 %v7860, 16
        %v8012 = vrot.slane %v8010, 5
        %v8013 = vsel %vm256, %v8008, %v8012
        %v8015 = vshrl.u32 %v7861, 16
        %v8017 = vrot.slane %v8015, 4
        %v8018 = vshll.u32 %v7861, 16
        %v8020 = vrot.slane %v8018, 5
        %v8021 = vor.u32 %v8017, %v8020
        %v8022 = vrot.slane %v8021, 4
        %v8024 = vshll.u32 %v7862, 16
        %v8026 = vrot.slane %v8024, 5
        %v8027 = vsel %vm256, %v8022, %v8026
        %v8028 = vshrl.u32 %v7862, 16
        %v8030 = vrot.slane %v8028, 4
        %v8031 = vor.u32 %v8030, %v8026
        %v8032 = vrot.slane %v8031, 4
        %v8034 = vshll.u32 %v7863, 16
        %v8036 = vrot.slane %v8034, 5
        %v8037 = vsel %vm256, %v8032, %v8036
        %v8039 = vshrl.u32 %v7864, 16
        %v8041 = vrot.slane %v8039, 4
        %v8042 = vshll.u32 %v7864, 16
        %v8044 = vrot.slane %v8042, 5
        %v8045 = vor.u32 %v8041, %v8044
        %v8046 = vrot.slane %v8045, 4
        %v8048 = vshll.u32 %v7865, 16
        %v8050 = vrot.slane %v8048, 5
        %v8051 = vsel %vm256, %v8046, %v8050
        %v8052 = vshrl.u32 %v7865, 16
        %v8054 = vrot.slane %v8052, 4
        %v8055 = vor.u32 %v8054, %v8050
        %v8056 = vrot.slane %v8055, 4
        %v8058 = vshll.u32 %v7866, 16
        %v8060 = vrot.slane %v8058, 5
        %v8061 = vsel %vm256, %v8056, %v8060
        %v8063 = vshrl.u32 %v7867, 16
        %v8065 = vrot.slane %v8063, 4
        %v8066 = vshll.u32 %v7867, 16
        %v8068 = vrot.slane %v8066, 5
        %v8069 = vor.u32 %v8065, %v8068
        %v8070 = vrot.slane %v8069, 4
        %v8072 = vshll.u32 %v7868, 16
        %v8074 = vrot.slane %v8072, 5
        %v8075 = vsel %vm256, %v8070, %v8074
        %v8076 = vshrl.u32 %v7868, 16
        %v8078 = vrot.slane %v8076, 4
        %v8079 = vor.u32 %v8078, %v8074
        %v8080 = vrot.slane %v8079, 4
        %v8082 = vshll.u32 %v7869, 16
        %v8084 = vrot.slane %v8082, 5
        %v8085 = vsel %vm256, %v8080, %v8084
        %v8087 = vshrl.u32 %v7870, 16
        %v8089 = vrot.slane %v8087, 4
        %v8090 = vshll.u32 %v7870, 16
        %v8092 = vrot.slane %v8090, 5
        %v8093 = vor.u32 %v8089, %v8092
        %v8094 = vrot.slane %v8093, 4
        %v8096 = vshll.u32 %v7871, 16
        %v8098 = vrot.slane %v8096, 5
        %v8099 = vsel %vm256, %v8094, %v8098
        %v8100 = vshrl.u32 %v7871, 16
        %v8102 = vrot.slane %v8100, 4
        %v8103 = vor.u32 %v8102, %v8098
        %v8104 = vrot.slane %v8103, 4
        %v8106 = vshll.u32 %v7872, 16
        %v8108 = vrot.slane %v8106, 5
        %v8109 = vsel %vm256, %v8104, %v8108
        %v8111 = vshrl.u32 %v7873, 16
        %v8113 = vrot.slane %v8111, 4
        %v8114 = vshll.u32 %v7873, 16
        %v8116 = vrot.slane %v8114, 5
        %v8117 = vor.u32 %v8113, %v8116
        %v8118 = vrot.slane %v8117, 4
        %v8120 = vshll.u32 %v7874, 16
        %v8122 = vrot.slane %v8120, 5
        %v8123 = vsel %vm256, %v8118, %v8122
        %v8124 = vshrl.u32 %v7874, 16
        %v8126 = vrot.slane %v8124, 4
        %v8127 = vor.u32 %v8126, %v8122
        %v8128 = vrot.slane %v8127, 4
        %v8130 = vshll.u32 %v7875, 16
        %v8132 = vrot.slane %v8130, 5
        %v8133 = vsel %vm256, %v8128, %v8132
        %v8135 = vshrl.u32 %v7876, 16
        %v8137 = vrot.slane %v8135, 4
        %v8138 = vshll.u32 %v7876, 16
        %v8140 = vrot.slane %v8138, 5
        %v8141 = vor.u32 %v8137, %v8140
        %v8142 = vrot.slane %v8141, 4
        %v8144 = vshll.u32 %v7877, 16
        %v8146 = vrot.slane %v8144, 5
        %v8147 = vsel %vm256, %v8142, %v8146
        %v8148 = vshrl.u32 %v7877, 16
        %v8150 = vrot.slane %v8148, 4
        %v8151 = vor.u32 %v8150, %v8146
        %v8152 = vrot.slane %v8151, 4
        %v8154 = vshll.u32 %v7878, 16
        %v8156 = vrot.slane %v8154, 5
        %v8157 = vsel %vm256, %v8152, %v8156
        %v8159 = vshrl.u32 %v7879, 16
        %v8161 = vrot.slane %v8159, 4
        %v8162 = vshll.u32 %v7879, 16
        %v8164 = vrot.slane %v8162, 5
        %v8165 = vor.u32 %v8161, %v8164
        %v8166 = vrot.slane %v8165, 4
        %v8168 = vshll.u32 %v7880, 16
        %v8170 = vrot.slane %v8168, 5
        %v8171 = vsel %vm256, %v8166, %v8170
        %v8172 = vshrl.u32 %v7880, 16
        %v8174 = vrot.slane %v8172, 4
        %v8175 = vor.u32 %v8174, %v8170
        %v8176 = vrot.slane %v8175, 4
        %v8178 = vshll.u32 %v7881, 16
        %v8180 = vrot.slane %v8178, 5
        %v8181 = vsel %vm256, %v8176, %v8180
        %v8183 = vshrl.u32 %v7882, 16
        %v8185 = vrot.slane %v8183, 4
        %v8186 = vshll.u32 %v7882, 16
        %v8188 = vrot.slane %v8186, 5
        %v8189 = vor.u32 %v8185, %v8188
        %v8190 = vrot.slane %v8189, 4
        %v8192 = vshll.u32 %v7883, 16
        %v8194 = vrot.slane %v8192, 5
        %v8195 = vsel %vm256, %v8190, %v8194
        %v8196 = vshrl.u32 %v7883, 16
        %v8198 = vrot.slane %v8196, 4
        %v8199 = vor.u32 %v8198, %v8194
        %v8200 = vrot.slane %v8199, 4
        %v8202 = vshll.u32 %v7884, 16
        %v8204 = vrot.slane %v8202, 5
        %v8205 = vsel %vm256, %v8200, %v8204
        %v8207 = vshrl.u32 %v7885, 16
        %v8209 = vrot.slane %v8207, 4
        %v8210 = vshll.u32 %v7885, 16
        %v8212 = vrot.slane %v8210, 5
        %v8213 = vor.u32 %v8209, %v8212
        %v8214 = vrot.slane %v8213, 4
        %v8216 = vshll.u32 %v7886, 16
        %v8218 = vrot.slane %v8216, 5
        %v8219 = vsel %vm256, %v8214, %v8218
        %v8220 = vshrl.u32 %v7886, 16
        %v8222 = vrot.slane %v8220, 4
        %v8223 = vor.u32 %v8222, %v8218
        %v8224 = vrot.slane %v8223, 4
        %v8226 = vshll.u32 %v7887, 16
        %v8228 = vrot.slane %v8226, 5
        %v8229 = vsel %vm256, %v8224, %v8228
        %v8231 = vshrl.u32 %v7888, 16
        %v8233 = vrot.slane %v8231, 4
        %v8234 = vshll.u32 %v7888, 16
        %v8236 = vrot.slane %v8234, 5
        %v8237 = vor.u32 %v8233, %v8236
        %v8238 = vrot.slane %v8237, 4
        %v8240 = vshll.u32 %v7889, 16
        %v8242 = vrot.slane %v8240, 5
        %v8243 = vsel %vm256, %v8238, %v8242
        %v8244 = vshrl.u32 %v7889, 16
        %v8246 = vrot.slane %v8244, 4
        %v8247 = vor.u32 %v8246, %v8242
        %v8248 = vrot.slane %v8247, 4
        %v8250 = vshll.u32 %v7890, 16
        %v8252 = vrot.slane %v8250, 5
        %v8253 = vsel %vm256, %v8248, %v8252
        %v8255 = vshrl.u32 %v7891, 16
        %v8257 = vrot.slane %v8255, 4
        %v8258 = vshll.u32 %v7891, 16
        %v8260 = vrot.slane %v8258, 5
        %v8261 = vor.u32 %v8257, %v8260
        %v8262 = vrot.slane %v8261, 4
        %v8264 = vshll.u32 %v7892, 16
        %v8266 = vrot.slane %v8264, 5
        %v8267 = vsel %vm256, %v8262, %v8266
        %v8268 = vshrl.u32 %v7892, 16
        %v8270 = vrot.slane %v8268, 4
        %v8271 = vor.u32 %v8270, %v8266
        %v8272 = vrot.slane %v8271, 4
        %v8274 = vshll.u32 %v7893, 16
        %v8276 = vrot.slane %v8274, 5
        %v8277 = vsel %vm256, %v8272, %v8276
        %s8278 = scalar_lea.vmem %s2, 16
        %v8279 = vld [vmem:[%s8278] sm:$0xf]
        %v8280 = vunpack.c.l.b16 %v7907
        %v8281 = vunpack.c.l.b16 %v7917
        %v8282 = vunpack.c.l.b16 %v7931
        %v8283 = vunpack.c.l.b16 %v7941
        %v8284 = vunpack.c.l.b16 %v7955
        %v8285 = vunpack.c.l.b16 %v7965
        %v8286 = vunpack.c.l.b16 %v7979
        %v8287 = vunpack.c.l.b16 %v7989
        %v8288 = vunpack.c.l.b16 %v8003
        %v8289 = vunpack.c.l.b16 %v8013
        %v8290 = vunpack.c.l.b16 %v8027
        %v8291 = vunpack.c.l.b16 %v8037
        %v8292 = vunpack.c.l.b16 %v8051
        %v8293 = vunpack.c.l.b16 %v8061
        %v8294 = vunpack.c.l.b16 %v8075
        %v8295 = vunpack.c.l.b16 %v8085
        %v8296 = vunpack.c.l.b16 %v8099
        %v8297 = vunpack.c.l.b16 %v8109
        %v8298 = vunpack.c.l.b16 %v8123
        %v8299 = vunpack.c.l.b16 %v8133
        %v8300 = vunpack.c.l.b16 %v8147
        %v8301 = vunpack.c.l.b16 %v8157
        %v8302 = vunpack.c.l.b16 %v8171
        %v8303 = vunpack.c.l.b16 %v8181
        %v8304 = vunpack.c.l.b16 %v8195
        %v8305 = vunpack.c.l.b16 %v8205
        %v8306 = vunpack.c.l.b16 %v8219
        %v8307 = vunpack.c.l.b16 %v8229
        %v8308 = vunpack.c.l.b16 %v8243
        %v8309 = vunpack.c.l.b16 %v8253
        %v8310 = vunpack.c.l.b16 %v8267
        %v8311 = vunpack.c.l.b16 %v8277
        %v8312 = vpack.c.b16 %v8281, %v8280
        %v8313 = vpack.c.b16 %v8283, %v8282
        %v8314 = vpack.c.b16 %v8285, %v8284
        %v8315 = vpack.c.b16 %v8287, %v8286
        %v8316 = vpack.c.b16 %v8289, %v8288
        %v8317 = vpack.c.b16 %v8291, %v8290
        %v8318 = vpack.c.b16 %v8293, %v8292
        %v8319 = vpack.c.b16 %v8295, %v8294
        %v8320 = vpack.c.b16 %v8297, %v8296
        %v8321 = vpack.c.b16 %v8299, %v8298
        %v8322 = vpack.c.b16 %v8301, %v8300
        %v8323 = vpack.c.b16 %v8303, %v8302
        %v8324 = vpack.c.b16 %v8305, %v8304
        %v8325 = vpack.c.b16 %v8307, %v8306
        %v8326 = vpack.c.b16 %v8309, %v8308
        %v8327 = vpack.c.b16 %v8311, %v8310
        %v8329 = vsel %vm6527, %v8312, 0
        %v8332 = vsel %vm6527, %v8313, 0
        %v8335 = vsel %vm6527, %v8314, 0
        %v8338 = vsel %vm6527, %v8315, 0
        %v8341 = vsel %vm6527, %v8316, 0
        %v8344 = vsel %vm6527, %v8317, 0
        %v8347 = vsel %vm6527, %v8318, 0
        %v8350 = vsel %vm6527, %v8319, 0
        %v8353 = vsel %vm6527, %v8320, 0
        %v8356 = vsel %vm6527, %v8321, 0
        %v8359 = vsel %vm6527, %v8322, 0
        %v8362 = vsel %vm6527, %v8323, 0
        %v8365 = vsel %vm6527, %v8324, 0
        %v8368 = vsel %vm6527, %v8325, 0
        %v8371 = vsel %vm6527, %v8326, 0
        %v8374 = vsel %vm6527, %v8327, 0
        %v8377 = vsel %vm6576, %v8279, 0
        %8379 = vmatprep.subr.bf16.mxu0 0
        %8380 = vmatpush1.bf16.msra.mxu0 %v8377
        %8381 = vmatprep.subr.bf16.mxu0 0
        %8382 = vmatpush1.bf16.msra.mxu0 0
        %8383 = vmatprep.subr.bf16.mxu0 0
        %8384 = vmatpush1.bf16.msra.mxu0 0
        %8385 = vmatprep.subr.bf16.mxu0 0
        %8386 = vmatpush1.bf16.msra.mxu0 0
        %8387 = vmatprep.subr.bf16.mxu0 0
        %8388 = vmatpush1.bf16.msra.mxu0 0
        %8389 = vmatprep.subr.bf16.mxu0 0
        %8390 = vmatpush1.bf16.msra.mxu0 0
        %8391 = vmatprep.subr.bf16.mxu0 0
        %8392 = vmatpush1.bf16.msra.mxu0 0
        %8393 = vmatprep.subr.bf16.mxu0 0
        %8394 = vmatpush1.bf16.msra.mxu0 0
        %8395 = vmatprep.subr.bf16.mxu0 0
        %8396 = vmatpush1.bf16.msra.mxu0 0
        %8397 = vmatprep.subr.bf16.mxu0 0
        %8398 = vmatpush1.bf16.msra.mxu0 0
        %8399 = vmatprep.subr.bf16.mxu0 0
        %8400 = vmatpush1.bf16.msra.mxu0 0
        %8401 = vmatprep.subr.bf16.mxu0 0
        %8402 = vmatpush1.bf16.msra.mxu0 0
        %8403 = vmatprep.subr.bf16.mxu0 0
        %8404 = vmatpush1.bf16.msra.mxu0 0
        %8405 = vmatprep.subr.bf16.mxu0 0
        %8406 = vmatpush1.bf16.msra.mxu0 0
        %8407 = vmatprep.subr.bf16.mxu0 0
        %8408 = vmatpush1.bf16.msra.mxu0 0
        %8409 = vmatprep.subr.bf16.mxu0 0
        %8410 = vmatpush1.bf16.msra.mxu0 0
        %8411 = vmatprep.mubr.bf16.mxu0 0
        %8412 = vmatmul.mubr.bf16.gmra.mrb[0].mxu0 %v8329
        %v8413 = vpop.f32.mrb[0].mxu0
        %v8414 = vadd.f32 0.0, %v8413
        %v8415 = vpop.f32.mrb[0].mxu0
        %v8416 = vpop.f32.mrb[0].mxu0
        %v8417 = vadd.f32 0.0, %v8416
        %v8418 = vpop.f32.mrb[0].mxu0
        %8419 = vmatprep.mubr.bf16.mxu0 0
        %8420 = vmatmul.mubr.bf16.gmra.mrb[0].mxu0 %v8332
        %v8421 = vpop.f32.mrb[0].mxu0
        %v8422 = vadd.f32 0.0, %v8421
        %v8423 = vpop.f32.mrb[0].mxu0
        %v8424 = vpop.f32.mrb[0].mxu0
        %v8425 = vadd.f32 0.0, %v8424
        %v8426 = vpop.f32.mrb[0].mxu0
        %8427 = vmatprep.mubr.bf16.mxu0 0
        %8428 = vmatmul.mubr.bf16.gmra.mrb[0].mxu0 %v8335
        %v8429 = vpop.f32.mrb[0].mxu0
        %v8430 = vadd.f32 0.0, %v8429
        %v8431 = vpop.f32.mrb[0].mxu0
        %v8432 = vpop.f32.mrb[0].mxu0
        %v8433 = vadd.f32 0.0, %v8432
        %v8434 = vpop.f32.mrb[0].mxu0
        %8435 = vmatprep.mubr.bf16.mxu0 0
        %8436 = vmatmul.mubr.bf16.gmra.mrb[0].mxu0 %v8338
        %v8437 = vpop.f32.mrb[0].mxu0
        %v8438 = vadd.f32 0.0, %v8437
        %v8439 = vpop.f32.mrb[0].mxu0
        %v8440 = vpop.f32.mrb[0].mxu0
        %v8441 = vadd.f32 0.0, %v8440
        %v8442 = vpop.f32.mrb[0].mxu0
        %8443 = vmatprep.mubr.bf16.mxu0 0
        %8444 = vmatmul.mubr.bf16.gmra.mrb[0].mxu0 %v8341
        %v8445 = vpop.f32.mrb[0].mxu0
        %v8446 = vadd.f32 0.0, %v8445
        %v8447 = vpop.f32.mrb[0].mxu0
        %v8448 = vpop.f32.mrb[0].mxu0
        %v8449 = vadd.f32 0.0, %v8448
        %v8450 = vpop.f32.mrb[0].mxu0
        %8451 = vmatprep.mubr.bf16.mxu0 0
        %8452 = vmatmul.mubr.bf16.gmra.mrb[0].mxu0 %v8344
        %v8453 = vpop.f32.mrb[0].mxu0
        %v8454 = vadd.f32 0.0, %v8453
        %v8455 = vpop.f32.mrb[0].mxu0
        %v8456 = vpop.f32.mrb[0].mxu0
        %v8457 = vadd.f32 0.0, %v8456
        %v8458 = vpop.f32.mrb[0].mxu0
        %8459 = vmatprep.mubr.bf16.mxu0 0
        %8460 = vmatmul.mubr.bf16.gmra.mrb[0].mxu0 %v8347
        %v8461 = vpop.f32.mrb[0].mxu0
        %v8462 = vadd.f32 0.0, %v8461
        %v8463 = vpop.f32.mrb[0].mxu0
        %v8464 = vpop.f32.mrb[0].mxu0
        %v8465 = vadd.f32 0.0, %v8464
        %v8466 = vpop.f32.mrb[0].mxu0
        %8467 = vmatprep.mubr.bf16.mxu0 0
        %8468 = vmatmul.mubr.bf16.gmra.mrb[0].mxu0 %v8350
        %v8469 = vpop.f32.mrb[0].mxu0
        %v8470 = vadd.f32 0.0, %v8469
        %v8471 = vpop.f32.mrb[0].mxu0
        %v8472 = vpop.f32.mrb[0].mxu0
        %v8473 = vadd.f32 0.0, %v8472
        %v8474 = vpop.f32.mrb[0].mxu0
        %8475 = vmatprep.mubr.bf16.mxu0 0
        %8476 = vmatmul.mubr.bf16.gmra.mrb[0].mxu0 %v8353
        %v8477 = vpop.f32.mrb[0].mxu0
        %v8478 = vadd.f32 0.0, %v8477
        %v8479 = vpop.f32.mrb[0].mxu0
        %v8480 = vpop.f32.mrb[0].mxu0
        %v8481 = vadd.f32 0.0, %v8480
        %v8482 = vpop.f32.mrb[0].mxu0
        %8483 = vmatprep.mubr.bf16.mxu0 0
        %8484 = vmatmul.mubr.bf16.gmra.mrb[0].mxu0 %v8356
        %v8485 = vpop.f32.mrb[0].mxu0
        %v8486 = vadd.f32 0.0, %v8485
        %v8487 = vpop.f32.mrb[0].mxu0
        %v8488 = vpop.f32.mrb[0].mxu0
        %v8489 = vadd.f32 0.0, %v8488
        %v8490 = vpop.f32.mrb[0].mxu0
        %8491 = vmatprep.mubr.bf16.mxu0 0
        %8492 = vmatmul.mubr.bf16.gmra.mrb[0].mxu0 %v8359
        %v8493 = vpop.f32.mrb[0].mxu0
        %v8494 = vadd.f32 0.0, %v8493
        %v8495 = vpop.f32.mrb[0].mxu0
        %v8496 = vpop.f32.mrb[0].mxu0
        %v8497 = vadd.f32 0.0, %v8496
        %v8498 = vpop.f32.mrb[0].mxu0
        %8499 = vmatprep.mubr.bf16.mxu0 0
        %8500 = vmatmul.mubr.bf16.gmra.mrb[0].mxu0 %v8362
        %v8501 = vpop.f32.mrb[0].mxu0
        %v8502 = vadd.f32 0.0, %v8501
        %v8503 = vpop.f32.mrb[0].mxu0
        %v8504 = vpop.f32.mrb[0].mxu0
        %v8505 = vadd.f32 0.0, %v8504
        %v8506 = vpop.f32.mrb[0].mxu0
        %8507 = vmatprep.mubr.bf16.mxu0 0
        %8508 = vmatmul.mubr.bf16.gmra.mrb[0].mxu0 %v8365
        %v8509 = vpop.f32.mrb[0].mxu0
        %v8510 = vadd.f32 0.0, %v8509
        %v8511 = vpop.f32.mrb[0].mxu0
        %v8512 = vpop.f32.mrb[0].mxu0
        %v8513 = vadd.f32 0.0, %v8512
        %v8514 = vpop.f32.mrb[0].mxu0
        %8515 = vmatprep.mubr.bf16.mxu0 0
        %8516 = vmatmul.mubr.bf16.gmra.mrb[0].mxu0 %v8368
        %v8517 = vpop.f32.mrb[0].mxu0
        %v8518 = vadd.f32 0.0, %v8517
        %v8519 = vpop.f32.mrb[0].mxu0
        %v8520 = vpop.f32.mrb[0].mxu0
        %v8521 = vadd.f32 0.0, %v8520
        %v8522 = vpop.f32.mrb[0].mxu0
        %8523 = vmatprep.mubr.bf16.mxu0 0
        %8524 = vmatmul.mubr.bf16.gmra.mrb[0].mxu0 %v8371
        %v8525 = vpop.f32.mrb[0].mxu0
        %v8526 = vadd.f32 0.0, %v8525
        %v8527 = vpop.f32.mrb[0].mxu0
        %v8528 = vpop.f32.mrb[0].mxu0
        %v8529 = vadd.f32 0.0, %v8528
        %v8530 = vpop.f32.mrb[0].mxu0
        %8531 = vmatprep.mubr.bf16.mxu0 0
        %8532 = vmatmul.mubr.bf16.gmra.mrb[0].mxu0 %v8374
        %v8533 = vpop.f32.mrb[0].mxu0
        %v8534 = vadd.f32 0.0, %v8533
        %v8535 = vpop.f32.mrb[0].mxu0
        %v8536 = vpop.f32.mrb[0].mxu0
        %v8537 = vadd.f32 0.0, %v8536
        %v8538 = vpop.f32.mrb[0].mxu0
        %8539 = vdwg.mxu0
        %v8540 = vadd.f32 %v7814, %v8414
        %v8541 = vadd.f32 %v7815, %v8417
        %v8542 = vadd.f32 %v7816, %v8422
        %v8543 = vadd.f32 %v7817, %v8425
        %v8544 = vadd.f32 %v7818, %v8430
        %v8545 = vadd.f32 %v7819, %v8433
        %v8546 = vadd.f32 %v7820, %v8438
        %v8547 = vadd.f32 %v7821, %v8441
        %v8548 = vadd.f32 %v7822, %v8446
        %v8549 = vadd.f32 %v7823, %v8449
        %v8550 = vadd.f32 %v7824, %v8454
        %v8551 = vadd.f32 %v7825, %v8457
        %v8552 = vadd.f32 %v7826, %v8462
        %v8553 = vadd.f32 %v7827, %v8465
        %v8554 = vadd.f32 %v7828, %v8470
        %v8555 = vadd.f32 %v7829, %v8473
        %v8556 = vadd.f32 %v7830, %v8478
        %v8557 = vadd.f32 %v7831, %v8481
        %v8558 = vadd.f32 %v7832, %v8486
        %v8559 = vadd.f32 %v7833, %v8489
        %v8560 = vadd.f32 %v7834, %v8494
        %v8561 = vadd.f32 %v7835, %v8497
        %v8562 = vadd.f32 %v7836, %v8502
        %v8563 = vadd.f32 %v7837, %v8505
        %v8564 = vadd.f32 %v7838, %v8510
        %v8565 = vadd.f32 %v7839, %v8513
        %v8566 = vadd.f32 %v7840, %v8518
        %v8567 = vadd.f32 %v7841, %v8521
        %v8568 = vadd.f32 %v7842, %v8526
        %v8569 = vadd.f32 %v7843, %v8529
        %v8570 = vadd.f32 %v7844, %v8534
        %v8571 = vadd.f32 %v7845, %v8537
        %v8572 = vld [vmem:[%s7487] sm:$0xe]
        %v8573 = vld [vmem:[%s7487 + $0xc] sm:$0xe]
        %v8574 = vld [vmem:[%s7487 + $0x18] sm:$0xe]
        %v8575 = vld [vmem:[%s7487 + $0x24] sm:$0xe]
        %v8576 = vld [vmem:[%s7487 + $0x30] sm:$0xe]
        %v8577 = vld [vmem:[%s7487 + $0x3c] sm:$0xe]
        %v8578 = vld [vmem:[%s7487 + $0x48] sm:$0xe]
        %v8579 = vld [vmem:[%s7487 + $0x54] sm:$0xe]
        %v8580 = vld [vmem:[%s7487 + $0x60] sm:$0xe]
        %v8581 = vld [vmem:[%s7487 + $0x6c] sm:$0xe]
        %v8582 = vld [vmem:[%s7487 + $0x78] sm:$0xe]
        %v8583 = vld [vmem:[%s7487 + $0x84] sm:$0xe]
        %v8584 = vld [vmem:[%s7487 + $0x90] sm:$0xe]
        %v8585 = vld [vmem:[%s7487 + $0x9c] sm:$0xe]
        %v8586 = vld [vmem:[%s7487 + $0xa8] sm:$0xe]
        %v8587 = vld [vmem:[%s7487 + $0xb4] sm:$0xe]
        %v8636 = vrot.slane %v8572, 5
        %v8637 = vrot.slane %v8636, 4
        %v8638 = vrot.slane %v7847, 5
        %v8639 = vsel %vm1361, %v8637, %v8638
        %v8640 = vrot.slane %v8638, 4
        %v8641 = vrot.slane %v7848, 5
        %v8642 = vsel %vm1361, %v8640, %v8641
        %v8643 = vrot.slane %v8573, 5
        %v8644 = vrot.slane %v8643, 4
        %v8645 = vrot.slane %v7850, 5
        %v8646 = vsel %vm1361, %v8644, %v8645
        %v8647 = vrot.slane %v8645, 4
        %v8648 = vrot.slane %v7851, 5
        %v8649 = vsel %vm1361, %v8647, %v8648
        %v8650 = vrot.slane %v8574, 5
        %v8651 = vrot.slane %v8650, 4
        %v8652 = vrot.slane %v7853, 5
        %v8653 = vsel %vm1361, %v8651, %v8652
        %v8654 = vrot.slane %v8652, 4
        %v8655 = vrot.slane %v7854, 5
        %v8656 = vsel %vm1361, %v8654, %v8655
        %v8657 = vrot.slane %v8575, 5
        %v8658 = vrot.slane %v8657, 4
        %v8659 = vrot.slane %v7856, 5
        %v8660 = vsel %vm1361, %v8658, %v8659
        %v8661 = vrot.slane %v8659, 4
        %v8662 = vrot.slane %v7857, 5
        %v8663 = vsel %vm1361, %v8661, %v8662
        %v8664 = vrot.slane %v8576, 5
        %v8665 = vrot.slane %v8664, 4
        %v8666 = vrot.slane %v7859, 5
        %v8667 = vsel %vm1361, %v8665, %v8666
        %v8668 = vrot.slane %v8666, 4
        %v8669 = vrot.slane %v7860, 5
        %v8670 = vsel %vm1361, %v8668, %v8669
        %v8671 = vrot.slane %v8577, 5
        %v8672 = vrot.slane %v8671, 4
        %v8673 = vrot.slane %v7862, 5
        %v8674 = vsel %vm1361, %v8672, %v8673
        %v8675 = vrot.slane %v8673, 4
        %v8676 = vrot.slane %v7863, 5
        %v8677 = vsel %vm1361, %v8675, %v8676
        %v8678 = vrot.slane %v8578, 5
        %v8679 = vrot.slane %v8678, 4
        %v8680 = vrot.slane %v7865, 5
        %v8681 = vsel %vm1361, %v8679, %v8680
        %v8682 = vrot.slane %v8680, 4
        %v8683 = vrot.slane %v7866, 5
        %v8684 = vsel %vm1361, %v8682, %v8683
        %v8685 = vrot.slane %v8579, 5
        %v8686 = vrot.slane %v8685, 4
        %v8687 = vrot.slane %v7868, 5
        %v8688 = vsel %vm1361, %v8686, %v8687
        %v8689 = vrot.slane %v8687, 4
        %v8690 = vrot.slane %v7869, 5
        %v8691 = vsel %vm1361, %v8689, %v8690
        %v8692 = vrot.slane %v8580, 5
        %v8693 = vrot.slane %v8692, 4
        %v8694 = vrot.slane %v7871, 5
        %v8695 = vsel %vm1361, %v8693, %v8694
        %v8696 = vrot.slane %v8694, 4
        %v8697 = vrot.slane %v7872, 5
        %v8698 = vsel %vm1361, %v8696, %v8697
        %v8699 = vrot.slane %v8581, 5
        %v8700 = vrot.slane %v8699, 4
        %v8701 = vrot.slane %v7874, 5
        %v8702 = vsel %vm1361, %v8700, %v8701
        %v8703 = vrot.slane %v8701, 4
        %v8704 = vrot.slane %v7875, 5
        %v8705 = vsel %vm1361, %v8703, %v8704
        %v8706 = vrot.slane %v8582, 5
        %v8707 = vrot.slane %v8706, 4
        %v8708 = vrot.slane %v7877, 5
        %v8709 = vsel %vm1361, %v8707, %v8708
        %v8710 = vrot.slane %v8708, 4
        %v8711 = vrot.slane %v7878, 5
        %v8712 = vsel %vm1361, %v8710, %v8711
        %v8713 = vrot.slane %v8583, 5
        %v8714 = vrot.slane %v8713, 4
        %v8715 = vrot.slane %v7880, 5
        %v8716 = vsel %vm1361, %v8714, %v8715
        %v8717 = vrot.slane %v8715, 4
        %v8718 = vrot.slane %v7881, 5
        %v8719 = vsel %vm1361, %v8717, %v8718
        %v8720 = vrot.slane %v8584, 5
        %v8721 = vrot.slane %v8720, 4
        %v8722 = vrot.slane %v7883, 5
        %v8723 = vsel %vm1361, %v8721, %v8722
        %v8724 = vrot.slane %v8722, 4
        %v8725 = vrot.slane %v7884, 5
        %v8726 = vsel %vm1361, %v8724, %v8725
        %v8727 = vrot.slane %v8585, 5
        %v8728 = vrot.slane %v8727, 4
        %v8729 = vrot.slane %v7886, 5
        %v8730 = vsel %vm1361, %v8728, %v8729
        %v8731 = vrot.slane %v8729, 4
        %v8732 = vrot.slane %v7887, 5
        %v8733 = vsel %vm1361, %v8731, %v8732
        %v8734 = vrot.slane %v8586, 5
        %v8735 = vrot.slane %v8734, 4
        %v8736 = vrot.slane %v7889, 5
        %v8737 = vsel %vm1361, %v8735, %v8736
        %v8738 = vrot.slane %v8736, 4
        %v8739 = vrot.slane %v7890, 5
        %v8740 = vsel %vm1361, %v8738, %v8739
        %v8741 = vrot.slane %v8587, 5
        %v8742 = vrot.slane %v8741, 4
        %v8743 = vrot.slane %v7892, 5
        %v8744 = vsel %vm1361, %v8742, %v8743
        %v8745 = vrot.slane %v8743, 4
        %v8746 = vrot.slane %v7893, 5
        %v8747 = vsel %vm1361, %v8745, %v8746
        %s8748 = scalar_lea.vmem %s2, 20
        %v8749 = vld [vmem:[%s8748] sm:$0xf]
        %v8750 = vunpack.c.l.b16 %v8639
        %v8751 = vunpack.c.l.b16 %v8642
        %v8752 = vunpack.c.l.b16 %v8646
        %v8753 = vunpack.c.l.b16 %v8649
        %v8754 = vunpack.c.l.b16 %v8653
        %v8755 = vunpack.c.l.b16 %v8656
        %v8756 = vunpack.c.l.b16 %v8660
        %v8757 = vunpack.c.l.b16 %v8663
        %v8758 = vunpack.c.l.b16 %v8667
        %v8759 = vunpack.c.l.b16 %v8670
        %v8760 = vunpack.c.l.b16 %v8674
        %v8761 = vunpack.c.l.b16 %v8677
        %v8762 = vunpack.c.l.b16 %v8681
        %v8763 = vunpack.c.l.b16 %v8684
        %v8764 = vunpack.c.l.b16 %v8688
        %v8765 = vunpack.c.l.b16 %v8691
        %v8766 = vunpack.c.l.b16 %v8695
        %v8767 = vunpack.c.l.b16 %v8698
        %v8768 = vunpack.c.l.b16 %v8702
        %v8769 = vunpack.c.l.b16 %v8705
        %v8770 = vunpack.c.l.b16 %v8709
        %v8771 = vunpack.c.l.b16 %v8712
        %v8772 = vunpack.c.l.b16 %v8716
        %v8773 = vunpack.c.l.b16 %v8719
        %v8774 = vunpack.c.l.b16 %v8723
        %v8775 = vunpack.c.l.b16 %v8726
        %v8776 = vunpack.c.l.b16 %v8730
        %v8777 = vunpack.c.l.b16 %v8733
        %v8778 = vunpack.c.l.b16 %v8737
        %v8779 = vunpack.c.l.b16 %v8740
        %v8780 = vunpack.c.l.b16 %v8744
        %v8781 = vunpack.c.l.b16 %v8747
        %v8782 = vpack.c.b16 %v8751, %v8750
        %v8783 = vpack.c.b16 %v8753, %v8752
        %v8784 = vpack.c.b16 %v8755, %v8754
        %v8785 = vpack.c.b16 %v8757, %v8756
        %v8786 = vpack.c.b16 %v8759, %v8758
        %v8787 = vpack.c.b16 %v8761, %v8760
        %v8788 = vpack.c.b16 %v8763, %v8762
        %v8789 = vpack.c.b16 %v8765, %v8764
        %v8790 = vpack.c.b16 %v8767, %v8766
        %v8791 = vpack.c.b16 %v8769, %v8768
        %v8792 = vpack.c.b16 %v8771, %v8770
        %v8793 = vpack.c.b16 %v8773, %v8772
        %v8794 = vpack.c.b16 %v8775, %v8774
        %v8795 = vpack.c.b16 %v8777, %v8776
        %v8796 = vpack.c.b16 %v8779, %v8778
        %v8797 = vpack.c.b16 %v8781, %v8780
        %v8799 = vsel %vm6527, %v8782, 0
        %v8802 = vsel %vm6527, %v8783, 0
        %v8805 = vsel %vm6527, %v8784, 0
        %v8808 = vsel %vm6527, %v8785, 0
        %v8811 = vsel %vm6527, %v8786, 0
        %v8814 = vsel %vm6527, %v8787, 0
        %v8817 = vsel %vm6527, %v8788, 0
        %v8820 = vsel %vm6527, %v8789, 0
        %v8823 = vsel %vm6527, %v8790, 0
        %v8826 = vsel %vm6527, %v8791, 0
        %v8829 = vsel %vm6527, %v8792, 0
        %v8832 = vsel %vm6527, %v8793, 0
        %v8835 = vsel %vm6527, %v8794, 0
        %v8838 = vsel %vm6527, %v8795, 0
        %v8841 = vsel %vm6527, %v8796, 0
        %v8844 = vsel %vm6527, %v8797, 0
        %v8847 = vsel %vm6576, %v8749, 0
        %8849 = vmatprep.subr.bf16.mxu0 0
        %8850 = vmatpush1.bf16.msra.mxu0 %v8847
        %8851 = vmatprep.subr.bf16.mxu0 0
        %8852 = vmatpush1.bf16.msra.mxu0 0
        %8853 = vmatprep.subr.bf16.mxu0 0
        %8854 = vmatpush1.bf16.msra.mxu0 0
        %8855 = vmatprep.subr.bf16.mxu0 0
        %8856 = vmatpush1.bf16.msra.mxu0 0
        %8857 = vmatprep.subr.bf16.mxu0 0
        %8858 = vmatpush1.bf16.msra.mxu0 0
        %8859 = vmatprep.subr.bf16.mxu0 0
        %8860 = vmatpush1.bf16.msra.mxu0 0
        %8861 = vmatprep.subr.bf16.mxu0 0
        %8862 = vmatpush1.bf16.msra.mxu0 0
        %8863 = vmatprep.subr.bf16.mxu0 0
        %8864 = vmatpush1.bf16.msra.mxu0 0
        %8865 = vmatprep.subr.bf16.mxu0 0
        %8866 = vmatpush1.bf16.msra.mxu0 0
        %8867 = vmatprep.subr.bf16.mxu0 0
        %8868 = vmatpush1.bf16.msra.mxu0 0
        %8869 = vmatprep.subr.bf16.mxu0 0
        %8870 = vmatpush1.bf16.msra.mxu0 0
        %8871 = vmatprep.subr.bf16.mxu0 0
        %8872 = vmatpush1.bf16.msra.mxu0 0
        %8873 = vmatprep.subr.bf16.mxu0 0
        %8874 = vmatpush1.bf16.msra.mxu0 0
        %8875 = vmatprep.subr.bf16.mxu0 0
        %8876 = vmatpush1.bf16.msra.mxu0 0
        %8877 = vmatprep.subr.bf16.mxu0 0
        %8878 = vmatpush1.bf16.msra.mxu0 0
        %8879 = vmatprep.subr.bf16.mxu0 0
        %8880 = vmatpush1.bf16.msra.mxu0 0
        %8881 = vmatprep.mubr.bf16.mxu0 0
        %8882 = vmatmul.mubr.bf16.gmra.mrb[0].mxu0 %v8799
        %v8883 = vpop.f32.mrb[0].mxu0
        %v8884 = vadd.f32 0.0, %v8883
        %v8885 = vpop.f32.mrb[0].mxu0
        %v8886 = vpop.f32.mrb[0].mxu0
        %v8887 = vadd.f32 0.0, %v8886
        %v8888 = vpop.f32.mrb[0].mxu0
        %8889 = vmatprep.mubr.bf16.mxu0 0
        %8890 = vmatmul.mubr.bf16.gmra.mrb[0].mxu0 %v8802
        %v8891 = vpop.f32.mrb[0].mxu0
        %v8892 = vadd.f32 0.0, %v8891
        %v8893 = vpop.f32.mrb[0].mxu0
        %v8894 = vpop.f32.mrb[0].mxu0
        %v8895 = vadd.f32 0.0, %v8894
        %v8896 = vpop.f32.mrb[0].mxu0
        %8897 = vmatprep.mubr.bf16.mxu0 0
        %8898 = vmatmul.mubr.bf16.gmra.mrb[0].mxu0 %v8805
        %v8899 = vpop.f32.mrb[0].mxu0
        %v8900 = vadd.f32 0.0, %v8899
        %v8901 = vpop.f32.mrb[0].mxu0
        %v8902 = vpop.f32.mrb[0].mxu0
        %v8903 = vadd.f32 0.0, %v8902
        %v8904 = vpop.f32.mrb[0].mxu0
        %8905 = vmatprep.mubr.bf16.mxu0 0
        %8906 = vmatmul.mubr.bf16.gmra.mrb[0].mxu0 %v8808
        %v8907 = vpop.f32.mrb[0].mxu0
        %v8908 = vadd.f32 0.0, %v8907
        %v8909 = vpop.f32.mrb[0].mxu0
        %v8910 = vpop.f32.mrb[0].mxu0
        %v8911 = vadd.f32 0.0, %v8910
        %v8912 = vpop.f32.mrb[0].mxu0
        %8913 = vmatprep.mubr.bf16.mxu0 0
        %8914 = vmatmul.mubr.bf16.gmra.mrb[0].mxu0 %v8811
        %v8915 = vpop.f32.mrb[0].mxu0
        %v8916 = vadd.f32 0.0, %v8915
        %v8917 = vpop.f32.mrb[0].mxu0
        %v8918 = vpop.f32.mrb[0].mxu0
        %v8919 = vadd.f32 0.0, %v8918
        %v8920 = vpop.f32.mrb[0].mxu0
        %8921 = vmatprep.mubr.bf16.mxu0 0
        %8922 = vmatmul.mubr.bf16.gmra.mrb[0].mxu0 %v8814
        %v8923 = vpop.f32.mrb[0].mxu0
        %v8924 = vadd.f32 0.0, %v8923
        %v8925 = vpop.f32.mrb[0].mxu0
        %v8926 = vpop.f32.mrb[0].mxu0
        %v8927 = vadd.f32 0.0, %v8926
        %v8928 = vpop.f32.mrb[0].mxu0
        %8929 = vmatprep.mubr.bf16.mxu0 0
        %8930 = vmatmul.mubr.bf16.gmra.mrb[0].mxu0 %v8817
        %v8931 = vpop.f32.mrb[0].mxu0
        %v8932 = vadd.f32 0.0, %v8931
        %v8933 = vpop.f32.mrb[0].mxu0
        %v8934 = vpop.f32.mrb[0].mxu0
        %v8935 = vadd.f32 0.0, %v8934
        %v8936 = vpop.f32.mrb[0].mxu0
        %8937 = vmatprep.mubr.bf16.mxu0 0
        %8938 = vmatmul.mubr.bf16.gmra.mrb[0].mxu0 %v8820
        %v8939 = vpop.f32.mrb[0].mxu0
        %v8940 = vadd.f32 0.0, %v8939
        %v8941 = vpop.f32.mrb[0].mxu0
        %v8942 = vpop.f32.mrb[0].mxu0
        %v8943 = vadd.f32 0.0, %v8942
        %v8944 = vpop.f32.mrb[0].mxu0
        %8945 = vmatprep.mubr.bf16.mxu0 0
        %8946 = vmatmul.mubr.bf16.gmra.mrb[0].mxu0 %v8823
        %v8947 = vpop.f32.mrb[0].mxu0
        %v8948 = vadd.f32 0.0, %v8947
        %v8949 = vpop.f32.mrb[0].mxu0
        %v8950 = vpop.f32.mrb[0].mxu0
        %v8951 = vadd.f32 0.0, %v8950
        %v8952 = vpop.f32.mrb[0].mxu0
        %8953 = vmatprep.mubr.bf16.mxu0 0
        %8954 = vmatmul.mubr.bf16.gmra.mrb[0].mxu0 %v8826
        %v8955 = vpop.f32.mrb[0].mxu0
        %v8956 = vadd.f32 0.0, %v8955
        %v8957 = vpop.f32.mrb[0].mxu0
        %v8958 = vpop.f32.mrb[0].mxu0
        %v8959 = vadd.f32 0.0, %v8958
        %v8960 = vpop.f32.mrb[0].mxu0
        %8961 = vmatprep.mubr.bf16.mxu0 0
        %8962 = vmatmul.mubr.bf16.gmra.mrb[0].mxu0 %v8829
        %v8963 = vpop.f32.mrb[0].mxu0
        %v8964 = vadd.f32 0.0, %v8963
        %v8965 = vpop.f32.mrb[0].mxu0
        %v8966 = vpop.f32.mrb[0].mxu0
        %v8967 = vadd.f32 0.0, %v8966
        %v8968 = vpop.f32.mrb[0].mxu0
        %8969 = vmatprep.mubr.bf16.mxu0 0
        %8970 = vmatmul.mubr.bf16.gmra.mrb[0].mxu0 %v8832
        %v8971 = vpop.f32.mrb[0].mxu0
        %v8972 = vadd.f32 0.0, %v8971
        %v8973 = vpop.f32.mrb[0].mxu0
        %v8974 = vpop.f32.mrb[0].mxu0
        %v8975 = vadd.f32 0.0, %v8974
        %v8976 = vpop.f32.mrb[0].mxu0
        %8977 = vmatprep.mubr.bf16.mxu0 0
        %8978 = vmatmul.mubr.bf16.gmra.mrb[0].mxu0 %v8835
        %v8979 = vpop.f32.mrb[0].mxu0
        %v8980 = vadd.f32 0.0, %v8979
        %v8981 = vpop.f32.mrb[0].mxu0
        %v8982 = vpop.f32.mrb[0].mxu0
        %v8983 = vadd.f32 0.0, %v8982
        %v8984 = vpop.f32.mrb[0].mxu0
        %8985 = vmatprep.mubr.bf16.mxu0 0
        %8986 = vmatmul.mubr.bf16.gmra.mrb[0].mxu0 %v8838
        %v8987 = vpop.f32.mrb[0].mxu0
        %v8988 = vadd.f32 0.0, %v8987
        %v8989 = vpop.f32.mrb[0].mxu0
        %v8990 = vpop.f32.mrb[0].mxu0
        %v8991 = vadd.f32 0.0, %v8990
        %v8992 = vpop.f32.mrb[0].mxu0
        %8993 = vmatprep.mubr.bf16.mxu0 0
        %8994 = vmatmul.mubr.bf16.gmra.mrb[0].mxu0 %v8841
        %v8995 = vpop.f32.mrb[0].mxu0
        %v8996 = vadd.f32 0.0, %v8995
        %v8997 = vpop.f32.mrb[0].mxu0
        %v8998 = vpop.f32.mrb[0].mxu0
        %v8999 = vadd.f32 0.0, %v8998
        %v9000 = vpop.f32.mrb[0].mxu0
        %9001 = vmatprep.mubr.bf16.mxu0 0
        %9002 = vmatmul.mubr.bf16.gmra.mrb[0].mxu0 %v8844
        %v9003 = vpop.f32.mrb[0].mxu0
        %v9004 = vadd.f32 0.0, %v9003
        %v9005 = vpop.f32.mrb[0].mxu0
        %v9006 = vpop.f32.mrb[0].mxu0
        %v9007 = vadd.f32 0.0, %v9006
        %v9008 = vpop.f32.mrb[0].mxu0
        %9009 = vdwg.mxu0
        %v9010 = vadd.f32 %v8540, %v8884
        %v9011 = vadd.f32 %v8541, %v8887
        %v9012 = vadd.f32 %v8542, %v8892
        %v9013 = vadd.f32 %v8543, %v8895
        %v9014 = vadd.f32 %v8544, %v8900
        %v9015 = vadd.f32 %v8545, %v8903
        %v9016 = vadd.f32 %v8546, %v8908
        %v9017 = vadd.f32 %v8547, %v8911
        %v9018 = vadd.f32 %v8548, %v8916
        %v9019 = vadd.f32 %v8549, %v8919
        %v9020 = vadd.f32 %v8550, %v8924
        %v9021 = vadd.f32 %v8551, %v8927
        %v9022 = vadd.f32 %v8552, %v8932
        %v9023 = vadd.f32 %v8553, %v8935
        %v9024 = vadd.f32 %v8554, %v8940
        %v9025 = vadd.f32 %v8555, %v8943
        %v9026 = vadd.f32 %v8556, %v8948
        %v9027 = vadd.f32 %v8557, %v8951
        %v9028 = vadd.f32 %v8558, %v8956
        %v9029 = vadd.f32 %v8559, %v8959
        %v9030 = vadd.f32 %v8560, %v8964
        %v9031 = vadd.f32 %v8561, %v8967
        %v9032 = vadd.f32 %v8562, %v8972
        %v9033 = vadd.f32 %v8563, %v8975
        %v9034 = vadd.f32 %v8564, %v8980
        %v9035 = vadd.f32 %v8565, %v8983
        %v9036 = vadd.f32 %v8566, %v8988
        %v9037 = vadd.f32 %v8567, %v8991
        %v9038 = vadd.f32 %v8568, %v8996
        %v9039 = vadd.f32 %v8569, %v8999
        %v9040 = vadd.f32 %v8570, %v9004
        %v9041 = vadd.f32 %v8571, %v9007
        %s9042 = scalar_lea.vmem [#allocation2], 24
        %v9043 = vld [vmem:[%s9042] sm:$0xf]
        %v9044 = vld [vmem:[%s9042 + $0x4] sm:$0xf]
        %v9045 = vld [vmem:[%s9042 + $0xc] sm:$0xf]
        %v9046 = vld [vmem:[%s9042 + $0x10] sm:$0xf]
        %v9047 = vld [vmem:[%s9042 + $0x18] sm:$0xf]
        %v9048 = vld [vmem:[%s9042 + $0x1c] sm:$0xf]
        %v9049 = vld [vmem:[%s9042 + $0x24] sm:$0xf]
        %v9050 = vld [vmem:[%s9042 + $0x28] sm:$0xf]
        %v9051 = vld [vmem:[%s9042 + $0x30] sm:$0xf]
        %v9052 = vld [vmem:[%s9042 + $0x34] sm:$0xf]
        %v9053 = vld [vmem:[%s9042 + $0x3c] sm:$0xf]
        %v9054 = vld [vmem:[%s9042 + $0x40] sm:$0xf]
        %v9055 = vld [vmem:[%s9042 + $0x48] sm:$0xf]
        %v9056 = vld [vmem:[%s9042 + $0x4c] sm:$0xf]
        %v9057 = vld [vmem:[%s9042 + $0x54] sm:$0xf]
        %v9058 = vld [vmem:[%s9042 + $0x58] sm:$0xf]
        %v9059 = vld [vmem:[%s9042 + $0x60] sm:$0xf]
        %v9060 = vld [vmem:[%s9042 + $0x64] sm:$0xf]
        %v9061 = vld [vmem:[%s9042 + $0x6c] sm:$0xf]
        %v9062 = vld [vmem:[%s9042 + $0x70] sm:$0xf]
        %v9063 = vld [vmem:[%s9042 + $0x78] sm:$0xf]
        %v9064 = vld [vmem:[%s9042 + $0x7c] sm:$0xf]
        %v9065 = vld [vmem:[%s9042 + $0x84] sm:$0xf]
        %v9066 = vld [vmem:[%s9042 + $0x88] sm:$0xf]
        %v9067 = vld [vmem:[%s9042 + $0x90] sm:$0xf]
        %v9068 = vld [vmem:[%s9042 + $0x94] sm:$0xf]
        %v9069 = vld [vmem:[%s9042 + $0x9c] sm:$0xf]
        %v9070 = vld [vmem:[%s9042 + $0xa0] sm:$0xf]
        %v9071 = vld [vmem:[%s9042 + $0xa8] sm:$0xf]
        %v9072 = vld [vmem:[%s9042 + $0xac] sm:$0xf]
        %v9073 = vld [vmem:[%s9042 + $0xb4] sm:$0xf]
        %v9074 = vld [vmem:[%s9042 + $0xb8] sm:$0xf]
        %s9075 = scalar_lea.vmem %s2, 24
        %v9076 = vld [vmem:[%s9075] sm:$0xf]
        %v9109 = vunpack.c.l.b16 %v9043
        %v9110 = vunpack.c.l.b16 %v9044
        %v9111 = vunpack.c.l.b16 %v9045
        %v9112 = vunpack.c.l.b16 %v9046
        %v9113 = vunpack.c.l.b16 %v9047
        %v9114 = vunpack.c.l.b16 %v9048
        %v9115 = vunpack.c.l.b16 %v9049
        %v9116 = vunpack.c.l.b16 %v9050
        %v9117 = vunpack.c.l.b16 %v9051
        %v9118 = vunpack.c.l.b16 %v9052
        %v9119 = vunpack.c.l.b16 %v9053
        %v9120 = vunpack.c.l.b16 %v9054
        %v9121 = vunpack.c.l.b16 %v9055
        %v9122 = vunpack.c.l.b16 %v9056
        %v9123 = vunpack.c.l.b16 %v9057
        %v9124 = vunpack.c.l.b16 %v9058
        %v9125 = vunpack.c.l.b16 %v9059
        %v9126 = vunpack.c.l.b16 %v9060
        %v9127 = vunpack.c.l.b16 %v9061
        %v9128 = vunpack.c.l.b16 %v9062
        %v9129 = vunpack.c.l.b16 %v9063
        %v9130 = vunpack.c.l.b16 %v9064
        %v9131 = vunpack.c.l.b16 %v9065
        %v9132 = vunpack.c.l.b16 %v9066
        %v9133 = vunpack.c.l.b16 %v9067
        %v9134 = vunpack.c.l.b16 %v9068
        %v9135 = vunpack.c.l.b16 %v9069
        %v9136 = vunpack.c.l.b16 %v9070
        %v9137 = vunpack.c.l.b16 %v9071
        %v9138 = vunpack.c.l.b16 %v9072
        %v9139 = vunpack.c.l.b16 %v9073
        %v9140 = vunpack.c.l.b16 %v9074
        %v9141 = vpack.c.b16 %v9110, %v9109
        %v9142 = vpack.c.b16 %v9112, %v9111
        %v9143 = vpack.c.b16 %v9114, %v9113
        %v9144 = vpack.c.b16 %v9116, %v9115
        %v9145 = vpack.c.b16 %v9118, %v9117
        %v9146 = vpack.c.b16 %v9120, %v9119
        %v9147 = vpack.c.b16 %v9122, %v9121
        %v9148 = vpack.c.b16 %v9124, %v9123
        %v9149 = vpack.c.b16 %v9126, %v9125
        %v9150 = vpack.c.b16 %v9128, %v9127
        %v9151 = vpack.c.b16 %v9130, %v9129
        %v9152 = vpack.c.b16 %v9132, %v9131
        %v9153 = vpack.c.b16 %v9134, %v9133
        %v9154 = vpack.c.b16 %v9136, %v9135
        %v9155 = vpack.c.b16 %v9138, %v9137
        %v9156 = vpack.c.b16 %v9140, %v9139
        %v9158 = vsel %vm6527, %v9141, 0
        %v9161 = vsel %vm6527, %v9142, 0
        %v9164 = vsel %vm6527, %v9143, 0
        %v9167 = vsel %vm6527, %v9144, 0
        %v9170 = vsel %vm6527, %v9145, 0
        %v9173 = vsel %vm6527, %v9146, 0
        %v9176 = vsel %vm6527, %v9147, 0
        %v9179 = vsel %vm6527, %v9148, 0
        %v9182 = vsel %vm6527, %v9149, 0
        %v9185 = vsel %vm6527, %v9150, 0
        %v9188 = vsel %vm6527, %v9151, 0
        %v9191 = vsel %vm6527, %v9152, 0
        %v9194 = vsel %vm6527, %v9153, 0
        %v9197 = vsel %vm6527, %v9154, 0
        %v9200 = vsel %vm6527, %v9155, 0
        %v9203 = vsel %vm6527, %v9156, 0
        %v9206 = vsel %vm6576, %v9076, 0
        %9208 = vmatprep.subr.bf16.mxu0 0
        %9209 = vmatpush1.bf16.msra.mxu0 %v9206
        %9210 = vmatprep.subr.bf16.mxu0 0
        %9211 = vmatpush1.bf16.msra.mxu0 0
        %9212 = vmatprep.subr.bf16.mxu0 0
        %9213 = vmatpush1.bf16.msra.mxu0 0
        %9214 = vmatprep.subr.bf16.mxu0 0
        %9215 = vmatpush1.bf16.msra.mxu0 0
        %9216 = vmatprep.subr.bf16.mxu0 0
        %9217 = vmatpush1.bf16.msra.mxu0 0
        %9218 = vmatprep.subr.bf16.mxu0 0
        %9219 = vmatpush1.bf16.msra.mxu0 0
        %9220 = vmatprep.subr.bf16.mxu0 0
        %9221 = vmatpush1.bf16.msra.mxu0 0
        %9222 = vmatprep.subr.bf16.mxu0 0
        %9223 = vmatpush1.bf16.msra.mxu0 0
        %9224 = vmatprep.subr.bf16.mxu0 0
        %9225 = vmatpush1.bf16.msra.mxu0 0
        %9226 = vmatprep.subr.bf16.mxu0 0
        %9227 = vmatpush1.bf16.msra.mxu0 0
        %9228 = vmatprep.subr.bf16.mxu0 0
        %9229 = vmatpush1.bf16.msra.mxu0 0
        %9230 = vmatprep.subr.bf16.mxu0 0
        %9231 = vmatpush1.bf16.msra.mxu0 0
        %9232 = vmatprep.subr.bf16.mxu0 0
        %9233 = vmatpush1.bf16.msra.mxu0 0
        %9234 = vmatprep.subr.bf16.mxu0 0
        %9235 = vmatpush1.bf16.msra.mxu0 0
        %9236 = vmatprep.subr.bf16.mxu0 0
        %9237 = vmatpush1.bf16.msra.mxu0 0
        %9238 = vmatprep.subr.bf16.mxu0 0
        %9239 = vmatpush1.bf16.msra.mxu0 0
        %9240 = vmatprep.mubr.bf16.mxu0 0
        %9241 = vmatmul.mubr.bf16.gmra.mrb[0].mxu0 %v9158
        %v9242 = vpop.f32.mrb[0].mxu0
        %v9243 = vadd.f32 0.0, %v9242
        %v9244 = vpop.f32.mrb[0].mxu0
        %v9245 = vpop.f32.mrb[0].mxu0
        %v9246 = vadd.f32 0.0, %v9245
        %v9247 = vpop.f32.mrb[0].mxu0
        %9248 = vmatprep.mubr.bf16.mxu0 0
        %9249 = vmatmul.mubr.bf16.gmra.mrb[0].mxu0 %v9161
        %v9250 = vpop.f32.mrb[0].mxu0
        %v9251 = vadd.f32 0.0, %v9250
        %v9252 = vpop.f32.mrb[0].mxu0
        %v9253 = vpop.f32.mrb[0].mxu0
        %v9254 = vadd.f32 0.0, %v9253
        %v9255 = vpop.f32.mrb[0].mxu0
        %9256 = vmatprep.mubr.bf16.mxu0 0
        %9257 = vmatmul.mubr.bf16.gmra.mrb[0].mxu0 %v9164
        %v9258 = vpop.f32.mrb[0].mxu0
        %v9259 = vadd.f32 0.0, %v9258
        %v9260 = vpop.f32.mrb[0].mxu0
        %v9261 = vpop.f32.mrb[0].mxu0
        %v9262 = vadd.f32 0.0, %v9261
        %v9263 = vpop.f32.mrb[0].mxu0
        %9264 = vmatprep.mubr.bf16.mxu0 0
        %9265 = vmatmul.mubr.bf16.gmra.mrb[0].mxu0 %v9167
        %v9266 = vpop.f32.mrb[0].mxu0
        %v9267 = vadd.f32 0.0, %v9266
        %v9268 = vpop.f32.mrb[0].mxu0
        %v9269 = vpop.f32.mrb[0].mxu0
        %v9270 = vadd.f32 0.0, %v9269
        %v9271 = vpop.f32.mrb[0].mxu0
        %9272 = vmatprep.mubr.bf16.mxu0 0
        %9273 = vmatmul.mubr.bf16.gmra.mrb[0].mxu0 %v9170
        %v9274 = vpop.f32.mrb[0].mxu0
        %v9275 = vadd.f32 0.0, %v9274
        %v9276 = vpop.f32.mrb[0].mxu0
        %v9277 = vpop.f32.mrb[0].mxu0
        %v9278 = vadd.f32 0.0, %v9277
        %v9279 = vpop.f32.mrb[0].mxu0
        %9280 = vmatprep.mubr.bf16.mxu0 0
        %9281 = vmatmul.mubr.bf16.gmra.mrb[0].mxu0 %v9173
        %v9282 = vpop.f32.mrb[0].mxu0
        %v9283 = vadd.f32 0.0, %v9282
        %v9284 = vpop.f32.mrb[0].mxu0
        %v9285 = vpop.f32.mrb[0].mxu0
        %v9286 = vadd.f32 0.0, %v9285
        %v9287 = vpop.f32.mrb[0].mxu0
        %9288 = vmatprep.mubr.bf16.mxu0 0
        %9289 = vmatmul.mubr.bf16.gmra.mrb[0].mxu0 %v9176
        %v9290 = vpop.f32.mrb[0].mxu0
        %v9291 = vadd.f32 0.0, %v9290
        %v9292 = vpop.f32.mrb[0].mxu0
        %v9293 = vpop.f32.mrb[0].mxu0
        %v9294 = vadd.f32 0.0, %v9293
        %v9295 = vpop.f32.mrb[0].mxu0
        %9296 = vmatprep.mubr.bf16.mxu0 0
        %9297 = vmatmul.mubr.bf16.gmra.mrb[0].mxu0 %v9179
        %v9298 = vpop.f32.mrb[0].mxu0
        %v9299 = vadd.f32 0.0, %v9298
        %v9300 = vpop.f32.mrb[0].mxu0
        %v9301 = vpop.f32.mrb[0].mxu0
        %v9302 = vadd.f32 0.0, %v9301
        %v9303 = vpop.f32.mrb[0].mxu0
        %9304 = vmatprep.mubr.bf16.mxu0 0
        %9305 = vmatmul.mubr.bf16.gmra.mrb[0].mxu0 %v9182
        %v9306 = vpop.f32.mrb[0].mxu0
        %v9307 = vadd.f32 0.0, %v9306
        %v9308 = vpop.f32.mrb[0].mxu0
        %v9309 = vpop.f32.mrb[0].mxu0
        %v9310 = vadd.f32 0.0, %v9309
        %v9311 = vpop.f32.mrb[0].mxu0
        %9312 = vmatprep.mubr.bf16.mxu0 0
        %9313 = vmatmul.mubr.bf16.gmra.mrb[0].mxu0 %v9185
        %v9314 = vpop.f32.mrb[0].mxu0
        %v9315 = vadd.f32 0.0, %v9314
        %v9316 = vpop.f32.mrb[0].mxu0
        %v9317 = vpop.f32.mrb[0].mxu0
        %v9318 = vadd.f32 0.0, %v9317
        %v9319 = vpop.f32.mrb[0].mxu0
        %9320 = vmatprep.mubr.bf16.mxu0 0
        %9321 = vmatmul.mubr.bf16.gmra.mrb[0].mxu0 %v9188
        %v9322 = vpop.f32.mrb[0].mxu0
        %v9323 = vadd.f32 0.0, %v9322
        %v9324 = vpop.f32.mrb[0].mxu0
        %v9325 = vpop.f32.mrb[0].mxu0
        %v9326 = vadd.f32 0.0, %v9325
        %v9327 = vpop.f32.mrb[0].mxu0
        %9328 = vmatprep.mubr.bf16.mxu0 0
        %9329 = vmatmul.mubr.bf16.gmra.mrb[0].mxu0 %v9191
        %v9330 = vpop.f32.mrb[0].mxu0
        %v9331 = vadd.f32 0.0, %v9330
        %v9332 = vpop.f32.mrb[0].mxu0
        %v9333 = vpop.f32.mrb[0].mxu0
        %v9334 = vadd.f32 0.0, %v9333
        %v9335 = vpop.f32.mrb[0].mxu0
        %9336 = vmatprep.mubr.bf16.mxu0 0
        %9337 = vmatmul.mubr.bf16.gmra.mrb[0].mxu0 %v9194
        %v9338 = vpop.f32.mrb[0].mxu0
        %v9339 = vadd.f32 0.0, %v9338
        %v9340 = vpop.f32.mrb[0].mxu0
        %v9341 = vpop.f32.mrb[0].mxu0
        %v9342 = vadd.f32 0.0, %v9341
        %v9343 = vpop.f32.mrb[0].mxu0
        %9344 = vmatprep.mubr.bf16.mxu0 0
        %9345 = vmatmul.mubr.bf16.gmra.mrb[0].mxu0 %v9197
        %v9346 = vpop.f32.mrb[0].mxu0
        %v9347 = vadd.f32 0.0, %v9346
        %v9348 = vpop.f32.mrb[0].mxu0
        %v9349 = vpop.f32.mrb[0].mxu0
        %v9350 = vadd.f32 0.0, %v9349
        %v9351 = vpop.f32.mrb[0].mxu0
        %9352 = vmatprep.mubr.bf16.mxu0 0
        %9353 = vmatmul.mubr.bf16.gmra.mrb[0].mxu0 %v9200
        %v9354 = vpop.f32.mrb[0].mxu0
        %v9355 = vadd.f32 0.0, %v9354
        %v9356 = vpop.f32.mrb[0].mxu0
        %v9357 = vpop.f32.mrb[0].mxu0
        %v9358 = vadd.f32 0.0, %v9357
        %v9359 = vpop.f32.mrb[0].mxu0
        %9360 = vmatprep.mubr.bf16.mxu0 0
        %9361 = vmatmul.mubr.bf16.gmra.mrb[0].mxu0 %v9203
        %v9362 = vpop.f32.mrb[0].mxu0
        %v9363 = vadd.f32 0.0, %v9362
        %v9364 = vpop.f32.mrb[0].mxu0
        %v9365 = vpop.f32.mrb[0].mxu0
        %v9366 = vadd.f32 0.0, %v9365
        %v9367 = vpop.f32.mrb[0].mxu0
        %9368 = vdwg.mxu0
        %v9369 = vadd.f32 %v9010, %v9243
        %v9370 = vadd.f32 %v9011, %v9246
        %v9371 = vadd.f32 %v9012, %v9251
        %v9372 = vadd.f32 %v9013, %v9254
        %v9373 = vadd.f32 %v9014, %v9259
        %v9374 = vadd.f32 %v9015, %v9262
        %v9375 = vadd.f32 %v9016, %v9267
        %v9376 = vadd.f32 %v9017, %v9270
        %v9377 = vadd.f32 %v9018, %v9275
        %v9378 = vadd.f32 %v9019, %v9278
        %v9379 = vadd.f32 %v9020, %v9283
        %v9380 = vadd.f32 %v9021, %v9286
        %v9381 = vadd.f32 %v9022, %v9291
        %v9382 = vadd.f32 %v9023, %v9294
        %v9383 = vadd.f32 %v9024, %v9299
        %v9384 = vadd.f32 %v9025, %v9302
        %v9385 = vadd.f32 %v9026, %v9307
        %v9386 = vadd.f32 %v9027, %v9310
        %v9387 = vadd.f32 %v9028, %v9315
        %v9388 = vadd.f32 %v9029, %v9318
        %v9389 = vadd.f32 %v9030, %v9323
        %v9390 = vadd.f32 %v9031, %v9326
        %v9391 = vadd.f32 %v9032, %v9331
        %v9392 = vadd.f32 %v9033, %v9334
        %v9393 = vadd.f32 %v9034, %v9339
        %v9394 = vadd.f32 %v9035, %v9342
        %v9395 = vadd.f32 %v9036, %v9347
        %v9396 = vadd.f32 %v9037, %v9350
        %v9397 = vadd.f32 %v9038, %v9355
        %v9398 = vadd.f32 %v9039, %v9358
        %v9399 = vadd.f32 %v9040, %v9363
        %v9400 = vadd.f32 %v9041, %v9366
        %v9401 = vld [vmem:[%s9042] sm:$0xf]
        %v9402 = vld [vmem:[%s9042 + $0x4] sm:$0xf]
        %v9403 = vld [vmem:[%s9042 + $0x8] sm:$0x1]
        %v9404 = vld [vmem:[%s9042 + $0xc] sm:$0xf]
        %v9405 = vld [vmem:[%s9042 + $0x10] sm:$0xf]
        %v9406 = vld [vmem:[%s9042 + $0x14] sm:$0x1]
        %v9407 = vld [vmem:[%s9042 + $0x18] sm:$0xf]
        %v9408 = vld [vmem:[%s9042 + $0x1c] sm:$0xf]
        %v9409 = vld [vmem:[%s9042 + $0x20] sm:$0x1]
        %v9410 = vld [vmem:[%s9042 + $0x24] sm:$0xf]
        %v9411 = vld [vmem:[%s9042 + $0x28] sm:$0xf]
        %v9412 = vld [vmem:[%s9042 + $0x2c] sm:$0x1]
        %v9413 = vld [vmem:[%s9042 + $0x30] sm:$0xf]
        %v9414 = vld [vmem:[%s9042 + $0x34] sm:$0xf]
        %v9415 = vld [vmem:[%s9042 + $0x38] sm:$0x1]
        %v9416 = vld [vmem:[%s9042 + $0x3c] sm:$0xf]
        %v9417 = vld [vmem:[%s9042 + $0x40] sm:$0xf]
        %v9418 = vld [vmem:[%s9042 + $0x44] sm:$0x1]
        %v9419 = vld [vmem:[%s9042 + $0x48] sm:$0xf]
        %v9420 = vld [vmem:[%s9042 + $0x4c] sm:$0xf]
        %v9421 = vld [vmem:[%s9042 + $0x50] sm:$0x1]
        %v9422 = vld [vmem:[%s9042 + $0x54] sm:$0xf]
        %v9423 = vld [vmem:[%s9042 + $0x58] sm:$0xf]
        %v9424 = vld [vmem:[%s9042 + $0x5c] sm:$0x1]
        %v9425 = vld [vmem:[%s9042 + $0x60] sm:$0xf]
        %v9426 = vld [vmem:[%s9042 + $0x64] sm:$0xf]
        %v9427 = vld [vmem:[%s9042 + $0x68] sm:$0x1]
        %v9428 = vld [vmem:[%s9042 + $0x6c] sm:$0xf]
        %v9429 = vld [vmem:[%s9042 + $0x70] sm:$0xf]
        %v9430 = vld [vmem:[%s9042 + $0x74] sm:$0x1]
        %v9431 = vld [vmem:[%s9042 + $0x78] sm:$0xf]
        %v9432 = vld [vmem:[%s9042 + $0x7c] sm:$0xf]
        %v9433 = vld [vmem:[%s9042 + $0x80] sm:$0x1]
        %v9434 = vld [vmem:[%s9042 + $0x84] sm:$0xf]
        %v9435 = vld [vmem:[%s9042 + $0x88] sm:$0xf]
        %v9436 = vld [vmem:[%s9042 + $0x8c] sm:$0x1]
        %v9437 = vld [vmem:[%s9042 + $0x90] sm:$0xf]
        %v9438 = vld [vmem:[%s9042 + $0x94] sm:$0xf]
        %v9439 = vld [vmem:[%s9042 + $0x98] sm:$0x1]
        %v9440 = vld [vmem:[%s9042 + $0x9c] sm:$0xf]
        %v9441 = vld [vmem:[%s9042 + $0xa0] sm:$0xf]
        %v9442 = vld [vmem:[%s9042 + $0xa4] sm:$0x1]
        %v9443 = vld [vmem:[%s9042 + $0xa8] sm:$0xf]
        %v9444 = vld [vmem:[%s9042 + $0xac] sm:$0xf]
        %v9445 = vld [vmem:[%s9042 + $0xb0] sm:$0x1]
        %v9446 = vld [vmem:[%s9042 + $0xb4] sm:$0xf]
        %v9447 = vld [vmem:[%s9042 + $0xb8] sm:$0xf]
        %v9448 = vld [vmem:[%s9042 + $0xbc] sm:$0x1]
        %v9450 = vshrl.u32 %v9401, 16
        %v9452 = vrot.slane %v9450, 4
        %v9453 = vshll.u32 %v9401, 16
        %v9455 = vrot.slane %v9453, 5
        %v9456 = vor.u32 %v9452, %v9455
        %v9457 = vrot.slane %v9456, 4
        %v9459 = vshll.u32 %v9402, 16
        %v9461 = vrot.slane %v9459, 5
        %v9462 = vsel %vm256, %v9457, %v9461
        %v9463 = vshrl.u32 %v9402, 16
        %v9465 = vrot.slane %v9463, 4
        %v9466 = vor.u32 %v9465, %v9461
        %v9467 = vrot.slane %v9466, 4
        %v9469 = vshll.u32 %v9403, 16
        %v9471 = vrot.slane %v9469, 5
        %v9472 = vsel %vm256, %v9467, %v9471
        %v9474 = vshrl.u32 %v9404, 16
        %v9476 = vrot.slane %v9474, 4
        %v9477 = vshll.u32 %v9404, 16
        %v9479 = vrot.slane %v9477, 5
        %v9480 = vor.u32 %v9476, %v9479
        %v9481 = vrot.slane %v9480, 4
        %v9483 = vshll.u32 %v9405, 16
        %v9485 = vrot.slane %v9483, 5
        %v9486 = vsel %vm256, %v9481, %v9485
        %v9487 = vshrl.u32 %v9405, 16
        %v9489 = vrot.slane %v9487, 4
        %v9490 = vor.u32 %v9489, %v9485
        %v9491 = vrot.slane %v9490, 4
        %v9493 = vshll.u32 %v9406, 16
        %v9495 = vrot.slane %v9493, 5
        %v9496 = vsel %vm256, %v9491, %v9495
        %v9498 = vshrl.u32 %v9407, 16
        %v9500 = vrot.slane %v9498, 4
        %v9501 = vshll.u32 %v9407, 16
        %v9503 = vrot.slane %v9501, 5
        %v9504 = vor.u32 %v9500, %v9503
        %v9505 = vrot.slane %v9504, 4
        %v9507 = vshll.u32 %v9408, 16
        %v9509 = vrot.slane %v9507, 5
        %v9510 = vsel %vm256, %v9505, %v9509
        %v9511 = vshrl.u32 %v9408, 16
        %v9513 = vrot.slane %v9511, 4
        %v9514 = vor.u32 %v9513, %v9509
        %v9515 = vrot.slane %v9514, 4
        %v9517 = vshll.u32 %v9409, 16
        %v9519 = vrot.slane %v9517, 5
        %v9520 = vsel %vm256, %v9515, %v9519
        %v9522 = vshrl.u32 %v9410, 16
        %v9524 = vrot.slane %v9522, 4
        %v9525 = vshll.u32 %v9410, 16
        %v9527 = vrot.slane %v9525, 5
        %v9528 = vor.u32 %v9524, %v9527
        %v9529 = vrot.slane %v9528, 4
        %v9531 = vshll.u32 %v9411, 16
        %v9533 = vrot.slane %v9531, 5
        %v9534 = vsel %vm256, %v9529, %v9533
        %v9535 = vshrl.u32 %v9411, 16
        %v9537 = vrot.slane %v9535, 4
        %v9538 = vor.u32 %v9537, %v9533
        %v9539 = vrot.slane %v9538, 4
        %v9541 = vshll.u32 %v9412, 16
        %v9543 = vrot.slane %v9541, 5
        %v9544 = vsel %vm256, %v9539, %v9543
        %v9546 = vshrl.u32 %v9413, 16
        %v9548 = vrot.slane %v9546, 4
        %v9549 = vshll.u32 %v9413, 16
        %v9551 = vrot.slane %v9549, 5
        %v9552 = vor.u32 %v9548, %v9551
        %v9553 = vrot.slane %v9552, 4
        %v9555 = vshll.u32 %v9414, 16
        %v9557 = vrot.slane %v9555, 5
        %v9558 = vsel %vm256, %v9553, %v9557
        %v9559 = vshrl.u32 %v9414, 16
        %v9561 = vrot.slane %v9559, 4
        %v9562 = vor.u32 %v9561, %v9557
        %v9563 = vrot.slane %v9562, 4
        %v9565 = vshll.u32 %v9415, 16
        %v9567 = vrot.slane %v9565, 5
        %v9568 = vsel %vm256, %v9563, %v9567
        %v9570 = vshrl.u32 %v9416, 16
        %v9572 = vrot.slane %v9570, 4
        %v9573 = vshll.u32 %v9416, 16
        %v9575 = vrot.slane %v9573, 5
        %v9576 = vor.u32 %v9572, %v9575
        %v9577 = vrot.slane %v9576, 4
        %v9579 = vshll.u32 %v9417, 16
        %v9581 = vrot.slane %v9579, 5
        %v9582 = vsel %vm256, %v9577, %v9581
        %v9583 = vshrl.u32 %v9417, 16
        %v9585 = vrot.slane %v9583, 4
        %v9586 = vor.u32 %v9585, %v9581
        %v9587 = vrot.slane %v9586, 4
        %v9589 = vshll.u32 %v9418, 16
        %v9591 = vrot.slane %v9589, 5
        %v9592 = vsel %vm256, %v9587, %v9591
        %v9594 = vshrl.u32 %v9419, 16
        %v9596 = vrot.slane %v9594, 4
        %v9597 = vshll.u32 %v9419, 16
        %v9599 = vrot.slane %v9597, 5
        %v9600 = vor.u32 %v9596, %v9599
        %v9601 = vrot.slane %v9600, 4
        %v9603 = vshll.u32 %v9420, 16
        %v9605 = vrot.slane %v9603, 5
        %v9606 = vsel %vm256, %v9601, %v9605
        %v9607 = vshrl.u32 %v9420, 16
        %v9609 = vrot.slane %v9607, 4
        %v9610 = vor.u32 %v9609, %v9605
        %v9611 = vrot.slane %v9610, 4
        %v9613 = vshll.u32 %v9421, 16
        %v9615 = vrot.slane %v9613, 5
        %v9616 = vsel %vm256, %v9611, %v9615
        %v9618 = vshrl.u32 %v9422, 16
        %v9620 = vrot.slane %v9618, 4
        %v9621 = vshll.u32 %v9422, 16
        %v9623 = vrot.slane %v9621, 5
        %v9624 = vor.u32 %v9620, %v9623
        %v9625 = vrot.slane %v9624, 4
        %v9627 = vshll.u32 %v9423, 16
        %v9629 = vrot.slane %v9627, 5
        %v9630 = vsel %vm256, %v9625, %v9629
        %v9631 = vshrl.u32 %v9423, 16
        %v9633 = vrot.slane %v9631, 4
        %v9634 = vor.u32 %v9633, %v9629
        %v9635 = vrot.slane %v9634, 4
        %v9637 = vshll.u32 %v9424, 16
        %v9639 = vrot.slane %v9637, 5
        %v9640 = vsel %vm256, %v9635, %v9639
        %v9642 = vshrl.u32 %v9425, 16
        %v9644 = vrot.slane %v9642, 4
        %v9645 = vshll.u32 %v9425, 16
        %v9647 = vrot.slane %v9645, 5
        %v9648 = vor.u32 %v9644, %v9647
        %v9649 = vrot.slane %v9648, 4
        %v9651 = vshll.u32 %v9426, 16
        %v9653 = vrot.slane %v9651, 5
        %v9654 = vsel %vm256, %v9649, %v9653
        %v9655 = vshrl.u32 %v9426, 16
        %v9657 = vrot.slane %v9655, 4
        %v9658 = vor.u32 %v9657, %v9653
        %v9659 = vrot.slane %v9658, 4
        %v9661 = vshll.u32 %v9427, 16
        %v9663 = vrot.slane %v9661, 5
        %v9664 = vsel %vm256, %v9659, %v9663
        %v9666 = vshrl.u32 %v9428, 16
        %v9668 = vrot.slane %v9666, 4
        %v9669 = vshll.u32 %v9428, 16
        %v9671 = vrot.slane %v9669, 5
        %v9672 = vor.u32 %v9668, %v9671
        %v9673 = vrot.slane %v9672, 4
        %v9675 = vshll.u32 %v9429, 16
        %v9677 = vrot.slane %v9675, 5
        %v9678 = vsel %vm256, %v9673, %v9677
        %v9679 = vshrl.u32 %v9429, 16
        %v9681 = vrot.slane %v9679, 4
        %v9682 = vor.u32 %v9681, %v9677
        %v9683 = vrot.slane %v9682, 4
        %v9685 = vshll.u32 %v9430, 16
        %v9687 = vrot.slane %v9685, 5
        %v9688 = vsel %vm256, %v9683, %v9687
        %v9690 = vshrl.u32 %v9431, 16
        %v9692 = vrot.slane %v9690, 4
        %v9693 = vshll.u32 %v9431, 16
        %v9695 = vrot.slane %v9693, 5
        %v9696 = vor.u32 %v9692, %v9695
        %v9697 = vrot.slane %v9696, 4
        %v9699 = vshll.u32 %v9432, 16
        %v9701 = vrot.slane %v9699, 5
        %v9702 = vsel %vm256, %v9697, %v9701
        %v9703 = vshrl.u32 %v9432, 16
        %v9705 = vrot.slane %v9703, 4
        %v9706 = vor.u32 %v9705, %v9701
        %v9707 = vrot.slane %v9706, 4
        %v9709 = vshll.u32 %v9433, 16
        %v9711 = vrot.slane %v9709, 5
        %v9712 = vsel %vm256, %v9707, %v9711
        %v9714 = vshrl.u32 %v9434, 16
        %v9716 = vrot.slane %v9714, 4
        %v9717 = vshll.u32 %v9434, 16
        %v9719 = vrot.slane %v9717, 5
        %v9720 = vor.u32 %v9716, %v9719
        %v9721 = vrot.slane %v9720, 4
        %v9723 = vshll.u32 %v9435, 16
        %v9725 = vrot.slane %v9723, 5
        %v9726 = vsel %vm256, %v9721, %v9725
        %v9727 = vshrl.u32 %v9435, 16
        %v9729 = vrot.slane %v9727, 4
        %v9730 = vor.u32 %v9729, %v9725
        %v9731 = vrot.slane %v9730, 4
        %v9733 = vshll.u32 %v9436, 16
        %v9735 = vrot.slane %v9733, 5
        %v9736 = vsel %vm256, %v9731, %v9735
        %v9738 = vshrl.u32 %v9437, 16
        %v9740 = vrot.slane %v9738, 4
        %v9741 = vshll.u32 %v9437, 16
        %v9743 = vrot.slane %v9741, 5
        %v9744 = vor.u32 %v9740, %v9743
        %v9745 = vrot.slane %v9744, 4
        %v9747 = vshll.u32 %v9438, 16
        %v9749 = vrot.slane %v9747, 5
        %v9750 = vsel %vm256, %v9745, %v9749
        %v9751 = vshrl.u32 %v9438, 16
        %v9753 = vrot.slane %v9751, 4
        %v9754 = vor.u32 %v9753, %v9749
        %v9755 = vrot.slane %v9754, 4
        %v9757 = vshll.u32 %v9439, 16
        %v9759 = vrot.slane %v9757, 5
        %v9760 = vsel %vm256, %v9755, %v9759
        %v9762 = vshrl.u32 %v9440, 16
        %v9764 = vrot.slane %v9762, 4
        %v9765 = vshll.u32 %v9440, 16
        %v9767 = vrot.slane %v9765, 5
        %v9768 = vor.u32 %v9764, %v9767
        %v9769 = vrot.slane %v9768, 4
        %v9771 = vshll.u32 %v9441, 16
        %v9773 = vrot.slane %v9771, 5
        %v9774 = vsel %vm256, %v9769, %v9773
        %v9775 = vshrl.u32 %v9441, 16
        %v9777 = vrot.slane %v9775, 4
        %v9778 = vor.u32 %v9777, %v9773
        %v9779 = vrot.slane %v9778, 4
        %v9781 = vshll.u32 %v9442, 16
        %v9783 = vrot.slane %v9781, 5
        %v9784 = vsel %vm256, %v9779, %v9783
        %v9786 = vshrl.u32 %v9443, 16
        %v9788 = vrot.slane %v9786, 4
        %v9789 = vshll.u32 %v9443, 16
        %v9791 = vrot.slane %v9789, 5
        %v9792 = vor.u32 %v9788, %v9791
        %v9793 = vrot.slane %v9792, 4
        %v9795 = vshll.u32 %v9444, 16
        %v9797 = vrot.slane %v9795, 5
        %v9798 = vsel %vm256, %v9793, %v9797
        %v9799 = vshrl.u32 %v9444, 16
        %v9801 = vrot.slane %v9799, 4
        %v9802 = vor.u32 %v9801, %v9797
        %v9803 = vrot.slane %v9802, 4
        %v9805 = vshll.u32 %v9445, 16
        %v9807 = vrot.slane %v9805, 5
        %v9808 = vsel %vm256, %v9803, %v9807
        %v9810 = vshrl.u32 %v9446, 16
        %v9812 = vrot.slane %v9810, 4
        %v9813 = vshll.u32 %v9446, 16
        %v9815 = vrot.slane %v9813, 5
        %v9816 = vor.u32 %v9812, %v9815
        %v9817 = vrot.slane %v9816, 4
        %v9819 = vshll.u32 %v9447, 16
        %v9821 = vrot.slane %v9819, 5
        %v9822 = vsel %vm256, %v9817, %v9821
        %v9823 = vshrl.u32 %v9447, 16
        %v9825 = vrot.slane %v9823, 4
        %v9826 = vor.u32 %v9825, %v9821
        %v9827 = vrot.slane %v9826, 4
        %v9829 = vshll.u32 %v9448, 16
        %v9831 = vrot.slane %v9829, 5
        %v9832 = vsel %vm256, %v9827, %v9831
        %s9833 = scalar_lea.vmem %s2, 28
        %v9834 = vld [vmem:[%s9833] sm:$0xf]
        %v9835 = vunpack.c.l.b16 %v9462
        %v9836 = vunpack.c.l.b16 %v9472
        %v9837 = vunpack.c.l.b16 %v9486
        %v9838 = vunpack.c.l.b16 %v9496
        %v9839 = vunpack.c.l.b16 %v9510
        %v9840 = vunpack.c.l.b16 %v9520
        %v9841 = vunpack.c.l.b16 %v9534
        %v9842 = vunpack.c.l.b16 %v9544
        %v9843 = vunpack.c.l.b16 %v9558
        %v9844 = vunpack.c.l.b16 %v9568
        %v9845 = vunpack.c.l.b16 %v9582
        %v9846 = vunpack.c.l.b16 %v9592
        %v9847 = vunpack.c.l.b16 %v9606
        %v9848 = vunpack.c.l.b16 %v9616
        %v9849 = vunpack.c.l.b16 %v9630
        %v9850 = vunpack.c.l.b16 %v9640
        %v9851 = vunpack.c.l.b16 %v9654
        %v9852 = vunpack.c.l.b16 %v9664
        %v9853 = vunpack.c.l.b16 %v9678
        %v9854 = vunpack.c.l.b16 %v9688
        %v9855 = vunpack.c.l.b16 %v9702
        %v9856 = vunpack.c.l.b16 %v9712
        %v9857 = vunpack.c.l.b16 %v9726
        %v9858 = vunpack.c.l.b16 %v9736
        %v9859 = vunpack.c.l.b16 %v9750
        %v9860 = vunpack.c.l.b16 %v9760
        %v9861 = vunpack.c.l.b16 %v9774
        %v9862 = vunpack.c.l.b16 %v9784
        %v9863 = vunpack.c.l.b16 %v9798
        %v9864 = vunpack.c.l.b16 %v9808
        %v9865 = vunpack.c.l.b16 %v9822
        %v9866 = vunpack.c.l.b16 %v9832
        %v9867 = vpack.c.b16 %v9836, %v9835
        %v9868 = vpack.c.b16 %v9838, %v9837
        %v9869 = vpack.c.b16 %v9840, %v9839
        %v9870 = vpack.c.b16 %v9842, %v9841
        %v9871 = vpack.c.b16 %v9844, %v9843
        %v9872 = vpack.c.b16 %v9846, %v9845
        %v9873 = vpack.c.b16 %v9848, %v9847
        %v9874 = vpack.c.b16 %v9850, %v9849
        %v9875 = vpack.c.b16 %v9852, %v9851
        %v9876 = vpack.c.b16 %v9854, %v9853
        %v9877 = vpack.c.b16 %v9856, %v9855
        %v9878 = vpack.c.b16 %v9858, %v9857
        %v9879 = vpack.c.b16 %v9860, %v9859
        %v9880 = vpack.c.b16 %v9862, %v9861
        %v9881 = vpack.c.b16 %v9864, %v9863
        %v9882 = vpack.c.b16 %v9866, %v9865
        %v9884 = vsel %vm6527, %v9867, 0
        %v9887 = vsel %vm6527, %v9868, 0
        %v9890 = vsel %vm6527, %v9869, 0
        %v9893 = vsel %vm6527, %v9870, 0
        %v9896 = vsel %vm6527, %v9871, 0
        %v9899 = vsel %vm6527, %v9872, 0
        %v9902 = vsel %vm6527, %v9873, 0
        %v9905 = vsel %vm6527, %v9874, 0
        %v9908 = vsel %vm6527, %v9875, 0
        %v9911 = vsel %vm6527, %v9876, 0
        %v9914 = vsel %vm6527, %v9877, 0
        %v9917 = vsel %vm6527, %v9878, 0
        %v9920 = vsel %vm6527, %v9879, 0
        %v9923 = vsel %vm6527, %v9880, 0
        %v9926 = vsel %vm6527, %v9881, 0
        %v9929 = vsel %vm6527, %v9882, 0
        %v9932 = vsel %vm6576, %v9834, 0
        %9934 = vmatprep.subr.bf16.mxu0 0
        %9935 = vmatpush1.bf16.msra.mxu0 %v9932
        %9936 = vmatprep.subr.bf16.mxu0 0
        %9937 = vmatpush1.bf16.msra.mxu0 0
        %9938 = vmatprep.subr.bf16.mxu0 0
        %9939 = vmatpush1.bf16.msra.mxu0 0
        %9940 = vmatprep.subr.bf16.mxu0 0
        %9941 = vmatpush1.bf16.msra.mxu0 0
        %9942 = vmatprep.subr.bf16.mxu0 0
        %9943 = vmatpush1.bf16.msra.mxu0 0
        %9944 = vmatprep.subr.bf16.mxu0 0
        %9945 = vmatpush1.bf16.msra.mxu0 0
        %9946 = vmatprep.subr.bf16.mxu0 0
        %9947 = vmatpush1.bf16.msra.mxu0 0
        %9948 = vmatprep.subr.bf16.mxu0 0
        %9949 = vmatpush1.bf16.msra.mxu0 0
        %9950 = vmatprep.subr.bf16.mxu0 0
        %9951 = vmatpush1.bf16.msra.mxu0 0
        %9952 = vmatprep.subr.bf16.mxu0 0
        %9953 = vmatpush1.bf16.msra.mxu0 0
        %9954 = vmatprep.subr.bf16.mxu0 0
        %9955 = vmatpush1.bf16.msra.mxu0 0
        %9956 = vmatprep.subr.bf16.mxu0 0
        %9957 = vmatpush1.bf16.msra.mxu0 0
        %9958 = vmatprep.subr.bf16.mxu0 0
        %9959 = vmatpush1.bf16.msra.mxu0 0
        %9960 = vmatprep.subr.bf16.mxu0 0
        %9961 = vmatpush1.bf16.msra.mxu0 0
        %9962 = vmatprep.subr.bf16.mxu0 0
        %9963 = vmatpush1.bf16.msra.mxu0 0
        %9964 = vmatprep.subr.bf16.mxu0 0
        %9965 = vmatpush1.bf16.msra.mxu0 0
        %9966 = vmatprep.mubr.bf16.mxu0 0
        %9967 = vmatmul.mubr.bf16.gmra.mrb[0].mxu0 %v9884
        %v9968 = vpop.f32.mrb[0].mxu0
        %v9969 = vadd.f32 0.0, %v9968
        %v9970 = vpop.f32.mrb[0].mxu0
        %v9971 = vpop.f32.mrb[0].mxu0
        %v9972 = vadd.f32 0.0, %v9971
        %v9973 = vpop.f32.mrb[0].mxu0
        %9974 = vmatprep.mubr.bf16.mxu0 0
        %9975 = vmatmul.mubr.bf16.gmra.mrb[0].mxu0 %v9887
        %v9976 = vpop.f32.mrb[0].mxu0
        %v9977 = vadd.f32 0.0, %v9976
        %v9978 = vpop.f32.mrb[0].mxu0
        %v9979 = vpop.f32.mrb[0].mxu0
        %v9980 = vadd.f32 0.0, %v9979
        %v9981 = vpop.f32.mrb[0].mxu0
        %9982 = vmatprep.mubr.bf16.mxu0 0
        %9983 = vmatmul.mubr.bf16.gmra.mrb[0].mxu0 %v9890
        %v9984 = vpop.f32.mrb[0].mxu0
        %v9985 = vadd.f32 0.0, %v9984
        %v9986 = vpop.f32.mrb[0].mxu0
        %v9987 = vpop.f32.mrb[0].mxu0
        %v9988 = vadd.f32 0.0, %v9987
        %v9989 = vpop.f32.mrb[0].mxu0
        %9990 = vmatprep.mubr.bf16.mxu0 0
        %9991 = vmatmul.mubr.bf16.gmra.mrb[0].mxu0 %v9893
        %v9992 = vpop.f32.mrb[0].mxu0
        %v9993 = vadd.f32 0.0, %v9992
        %v9994 = vpop.f32.mrb[0].mxu0
        %v9995 = vpop.f32.mrb[0].mxu0
        %v9996 = vadd.f32 0.0, %v9995
        %v9997 = vpop.f32.mrb[0].mxu0
        %9998 = vmatprep.mubr.bf16.mxu0 0
        %9999 = vmatmul.mubr.bf16.gmra.mrb[0].mxu0 %v9896
        %v10000 = vpop.f32.mrb[0].mxu0
        %v10001 = vadd.f32 0.0, %v10000
        %v10002 = vpop.f32.mrb[0].mxu0
        %v10003 = vpop.f32.mrb[0].mxu0
        %v10004 = vadd.f32 0.0, %v10003
        %v10005 = vpop.f32.mrb[0].mxu0
        %10006 = vmatprep.mubr.bf16.mxu0 0
        %10007 = vmatmul.mubr.bf16.gmra.mrb[0].mxu0 %v9899
        %v10008 = vpop.f32.mrb[0].mxu0
        %v10009 = vadd.f32 0.0, %v10008
        %v10010 = vpop.f32.mrb[0].mxu0
        %v10011 = vpop.f32.mrb[0].mxu0
        %v10012 = vadd.f32 0.0, %v10011
        %v10013 = vpop.f32.mrb[0].mxu0
        %10014 = vmatprep.mubr.bf16.mxu0 0
        %10015 = vmatmul.mubr.bf16.gmra.mrb[0].mxu0 %v9902
        %v10016 = vpop.f32.mrb[0].mxu0
        %v10017 = vadd.f32 0.0, %v10016
        %v10018 = vpop.f32.mrb[0].mxu0
        %v10019 = vpop.f32.mrb[0].mxu0
        %v10020 = vadd.f32 0.0, %v10019
        %v10021 = vpop.f32.mrb[0].mxu0
        %10022 = vmatprep.mubr.bf16.mxu0 0
        %10023 = vmatmul.mubr.bf16.gmra.mrb[0].mxu0 %v9905
        %v10024 = vpop.f32.mrb[0].mxu0
        %v10025 = vadd.f32 0.0, %v10024
        %v10026 = vpop.f32.mrb[0].mxu0
        %v10027 = vpop.f32.mrb[0].mxu0
        %v10028 = vadd.f32 0.0, %v10027
        %v10029 = vpop.f32.mrb[0].mxu0
        %10030 = vmatprep.mubr.bf16.mxu0 0
        %10031 = vmatmul.mubr.bf16.gmra.mrb[0].mxu0 %v9908
        %v10032 = vpop.f32.mrb[0].mxu0
        %v10033 = vadd.f32 0.0, %v10032
        %v10034 = vpop.f32.mrb[0].mxu0
        %v10035 = vpop.f32.mrb[0].mxu0
        %v10036 = vadd.f32 0.0, %v10035
        %v10037 = vpop.f32.mrb[0].mxu0
        %10038 = vmatprep.mubr.bf16.mxu0 0
        %10039 = vmatmul.mubr.bf16.gmra.mrb[0].mxu0 %v9911
        %v10040 = vpop.f32.mrb[0].mxu0
        %v10041 = vadd.f32 0.0, %v10040
        %v10042 = vpop.f32.mrb[0].mxu0
        %v10043 = vpop.f32.mrb[0].mxu0
        %v10044 = vadd.f32 0.0, %v10043
        %v10045 = vpop.f32.mrb[0].mxu0
        %10046 = vmatprep.mubr.bf16.mxu0 0
        %10047 = vmatmul.mubr.bf16.gmra.mrb[0].mxu0 %v9914
        %v10048 = vpop.f32.mrb[0].mxu0
        %v10049 = vadd.f32 0.0, %v10048
        %v10050 = vpop.f32.mrb[0].mxu0
        %v10051 = vpop.f32.mrb[0].mxu0
        %v10052 = vadd.f32 0.0, %v10051
        %v10053 = vpop.f32.mrb[0].mxu0
        %10054 = vmatprep.mubr.bf16.mxu0 0
        %10055 = vmatmul.mubr.bf16.gmra.mrb[0].mxu0 %v9917
        %v10056 = vpop.f32.mrb[0].mxu0
        %v10057 = vadd.f32 0.0, %v10056
        %v10058 = vpop.f32.mrb[0].mxu0
        %v10059 = vpop.f32.mrb[0].mxu0
        %v10060 = vadd.f32 0.0, %v10059
        %v10061 = vpop.f32.mrb[0].mxu0
        %10062 = vmatprep.mubr.bf16.mxu0 0
        %10063 = vmatmul.mubr.bf16.gmra.mrb[0].mxu0 %v9920
        %v10064 = vpop.f32.mrb[0].mxu0
        %v10065 = vadd.f32 0.0, %v10064
        %v10066 = vpop.f32.mrb[0].mxu0
        %v10067 = vpop.f32.mrb[0].mxu0
        %v10068 = vadd.f32 0.0, %v10067
        %v10069 = vpop.f32.mrb[0].mxu0
        %10070 = vmatprep.mubr.bf16.mxu0 0
        %10071 = vmatmul.mubr.bf16.gmra.mrb[0].mxu0 %v9923
        %v10072 = vpop.f32.mrb[0].mxu0
        %v10073 = vadd.f32 0.0, %v10072
        %v10074 = vpop.f32.mrb[0].mxu0
        %v10075 = vpop.f32.mrb[0].mxu0
        %v10076 = vadd.f32 0.0, %v10075
        %v10077 = vpop.f32.mrb[0].mxu0
        %10078 = vmatprep.mubr.bf16.mxu0 0
        %10079 = vmatmul.mubr.bf16.gmra.mrb[0].mxu0 %v9926
        %v10080 = vpop.f32.mrb[0].mxu0
        %v10081 = vadd.f32 0.0, %v10080
        %v10082 = vpop.f32.mrb[0].mxu0
        %v10083 = vpop.f32.mrb[0].mxu0
        %v10084 = vadd.f32 0.0, %v10083
        %v10085 = vpop.f32.mrb[0].mxu0
        %10086 = vmatprep.mubr.bf16.mxu0 0
        %10087 = vmatmul.mubr.bf16.gmra.mrb[0].mxu0 %v9929
        %v10088 = vpop.f32.mrb[0].mxu0
        %v10089 = vadd.f32 0.0, %v10088
        %v10090 = vpop.f32.mrb[0].mxu0
        %v10091 = vpop.f32.mrb[0].mxu0
        %v10092 = vadd.f32 0.0, %v10091
        %v10093 = vpop.f32.mrb[0].mxu0
        %10094 = vdwg.mxu0
        %v10095 = vadd.f32 %v9369, %v9969
        %v10096 = vadd.f32 %v9370, %v9972
        %v10097 = vadd.f32 %v9371, %v9977
        %v10098 = vadd.f32 %v9372, %v9980
        %v10099 = vadd.f32 %v9373, %v9985
        %v10100 = vadd.f32 %v9374, %v9988
        %v10101 = vadd.f32 %v9375, %v9993
        %v10102 = vadd.f32 %v9376, %v9996
        %v10103 = vadd.f32 %v9377, %v10001
        %v10104 = vadd.f32 %v9378, %v10004
        %v10105 = vadd.f32 %v9379, %v10009
        %v10106 = vadd.f32 %v9380, %v10012
        %v10107 = vadd.f32 %v9381, %v10017
        %v10108 = vadd.f32 %v9382, %v10020
        %v10109 = vadd.f32 %v9383, %v10025
        %v10110 = vadd.f32 %v9384, %v10028
        %v10111 = vadd.f32 %v9385, %v10033
        %v10112 = vadd.f32 %v9386, %v10036
        %v10113 = vadd.f32 %v9387, %v10041
        %v10114 = vadd.f32 %v9388, %v10044
        %v10115 = vadd.f32 %v9389, %v10049
        %v10116 = vadd.f32 %v9390, %v10052
        %v10117 = vadd.f32 %v9391, %v10057
        %v10118 = vadd.f32 %v9392, %v10060
        %v10119 = vadd.f32 %v9393, %v10065
        %v10120 = vadd.f32 %v9394, %v10068
        %v10121 = vadd.f32 %v9395, %v10073
        %v10122 = vadd.f32 %v9396, %v10076
        %v10123 = vadd.f32 %v9397, %v10081
        %v10124 = vadd.f32 %v9398, %v10084
        %v10125 = vadd.f32 %v9399, %v10089
        %v10126 = vadd.f32 %v9400, %v10092
        %v10127 = vld [vmem:[%s9042] sm:$0xe]
        %v10128 = vld [vmem:[%s9042 + $0xc] sm:$0xe]
        %v10129 = vld [vmem:[%s9042 + $0x18] sm:$0xe]
        %v10130 = vld [vmem:[%s9042 + $0x24] sm:$0xe]
        %v10131 = vld [vmem:[%s9042 + $0x30] sm:$0xe]
        %v10132 = vld [vmem:[%s9042 + $0x3c] sm:$0xe]
        %v10133 = vld [vmem:[%s9042 + $0x48] sm:$0xe]
        %v10134 = vld [vmem:[%s9042 + $0x54] sm:$0xe]
        %v10135 = vld [vmem:[%s9042 + $0x60] sm:$0xe]
        %v10136 = vld [vmem:[%s9042 + $0x6c] sm:$0xe]
        %v10137 = vld [vmem:[%s9042 + $0x78] sm:$0xe]
        %v10138 = vld [vmem:[%s9042 + $0x84] sm:$0xe]
        %v10139 = vld [vmem:[%s9042 + $0x90] sm:$0xe]
        %v10140 = vld [vmem:[%s9042 + $0x9c] sm:$0xe]
        %v10141 = vld [vmem:[%s9042 + $0xa8] sm:$0xe]
        %v10142 = vld [vmem:[%s9042 + $0xb4] sm:$0xe]
        %v10191 = vrot.slane %v10127, 5
        %v10192 = vrot.slane %v10191, 4
        %v10193 = vrot.slane %v9402, 5
        %v10194 = vsel %vm1361, %v10192, %v10193
        %v10195 = vrot.slane %v10193, 4
        %v10196 = vrot.slane %v9403, 5
        %v10197 = vsel %vm1361, %v10195, %v10196
        %v10198 = vrot.slane %v10128, 5
        %v10199 = vrot.slane %v10198, 4
        %v10200 = vrot.slane %v9405, 5
        %v10201 = vsel %vm1361, %v10199, %v10200
        %v10202 = vrot.slane %v10200, 4
        %v10203 = vrot.slane %v9406, 5
        %v10204 = vsel %vm1361, %v10202, %v10203
        %v10205 = vrot.slane %v10129, 5
        %v10206 = vrot.slane %v10205, 4
        %v10207 = vrot.slane %v9408, 5
        %v10208 = vsel %vm1361, %v10206, %v10207
        %v10209 = vrot.slane %v10207, 4
        %v10210 = vrot.slane %v9409, 5
        %v10211 = vsel %vm1361, %v10209, %v10210
        %v10212 = vrot.slane %v10130, 5
        %v10213 = vrot.slane %v10212, 4
        %v10214 = vrot.slane %v9411, 5
        %v10215 = vsel %vm1361, %v10213, %v10214
        %v10216 = vrot.slane %v10214, 4
        %v10217 = vrot.slane %v9412, 5
        %v10218 = vsel %vm1361, %v10216, %v10217
        %v10219 = vrot.slane %v10131, 5
        %v10220 = vrot.slane %v10219, 4
        %v10221 = vrot.slane %v9414, 5
        %v10222 = vsel %vm1361, %v10220, %v10221
        %v10223 = vrot.slane %v10221, 4
        %v10224 = vrot.slane %v9415, 5
        %v10225 = vsel %vm1361, %v10223, %v10224
        %v10226 = vrot.slane %v10132, 5
        %v10227 = vrot.slane %v10226, 4
        %v10228 = vrot.slane %v9417, 5
        %v10229 = vsel %vm1361, %v10227, %v10228
        %v10230 = vrot.slane %v10228, 4
        %v10231 = vrot.slane %v9418, 5
        %v10232 = vsel %vm1361, %v10230, %v10231
        %v10233 = vrot.slane %v10133, 5
        %v10234 = vrot.slane %v10233, 4
        %v10235 = vrot.slane %v9420, 5
        %v10236 = vsel %vm1361, %v10234, %v10235
        %v10237 = vrot.slane %v10235, 4
        %v10238 = vrot.slane %v9421, 5
        %v10239 = vsel %vm1361, %v10237, %v10238
        %v10240 = vrot.slane %v10134, 5
        %v10241 = vrot.slane %v10240, 4
        %v10242 = vrot.slane %v9423, 5
        %v10243 = vsel %vm1361, %v10241, %v10242
        %v10244 = vrot.slane %v10242, 4
        %v10245 = vrot.slane %v9424, 5
        %v10246 = vsel %vm1361, %v10244, %v10245
        %v10247 = vrot.slane %v10135, 5
        %v10248 = vrot.slane %v10247, 4
        %v10249 = vrot.slane %v9426, 5
        %v10250 = vsel %vm1361, %v10248, %v10249
        %v10251 = vrot.slane %v10249, 4
        %v10252 = vrot.slane %v9427, 5
        %v10253 = vsel %vm1361, %v10251, %v10252
        %v10254 = vrot.slane %v10136, 5
        %v10255 = vrot.slane %v10254, 4
        %v10256 = vrot.slane %v9429, 5
        %v10257 = vsel %vm1361, %v10255, %v10256
        %v10258 = vrot.slane %v10256, 4
        %v10259 = vrot.slane %v9430, 5
        %v10260 = vsel %vm1361, %v10258, %v10259
        %v10261 = vrot.slane %v10137, 5
        %v10262 = vrot.slane %v10261, 4
        %v10263 = vrot.slane %v9432, 5
        %v10264 = vsel %vm1361, %v10262, %v10263
        %v10265 = vrot.slane %v10263, 4
        %v10266 = vrot.slane %v9433, 5
        %v10267 = vsel %vm1361, %v10265, %v10266
        %v10268 = vrot.slane %v10138, 5
        %v10269 = vrot.slane %v10268, 4
        %v10270 = vrot.slane %v9435, 5
        %v10271 = vsel %vm1361, %v10269, %v10270
        %v10272 = vrot.slane %v10270, 4
        %v10273 = vrot.slane %v9436, 5
        %v10274 = vsel %vm1361, %v10272, %v10273
        %v10275 = vrot.slane %v10139, 5
        %v10276 = vrot.slane %v10275, 4
        %v10277 = vrot.slane %v9438, 5
        %v10278 = vsel %vm1361, %v10276, %v10277
        %v10279 = vrot.slane %v10277, 4
        %v10280 = vrot.slane %v9439, 5
        %v10281 = vsel %vm1361, %v10279, %v10280
        %v10282 = vrot.slane %v10140, 5
        %v10283 = vrot.slane %v10282, 4
        %v10284 = vrot.slane %v9441, 5
        %v10285 = vsel %vm1361, %v10283, %v10284
        %v10286 = vrot.slane %v10284, 4
        %v10287 = vrot.slane %v9442, 5
        %v10288 = vsel %vm1361, %v10286, %v10287
        %v10289 = vrot.slane %v10141, 5
        %v10290 = vrot.slane %v10289, 4
        %v10291 = vrot.slane %v9444, 5
        %v10292 = vsel %vm1361, %v10290, %v10291
        %v10293 = vrot.slane %v10291, 4
        %v10294 = vrot.slane %v9445, 5
        %v10295 = vsel %vm1361, %v10293, %v10294
        %v10296 = vrot.slane %v10142, 5
        %v10297 = vrot.slane %v10296, 4
        %v10298 = vrot.slane %v9447, 5
        %v10299 = vsel %vm1361, %v10297, %v10298
        %v10300 = vrot.slane %v10298, 4
        %v10301 = vrot.slane %v9448, 5
        %v10302 = vsel %vm1361, %v10300, %v10301
        %s10303 = scalar_lea.vmem %s2, 32
        %v10304 = vld [vmem:[%s10303] sm:$0xf]
        %v10305 = vunpack.c.l.b16 %v10194
        %v10306 = vunpack.c.l.b16 %v10197
        %v10307 = vunpack.c.l.b16 %v10201
        %v10308 = vunpack.c.l.b16 %v10204
        %v10309 = vunpack.c.l.b16 %v10208
        %v10310 = vunpack.c.l.b16 %v10211
        %v10311 = vunpack.c.l.b16 %v10215
        %v10312 = vunpack.c.l.b16 %v10218
        %v10313 = vunpack.c.l.b16 %v10222
        %v10314 = vunpack.c.l.b16 %v10225
        %v10315 = vunpack.c.l.b16 %v10229
        %v10316 = vunpack.c.l.b16 %v10232
        %v10317 = vunpack.c.l.b16 %v10236
        %v10318 = vunpack.c.l.b16 %v10239
        %v10319 = vunpack.c.l.b16 %v10243
        %v10320 = vunpack.c.l.b16 %v10246
        %v10321 = vunpack.c.l.b16 %v10250
        %v10322 = vunpack.c.l.b16 %v10253
        %v10323 = vunpack.c.l.b16 %v10257
        %v10324 = vunpack.c.l.b16 %v10260
        %v10325 = vunpack.c.l.b16 %v10264
        %v10326 = vunpack.c.l.b16 %v10267
        %v10327 = vunpack.c.l.b16 %v10271
        %v10328 = vunpack.c.l.b16 %v10274
        %v10329 = vunpack.c.l.b16 %v10278
        %v10330 = vunpack.c.l.b16 %v10281
        %v10331 = vunpack.c.l.b16 %v10285
        %v10332 = vunpack.c.l.b16 %v10288
        %v10333 = vunpack.c.l.b16 %v10292
        %v10334 = vunpack.c.l.b16 %v10295
        %v10335 = vunpack.c.l.b16 %v10299
        %v10336 = vunpack.c.l.b16 %v10302
        %v10337 = vpack.c.b16 %v10306, %v10305
        %v10338 = vpack.c.b16 %v10308, %v10307
        %v10339 = vpack.c.b16 %v10310, %v10309
        %v10340 = vpack.c.b16 %v10312, %v10311
        %v10341 = vpack.c.b16 %v10314, %v10313
        %v10342 = vpack.c.b16 %v10316, %v10315
        %v10343 = vpack.c.b16 %v10318, %v10317
        %v10344 = vpack.c.b16 %v10320, %v10319
        %v10345 = vpack.c.b16 %v10322, %v10321
        %v10346 = vpack.c.b16 %v10324, %v10323
        %v10347 = vpack.c.b16 %v10326, %v10325
        %v10348 = vpack.c.b16 %v10328, %v10327
        %v10349 = vpack.c.b16 %v10330, %v10329
        %v10350 = vpack.c.b16 %v10332, %v10331
        %v10351 = vpack.c.b16 %v10334, %v10333
        %v10352 = vpack.c.b16 %v10336, %v10335
        %v10354 = vsel %vm6527, %v10337, 0
        %v10357 = vsel %vm6527, %v10338, 0
        %v10360 = vsel %vm6527, %v10339, 0
        %v10363 = vsel %vm6527, %v10340, 0
        %v10366 = vsel %vm6527, %v10341, 0
        %v10369 = vsel %vm6527, %v10342, 0
        %v10372 = vsel %vm6527, %v10343, 0
        %v10375 = vsel %vm6527, %v10344, 0
        %v10378 = vsel %vm6527, %v10345, 0
        %v10381 = vsel %vm6527, %v10346, 0
        %v10384 = vsel %vm6527, %v10347, 0
        %v10387 = vsel %vm6527, %v10348, 0
        %v10390 = vsel %vm6527, %v10349, 0
        %v10393 = vsel %vm6527, %v10350, 0
        %v10396 = vsel %vm6527, %v10351, 0
        %v10399 = vsel %vm6527, %v10352, 0
        %v10402 = vsel %vm6576, %v10304, 0
        %10404 = vmatprep.subr.bf16.mxu0 0
        %10405 = vmatpush1.bf16.msra.mxu0 %v10402
        %10406 = vmatprep.subr.bf16.mxu0 0
        %10407 = vmatpush1.bf16.msra.mxu0 0
        %10408 = vmatprep.subr.bf16.mxu0 0
        %10409 = vmatpush1.bf16.msra.mxu0 0
        %10410 = vmatprep.subr.bf16.mxu0 0
        %10411 = vmatpush1.bf16.msra.mxu0 0
        %10412 = vmatprep.subr.bf16.mxu0 0
        %10413 = vmatpush1.bf16.msra.mxu0 0
        %10414 = vmatprep.subr.bf16.mxu0 0
        %10415 = vmatpush1.bf16.msra.mxu0 0
        %10416 = vmatprep.subr.bf16.mxu0 0
        %10417 = vmatpush1.bf16.msra.mxu0 0
        %10418 = vmatprep.subr.bf16.mxu0 0
        %10419 = vmatpush1.bf16.msra.mxu0 0
        %10420 = vmatprep.subr.bf16.mxu0 0
        %10421 = vmatpush1.bf16.msra.mxu0 0
        %10422 = vmatprep.subr.bf16.mxu0 0
        %10423 = vmatpush1.bf16.msra.mxu0 0
        %10424 = vmatprep.subr.bf16.mxu0 0
        %10425 = vmatpush1.bf16.msra.mxu0 0
        %10426 = vmatprep.subr.bf16.mxu0 0
        %10427 = vmatpush1.bf16.msra.mxu0 0
        %10428 = vmatprep.subr.bf16.mxu0 0
        %10429 = vmatpush1.bf16.msra.mxu0 0
        %10430 = vmatprep.subr.bf16.mxu0 0
        %10431 = vmatpush1.bf16.msra.mxu0 0
        %10432 = vmatprep.subr.bf16.mxu0 0
        %10433 = vmatpush1.bf16.msra.mxu0 0
        %10434 = vmatprep.subr.bf16.mxu0 0
        %10435 = vmatpush1.bf16.msra.mxu0 0
        %10436 = vmatprep.mubr.bf16.mxu0 0
        %10437 = vmatmul.mubr.bf16.gmra.mrb[0].mxu0 %v10354
        %v10438 = vpop.f32.mrb[0].mxu0
        %v10439 = vadd.f32 0.0, %v10438
        %v10440 = vpop.f32.mrb[0].mxu0
        %v10441 = vpop.f32.mrb[0].mxu0
        %v10442 = vadd.f32 0.0, %v10441
        %v10443 = vpop.f32.mrb[0].mxu0
        %10444 = vmatprep.mubr.bf16.mxu0 0
        %10445 = vmatmul.mubr.bf16.gmra.mrb[0].mxu0 %v10357
        %v10446 = vpop.f32.mrb[0].mxu0
        %v10447 = vadd.f32 0.0, %v10446
        %v10448 = vpop.f32.mrb[0].mxu0
        %v10449 = vpop.f32.mrb[0].mxu0
        %v10450 = vadd.f32 0.0, %v10449
        %v10451 = vpop.f32.mrb[0].mxu0
        %10452 = vmatprep.mubr.bf16.mxu0 0
        %10453 = vmatmul.mubr.bf16.gmra.mrb[0].mxu0 %v10360
        %v10454 = vpop.f32.mrb[0].mxu0
        %v10455 = vadd.f32 0.0, %v10454
        %v10456 = vpop.f32.mrb[0].mxu0
        %v10457 = vpop.f32.mrb[0].mxu0
        %v10458 = vadd.f32 0.0, %v10457
        %v10459 = vpop.f32.mrb[0].mxu0
        %10460 = vmatprep.mubr.bf16.mxu0 0
        %10461 = vmatmul.mubr.bf16.gmra.mrb[0].mxu0 %v10363
        %v10462 = vpop.f32.mrb[0].mxu0
        %v10463 = vadd.f32 0.0, %v10462
        %v10464 = vpop.f32.mrb[0].mxu0
        %v10465 = vpop.f32.mrb[0].mxu0
        %v10466 = vadd.f32 0.0, %v10465
        %v10467 = vpop.f32.mrb[0].mxu0
        %10468 = vmatprep.mubr.bf16.mxu0 0
        %10469 = vmatmul.mubr.bf16.gmra.mrb[0].mxu0 %v10366
        %v10470 = vpop.f32.mrb[0].mxu0
        %v10471 = vadd.f32 0.0, %v10470
        %v10472 = vpop.f32.mrb[0].mxu0
        %v10473 = vpop.f32.mrb[0].mxu0
        %v10474 = vadd.f32 0.0, %v10473
        %v10475 = vpop.f32.mrb[0].mxu0
        %10476 = vmatprep.mubr.bf16.mxu0 0
        %10477 = vmatmul.mubr.bf16.gmra.mrb[0].mxu0 %v10369
        %v10478 = vpop.f32.mrb[0].mxu0
        %v10479 = vadd.f32 0.0, %v10478
        %v10480 = vpop.f32.mrb[0].mxu0
        %v10481 = vpop.f32.mrb[0].mxu0
        %v10482 = vadd.f32 0.0, %v10481
        %v10483 = vpop.f32.mrb[0].mxu0
        %10484 = vmatprep.mubr.bf16.mxu0 0
        %10485 = vmatmul.mubr.bf16.gmra.mrb[0].mxu0 %v10372
        %v10486 = vpop.f32.mrb[0].mxu0
        %v10487 = vadd.f32 0.0, %v10486
        %v10488 = vpop.f32.mrb[0].mxu0
        %v10489 = vpop.f32.mrb[0].mxu0
        %v10490 = vadd.f32 0.0, %v10489
        %v10491 = vpop.f32.mrb[0].mxu0
        %10492 = vmatprep.mubr.bf16.mxu0 0
        %10493 = vmatmul.mubr.bf16.gmra.mrb[0].mxu0 %v10375
        %v10494 = vpop.f32.mrb[0].mxu0
        %v10495 = vadd.f32 0.0, %v10494
        %v10496 = vpop.f32.mrb[0].mxu0
        %v10497 = vpop.f32.mrb[0].mxu0
        %v10498 = vadd.f32 0.0, %v10497
        %v10499 = vpop.f32.mrb[0].mxu0
        %10500 = vmatprep.mubr.bf16.mxu0 0
        %10501 = vmatmul.mubr.bf16.gmra.mrb[0].mxu0 %v10378
        %v10502 = vpop.f32.mrb[0].mxu0
        %v10503 = vadd.f32 0.0, %v10502
        %v10504 = vpop.f32.mrb[0].mxu0
        %v10505 = vpop.f32.mrb[0].mxu0
        %v10506 = vadd.f32 0.0, %v10505
        %v10507 = vpop.f32.mrb[0].mxu0
        %10508 = vmatprep.mubr.bf16.mxu0 0
        %10509 = vmatmul.mubr.bf16.gmra.mrb[0].mxu0 %v10381
        %v10510 = vpop.f32.mrb[0].mxu0
        %v10511 = vadd.f32 0.0, %v10510
        %v10512 = vpop.f32.mrb[0].mxu0
        %v10513 = vpop.f32.mrb[0].mxu0
        %v10514 = vadd.f32 0.0, %v10513
        %v10515 = vpop.f32.mrb[0].mxu0
        %10516 = vmatprep.mubr.bf16.mxu0 0
        %10517 = vmatmul.mubr.bf16.gmra.mrb[0].mxu0 %v10384
        %v10518 = vpop.f32.mrb[0].mxu0
        %v10519 = vadd.f32 0.0, %v10518
        %v10520 = vpop.f32.mrb[0].mxu0
        %v10521 = vpop.f32.mrb[0].mxu0
        %v10522 = vadd.f32 0.0, %v10521
        %v10523 = vpop.f32.mrb[0].mxu0
        %10524 = vmatprep.mubr.bf16.mxu0 0
        %10525 = vmatmul.mubr.bf16.gmra.mrb[0].mxu0 %v10387
        %v10526 = vpop.f32.mrb[0].mxu0
        %v10527 = vadd.f32 0.0, %v10526
        %v10528 = vpop.f32.mrb[0].mxu0
        %v10529 = vpop.f32.mrb[0].mxu0
        %v10530 = vadd.f32 0.0, %v10529
        %v10531 = vpop.f32.mrb[0].mxu0
        %10532 = vmatprep.mubr.bf16.mxu0 0
        %10533 = vmatmul.mubr.bf16.gmra.mrb[0].mxu0 %v10390
        %v10534 = vpop.f32.mrb[0].mxu0
        %v10535 = vadd.f32 0.0, %v10534
        %v10536 = vpop.f32.mrb[0].mxu0
        %v10537 = vpop.f32.mrb[0].mxu0
        %v10538 = vadd.f32 0.0, %v10537
        %v10539 = vpop.f32.mrb[0].mxu0
        %10540 = vmatprep.mubr.bf16.mxu0 0
        %10541 = vmatmul.mubr.bf16.gmra.mrb[0].mxu0 %v10393
        %v10542 = vpop.f32.mrb[0].mxu0
        %v10543 = vadd.f32 0.0, %v10542
        %v10544 = vpop.f32.mrb[0].mxu0
        %v10545 = vpop.f32.mrb[0].mxu0
        %v10546 = vadd.f32 0.0, %v10545
        %v10547 = vpop.f32.mrb[0].mxu0
        %10548 = vmatprep.mubr.bf16.mxu0 0
        %10549 = vmatmul.mubr.bf16.gmra.mrb[0].mxu0 %v10396
        %v10550 = vpop.f32.mrb[0].mxu0
        %v10551 = vadd.f32 0.0, %v10550
        %v10552 = vpop.f32.mrb[0].mxu0
        %v10553 = vpop.f32.mrb[0].mxu0
        %v10554 = vadd.f32 0.0, %v10553
        %v10555 = vpop.f32.mrb[0].mxu0
        %10556 = vmatprep.mubr.bf16.mxu0 0
        %10557 = vmatmul.mubr.bf16.gmra.mrb[0].mxu0 %v10399
        %v10558 = vpop.f32.mrb[0].mxu0
        %v10559 = vadd.f32 0.0, %v10558
        %v10560 = vpop.f32.mrb[0].mxu0
        %v10561 = vpop.f32.mrb[0].mxu0
        %v10562 = vadd.f32 0.0, %v10561
        %v10563 = vpop.f32.mrb[0].mxu0
        %10564 = vdwg.mxu0
        %v10565 = vadd.f32 %v10095, %v10439
        %v10566 = vadd.f32 %v10096, %v10442
        %v10567 = vadd.f32 %v10097, %v10447
        %v10568 = vadd.f32 %v10098, %v10450
        %v10569 = vadd.f32 %v10099, %v10455
        %v10570 = vadd.f32 %v10100, %v10458
        %v10571 = vadd.f32 %v10101, %v10463
        %v10572 = vadd.f32 %v10102, %v10466
        %v10573 = vadd.f32 %v10103, %v10471
        %v10574 = vadd.f32 %v10104, %v10474
        %v10575 = vadd.f32 %v10105, %v10479
        %v10576 = vadd.f32 %v10106, %v10482
        %v10577 = vadd.f32 %v10107, %v10487
        %v10578 = vadd.f32 %v10108, %v10490
        %v10579 = vadd.f32 %v10109, %v10495
        %v10580 = vadd.f32 %v10110, %v10498
        %v10581 = vadd.f32 %v10111, %v10503
        %v10582 = vadd.f32 %v10112, %v10506
        %v10583 = vadd.f32 %v10113, %v10511
        %v10584 = vadd.f32 %v10114, %v10514
        %v10585 = vadd.f32 %v10115, %v10519
        %v10586 = vadd.f32 %v10116, %v10522
        %v10587 = vadd.f32 %v10117, %v10527
        %v10588 = vadd.f32 %v10118, %v10530
        %v10589 = vadd.f32 %v10119, %v10535
        %v10590 = vadd.f32 %v10120, %v10538
        %v10591 = vadd.f32 %v10121, %v10543
        %v10592 = vadd.f32 %v10122, %v10546
        %v10593 = vadd.f32 %v10123, %v10551
        %v10594 = vadd.f32 %v10124, %v10554
        %v10595 = vadd.f32 %v10125, %v10559
        %v10596 = vadd.f32 %v10126, %v10562
        %v10597 = vmax.f32 %v10565, 0.0
        %v10598 = vmax.f32 %v10566, 0.0
        %v10599 = vmax.f32 %v10567, 0.0
        %v10600 = vmax.f32 %v10568, 0.0
        %v10601 = vmax.f32 %v10569, 0.0
        %v10602 = vmax.f32 %v10570, 0.0
        %v10603 = vmax.f32 %v10571, 0.0
        %v10604 = vmax.f32 %v10572, 0.0
        %v10605 = vmax.f32 %v10573, 0.0
        %v10606 = vmax.f32 %v10574, 0.0
        %v10607 = vmax.f32 %v10575, 0.0
        %v10608 = vmax.f32 %v10576, 0.0
        %v10609 = vmax.f32 %v10577, 0.0
        %v10610 = vmax.f32 %v10578, 0.0
        %v10611 = vmax.f32 %v10579, 0.0
        %v10612 = vmax.f32 %v10580, 0.0
        %v10613 = vmax.f32 %v10581, 0.0
        %v10614 = vmax.f32 %v10582, 0.0
        %v10615 = vmax.f32 %v10583, 0.0
        %v10616 = vmax.f32 %v10584, 0.0
        %v10617 = vmax.f32 %v10585, 0.0
        %v10618 = vmax.f32 %v10586, 0.0
        %v10619 = vmax.f32 %v10587, 0.0
        %v10620 = vmax.f32 %v10588, 0.0
        %v10621 = vmax.f32 %v10589, 0.0
        %v10622 = vmax.f32 %v10590, 0.0
        %v10623 = vmax.f32 %v10591, 0.0
        %v10624 = vmax.f32 %v10592, 0.0
        %v10625 = vmax.f32 %v10593, 0.0
        %v10626 = vmax.f32 %v10594, 0.0
        %v10627 = vmax.f32 %v10595, 0.0
        %v10628 = vmax.f32 %v10596, 0.0
        %10629 = vxpose.xlu0.b32.start [1/16] %v10597, 128
        %10630 = vxpose.xlu0.b32.cont [2/16] %v10598, 128
        %10631 = vxpose.xlu0.b32.cont [3/16] %v10599, 128
        %10632 = vxpose.xlu0.b32.cont [4/16] %v10600, 128
        %10633 = vxpose.xlu0.b32.cont [5/16] %v10601, 128
        %10634 = vxpose.xlu0.b32.cont [6/16] %v10602, 128
        %10635 = vxpose.xlu0.b32.cont [7/16] %v10603, 128
        %10636 = vxpose.xlu0.b32.cont [8/16] %v10604, 128
        %10637 = vxpose.xlu0.b32.cont [9/16] %v10605, 128
        %10638 = vxpose.xlu0.b32.cont [10/16] %v10606, 128
        %10639 = vxpose.xlu0.b32.cont [11/16] %v10607, 128
        %10640 = vxpose.xlu0.b32.cont [12/16] %v10608, 128
        %10641 = vxpose.xlu0.b32.cont [13/16] %v10609, 128
        %10642 = vxpose.xlu0.b32.cont [14/16] %v10610, 128
        %10643 = vxpose.xlu0.b32.cont [15/16] %v10611, 128
        %10644 = vxpose.xlu0.b32.end [16/16] %v10612, 128
        %v10645 = vpop.trf.xlu0
        %v10646 = vpop.trf.xlu0
        %v10647 = vpop.trf.xlu0
        %v10648 = vpop.trf.xlu0
        %v10649 = vpop.trf.xlu0
        %v10650 = vpop.trf.xlu0
        %v10651 = vpop.trf.xlu0
        %v10652 = vpop.trf.xlu0
        %v10653 = vpop.trf.xlu0
        %v10654 = vpop.trf.xlu0
        %v10655 = vpop.trf.xlu0
        %v10656 = vpop.trf.xlu0
        %v10657 = vpop.trf.xlu0
        %v10658 = vpop.trf.xlu0
        %v10659 = vpop.trf.xlu0
        %v10660 = vpop.trf.xlu0
        %10661 = vxpose.xlu0.b32.start [1/16] %v10613, 128
        %10662 = vxpose.xlu0.b32.cont [2/16] %v10614, 128
        %10663 = vxpose.xlu0.b32.cont [3/16] %v10615, 128
        %10664 = vxpose.xlu0.b32.cont [4/16] %v10616, 128
        %10665 = vxpose.xlu0.b32.cont [5/16] %v10617, 128
        %10666 = vxpose.xlu0.b32.cont [6/16] %v10618, 128
        %10667 = vxpose.xlu0.b32.cont [7/16] %v10619, 128
        %10668 = vxpose.xlu0.b32.cont [8/16] %v10620, 128
        %10669 = vxpose.xlu0.b32.cont [9/16] %v10621, 128
        %10670 = vxpose.xlu0.b32.cont [10/16] %v10622, 128
        %10671 = vxpose.xlu0.b32.cont [11/16] %v10623, 128
        %10672 = vxpose.xlu0.b32.cont [12/16] %v10624, 128
        %10673 = vxpose.xlu0.b32.cont [13/16] %v10625, 128
        %10674 = vxpose.xlu0.b32.cont [14/16] %v10626, 128
        %10675 = vxpose.xlu0.b32.cont [15/16] %v10627, 128
        %10676 = vxpose.xlu0.b32.end [16/16] %v10628, 128
        %v10677 = vpop.trf.xlu0
        %v10678 = vpop.trf.xlu0
        %v10679 = vpop.trf.xlu0
        %v10680 = vpop.trf.xlu0
        %v10681 = vpop.trf.xlu0
        %v10682 = vpop.trf.xlu0
        %v10683 = vpop.trf.xlu0
        %v10684 = vpop.trf.xlu0
        %v10685 = vpop.trf.xlu0
        %v10686 = vpop.trf.xlu0
        %v10687 = vpop.trf.xlu0
        %v10688 = vpop.trf.xlu0
        %v10689 = vpop.trf.xlu0
        %v10690 = vpop.trf.xlu0
        %v10691 = vpop.trf.xlu0
        %v10692 = vpop.trf.xlu0
        %10693 = vst [vmem:[%s187] sm:$0xff] %v10645
        %10694 = vst [vmem:[%s187 + $0x8] sm:$0xff] %v10677
        %s10695 = sand.u32 %s109, 1
        %s10696 = scalar_lea.sflag [#allocation4], %s10695
        %s10697 = sand.u32 %s109, 1
        %s10698 = smul.addr %s10697, 16
        %s10699 = scalar_lea.vmem [#allocation3], %s10698
        // Predicated region
        $region37: #{tpu_custom_call.1} parent=31 // pred_check
          %p10700 = pneg %p119
        $region38: #{tpu_custom_call.1} parent=31 // pred_check_branch
          %10702 = sbr.rel (%p10700) target = $region40
        $region39: #{tpu_custom_call.1} parent=31 // pred_region
          %s10703 = smul.u32 2, %s22
          %s10705 = ssub.s32 256, 256
          %10706 = vsyncadd %s10696, %s10705
          %s10707 = smul.addr %s21, 2
          %s10708 = sadd.s32 %s10703, %s10707
          %s10709 = smul.addr %s10708, 128
          %s10710 = scalar_lea.hbm %s3, %s10709
          %s10712 = sshll.u32 %s10699, 4
          %s10713 = int_to_ptr.vmem [resolvable:$true] %s10712
          %10715 = dma.vmem_to_hbm [thread:$0]  %s10713, 256, %s10710, %s10696
        $region40: #{tpu_custom_call.1} parent=31 // pred_fallthru
          _
      $region32: #{tpu_custom_call.1} parent=5 // pred_fallthru
        _
      %p10716 = scmp.le.s32.totalorder 2, %s12
      // Predicated region
      $region41: #{tpu_custom_call.1} parent=5 // pred_check
        %p10717 = pneg %p10716
      $region42: #{tpu_custom_call.1} parent=5 // pred_check_branch
        %10719 = sbr.rel (%p10717) target = $region44
      $region43: #{tpu_custom_call.1} parent=5 // pred_region
        %s10720 = ssub.s32 %s12, 2
        // Predicated region
        $region45: #{tpu_custom_call.1} parent=43 // pred_check
          %p10721 = pneg %p125
        $region46: #{tpu_custom_call.1} parent=43 // pred_check_branch
          %10723 = sbr.rel (%p10721) target = $region48
        $region47: #{tpu_custom_call.1} parent=43 // pred_region
          %s10724 = sand.u32 %s110, 1
          %s10725 = scalar_lea.sflag [#allocation4], %s10724
          %s10726 = sand.u32 %s110, 1
          %s10727 = smul.addr %s10726, 16
          %s10728 = scalar_lea.vmem [#allocation3], %s10727
          %10729 = dma.done %s10725, 256
        $region48: #{tpu_custom_call.1} parent=43 // pred_fallthru
          _
      $region44: #{tpu_custom_call.1} parent=5 // pred_fallthru
        _
    $region6: #{tpu_custom_call.1} parent=1 // loop_footer
      %s16 = sadd.s32 1, %s12
    $region7: #{tpu_custom_call.1} parent=1 // loop_footer_branch
      %11 = sbr.rel target = $region3
    $region8: #{tpu_custom_call.1} parent=1 // loop_exit
      _
    %10730 = vsyncpa [#allocation4], 1
    %s10731 = scalar_lea.sflag [#allocation4], 1
    %10732 = vsyncpa %s10731, 1

</llo_original>
